<compile_context>
chip_gen: v7x
topology: tpu7x:2x2x1
jax: 0.10.0
libtpu: 0.0.40
codegen_flags: <defaults>
</compile_context>

<pallas_src>
import functools
import math

import jax
import jax.numpy as jnp
from jax.experimental import pallas as pl
from jax.experimental.pallas import tpu as pltpu

_F32 = jnp.float32
_BF16 = jnp.bfloat16
_EPS = 1e-5


# ------------------------------- kernels -------------------------------------
def _attn_kernel(x_ref, wq_ref, wk_ref, wv_ref, wo_ref, y1_ref, st_ref,
                 acc_ref, *, n_heads):
    """One batch: per-head attention with the output projection folded into a
    per-head (Vd,D) matmul accumulated into a lane-dense (N,D) scratch slab,
    residual add, and BN1 partial statistics."""
    x = x_ref[...]                                    # (N, D) f32, one batch
    xb = x.astype(_BF16)
    acc_ref[...] = jnp.zeros_like(acc_ref)            # (N, D) f32 accumulator

    def head_body(h, carry):
        # Per-head projections: lane-dense x operand, full-D contraction,
        # weight refs dynamically indexed on their major (head) axis ->
        # no lane-misaligned slices or selects anywhere in the loop.
        q = jnp.dot(xb, wq_ref[h], preferred_element_type=_F32).astype(_BF16)
        k = jnp.dot(xb, wk_ref[h], preferred_element_type=_F32).astype(_BF16)
        v = jnp.dot(xb, wv_ref[h], preferred_element_type=_F32).astype(_BF16)
        s = jnp.einsum('nk,mk->nm', q, k, preferred_element_type=_F32)  # (N,N)
        s = s - jnp.max(s, axis=-1, keepdims=True)                      # f32
        e = jnp.exp(s)
        inv = pl.reciprocal(jnp.sum(e, axis=-1, keepdims=True), approx=True)
        attn = (e * inv).astype(_BF16)
        head = jnp.dot(attn, v, preferred_element_type=_F32).astype(_BF16)
        # Fused per-head output projection: (N,Vd)@(Vd,D) accumulated into the
        # lane-dense slab; sum over heads == concat-over-heads @ W_out.
        acc_ref[...] += jnp.dot(head, wo_ref[h], preferred_element_type=_F32)
        return carry

    jax.lax.fori_loop(0, n_heads, head_body, 0, unroll=True)

    y1 = x + acc_ref[...]              # residual (dropout = eval-mode identity)
    y1_ref[...] = y1.astype(y1_ref.dtype)             # bf16 inter-pass storage
    # BN1 pass 1: per-block sum / sum-of-squares in the same traversal (f32).
    s1 = jnp.sum(y1, axis=0, keepdims=True)
    s2 = jnp.sum(y1 * y1, axis=0, keepdims=True)
    st_ref[...] = jnp.concatenate([s1, s2], axis=0)[None]       # (1, 2, D)


def _ff_kernel(y1_ref, sc1_ref, sh1_ref, w1_ref, b1_ref, w2_ref, b2_ref,
               z_ref, st_ref):
    """One row tile: BN1 normalize (folded affine), feed-forward, residual,
    eval-mode dropout identity (x -> 2x), and BN2 partial statistics."""
    y = y1_ref[...].astype(_F32) * sc1_ref[...] + sh1_ref[...]      # (R, D)
    h1 = jnp.dot(y.astype(_BF16), w1_ref[...],
                 preferred_element_type=_F32) + b1_ref[...]
    h1 = jnp.maximum(h1, 0.0)                                       # ReLU, f32
    ff = jnp.dot(h1.astype(_BF16), w2_ref[...],
                 preferred_element_type=_F32) + b2_ref[...]
    z = 2.0 * (y + ff)                  # +FF residual, then x = x + dropout(x)
    z_ref[...] = z.astype(z_ref.dtype)                 # bf16 inter-pass storage
    s1 = jnp.sum(z, axis=0, keepdims=True)
    s2 = jnp.sum(z * z, axis=0, keepdims=True)
    st_ref[...] = jnp.concatenate([s1, s2], axis=0)[None]          # (1, 2, D)


def _bn_kernel(z_ref, sc_ref, sh_ref, o_ref):
    """One row tile: BN2 normalize with the globally-reduced (folded) stats."""
    o_ref[...] = z_ref[...].astype(_F32) * sc_ref[...] + sh_ref[...]


# ------------------------------- helpers --------------------------------------
def _padded_nbytes(shape, dtype):
    """VMEM-footprint estimate: last dim padded to 128 lanes, 2nd-to-last to 8."""
    s = list(shape)
    if s:
        s[-1] = -(-s[-1] // 128) * 128
    if len(s) >= 2:
        s[-2] = -(-s[-2] // 8) * 8
    return int(math.prod(s)) * jnp.dtype(dtype).itemsize


def _compiler_params(block_bytes, temp_bytes):
    """'parallel' grid semantics shard the 1-D grid across v7x's two TCs.
    The VMEM limit is sized from double-buffered pipeline blocks plus in-kernel
    temporaries with ~2x headroom, capped generation-aware (~0.6x physical on
    v7x's 64 MiB/TC; 48 MiB on v5e/v6e's 128 MiB)."""
    try:
        info = pltpu.get_tpu_info()
        phys = int(getattr(info, "vmem_capacity_bytes", 64 << 20))
    except Exception:  # pragma: no cover - conservative fallback (v7x-sized)
        phys = 64 << 20
    cap = min(48 << 20, int(phys * 0.6))
    need = 2 * block_bytes + temp_bytes
    limit = int(min(max(2 * need, 8 << 20), cap))
    return pltpu.CompilerParams(dimension_semantics=("parallel",),
                                vmem_limit_bytes=limit)


def prepare_params(params):
    """One-time weight preprocessing (hoisted out of the jitted forward):
    fold 1/sqrt(key_dim) into W_query, cast MXU operands to bf16, transpose the
    FF weights.  Call once at parameter-load time."""
    H, D, Kd = params['W_query'].shape
    Fh = params['ff_w1'].shape[0]
    norm_factor = 1.0 / math.sqrt(Kd)
    return {
        'wq': (params['W_query'] * norm_factor).astype(_BF16),   # (H, D, Kd)
        'wk': params['W_key'].astype(_BF16),                     # (H, D, Kd)
        'wv': params['W_val'].astype(_BF16),                     # (H, D, Vd)
        'wo': params['W_out'].astype(_BF16),                     # (H, Vd, D)
        'w1': params['ff_w1'].T.astype(_BF16),                   # (D, Fh)
        'b1': params['ff_b1'].reshape(1, Fh).astype(_F32),
        'w2': params['ff_w2'].T.astype(_BF16),                   # (Fh, D)
        'b2': params['ff_b2'].reshape(1, D).astype(_F32),
        'norm1_w': params['norm1_w'].astype(_F32),
        'norm1_b': params['norm1_b'].astype(_F32),
        'norm2_w': params['norm2_w'].astype(_F32),
        'norm2_b': params['norm2_b'].astype(_F32),
    }


# ------------------------------- forward --------------------------------------
def mha_layer1_forward(x, prep, *, rows_tile=512):
    """x: (B, N, D) float32, prep: output of prepare_params.  Returns (B, N, D)
    float32.  rows_tile (passes B/C) defaults to 512 so mem-bound streaming runs
    near HBM roofline and the FF matmuls present >=256 rows to v6e/v7x MXUs."""
    B, N, D = x.shape
    H, Dw, Kd = prep['wq'].shape
    Vd = prep['wv'].shape[-1]
    Fh = prep['w1'].shape[-1]
    assert Dw == D
    M = B * N
    assert N % 8 == 0, "graph_size must be a multiple of 8 (pad + mask otherwise)"

    # largest row tile <= rows_tile that divides M and is a multiple of 8
    rt = max(8, min(rows_tile, M))
    while (M % rt) or (rt % 8):
        rt -= 8
    T = M // rt

    xf = x.reshape(M, D).astype(_F32)

    # ---- pass A: attention + residual + BN1 partial stats (grid over batch) --
    blk_a = (_padded_nbytes((N, D), _F32) + _padded_nbytes((N, D), _BF16)
             + _padded_nbytes((1, 2, D), _F32)
             + 2 * _padded_nbytes((H, D, Kd), _BF16)
             + _padded_nbytes((H, D, Vd), _BF16)
             + _padded_nbytes((H, Vd, D), _BF16))
    tmp_a = (2 * _padded_nbytes((N, N), _F32)
             + 3 * _padded_nbytes((N, Kd), _F32)
             + 3 * _padded_nbytes((N, D), _F32))
    y1, stats1 = pl.pallas_call(
        functools.partial(_attn_kernel, n_heads=H),
        grid=(B,),
        in_specs=[
            pl.BlockSpec((N, D), lambda b: (b, 0)),
            pl.BlockSpec((H, D, Kd), lambda b: (0, 0, 0)),
            pl.BlockSpec((H, D, Kd), lambda b: (0, 0, 0)),
            pl.BlockSpec((H, D, Vd), lambda b: (0, 0, 0)),
            pl.BlockSpec((H, Vd, D), lambda b: (0, 0, 0)),
        ],
        out_specs=(
            pl.BlockSpec((N, D), lambda b: (b, 0)),
            pl.BlockSpec((1, 2, D), lambda b: (b, 0, 0)),
        ),
        out_shape=(
            jax.ShapeDtypeStruct((M, D), _BF16),
            jax.ShapeDtypeStruct((B, 2, D), _F32),
        ),
        scratch_shapes=[pltpu.VMEM((N, D), _F32)],
        compiler_params=_compiler_params(blk_a, tmp_a),
    )(xf, prep['wq'], prep['wk'], prep['wv'], prep['wo'])

    def bn_fold(stats, gamma, beta):
        # Reduce per-tile partial sums -> training-mode (biased) batch stats,
        # folded into a per-feature affine:  y_norm = y*scale + shift
        total = jnp.sum(stats[:, 0, :], axis=0)
        totsq = jnp.sum(stats[:, 1, :], axis=0)
        mean = total / M
        var = jnp.maximum(totsq / M - mean * mean, 0.0)
        scale = gamma * jax.lax.rsqrt(var + _EPS)
        shift = beta - mean * scale
        return (scale.reshape(1, D).astype(_F32),
                shift.reshape(1, D).astype(_F32))

    scale1, shift1 = bn_fold(stats1, prep['norm1_w'], prep['norm1_b'])

    # ---- pass B: BN1 normalize + FF + residual + x2 + BN2 partial stats -------
    blk_b = (2 * _padded_nbytes((rt, D), _BF16) + _padded_nbytes((1, 2, D), _F32)
             + 3 * _padded_nbytes((1, D), _F32) + _padded_nbytes((1, Fh), _F32)
             + _padded_nbytes((D, Fh), _BF16) + _padded_nbytes((Fh, D), _BF16))
    tmp_b = 3 * _padded_nbytes((rt, Fh), _F32) + 4 * _padded_nbytes((rt, D), _F32)
    y2, stats2 = pl.pallas_call(
        _ff_kernel,
        grid=(T,),
        in_specs=[
            pl.BlockSpec((rt, D), lambda t: (t, 0)),
            pl.BlockSpec((1, D), lambda t: (0, 0)),
            pl.BlockSpec((1, D), lambda t: (0, 0)),
            pl.BlockSpec((D, Fh), lambda t: (0, 0)),
            pl.BlockSpec((1, Fh), lambda t: (0, 0)),
            pl.BlockSpec((Fh, D), lambda t: (0, 0)),
            pl.BlockSpec((1, D), lambda t: (0, 0)),
        ],
        out_specs=(
            pl.BlockSpec((rt, D), lambda t: (t, 0)),
            pl.BlockSpec((1, 2, D), lambda t: (t, 0, 0)),
        ),
        out_shape=(
            jax.ShapeDtypeStruct((M, D), _BF16),
            jax.ShapeDtypeStruct((T, 2, D), _F32),
        ),
        compiler_params=_compiler_params(blk_b, tmp_b),
    )(y1, scale1, shift1, prep['w1'], prep['b1'], prep['w2'], prep['b2'])

    scale2, shift2 = bn_fold(stats2, prep['norm2_w'], prep['norm2_b'])

    # ---- pass C: BN2 normalize -------------------------------------------------
    blk_c = (_padded_nbytes((rt, D), _BF16) + _padded_nbytes((rt, D), _F32)
             + 2 * _padded_nbytes((1, D), _F32))
    tmp_c = 2 * _padded_nbytes((rt, D), _F32)
    out = pl.pallas_call(
        _bn_kernel,
        grid=(T,),
        in_specs=[
            pl.BlockSpec((rt, D), lambda t: (t, 0)),
            pl.BlockSpec((1, D), lambda t: (0, 0)),
            pl.BlockSpec((1, D), lambda t: (0, 0)),
        ],
        out_specs=pl.BlockSpec((rt, D), lambda t: (t, 0)),
        out_shape=jax.ShapeDtypeStruct((M, D), _F32),
        compiler_params=_compiler_params(blk_c, tmp_c),
    )(y2, scale2, shift2)

    return out.reshape(B, N, D)


# ------------------------------- references -----------------------------------
def reference_forward(x, params, matmul_dtype=jnp.float32):
    """Pure-JAX reference with the PyTorch per-head structure (independent of
    the kernel's per-head weight layout / output-projection folding).
    matmul_dtype=bfloat16 mirrors the kernel's MXU precision; float32 is the
    exact PyTorch-equivalent path."""
    B, N, D = x.shape
    H, _, Kd = params['W_query'].shape
    md = matmul_dtype
    f32 = jnp.float32
    xf = x.reshape(B * N, D).astype(f32)

    def mm(a, b):
        return jnp.matmul(a.astype(md), b.astype(md), preferred_element_type=f32)

    Q = jnp.einsum('nd,hdk->hnk', xf.astype(md), params['W_query'].astype(md),
                   preferred_element_type=f32).reshape(H, B, N, Kd)
    K = jnp.einsum('nd,hdk->hnk', xf.astype(md), params['W_key'].astype(md),
                   preferred_element_type=f32).reshape(H, B, N, Kd)
    V = jnp.einsum('nd,hdk->hnk', xf.astype(md), params['W_val'].astype(md),
                   preferred_element_type=f32).reshape(H, B, N, -1)
    comp = (1.0 / math.sqrt(Kd)) * jnp.einsum(
        'hbnk,hbmk->hbnm', Q.astype(md), K.astype(md), preferred_element_type=f32)
    attn = jax.nn.softmax(comp, axis=-1)
    heads = jnp.einsum('hbnm,hbmv->hbnv', attn.astype(md), V.astype(md),
                       preferred_element_type=f32)
    cat = jnp.transpose(heads, (1, 2, 0, 3)).reshape(B * N, -1)
    out = mm(cat, params['W_out'].reshape(-1, D))
    y = xf + out

    def bn(z, w, b):
        m = jnp.mean(z, axis=0, keepdims=True)
        v = jnp.mean((z - m) ** 2, axis=0, keepdims=True)
        return (z - m) / jnp.sqrt(v + _EPS) * w + b

    y = bn(y, params['norm1_w'], params['norm1_b'])
    h1 = jax.nn.relu(mm(y, params['ff_w1'].T) + params['ff_b1'])
    ff = mm(h1, params['ff_w2'].T) + params['ff_b2']
    y = y + ff
    y = y + y
    y = bn(y, params['norm2_w'], params['norm2_b'])
    return y.reshape(B, N, D)


def init_params(key, n_heads, embed_dim, feed_forward_hidden):
    key_dim = val_dim = embed_dim // n_heads
    ks = jax.random.split(key, 8)

    def u(k, shape, fan):
        s = 1.0 / math.sqrt(fan)
        return jax.random.uniform(k, shape, jnp.float32, -s, s)

    return {
        'W_query': u(ks[0], (n_heads, embed_dim, key_dim), key_dim),
        'W_key':   u(ks[1], (n_heads, embed_dim, key_dim), key_dim),
        'W_val':   u(ks[2], (n_heads, embed_dim, val_dim), val_dim),
        'W_out':   u(ks[3], (n_heads, val_dim, embed_dim), embed_dim),
        'norm1_w': jnp.ones((embed_dim,), jnp.float32),
        'norm1_b': jnp.zeros((embed_dim,), jnp.float32),
        'ff_w1':   u(ks[4], (feed_forward_hidden, embed_dim), embed_dim),
        'ff_b1':   u(ks[5], (feed_forward_hidden,), embed_dim),
        'ff_w2':   u(ks[6], (embed_dim, feed_forward_hidden), feed_forward_hidden),
        'ff_b2':   u(ks[7], (embed_dim,), feed_forward_hidden),
        'norm2_w': jnp.ones((embed_dim,), jnp.float32),
        'norm2_b': jnp.zeros((embed_dim,), jnp.float32),
    }


if __name__ == "__main__":
    # lane-dense demo shapes: embed_dim=128, H*Kd=128, feed_forward_hidden=512
    B, N, D = 2, 128, 128       # batch, graph_size (=n_query), embed_dim
    H = 8                       # n_heads -> key_dim = val_dim = 16
    FFH = 512                   # feed_forward_hidden (module default)

    root = jax.random.PRNGKey(0)
    kx, kp = jax.random.split(root)
    x = jax.random.normal(kx, (B, N, D), jnp.float32)
    params = init_params(kp, H, D, FFH)

    # one-time weight preprocessing, hoisted out of the jitted forward
    prep = prepare_params(params)

    fwd = jax.jit(mha_layer1_forward)
    out = jax.block_until_ready(fwd(x, prep))
    assert out.shape == (B, N, D)
    assert bool(jnp.all(jnp.isfinite(out)))

    # structural check against a reference that mirrors the kernel's MXU
    # precision (bf16 operands, f32 accumulation) but keeps the original
    # per-head PyTorch structure; tolerances account for the bf16 storage of
    # the (M, D) inter-pass intermediates and the approx softmax reciprocal.
    ref_mixed = reference_forward(x, params, matmul_dtype=jnp.bfloat16)
    assert jnp.allclose(out, ref_mixed, rtol=2e-2, atol=3e-2), \
        "mismatch vs mixed-precision JAX reference"
    assert float(jnp.mean(jnp.abs(out - ref_mixed))) < 1e-2, \
        "mean deviation vs mixed-precision reference too large"

    # semantic sanity vs the exact f32 PyTorch-equivalent path (difference is
    # bf16 rounding of matmul operands + intermediates only).
    ref_f32 = reference_forward(x, params, matmul_dtype=jnp.float32)
    mean_err = float(jnp.mean(jnp.abs(out - ref_f32)))
    assert mean_err < 0.05, f"unexpectedly large deviation from f32 reference: {mean_err}"

    print("KERNEL_OK")
</pallas_src>

<mosaic_0001>
module attributes {stable_mosaic.version = 11 : i64} {
  func.func @_attn_kernel(%arg0: i32, %arg1: memref<128x128xf32, #tpu.memory_space<vmem>>, %arg2: memref<8x128x16xbf16, #tpu.memory_space<vmem>>, %arg3: memref<8x128x16xbf16, #tpu.memory_space<vmem>>, %arg4: memref<8x128x16xbf16, #tpu.memory_space<vmem>>, %arg5: memref<8x16x128xbf16, #tpu.memory_space<vmem>>, %arg6: memref<128x128xbf16, #tpu.memory_space<vmem>>, %arg7: memref<1x2x128xf32, #tpu.memory_space<vmem>>, %arg8: memref<128x128xf32, #tpu.memory_space<vmem>>) attributes {dimension_semantics = [#tpu.dimension_semantics<parallel>], iteration_bounds = array<i64: 2>, scalar_prefetch = 0 : i64, scratch_operands = 1 : i64, tpu.core_type = #tpu.core_type<tc>, window_params = [{transform_indices = @transform_0, window_bounds = array<i64: 128, 128>}, {pipeline_mode = #tpu.pipeline_mode<synchronous>, transform_indices = @transform_1, window_bounds = array<i64: 8, 128, 16>}, {pipeline_mode = #tpu.pipeline_mode<synchronous>, transform_indices = @transform_2, window_bounds = array<i64: 8, 128, 16>}, {pipeline_mode = #tpu.pipeline_mode<synchronous>, transform_indices = @transform_3, window_bounds = array<i64: 8, 128, 16>}, {pipeline_mode = #tpu.pipeline_mode<synchronous>, transform_indices = @transform_4, window_bounds = array<i64: 8, 16, 128>}, {transform_indices = @transform_5, window_bounds = array<i64: 128, 128>}, {transform_indices = @transform_6, window_bounds = array<i64: 1, 2, 128>}]} {
    %c0 = arith.constant 0 : index
    %c0_0 = arith.constant 0 : index
    %0 = vector.load %arg1[%c0, %c0_0] : memref<128x128xf32, #tpu.memory_space<vmem>>, vector<128x128xf32>
    %1 = arith.truncf %0 : vector<128x128xf32> to vector<128x128xbf16>
    %cst = arith.constant 0.000000e+00 : f32
    %2 = vector.broadcast %cst : f32 to vector<128x128xf32>
    %c0_1 = arith.constant 0 : index
    %c0_2 = arith.constant 0 : index
    %3 = vector.load %arg8[%c0_1, %c0_2] : memref<128x128xf32, #tpu.memory_space<vmem>>, vector<128x128xf32>
    tpu.vector_store %arg8[%c0_1, %c0_2], %2 {strides = array<i32>} : memref<128x128xf32, #tpu.memory_space<vmem>>, vector<128x128xf32>,
    %c0_i32 = arith.constant 0 : i32
    %4 = arith.index_cast %c0_i32 : i32 to index
    %c0_3 = arith.constant 0 : index
    %c0_4 = arith.constant 0 : index
    %5 = vector.load %arg2[%4, %c0_3, %c0_4] : memref<8x128x16xbf16, #tpu.memory_space<vmem>>, vector<1x128x16xbf16>
    %6 = vector.shape_cast %5 : vector<1x128x16xbf16> to vector<128x16xbf16>
    %cst_5 = arith.constant dense<0.000000e+00> : vector<128x16xf32>
    %7 = tpu.matmul %1, %6, %cst_5 {dimension_numbers = #tpu.dot_dimension_numbers<[1], [0], [0], [1], [0, 0, 1, 1], [], []>} : vector<128x128xbf16>, vector<128x16xbf16>, vector<128x16xf32> -> vector<128x16xf32>
    %8 = arith.truncf %7 : vector<128x16xf32> to vector<128x16xbf16>
    %9 = arith.index_cast %c0_i32 : i32 to index
    %c0_6 = arith.constant 0 : index
    %c0_7 = arith.constant 0 : index
    %10 = vector.load %arg3[%9, %c0_6, %c0_7] : memref<8x128x16xbf16, #tpu.memory_space<vmem>>, vector<1x128x16xbf16>
    %11 = vector.shape_cast %10 : vector<1x128x16xbf16> to vector<128x16xbf16>
    %cst_8 = arith.constant dense<0.000000e+00> : vector<128x16xf32>
    %12 = tpu.matmul %1, %11, %cst_8 {dimension_numbers = #tpu.dot_dimension_numbers<[1], [0], [0], [1], [0, 0, 1, 1], [], []>} : vector<128x128xbf16>, vector<128x16xbf16>, vector<128x16xf32> -> vector<128x16xf32>
    %13 = arith.truncf %12 : vector<128x16xf32> to vector<128x16xbf16>
    %14 = arith.index_cast %c0_i32 : i32 to index
    %c0_9 = arith.constant 0 : index
    %c0_10 = arith.constant 0 : index
    %15 = vector.load %arg4[%14, %c0_9, %c0_10] : memref<8x128x16xbf16, #tpu.memory_space<vmem>>, vector<1x128x16xbf16>
    %16 = vector.shape_cast %15 : vector<1x128x16xbf16> to vector<128x16xbf16>
    %cst_11 = arith.constant dense<0.000000e+00> : vector<128x16xf32>
    %17 = tpu.matmul %1, %16, %cst_11 {dimension_numbers = #tpu.dot_dimension_numbers<[1], [0], [0], [1], [0, 0, 1, 1], [], []>} : vector<128x128xbf16>, vector<128x16xbf16>, vector<128x16xf32> -> vector<128x16xf32>
    %18 = arith.truncf %17 : vector<128x16xf32> to vector<128x16xbf16>
    "tpu.trace_start"() <{level = 10 : i32, message = "nk,mk->nm"}> : () -> ()
    %cst_12 = arith.constant dense<0.000000e+00> : vector<128x128xf32>
    %19 = tpu.matmul %8, %13, %cst_12 {dimension_numbers = #tpu.dot_dimension_numbers<[1], [1], [0], [0], [0, 0, 1, 0], [], []>} : vector<128x16xbf16>, vector<128x16xbf16>, vector<128x128xf32> -> vector<128x128xf32>
    "tpu.trace_stop"() : () -> ()
    %cst_13 = arith.constant dense<0xFF800000> : vector<128xf32>
    %20 = vector.multi_reduction <maximumf>, %19, %cst_13 [1] : vector<128x128xf32> to vector<128xf32>
    %21 = vector.shape_cast %20 : vector<128xf32> to vector<128x1xf32>
    %22 = vector.broadcast %21 : vector<128x1xf32> to vector<128x128xf32>
    %23 = arith.subf %19, %22 : vector<128x128xf32>
    %24 = math.exp %23 : vector<128x128xf32>
    %cst_14 = arith.constant dense<0.000000e+00> : vector<128xf32>
    %25 = vector.multi_reduction <add>, %24, %cst_14 [1] : vector<128x128xf32> to vector<128xf32>
    %26 = vector.shape_cast %25 : vector<128xf32> to vector<128x1xf32>
    %27 = tpu.reciprocal %26 {approx = true} : vector<128x1xf32> -> vector<128x1xf32>
    %28 = vector.broadcast %27 : vector<128x1xf32> to vector<128x128xf32>
    %29 = arith.mulf %24, %28 : vector<128x128xf32>
    %30 = arith.truncf %29 : vector<128x128xf32> to vector<128x128xbf16>
    %cst_15 = arith.constant dense<0.000000e+00> : vector<128x16xf32>
    %31 = tpu.matmul %30, %18, %cst_15 {dimension_numbers = #tpu.dot_dimension_numbers<[1], [0], [0], [1], [0, 0, 1, 1], [], []>} : vector<128x128xbf16>, vector<128x16xbf16>, vector<128x16xf32> -> vector<128x16xf32>
    %32 = arith.truncf %31 : vector<128x16xf32> to vector<128x16xbf16>
    %c0_16 = arith.constant 0 : index
    %c0_17 = arith.constant 0 : index
    %33 = vector.load %arg8[%c0_16, %c0_17] : memref<128x128xf32, #tpu.memory_space<vmem>>, vector<128x128xf32>
    %34 = arith.index_cast %c0_i32 : i32 to index
    %c0_18 = arith.constant 0 : index
    %c0_19 = arith.constant 0 : index
    %35 = vector.load %arg5[%34, %c0_18, %c0_19] : memref<8x16x128xbf16, #tpu.memory_space<vmem>>, vector<1x16x128xbf16>
    %36 = vector.shape_cast %35 : vector<1x16x128xbf16> to vector<16x128xbf16>
    %cst_20 = arith.constant dense<0.000000e+00> : vector<128x128xf32>
    %37 = tpu.matmul %32, %36, %cst_20 {dimension_numbers = #tpu.dot_dimension_numbers<[1], [0], [0], [1], [0, 0, 1, 1], [], []>} : vector<128x16xbf16>, vector<16x128xbf16>, vector<128x128xf32> -> vector<128x128xf32>
    %38 = arith.addf %33, %37 : vector<128x128xf32>
    %c0_21 = arith.constant 0 : index
    %c0_22 = arith.constant 0 : index
    %39 = vector.load %arg8[%c0_21, %c0_22] : memref<128x128xf32, #tpu.memory_space<vmem>>, vector<128x128xf32>
    tpu.vector_store %arg8[%c0_21, %c0_22], %38 {strides = array<i32>} : memref<128x128xf32, #tpu.memory_space<vmem>>, vector<128x128xf32>,
    %c1_i32 = arith.constant 1 : i32
    %40 = arith.index_cast %c1_i32 : i32 to index
    %c0_23 = arith.constant 0 : index
    %c0_24 = arith.constant 0 : index
    %41 = vector.load %arg2[%40, %c0_23, %c0_24] : memref<8x128x16xbf16, #tpu.memory_space<vmem>>, vector<1x128x16xbf16>
    %42 = vector.shape_cast %41 : vector<1x128x16xbf16> to vector<128x16xbf16>
    %cst_25 = arith.constant dense<0.000000e+00> : vector<128x16xf32>
    %43 = tpu.matmul %1, %42, %cst_25 {dimension_numbers = #tpu.dot_dimension_numbers<[1], [0], [0], [1], [0, 0, 1, 1], [], []>} : vector<128x128xbf16>, vector<128x16xbf16>, vector<128x16xf32> -> vector<128x16xf32>
    %44 = arith.truncf %43 : vector<128x16xf32> to vector<128x16xbf16>
    %45 = arith.index_cast %c1_i32 : i32 to index
    %c0_26 = arith.constant 0 : index
    %c0_27 = arith.constant 0 : index
    %46 = vector.load %arg3[%45, %c0_26, %c0_27] : memref<8x128x16xbf16, #tpu.memory_space<vmem>>, vector<1x128x16xbf16>
    %47 = vector.shape_cast %46 : vector<1x128x16xbf16> to vector<128x16xbf16>
    %cst_28 = arith.constant dense<0.000000e+00> : vector<128x16xf32>
    %48 = tpu.matmul %1, %47, %cst_28 {dimension_numbers = #tpu.dot_dimension_numbers<[1], [0], [0], [1], [0, 0, 1, 1], [], []>} : vector<128x128xbf16>, vector<128x16xbf16>, vector<128x16xf32> -> vector<128x16xf32>
    %49 = arith.truncf %48 : vector<128x16xf32> to vector<128x16xbf16>
    %50 = arith.index_cast %c1_i32 : i32 to index
    %c0_29 = arith.constant 0 : index
    %c0_30 = arith.constant 0 : index
    %51 = vector.load %arg4[%50, %c0_29, %c0_30] : memref<8x128x16xbf16, #tpu.memory_space<vmem>>, vector<1x128x16xbf16>
    %52 = vector.shape_cast %51 : vector<1x128x16xbf16> to vector<128x16xbf16>
    %cst_31 = arith.constant dense<0.000000e+00> : vector<128x16xf32>
    %53 = tpu.matmul %1, %52, %cst_31 {dimension_numbers = #tpu.dot_dimension_numbers<[1], [0], [0], [1], [0, 0, 1, 1], [], []>} : vector<128x128xbf16>, vector<128x16xbf16>, vector<128x16xf32> -> vector<128x16xf32>
    %54 = arith.truncf %53 : vector<128x16xf32> to vector<128x16xbf16>
    "tpu.trace_start"() <{level = 10 : i32, message = "nk,mk->nm"}> : () -> ()
    %cst_32 = arith.constant dense<0.000000e+00> : vector<128x128xf32>
    %55 = tpu.matmul %44, %49, %cst_32 {dimension_numbers = #tpu.dot_dimension_numbers<[1], [1], [0], [0], [0, 0, 1, 0], [], []>} : vector<128x16xbf16>, vector<128x16xbf16>, vector<128x128xf32> -> vector<128x128xf32>
    "tpu.trace_stop"() : () -> ()
    %cst_33 = arith.constant dense<0xFF800000> : vector<128xf32>
    %56 = vector.multi_reduction <maximumf>, %55, %cst_33 [1] : vector<128x128xf32> to vector<128xf32>
    %57 = vector.shape_cast %56 : vector<128xf32> to vector<128x1xf32>
    %58 = vector.broadcast %57 : vector<128x1xf32> to vector<128x128xf32>
    %59 = arith.subf %55, %58 : vector<128x128xf32>
    %60 = math.exp %59 : vector<128x128xf32>
    %cst_34 = arith.constant dense<0.000000e+00> : vector<128xf32>
    %61 = vector.multi_reduction <add>, %60, %cst_34 [1] : vector<128x128xf32> to vector<128xf32>
    %62 = vector.shape_cast %61 : vector<128xf32> to vector<128x1xf32>
    %63 = tpu.reciprocal %62 {approx = true} : vector<128x1xf32> -> vector<128x1xf32>
    %64 = vector.broadcast %63 : vector<128x1xf32> to vector<128x128xf32>
    %65 = arith.mulf %60, %64 : vector<128x128xf32>
    %66 = arith.truncf %65 : vector<128x128xf32> to vector<128x128xbf16>
    %cst_35 = arith.constant dense<0.000000e+00> : vector<128x16xf32>
    %67 = tpu.matmul %66, %54, %cst_35 {dimension_numbers = #tpu.dot_dimension_numbers<[1], [0], [0], [1], [0, 0, 1, 1], [], []>} : vector<128x128xbf16>, vector<128x16xbf16>, vector<128x16xf32> -> vector<128x16xf32>
    %68 = arith.truncf %67 : vector<128x16xf32> to vector<128x16xbf16>
    %c0_36 = arith.constant 0 : index
    %c0_37 = arith.constant 0 : index
    %69 = vector.load %arg8[%c0_36, %c0_37] : memref<128x128xf32, #tpu.memory_space<vmem>>, vector<128x128xf32>
    %70 = arith.index_cast %c1_i32 : i32 to index
    %c0_38 = arith.constant 0 : index
    %c0_39 = arith.constant 0 : index
    %71 = vector.load %arg5[%70, %c0_38, %c0_39] : memref<8x16x128xbf16, #tpu.memory_space<vmem>>, vector<1x16x128xbf16>
    %72 = vector.shape_cast %71 : vector<1x16x128xbf16> to vector<16x128xbf16>
    %cst_40 = arith.constant dense<0.000000e+00> : vector<128x128xf32>
    %73 = tpu.matmul %68, %72, %cst_40 {dimension_numbers = #tpu.dot_dimension_numbers<[1], [0], [0], [1], [0, 0, 1, 1], [], []>} : vector<128x16xbf16>, vector<16x128xbf16>, vector<128x128xf32> -> vector<128x128xf32>
    %74 = arith.addf %69, %73 : vector<128x128xf32>
    %c0_41 = arith.constant 0 : index
    %c0_42 = arith.constant 0 : index
    %75 = vector.load %arg8[%c0_41, %c0_42] : memref<128x128xf32, #tpu.memory_space<vmem>>, vector<128x128xf32>
    tpu.vector_store %arg8[%c0_41, %c0_42], %74 {strides = array<i32>} : memref<128x128xf32, #tpu.memory_space<vmem>>, vector<128x128xf32>,
    %c2_i32 = arith.constant 2 : i32
    %76 = arith.index_cast %c2_i32 : i32 to index
    %c0_43 = arith.constant 0 : index
    %c0_44 = arith.constant 0 : index
    %77 = vector.load %arg2[%76, %c0_43, %c0_44] : memref<8x128x16xbf16, #tpu.memory_space<vmem>>, vector<1x128x16xbf16>
    %78 = vector.shape_cast %77 : vector<1x128x16xbf16> to vector<128x16xbf16>
    %cst_45 = arith.constant dense<0.000000e+00> : vector<128x16xf32>
    %79 = tpu.matmul %1, %78, %cst_45 {dimension_numbers = #tpu.dot_dimension_numbers<[1], [0], [0], [1], [0, 0, 1, 1], [], []>} : vector<128x128xbf16>, vector<128x16xbf16>, vector<128x16xf32> -> vector<128x16xf32>
    %80 = arith.truncf %79 : vector<128x16xf32> to vector<128x16xbf16>
    %81 = arith.index_cast %c2_i32 : i32 to index
    %c0_46 = arith.constant 0 : index
    %c0_47 = arith.constant 0 : index
    %82 = vector.load %arg3[%81, %c0_46, %c0_47] : memref<8x128x16xbf16, #tpu.memory_space<vmem>>, vector<1x128x16xbf16>
    %83 = vector.shape_cast %82 : vector<1x128x16xbf16> to vector<128x16xbf16>
    %cst_48 = arith.constant dense<0.000000e+00> : vector<128x16xf32>
    %84 = tpu.matmul %1, %83, %cst_48 {dimension_numbers = #tpu.dot_dimension_numbers<[1], [0], [0], [1], [0, 0, 1, 1], [], []>} : vector<128x128xbf16>, vector<128x16xbf16>, vector<128x16xf32> -> vector<128x16xf32>
    %85 = arith.truncf %84 : vector<128x16xf32> to vector<128x16xbf16>
    %86 = arith.index_cast %c2_i32 : i32 to index
    %c0_49 = arith.constant 0 : index
    %c0_50 = arith.constant 0 : index
    %87 = vector.load %arg4[%86, %c0_49, %c0_50] : memref<8x128x16xbf16, #tpu.memory_space<vmem>>, vector<1x128x16xbf16>
    %88 = vector.shape_cast %87 : vector<1x128x16xbf16> to vector<128x16xbf16>
    %cst_51 = arith.constant dense<0.000000e+00> : vector<128x16xf32>
    %89 = tpu.matmul %1, %88, %cst_51 {dimension_numbers = #tpu.dot_dimension_numbers<[1], [0], [0], [1], [0, 0, 1, 1], [], []>} : vector<128x128xbf16>, vector<128x16xbf16>, vector<128x16xf32> -> vector<128x16xf32>
    %90 = arith.truncf %89 : vector<128x16xf32> to vector<128x16xbf16>
    "tpu.trace_start"() <{level = 10 : i32, message = "nk,mk->nm"}> : () -> ()
    %cst_52 = arith.constant dense<0.000000e+00> : vector<128x128xf32>
    %91 = tpu.matmul %80, %85, %cst_52 {dimension_numbers = #tpu.dot_dimension_numbers<[1], [1], [0], [0], [0, 0, 1, 0], [], []>} : vector<128x16xbf16>, vector<128x16xbf16>, vector<128x128xf32> -> vector<128x128xf32>
    "tpu.trace_stop"() : () -> ()
    %cst_53 = arith.constant dense<0xFF800000> : vector<128xf32>
    %92 = vector.multi_reduction <maximumf>, %91, %cst_53 [1] : vector<128x128xf32> to vector<128xf32>
    %93 = vector.shape_cast %92 : vector<128xf32> to vector<128x1xf32>
    %94 = vector.broadcast %93 : vector<128x1xf32> to vector<128x128xf32>
    %95 = arith.subf %91, %94 : vector<128x128xf32>
    %96 = math.exp %95 : vector<128x128xf32>
    %cst_54 = arith.constant dense<0.000000e+00> : vector<128xf32>
    %97 = vector.multi_reduction <add>, %96, %cst_54 [1] : vector<128x128xf32> to vector<128xf32>
    %98 = vector.shape_cast %97 : vector<128xf32> to vector<128x1xf32>
    %99 = tpu.reciprocal %98 {approx = true} : vector<128x1xf32> -> vector<128x1xf32>
    %100 = vector.broadcast %99 : vector<128x1xf32> to vector<128x128xf32>
    %101 = arith.mulf %96, %100 : vector<128x128xf32>
    %102 = arith.truncf %101 : vector<128x128xf32> to vector<128x128xbf16>
    %cst_55 = arith.constant dense<0.000000e+00> : vector<128x16xf32>
    %103 = tpu.matmul %102, %90, %cst_55 {dimension_numbers = #tpu.dot_dimension_numbers<[1], [0], [0], [1], [0, 0, 1, 1], [], []>} : vector<128x128xbf16>, vector<128x16xbf16>, vector<128x16xf32> -> vector<128x16xf32>
    %104 = arith.truncf %103 : vector<128x16xf32> to vector<128x16xbf16>
    %c0_56 = arith.constant 0 : index
    %c0_57 = arith.constant 0 : index
    %105 = vector.load %arg8[%c0_56, %c0_57] : memref<128x128xf32, #tpu.memory_space<vmem>>, vector<128x128xf32>
    %106 = arith.index_cast %c2_i32 : i32 to index
    %c0_58 = arith.constant 0 : index
    %c0_59 = arith.constant 0 : index
    %107 = vector.load %arg5[%106, %c0_58, %c0_59] : memref<8x16x128xbf16, #tpu.memory_space<vmem>>, vector<1x16x128xbf16>
    %108 = vector.shape_cast %107 : vector<1x16x128xbf16> to vector<16x128xbf16>
    %cst_60 = arith.constant dense<0.000000e+00> : vector<128x128xf32>
    %109 = tpu.matmul %104, %108, %cst_60 {dimension_numbers = #tpu.dot_dimension_numbers<[1], [0], [0], [1], [0, 0, 1, 1], [], []>} : vector<128x16xbf16>, vector<16x128xbf16>, vector<128x128xf32> -> vector<128x128xf32>
    %110 = arith.addf %105, %109 : vector<128x128xf32>
    %c0_61 = arith.constant 0 : index
    %c0_62 = arith.constant 0 : index
    %111 = vector.load %arg8[%c0_61, %c0_62] : memref<128x128xf32, #tpu.memory_space<vmem>>, vector<128x128xf32>
    tpu.vector_store %arg8[%c0_61, %c0_62], %110 {strides = array<i32>} : memref<128x128xf32, #tpu.memory_space<vmem>>, vector<128x128xf32>,
    %c3_i32 = arith.constant 3 : i32
    %112 = arith.index_cast %c3_i32 : i32 to index
    %c0_63 = arith.constant 0 : index
    %c0_64 = arith.constant 0 : index
    %113 = vector.load %arg2[%112, %c0_63, %c0_64] : memref<8x128x16xbf16, #tpu.memory_space<vmem>>, vector<1x128x16xbf16>
    %114 = vector.shape_cast %113 : vector<1x128x16xbf16> to vector<128x16xbf16>
    %cst_65 = arith.constant dense<0.000000e+00> : vector<128x16xf32>
    %115 = tpu.matmul %1, %114, %cst_65 {dimension_numbers = #tpu.dot_dimension_numbers<[1], [0], [0], [1], [0, 0, 1, 1], [], []>} : vector<128x128xbf16>, vector<128x16xbf16>, vector<128x16xf32> -> vector<128x16xf32>
    %116 = arith.truncf %115 : vector<128x16xf32> to vector<128x16xbf16>
    %117 = arith.index_cast %c3_i32 : i32 to index
    %c0_66 = arith.constant 0 : index
    %c0_67 = arith.constant 0 : index
    %118 = vector.load %arg3[%117, %c0_66, %c0_67] : memref<8x128x16xbf16, #tpu.memory_space<vmem>>, vector<1x128x16xbf16>
    %119 = vector.shape_cast %118 : vector<1x128x16xbf16> to vector<128x16xbf16>
    %cst_68 = arith.constant dense<0.000000e+00> : vector<128x16xf32>
    %120 = tpu.matmul %1, %119, %cst_68 {dimension_numbers = #tpu.dot_dimension_numbers<[1], [0], [0], [1], [0, 0, 1, 1], [], []>} : vector<128x128xbf16>, vector<128x16xbf16>, vector<128x16xf32> -> vector<128x16xf32>
    %121 = arith.truncf %120 : vector<128x16xf32> to vector<128x16xbf16>
    %122 = arith.index_cast %c3_i32 : i32 to index
    %c0_69 = arith.constant 0 : index
    %c0_70 = arith.constant 0 : index
    %123 = vector.load %arg4[%122, %c0_69, %c0_70] : memref<8x128x16xbf16, #tpu.memory_space<vmem>>, vector<1x128x16xbf16>
    %124 = vector.shape_cast %123 : vector<1x128x16xbf16> to vector<128x16xbf16>
    %cst_71 = arith.constant dense<0.000000e+00> : vector<128x16xf32>
    %125 = tpu.matmul %1, %124, %cst_71 {dimension_numbers = #tpu.dot_dimension_numbers<[1], [0], [0], [1], [0, 0, 1, 1], [], []>} : vector<128x128xbf16>, vector<128x16xbf16>, vector<128x16xf32> -> vector<128x16xf32>
    %126 = arith.truncf %125 : vector<128x16xf32> to vector<128x16xbf16>
    "tpu.trace_start"() <{level = 10 : i32, message = "nk,mk->nm"}> : () -> ()
    %cst_72 = arith.constant dense<0.000000e+00> : vector<128x128xf32>
    %127 = tpu.matmul %116, %121, %cst_72 {dimension_numbers = #tpu.dot_dimension_numbers<[1], [1], [0], [0], [0, 0, 1, 0], [], []>} : vector<128x16xbf16>, vector<128x16xbf16>, vector<128x128xf32> -> vector<128x128xf32>
    "tpu.trace_stop"() : () -> ()
    %cst_73 = arith.constant dense<0xFF800000> : vector<128xf32>
    %128 = vector.multi_reduction <maximumf>, %127, %cst_73 [1] : vector<128x128xf32> to vector<128xf32>
    %129 = vector.shape_cast %128 : vector<128xf32> to vector<128x1xf32>
    %130 = vector.broadcast %129 : vector<128x1xf32> to vector<128x128xf32>
    %131 = arith.subf %127, %130 : vector<128x128xf32>
    %132 = math.exp %131 : vector<128x128xf32>
    %cst_74 = arith.constant dense<0.000000e+00> : vector<128xf32>
    %133 = vector.multi_reduction <add>, %132, %cst_74 [1] : vector<128x128xf32> to vector<128xf32>
    %134 = vector.shape_cast %133 : vector<128xf32> to vector<128x1xf32>
    %135 = tpu.reciprocal %134 {approx = true} : vector<128x1xf32> -> vector<128x1xf32>
    %136 = vector.broadcast %135 : vector<128x1xf32> to vector<128x128xf32>
    %137 = arith.mulf %132, %136 : vector<128x128xf32>
    %138 = arith.truncf %137 : vector<128x128xf32> to vector<128x128xbf16>
    %cst_75 = arith.constant dense<0.000000e+00> : vector<128x16xf32>
    %139 = tpu.matmul %138, %126, %cst_75 {dimension_numbers = #tpu.dot_dimension_numbers<[1], [0], [0], [1], [0, 0, 1, 1], [], []>} : vector<128x128xbf16>, vector<128x16xbf16>, vector<128x16xf32> -> vector<128x16xf32>
    %140 = arith.truncf %139 : vector<128x16xf32> to vector<128x16xbf16>
    %c0_76 = arith.constant 0 : index
    %c0_77 = arith.constant 0 : index
    %141 = vector.load %arg8[%c0_76, %c0_77] : memref<128x128xf32, #tpu.memory_space<vmem>>, vector<128x128xf32>
    %142 = arith.index_cast %c3_i32 : i32 to index
    %c0_78 = arith.constant 0 : index
    %c0_79 = arith.constant 0 : index
    %143 = vector.load %arg5[%142, %c0_78, %c0_79] : memref<8x16x128xbf16, #tpu.memory_space<vmem>>, vector<1x16x128xbf16>
    %144 = vector.shape_cast %143 : vector<1x16x128xbf16> to vector<16x128xbf16>
    %cst_80 = arith.constant dense<0.000000e+00> : vector<128x128xf32>
    %145 = tpu.matmul %140, %144, %cst_80 {dimension_numbers = #tpu.dot_dimension_numbers<[1], [0], [0], [1], [0, 0, 1, 1], [], []>} : vector<128x16xbf16>, vector<16x128xbf16>, vector<128x128xf32> -> vector<128x128xf32>
    %146 = arith.addf %141, %145 : vector<128x128xf32>
    %c0_81 = arith.constant 0 : index
    %c0_82 = arith.constant 0 : index
    %147 = vector.load %arg8[%c0_81, %c0_82] : memref<128x128xf32, #tpu.memory_space<vmem>>, vector<128x128xf32>
    tpu.vector_store %arg8[%c0_81, %c0_82], %146 {strides = array<i32>} : memref<128x128xf32, #tpu.memory_space<vmem>>, vector<128x128xf32>,
    %c4_i32 = arith.constant 4 : i32
    %148 = arith.index_cast %c4_i32 : i32 to index
    %c0_83 = arith.constant 0 : index
    %c0_84 = arith.constant 0 : index
    %149 = vector.load %arg2[%148, %c0_83, %c0_84] : memref<8x128x16xbf16, #tpu.memory_space<vmem>>, vector<1x128x16xbf16>
    %150 = vector.shape_cast %149 : vector<1x128x16xbf16> to vector<128x16xbf16>
    %cst_85 = arith.constant dense<0.000000e+00> : vector<128x16xf32>
    %151 = tpu.matmul %1, %150, %cst_85 {dimension_numbers = #tpu.dot_dimension_numbers<[1], [0], [0], [1], [0, 0, 1, 1], [], []>} : vector<128x128xbf16>, vector<128x16xbf16>, vector<128x16xf32> -> vector<128x16xf32>
    %152 = arith.truncf %151 : vector<128x16xf32> to vector<128x16xbf16>
    %153 = arith.index_cast %c4_i32 : i32 to index
    %c0_86 = arith.constant 0 : index
    %c0_87 = arith.constant 0 : index
    %154 = vector.load %arg3[%153, %c0_86, %c0_87] : memref<8x128x16xbf16, #tpu.memory_space<vmem>>, vector<1x128x16xbf16>
    %155 = vector.shape_cast %154 : vector<1x128x16xbf16> to vector<128x16xbf16>
    %cst_88 = arith.constant dense<0.000000e+00> : vector<128x16xf32>
    %156 = tpu.matmul %1, %155, %cst_88 {dimension_numbers = #tpu.dot_dimension_numbers<[1], [0], [0], [1], [0, 0, 1, 1], [], []>} : vector<128x128xbf16>, vector<128x16xbf16>, vector<128x16xf32> -> vector<128x16xf32>
    %157 = arith.truncf %156 : vector<128x16xf32> to vector<128x16xbf16>
    %158 = arith.index_cast %c4_i32 : i32 to index
    %c0_89 = arith.constant 0 : index
    %c0_90 = arith.constant 0 : index
    %159 = vector.load %arg4[%158, %c0_89, %c0_90] : memref<8x128x16xbf16, #tpu.memory_space<vmem>>, vector<1x128x16xbf16>
    %160 = vector.shape_cast %159 : vector<1x128x16xbf16> to vector<128x16xbf16>
    %cst_91 = arith.constant dense<0.000000e+00> : vector<128x16xf32>
    %161 = tpu.matmul %1, %160, %cst_91 {dimension_numbers = #tpu.dot_dimension_numbers<[1], [0], [0], [1], [0, 0, 1, 1], [], []>} : vector<128x128xbf16>, vector<128x16xbf16>, vector<128x16xf32> -> vector<128x16xf32>
    %162 = arith.truncf %161 : vector<128x16xf32> to vector<128x16xbf16>
    "tpu.trace_start"() <{level = 10 : i32, message = "nk,mk->nm"}> : () -> ()
    %cst_92 = arith.constant dense<0.000000e+00> : vector<128x128xf32>
    %163 = tpu.matmul %152, %157, %cst_92 {dimension_numbers = #tpu.dot_dimension_numbers<[1], [1], [0], [0], [0, 0, 1, 0], [], []>} : vector<128x16xbf16>, vector<128x16xbf16>, vector<128x128xf32> -> vector<128x128xf32>
    "tpu.trace_stop"() : () -> ()
    %cst_93 = arith.constant dense<0xFF800000> : vector<128xf32>
    %164 = vector.multi_reduction <maximumf>, %163, %cst_93 [1] : vector<128x128xf32> to vector<128xf32>
    %165 = vector.shape_cast %164 : vector<128xf32> to vector<128x1xf32>
    %166 = vector.broadcast %165 : vector<128x1xf32> to vector<128x128xf32>
    %167 = arith.subf %163, %166 : vector<128x128xf32>
    %168 = math.exp %167 : vector<128x128xf32>
    %cst_94 = arith.constant dense<0.000000e+00> : vector<128xf32>
    %169 = vector.multi_reduction <add>, %168, %cst_94 [1] : vector<128x128xf32> to vector<128xf32>
    %170 = vector.shape_cast %169 : vector<128xf32> to vector<128x1xf32>
    %171 = tpu.reciprocal %170 {approx = true} : vector<128x1xf32> -> vector<128x1xf32>
    %172 = vector.broadcast %171 : vector<128x1xf32> to vector<128x128xf32>
    %173 = arith.mulf %168, %172 : vector<128x128xf32>
    %174 = arith.truncf %173 : vector<128x128xf32> to vector<128x128xbf16>
    %cst_95 = arith.constant dense<0.000000e+00> : vector<128x16xf32>
    %175 = tpu.matmul %174, %162, %cst_95 {dimension_numbers = #tpu.dot_dimension_numbers<[1], [0], [0], [1], [0, 0, 1, 1], [], []>} : vector<128x128xbf16>, vector<128x16xbf16>, vector<128x16xf32> -> vector<128x16xf32>
    %176 = arith.truncf %175 : vector<128x16xf32> to vector<128x16xbf16>
    %c0_96 = arith.constant 0 : index
    %c0_97 = arith.constant 0 : index
    %177 = vector.load %arg8[%c0_96, %c0_97] : memref<128x128xf32, #tpu.memory_space<vmem>>, vector<128x128xf32>
    %178 = arith.index_cast %c4_i32 : i32 to index
    %c0_98 = arith.constant 0 : index
    %c0_99 = arith.constant 0 : index
    %179 = vector.load %arg5[%178, %c0_98, %c0_99] : memref<8x16x128xbf16, #tpu.memory_space<vmem>>, vector<1x16x128xbf16>
    %180 = vector.shape_cast %179 : vector<1x16x128xbf16> to vector<16x128xbf16>
    %cst_100 = arith.constant dense<0.000000e+00> : vector<128x128xf32>
    %181 = tpu.matmul %176, %180, %cst_100 {dimension_numbers = #tpu.dot_dimension_numbers<[1], [0], [0], [1], [0, 0, 1, 1], [], []>} : vector<128x16xbf16>, vector<16x128xbf16>, vector<128x128xf32> -> vector<128x128xf32>
    %182 = arith.addf %177, %181 : vector<128x128xf32>
    %c0_101 = arith.constant 0 : index
    %c0_102 = arith.constant 0 : index
    %183 = vector.load %arg8[%c0_101, %c0_102] : memref<128x128xf32, #tpu.memory_space<vmem>>, vector<128x128xf32>
    tpu.vector_store %arg8[%c0_101, %c0_102], %182 {strides = array<i32>} : memref<128x128xf32, #tpu.memory_space<vmem>>, vector<128x128xf32>,
    %c5_i32 = arith.constant 5 : i32
    %184 = arith.index_cast %c5_i32 : i32 to index
    %c0_103 = arith.constant 0 : index
    %c0_104 = arith.constant 0 : index
    %185 = vector.load %arg2[%184, %c0_103, %c0_104] : memref<8x128x16xbf16, #tpu.memory_space<vmem>>, vector<1x128x16xbf16>
    %186 = vector.shape_cast %185 : vector<1x128x16xbf16> to vector<128x16xbf16>
    %cst_105 = arith.constant dense<0.000000e+00> : vector<128x16xf32>
    %187 = tpu.matmul %1, %186, %cst_105 {dimension_numbers = #tpu.dot_dimension_numbers<[1], [0], [0], [1], [0, 0, 1, 1], [], []>} : vector<128x128xbf16>, vector<128x16xbf16>, vector<128x16xf32> -> vector<128x16xf32>
    %188 = arith.truncf %187 : vector<128x16xf32> to vector<128x16xbf16>
    %189 = arith.index_cast %c5_i32 : i32 to index
    %c0_106 = arith.constant 0 : index
    %c0_107 = arith.constant 0 : index
    %190 = vector.load %arg3[%189, %c0_106, %c0_107] : memref<8x128x16xbf16, #tpu.memory_space<vmem>>, vector<1x128x16xbf16>
    %191 = vector.shape_cast %190 : vector<1x128x16xbf16> to vector<128x16xbf16>
    %cst_108 = arith.constant dense<0.000000e+00> : vector<128x16xf32>
    %192 = tpu.matmul %1, %191, %cst_108 {dimension_numbers = #tpu.dot_dimension_numbers<[1], [0], [0], [1], [0, 0, 1, 1], [], []>} : vector<128x128xbf16>, vector<128x16xbf16>, vector<128x16xf32> -> vector<128x16xf32>
    %193 = arith.truncf %192 : vector<128x16xf32> to vector<128x16xbf16>
    %194 = arith.index_cast %c5_i32 : i32 to index
    %c0_109 = arith.constant 0 : index
    %c0_110 = arith.constant 0 : index
    %195 = vector.load %arg4[%194, %c0_109, %c0_110] : memref<8x128x16xbf16, #tpu.memory_space<vmem>>, vector<1x128x16xbf16>
    %196 = vector.shape_cast %195 : vector<1x128x16xbf16> to vector<128x16xbf16>
    %cst_111 = arith.constant dense<0.000000e+00> : vector<128x16xf32>
    %197 = tpu.matmul %1, %196, %cst_111 {dimension_numbers = #tpu.dot_dimension_numbers<[1], [0], [0], [1], [0, 0, 1, 1], [], []>} : vector<128x128xbf16>, vector<128x16xbf16>, vector<128x16xf32> -> vector<128x16xf32>
    %198 = arith.truncf %197 : vector<128x16xf32> to vector<128x16xbf16>
    "tpu.trace_start"() <{level = 10 : i32, message = "nk,mk->nm"}> : () -> ()
    %cst_112 = arith.constant dense<0.000000e+00> : vector<128x128xf32>
    %199 = tpu.matmul %188, %193, %cst_112 {dimension_numbers = #tpu.dot_dimension_numbers<[1], [1], [0], [0], [0, 0, 1, 0], [], []>} : vector<128x16xbf16>, vector<128x16xbf16>, vector<128x128xf32> -> vector<128x128xf32>
    "tpu.trace_stop"() : () -> ()
    %cst_113 = arith.constant dense<0xFF800000> : vector<128xf32>
    %200 = vector.multi_reduction <maximumf>, %199, %cst_113 [1] : vector<128x128xf32> to vector<128xf32>
    %201 = vector.shape_cast %200 : vector<128xf32> to vector<128x1xf32>
    %202 = vector.broadcast %201 : vector<128x1xf32> to vector<128x128xf32>
    %203 = arith.subf %199, %202 : vector<128x128xf32>
    %204 = math.exp %203 : vector<128x128xf32>
    %cst_114 = arith.constant dense<0.000000e+00> : vector<128xf32>
    %205 = vector.multi_reduction <add>, %204, %cst_114 [1] : vector<128x128xf32> to vector<128xf32>
    %206 = vector.shape_cast %205 : vector<128xf32> to vector<128x1xf32>
    %207 = tpu.reciprocal %206 {approx = true} : vector<128x1xf32> -> vector<128x1xf32>
    %208 = vector.broadcast %207 : vector<128x1xf32> to vector<128x128xf32>
    %209 = arith.mulf %204, %208 : vector<128x128xf32>
    %210 = arith.truncf %209 : vector<128x128xf32> to vector<128x128xbf16>
    %cst_115 = arith.constant dense<0.000000e+00> : vector<128x16xf32>
    %211 = tpu.matmul %210, %198, %cst_115 {dimension_numbers = #tpu.dot_dimension_numbers<[1], [0], [0], [1], [0, 0, 1, 1], [], []>} : vector<128x128xbf16>, vector<128x16xbf16>, vector<128x16xf32> -> vector<128x16xf32>
    %212 = arith.truncf %211 : vector<128x16xf32> to vector<128x16xbf16>
    %c0_116 = arith.constant 0 : index
    %c0_117 = arith.constant 0 : index
    %213 = vector.load %arg8[%c0_116, %c0_117] : memref<128x128xf32, #tpu.memory_space<vmem>>, vector<128x128xf32>
    %214 = arith.index_cast %c5_i32 : i32 to index
    %c0_118 = arith.constant 0 : index
    %c0_119 = arith.constant 0 : index
    %215 = vector.load %arg5[%214, %c0_118, %c0_119] : memref<8x16x128xbf16, #tpu.memory_space<vmem>>, vector<1x16x128xbf16>
    %216 = vector.shape_cast %215 : vector<1x16x128xbf16> to vector<16x128xbf16>
    %cst_120 = arith.constant dense<0.000000e+00> : vector<128x128xf32>
    %217 = tpu.matmul %212, %216, %cst_120 {dimension_numbers = #tpu.dot_dimension_numbers<[1], [0], [0], [1], [0, 0, 1, 1], [], []>} : vector<128x16xbf16>, vector<16x128xbf16>, vector<128x128xf32> -> vector<128x128xf32>
    %218 = arith.addf %213, %217 : vector<128x128xf32>
    %c0_121 = arith.constant 0 : index
    %c0_122 = arith.constant 0 : index
    %219 = vector.load %arg8[%c0_121, %c0_122] : memref<128x128xf32, #tpu.memory_space<vmem>>, vector<128x128xf32>
    tpu.vector_store %arg8[%c0_121, %c0_122], %218 {strides = array<i32>} : memref<128x128xf32, #tpu.memory_space<vmem>>, vector<128x128xf32>,
    %c6_i32 = arith.constant 6 : i32
    %220 = arith.index_cast %c6_i32 : i32 to index
    %c0_123 = arith.constant 0 : index
    %c0_124 = arith.constant 0 : index
    %221 = vector.load %arg2[%220, %c0_123, %c0_124] : memref<8x128x16xbf16, #tpu.memory_space<vmem>>, vector<1x128x16xbf16>
    %222 = vector.shape_cast %221 : vector<1x128x16xbf16> to vector<128x16xbf16>
    %cst_125 = arith.constant dense<0.000000e+00> : vector<128x16xf32>
    %223 = tpu.matmul %1, %222, %cst_125 {dimension_numbers = #tpu.dot_dimension_numbers<[1], [0], [0], [1], [0, 0, 1, 1], [], []>} : vector<128x128xbf16>, vector<128x16xbf16>, vector<128x16xf32> -> vector<128x16xf32>
    %224 = arith.truncf %223 : vector<128x16xf32> to vector<128x16xbf16>
    %225 = arith.index_cast %c6_i32 : i32 to index
    %c0_126 = arith.constant 0 : index
    %c0_127 = arith.constant 0 : index
    %226 = vector.load %arg3[%225, %c0_126, %c0_127] : memref<8x128x16xbf16, #tpu.memory_space<vmem>>, vector<1x128x16xbf16>
    %227 = vector.shape_cast %226 : vector<1x128x16xbf16> to vector<128x16xbf16>
    %cst_128 = arith.constant dense<0.000000e+00> : vector<128x16xf32>
    %228 = tpu.matmul %1, %227, %cst_128 {dimension_numbers = #tpu.dot_dimension_numbers<[1], [0], [0], [1], [0, 0, 1, 1], [], []>} : vector<128x128xbf16>, vector<128x16xbf16>, vector<128x16xf32> -> vector<128x16xf32>
    %229 = arith.truncf %228 : vector<128x16xf32> to vector<128x16xbf16>
    %230 = arith.index_cast %c6_i32 : i32 to index
    %c0_129 = arith.constant 0 : index
    %c0_130 = arith.constant 0 : index
    %231 = vector.load %arg4[%230, %c0_129, %c0_130] : memref<8x128x16xbf16, #tpu.memory_space<vmem>>, vector<1x128x16xbf16>
    %232 = vector.shape_cast %231 : vector<1x128x16xbf16> to vector<128x16xbf16>
    %cst_131 = arith.constant dense<0.000000e+00> : vector<128x16xf32>
    %233 = tpu.matmul %1, %232, %cst_131 {dimension_numbers = #tpu.dot_dimension_numbers<[1], [0], [0], [1], [0, 0, 1, 1], [], []>} : vector<128x128xbf16>, vector<128x16xbf16>, vector<128x16xf32> -> vector<128x16xf32>
    %234 = arith.truncf %233 : vector<128x16xf32> to vector<128x16xbf16>
    "tpu.trace_start"() <{level = 10 : i32, message = "nk,mk->nm"}> : () -> ()
    %cst_132 = arith.constant dense<0.000000e+00> : vector<128x128xf32>
    %235 = tpu.matmul %224, %229, %cst_132 {dimension_numbers = #tpu.dot_dimension_numbers<[1], [1], [0], [0], [0, 0, 1, 0], [], []>} : vector<128x16xbf16>, vector<128x16xbf16>, vector<128x128xf32> -> vector<128x128xf32>
    "tpu.trace_stop"() : () -> ()
    %cst_133 = arith.constant dense<0xFF800000> : vector<128xf32>
    %236 = vector.multi_reduction <maximumf>, %235, %cst_133 [1] : vector<128x128xf32> to vector<128xf32>
    %237 = vector.shape_cast %236 : vector<128xf32> to vector<128x1xf32>
    %238 = vector.broadcast %237 : vector<128x1xf32> to vector<128x128xf32>
    %239 = arith.subf %235, %238 : vector<128x128xf32>
    %240 = math.exp %239 : vector<128x128xf32>
    %cst_134 = arith.constant dense<0.000000e+00> : vector<128xf32>
    %241 = vector.multi_reduction <add>, %240, %cst_134 [1] : vector<128x128xf32> to vector<128xf32>
    %242 = vector.shape_cast %241 : vector<128xf32> to vector<128x1xf32>
    %243 = tpu.reciprocal %242 {approx = true} : vector<128x1xf32> -> vector<128x1xf32>
    %244 = vector.broadcast %243 : vector<128x1xf32> to vector<128x128xf32>
    %245 = arith.mulf %240, %244 : vector<128x128xf32>
    %246 = arith.truncf %245 : vector<128x128xf32> to vector<128x128xbf16>
    %cst_135 = arith.constant dense<0.000000e+00> : vector<128x16xf32>
    %247 = tpu.matmul %246, %234, %cst_135 {dimension_numbers = #tpu.dot_dimension_numbers<[1], [0], [0], [1], [0, 0, 1, 1], [], []>} : vector<128x128xbf16>, vector<128x16xbf16>, vector<128x16xf32> -> vector<128x16xf32>
    %248 = arith.truncf %247 : vector<128x16xf32> to vector<128x16xbf16>
    %c0_136 = arith.constant 0 : index
    %c0_137 = arith.constant 0 : index
    %249 = vector.load %arg8[%c0_136, %c0_137] : memref<128x128xf32, #tpu.memory_space<vmem>>, vector<128x128xf32>
    %250 = arith.index_cast %c6_i32 : i32 to index
    %c0_138 = arith.constant 0 : index
    %c0_139 = arith.constant 0 : index
    %251 = vector.load %arg5[%250, %c0_138, %c0_139] : memref<8x16x128xbf16, #tpu.memory_space<vmem>>, vector<1x16x128xbf16>
    %252 = vector.shape_cast %251 : vector<1x16x128xbf16> to vector<16x128xbf16>
    %cst_140 = arith.constant dense<0.000000e+00> : vector<128x128xf32>
    %253 = tpu.matmul %248, %252, %cst_140 {dimension_numbers = #tpu.dot_dimension_numbers<[1], [0], [0], [1], [0, 0, 1, 1], [], []>} : vector<128x16xbf16>, vector<16x128xbf16>, vector<128x128xf32> -> vector<128x128xf32>
    %254 = arith.addf %249, %253 : vector<128x128xf32>
    %c0_141 = arith.constant 0 : index
    %c0_142 = arith.constant 0 : index
    %255 = vector.load %arg8[%c0_141, %c0_142] : memref<128x128xf32, #tpu.memory_space<vmem>>, vector<128x128xf32>
    tpu.vector_store %arg8[%c0_141, %c0_142], %254 {strides = array<i32>} : memref<128x128xf32, #tpu.memory_space<vmem>>, vector<128x128xf32>,
    %c7_i32 = arith.constant 7 : i32
    %256 = arith.index_cast %c7_i32 : i32 to index
    %c0_143 = arith.constant 0 : index
    %c0_144 = arith.constant 0 : index
    %257 = vector.load %arg2[%256, %c0_143, %c0_144] : memref<8x128x16xbf16, #tpu.memory_space<vmem>>, vector<1x128x16xbf16>
    %258 = vector.shape_cast %257 : vector<1x128x16xbf16> to vector<128x16xbf16>
    %cst_145 = arith.constant dense<0.000000e+00> : vector<128x16xf32>
    %259 = tpu.matmul %1, %258, %cst_145 {dimension_numbers = #tpu.dot_dimension_numbers<[1], [0], [0], [1], [0, 0, 1, 1], [], []>} : vector<128x128xbf16>, vector<128x16xbf16>, vector<128x16xf32> -> vector<128x16xf32>
    %260 = arith.truncf %259 : vector<128x16xf32> to vector<128x16xbf16>
    %261 = arith.index_cast %c7_i32 : i32 to index
    %c0_146 = arith.constant 0 : index
    %c0_147 = arith.constant 0 : index
    %262 = vector.load %arg3[%261, %c0_146, %c0_147] : memref<8x128x16xbf16, #tpu.memory_space<vmem>>, vector<1x128x16xbf16>
    %263 = vector.shape_cast %262 : vector<1x128x16xbf16> to vector<128x16xbf16>
    %cst_148 = arith.constant dense<0.000000e+00> : vector<128x16xf32>
    %264 = tpu.matmul %1, %263, %cst_148 {dimension_numbers = #tpu.dot_dimension_numbers<[1], [0], [0], [1], [0, 0, 1, 1], [], []>} : vector<128x128xbf16>, vector<128x16xbf16>, vector<128x16xf32> -> vector<128x16xf32>
    %265 = arith.truncf %264 : vector<128x16xf32> to vector<128x16xbf16>
    %266 = arith.index_cast %c7_i32 : i32 to index
    %c0_149 = arith.constant 0 : index
    %c0_150 = arith.constant 0 : index
    %267 = vector.load %arg4[%266, %c0_149, %c0_150] : memref<8x128x16xbf16, #tpu.memory_space<vmem>>, vector<1x128x16xbf16>
    %268 = vector.shape_cast %267 : vector<1x128x16xbf16> to vector<128x16xbf16>
    %cst_151 = arith.constant dense<0.000000e+00> : vector<128x16xf32>
    %269 = tpu.matmul %1, %268, %cst_151 {dimension_numbers = #tpu.dot_dimension_numbers<[1], [0], [0], [1], [0, 0, 1, 1], [], []>} : vector<128x128xbf16>, vector<128x16xbf16>, vector<128x16xf32> -> vector<128x16xf32>
    %270 = arith.truncf %269 : vector<128x16xf32> to vector<128x16xbf16>
    "tpu.trace_start"() <{level = 10 : i32, message = "nk,mk->nm"}> : () -> ()
    %cst_152 = arith.constant dense<0.000000e+00> : vector<128x128xf32>
    %271 = tpu.matmul %260, %265, %cst_152 {dimension_numbers = #tpu.dot_dimension_numbers<[1], [1], [0], [0], [0, 0, 1, 0], [], []>} : vector<128x16xbf16>, vector<128x16xbf16>, vector<128x128xf32> -> vector<128x128xf32>
    "tpu.trace_stop"() : () -> ()
    %cst_153 = arith.constant dense<0xFF800000> : vector<128xf32>
    %272 = vector.multi_reduction <maximumf>, %271, %cst_153 [1] : vector<128x128xf32> to vector<128xf32>
    %273 = vector.shape_cast %272 : vector<128xf32> to vector<128x1xf32>
    %274 = vector.broadcast %273 : vector<128x1xf32> to vector<128x128xf32>
    %275 = arith.subf %271, %274 : vector<128x128xf32>
    %276 = math.exp %275 : vector<128x128xf32>
    %cst_154 = arith.constant dense<0.000000e+00> : vector<128xf32>
    %277 = vector.multi_reduction <add>, %276, %cst_154 [1] : vector<128x128xf32> to vector<128xf32>
    %278 = vector.shape_cast %277 : vector<128xf32> to vector<128x1xf32>
    %279 = tpu.reciprocal %278 {approx = true} : vector<128x1xf32> -> vector<128x1xf32>
    %280 = vector.broadcast %279 : vector<128x1xf32> to vector<128x128xf32>
    %281 = arith.mulf %276, %280 : vector<128x128xf32>
    %282 = arith.truncf %281 : vector<128x128xf32> to vector<128x128xbf16>
    %cst_155 = arith.constant dense<0.000000e+00> : vector<128x16xf32>
    %283 = tpu.matmul %282, %270, %cst_155 {dimension_numbers = #tpu.dot_dimension_numbers<[1], [0], [0], [1], [0, 0, 1, 1], [], []>} : vector<128x128xbf16>, vector<128x16xbf16>, vector<128x16xf32> -> vector<128x16xf32>
    %284 = arith.truncf %283 : vector<128x16xf32> to vector<128x16xbf16>
    %c0_156 = arith.constant 0 : index
    %c0_157 = arith.constant 0 : index
    %285 = vector.load %arg8[%c0_156, %c0_157] : memref<128x128xf32, #tpu.memory_space<vmem>>, vector<128x128xf32>
    %286 = arith.index_cast %c7_i32 : i32 to index
    %c0_158 = arith.constant 0 : index
    %c0_159 = arith.constant 0 : index
    %287 = vector.load %arg5[%286, %c0_158, %c0_159] : memref<8x16x128xbf16, #tpu.memory_space<vmem>>, vector<1x16x128xbf16>
    %288 = vector.shape_cast %287 : vector<1x16x128xbf16> to vector<16x128xbf16>
    %cst_160 = arith.constant dense<0.000000e+00> : vector<128x128xf32>
    %289 = tpu.matmul %284, %288, %cst_160 {dimension_numbers = #tpu.dot_dimension_numbers<[1], [0], [0], [1], [0, 0, 1, 1], [], []>} : vector<128x16xbf16>, vector<16x128xbf16>, vector<128x128xf32> -> vector<128x128xf32>
    %290 = arith.addf %285, %289 : vector<128x128xf32>
    %c0_161 = arith.constant 0 : index
    %c0_162 = arith.constant 0 : index
    %291 = vector.load %arg8[%c0_161, %c0_162] : memref<128x128xf32, #tpu.memory_space<vmem>>, vector<128x128xf32>
    tpu.vector_store %arg8[%c0_161, %c0_162], %290 {strides = array<i32>} : memref<128x128xf32, #tpu.memory_space<vmem>>, vector<128x128xf32>,
    %c8_i32 = arith.constant 8 : i32
    %c0_163 = arith.constant 0 : index
    %c0_164 = arith.constant 0 : index
    %292 = vector.load %arg8[%c0_163, %c0_164] : memref<128x128xf32, #tpu.memory_space<vmem>>, vector<128x128xf32>
    %293 = arith.addf %0, %292 : vector<128x128xf32>
    %294 = arith.truncf %293 : vector<128x128xf32> to vector<128x128xbf16>
    %c0_165 = arith.constant 0 : index
    %c0_166 = arith.constant 0 : index
    %295 = vector.load %arg6[%c0_165, %c0_166] : memref<128x128xbf16, #tpu.memory_space<vmem>>, vector<128x128xbf16>
    tpu.vector_store %arg6[%c0_165, %c0_166], %294 {strides = array<i32>} : memref<128x128xbf16, #tpu.memory_space<vmem>>, vector<128x128xbf16>,
    %cst_167 = arith.constant dense<0.000000e+00> : vector<128xf32>
    %296 = vector.multi_reduction <add>, %293, %cst_167 [0] : vector<128x128xf32> to vector<128xf32>
    %297 = vector.shape_cast %296 : vector<128xf32> to vector<1x128xf32>
    %298 = arith.mulf %293, %293 : vector<128x128xf32>
    %cst_168 = arith.constant dense<0.000000e+00> : vector<128xf32>
    %299 = vector.multi_reduction <add>, %298, %cst_168 [0] : vector<128x128xf32> to vector<128xf32>
    %300 = vector.shape_cast %299 : vector<128xf32> to vector<1x128xf32>
    %301 = tpu.concatenate %297, %300 in 0 : vector<1x128xf32>, vector<1x128xf32> -> vector<2x128xf32>
    %302 = vector.shape_cast %301 : vector<2x128xf32> to vector<1x2x128xf32>
    %c0_169 = arith.constant 0 : index
    %c0_170 = arith.constant 0 : index
    %c0_171 = arith.constant 0 : index
    %303 = vector.load %arg7[%c0_169, %c0_170, %c0_171] : memref<1x2x128xf32, #tpu.memory_space<vmem>>, vector<1x2x128xf32>
    tpu.vector_store %arg7[%c0_169, %c0_170, %c0_171], %302 {strides = array<i32>} : memref<1x2x128xf32, #tpu.memory_space<vmem>>, vector<1x2x128xf32>,
    return
  }
  func.func @transform_0(%arg0: i32) -> (i32, i32) {
    %c0_i32 = arith.constant 0 : i32
    %c0_i32_0 = arith.constant 0 : i32
    return %arg0, %c0_i32 : i32, i32
  }
  func.func @transform_1(%arg0: i32) -> (i32, i32, i32) {
    %c0_i32 = arith.constant 0 : i32
    %c0_i32_0 = arith.constant 0 : i32
    %c0_i32_1 = arith.constant 0 : i32
    %c0_i32_2 = arith.constant 0 : i32
    return %c0_i32, %c0_i32_0, %c0_i32_1 : i32, i32, i32
  }
  func.func @transform_2(%arg0: i32) -> (i32, i32, i32) {
    %c0_i32 = arith.constant 0 : i32
    %c0_i32_0 = arith.constant 0 : i32
    %c0_i32_1 = arith.constant 0 : i32
    %c0_i32_2 = arith.constant 0 : i32
    return %c0_i32, %c0_i32_0, %c0_i32_1 : i32, i32, i32
  }
  func.func @transform_3(%arg0: i32) -> (i32, i32, i32) {
    %c0_i32 = arith.constant 0 : i32
    %c0_i32_0 = arith.constant 0 : i32
    %c0_i32_1 = arith.constant 0 : i32
    %c0_i32_2 = arith.constant 0 : i32
    return %c0_i32, %c0_i32_0, %c0_i32_1 : i32, i32, i32
  }
  func.func @transform_4(%arg0: i32) -> (i32, i32, i32) {
    %c0_i32 = arith.constant 0 : i32
    %c0_i32_0 = arith.constant 0 : i32
    %c0_i32_1 = arith.constant 0 : i32
    %c0_i32_2 = arith.constant 0 : i32
    return %c0_i32, %c0_i32_0, %c0_i32_1 : i32, i32, i32
  }
  func.func @transform_5(%arg0: i32) -> (i32, i32) {
    %c0_i32 = arith.constant 0 : i32
    %c0_i32_0 = arith.constant 0 : i32
    return %arg0, %c0_i32 : i32, i32
  }
  func.func @transform_6(%arg0: i32) -> (i32, i32, i32) {
    %c0_i32 = arith.constant 0 : i32
    %c0_i32_0 = arith.constant 0 : i32
    %c0_i32_1 = arith.constant 0 : i32
    return %arg0, %c0_i32, %c0_i32_0 : i32, i32, i32
  }
}

module attributes {stable_mosaic.version = 11 : i64} {
  func.func @_ff_kernel(%arg0: i32, %arg1: memref<256x128xbf16, #tpu.memory_space<vmem>>, %arg2: memref<1x128xf32, #tpu.memory_space<vmem>>, %arg3: memref<1x128xf32, #tpu.memory_space<vmem>>, %arg4: memref<128x512xbf16, #tpu.memory_space<vmem>>, %arg5: memref<1x512xf32, #tpu.memory_space<vmem>>, %arg6: memref<512x128xbf16, #tpu.memory_space<vmem>>, %arg7: memref<1x128xf32, #tpu.memory_space<vmem>>, %arg8: memref<256x128xbf16, #tpu.memory_space<vmem>>, %arg9: memref<1x2x128xf32, #tpu.memory_space<vmem>>) attributes {dimension_semantics = [#tpu.dimension_semantics<parallel>], iteration_bounds = array<i64: 1>, scalar_prefetch = 0 : i64, scratch_operands = 0 : i64, tpu.core_type = #tpu.core_type<tc>, window_params = [{transform_indices = @transform_0, window_bounds = array<i64: 256, 128>}, {pipeline_mode = #tpu.pipeline_mode<synchronous>, transform_indices = @transform_1, window_bounds = array<i64: 1, 128>}, {pipeline_mode = #tpu.pipeline_mode<synchronous>, transform_indices = @transform_2, window_bounds = array<i64: 1, 128>}, {pipeline_mode = #tpu.pipeline_mode<synchronous>, transform_indices = @transform_3, window_bounds = array<i64: 128, 512>}, {pipeline_mode = #tpu.pipeline_mode<synchronous>, transform_indices = @transform_4, window_bounds = array<i64: 1, 512>}, {pipeline_mode = #tpu.pipeline_mode<synchronous>, transform_indices = @transform_5, window_bounds = array<i64: 512, 128>}, {pipeline_mode = #tpu.pipeline_mode<synchronous>, transform_indices = @transform_6, window_bounds = array<i64: 1, 128>}, {transform_indices = @transform_7, window_bounds = array<i64: 256, 128>}, {transform_indices = @transform_8, window_bounds = array<i64: 1, 2, 128>}]} {
    %c0 = arith.constant 0 : index
    %c0_0 = arith.constant 0 : index
    %0 = vector.load %arg1[%c0, %c0_0] : memref<256x128xbf16, #tpu.memory_space<vmem>>, vector<256x128xbf16>
    %1 = arith.extf %0 : vector<256x128xbf16> to vector<256x128xf32>
    %c0_1 = arith.constant 0 : index
    %c0_2 = arith.constant 0 : index
    %2 = vector.load %arg2[%c0_1, %c0_2] : memref<1x128xf32, #tpu.memory_space<vmem>>, vector<1x128xf32>
    %3 = vector.broadcast %2 : vector<1x128xf32> to vector<256x128xf32>
    %4 = arith.mulf %1, %3 : vector<256x128xf32>
    %c0_3 = arith.constant 0 : index
    %c0_4 = arith.constant 0 : index
    %5 = vector.load %arg3[%c0_3, %c0_4] : memref<1x128xf32, #tpu.memory_space<vmem>>, vector<1x128xf32>
    %6 = vector.broadcast %5 : vector<1x128xf32> to vector<256x128xf32>
    %7 = arith.addf %4, %6 : vector<256x128xf32>
    %8 = arith.truncf %7 : vector<256x128xf32> to vector<256x128xbf16>
    %c0_5 = arith.constant 0 : index
    %c0_6 = arith.constant 0 : index
    %9 = vector.load %arg4[%c0_5, %c0_6] : memref<128x512xbf16, #tpu.memory_space<vmem>>, vector<128x512xbf16>
    %cst = arith.constant dense<0.000000e+00> : vector<256x512xf32>
    %10 = tpu.matmul %8, %9, %cst {dimension_numbers = #tpu.dot_dimension_numbers<[1], [0], [0], [1], [0, 0, 1, 1], [], []>} : vector<256x128xbf16>, vector<128x512xbf16>, vector<256x512xf32> -> vector<256x512xf32>
    %c0_7 = arith.constant 0 : index
    %c0_8 = arith.constant 0 : index
    %11 = vector.load %arg5[%c0_7, %c0_8] : memref<1x512xf32, #tpu.memory_space<vmem>>, vector<1x512xf32>
    %12 = vector.broadcast %11 : vector<1x512xf32> to vector<256x512xf32>
    %13 = arith.addf %10, %12 : vector<256x512xf32>
    %cst_9 = arith.constant 0.000000e+00 : f32
    %14 = vector.broadcast %cst_9 : f32 to vector<256x512xf32>
    %15 = arith.maximumf %13, %14 : vector<256x512xf32>
    %16 = arith.truncf %15 : vector<256x512xf32> to vector<256x512xbf16>
    %c0_10 = arith.constant 0 : index
    %c0_11 = arith.constant 0 : index
    %17 = vector.load %arg6[%c0_10, %c0_11] : memref<512x128xbf16, #tpu.memory_space<vmem>>, vector<512x128xbf16>
    %cst_12 = arith.constant dense<0.000000e+00> : vector<256x128xf32>
    %18 = tpu.matmul %16, %17, %cst_12 {dimension_numbers = #tpu.dot_dimension_numbers<[1], [0], [0], [1], [0, 0, 1, 1], [], []>} : vector<256x512xbf16>, vector<512x128xbf16>, vector<256x128xf32> -> vector<256x128xf32>
    %c0_13 = arith.constant 0 : index
    %c0_14 = arith.constant 0 : index
    %19 = vector.load %arg7[%c0_13, %c0_14] : memref<1x128xf32, #tpu.memory_space<vmem>>, vector<1x128xf32>
    %20 = vector.broadcast %19 : vector<1x128xf32> to vector<256x128xf32>
    %21 = arith.addf %18, %20 : vector<256x128xf32>
    %22 = arith.addf %7, %21 : vector<256x128xf32>
    %cst_15 = arith.constant 2.000000e+00 : f32
    %23 = vector.broadcast %cst_15 : f32 to vector<256x128xf32>
    %24 = arith.mulf %23, %22 : vector<256x128xf32>
    %25 = arith.truncf %24 : vector<256x128xf32> to vector<256x128xbf16>
    %c0_16 = arith.constant 0 : index
    %c0_17 = arith.constant 0 : index
    %26 = vector.load %arg8[%c0_16, %c0_17] : memref<256x128xbf16, #tpu.memory_space<vmem>>, vector<256x128xbf16>
    tpu.vector_store %arg8[%c0_16, %c0_17], %25 {strides = array<i32>} : memref<256x128xbf16, #tpu.memory_space<vmem>>, vector<256x128xbf16>,
    %cst_18 = arith.constant dense<0.000000e+00> : vector<128xf32>
    %27 = vector.multi_reduction <add>, %24, %cst_18 [0] : vector<256x128xf32> to vector<128xf32>
    %28 = vector.shape_cast %27 : vector<128xf32> to vector<1x128xf32>
    %29 = arith.mulf %24, %24 : vector<256x128xf32>
    %cst_19 = arith.constant dense<0.000000e+00> : vector<128xf32>
    %30 = vector.multi_reduction <add>, %29, %cst_19 [0] : vector<256x128xf32> to vector<128xf32>
    %31 = vector.shape_cast %30 : vector<128xf32> to vector<1x128xf32>
    %32 = tpu.concatenate %28, %31 in 0 : vector<1x128xf32>, vector<1x128xf32> -> vector<2x128xf32>
    %33 = vector.shape_cast %32 : vector<2x128xf32> to vector<1x2x128xf32>
    %c0_20 = arith.constant 0 : index
    %c0_21 = arith.constant 0 : index
    %c0_22 = arith.constant 0 : index
    %34 = vector.load %arg9[%c0_20, %c0_21, %c0_22] : memref<1x2x128xf32, #tpu.memory_space<vmem>>, vector<1x2x128xf32>
    tpu.vector_store %arg9[%c0_20, %c0_21, %c0_22], %33 {strides = array<i32>} : memref<1x2x128xf32, #tpu.memory_space<vmem>>, vector<1x2x128xf32>,
    return
  }
  func.func @transform_0(%arg0: i32) -> (i32, i32) {
    %c0_i32 = arith.constant 0 : i32
    %c0_i32_0 = arith.constant 0 : i32
    return %arg0, %c0_i32 : i32, i32
  }
  func.func @transform_1(%arg0: i32) -> (i32, i32) {
    %c0_i32 = arith.constant 0 : i32
    %c0_i32_0 = arith.constant 0 : i32
    %c0_i32_1 = arith.constant 0 : i32
    return %c0_i32, %c0_i32_0 : i32, i32
  }
  func.func @transform_2(%arg0: i32) -> (i32, i32) {
    %c0_i32 = arith.constant 0 : i32
    %c0_i32_0 = arith.constant 0 : i32
    %c0_i32_1 = arith.constant 0 : i32
    return %c0_i32, %c0_i32_0 : i32, i32
  }
  func.func @transform_3(%arg0: i32) -> (i32, i32) {
    %c0_i32 = arith.constant 0 : i32
    %c0_i32_0 = arith.constant 0 : i32
    %c0_i32_1 = arith.constant 0 : i32
    return %c0_i32, %c0_i32_0 : i32, i32
  }
  func.func @transform_4(%arg0: i32) -> (i32, i32) {
    %c0_i32 = arith.constant 0 : i32
    %c0_i32_0 = arith.constant 0 : i32
    %c0_i32_1 = arith.constant 0 : i32
    return %c0_i32, %c0_i32_0 : i32, i32
  }
  func.func @transform_5(%arg0: i32) -> (i32, i32) {
    %c0_i32 = arith.constant 0 : i32
    %c0_i32_0 = arith.constant 0 : i32
    %c0_i32_1 = arith.constant 0 : i32
    return %c0_i32, %c0_i32_0 : i32, i32
  }
  func.func @transform_6(%arg0: i32) -> (i32, i32) {
    %c0_i32 = arith.constant 0 : i32
    %c0_i32_0 = arith.constant 0 : i32
    %c0_i32_1 = arith.constant 0 : i32
    return %c0_i32, %c0_i32_0 : i32, i32
  }
  func.func @transform_7(%arg0: i32) -> (i32, i32) {
    %c0_i32 = arith.constant 0 : i32
    %c0_i32_0 = arith.constant 0 : i32
    return %arg0, %c0_i32 : i32, i32
  }
  func.func @transform_8(%arg0: i32) -> (i32, i32, i32) {
    %c0_i32 = arith.constant 0 : i32
    %c0_i32_0 = arith.constant 0 : i32
    %c0_i32_1 = arith.constant 0 : i32
    return %arg0, %c0_i32, %c0_i32_0 : i32, i32, i32
  }
}

module attributes {stable_mosaic.version = 11 : i64} {
  func.func @_bn_kernel(%arg0: i32, %arg1: memref<256x128xbf16, #tpu.memory_space<vmem>>, %arg2: memref<1x128xf32, #tpu.memory_space<vmem>>, %arg3: memref<1x128xf32, #tpu.memory_space<vmem>>, %arg4: memref<256x128xf32, #tpu.memory_space<vmem>>) attributes {dimension_semantics = [#tpu.dimension_semantics<parallel>], iteration_bounds = array<i64: 1>, scalar_prefetch = 0 : i64, scratch_operands = 0 : i64, tpu.core_type = #tpu.core_type<tc>, window_params = [{transform_indices = @transform_0, window_bounds = array<i64: 256, 128>}, {pipeline_mode = #tpu.pipeline_mode<synchronous>, transform_indices = @transform_1, window_bounds = array<i64: 1, 128>}, {pipeline_mode = #tpu.pipeline_mode<synchronous>, transform_indices = @transform_2, window_bounds = array<i64: 1, 128>}, {transform_indices = @transform_3, window_bounds = array<i64: 256, 128>}]} {
    %c0 = arith.constant 0 : index
    %c0_0 = arith.constant 0 : index
    %0 = vector.load %arg1[%c0, %c0_0] : memref<256x128xbf16, #tpu.memory_space<vmem>>, vector<256x128xbf16>
    %1 = arith.extf %0 : vector<256x128xbf16> to vector<256x128xf32>
    %c0_1 = arith.constant 0 : index
    %c0_2 = arith.constant 0 : index
    %2 = vector.load %arg2[%c0_1, %c0_2] : memref<1x128xf32, #tpu.memory_space<vmem>>, vector<1x128xf32>
    %3 = vector.broadcast %2 : vector<1x128xf32> to vector<256x128xf32>
    %4 = arith.mulf %1, %3 : vector<256x128xf32>
    %c0_3 = arith.constant 0 : index
    %c0_4 = arith.constant 0 : index
    %5 = vector.load %arg3[%c0_3, %c0_4] : memref<1x128xf32, #tpu.memory_space<vmem>>, vector<1x128xf32>
    %6 = vector.broadcast %5 : vector<1x128xf32> to vector<256x128xf32>
    %7 = arith.addf %4, %6 : vector<256x128xf32>
    %c0_5 = arith.constant 0 : index
    %c0_6 = arith.constant 0 : index
    %8 = vector.load %arg4[%c0_5, %c0_6] : memref<256x128xf32, #tpu.memory_space<vmem>>, vector<256x128xf32>
    tpu.vector_store %arg4[%c0_5, %c0_6], %7 {strides = array<i32>} : memref<256x128xf32, #tpu.memory_space<vmem>>, vector<256x128xf32>,
    return
  }
  func.func @transform_0(%arg0: i32) -> (i32, i32) {
    %c0_i32 = arith.constant 0 : i32
    %c0_i32_0 = arith.constant 0 : i32
    return %arg0, %c0_i32 : i32, i32
  }
  func.func @transform_1(%arg0: i32) -> (i32, i32) {
    %c0_i32 = arith.constant 0 : i32
    %c0_i32_0 = arith.constant 0 : i32
    %c0_i32_1 = arith.constant 0 : i32
    return %c0_i32, %c0_i32_0 : i32, i32
  }
  func.func @transform_2(%arg0: i32) -> (i32, i32) {
    %c0_i32 = arith.constant 0 : i32
    %c0_i32_0 = arith.constant 0 : i32
    %c0_i32_1 = arith.constant 0 : i32
    return %c0_i32, %c0_i32_0 : i32, i32
  }
  func.func @transform_3(%arg0: i32) -> (i32, i32) {
    %c0_i32 = arith.constant 0 : i32
    %c0_i32_0 = arith.constant 0 : i32
    return %arg0, %c0_i32 : i32, i32
  }
}

</mosaic_0001>

<llo_original>
// kernel: mha_layer1_forward.5
$region0: #{mha_layer1_forward.5}
  #allocation0 [shape = 'u32[]', space=smem, size = 0x4, offset = 0x4, fixed_abs, tag = 'smem constant byte address 0x4 - core index']
  #allocation1 [shape = 'u32[144,128]{1,0:T(1,128)}', space=vmem, size = 0x12000, scoped, tag = 'internal scratch']
  %s0 = inlined_call_operand.vmem [shape: bf16[256,128], index: 0, kind: input, shape index: {}]
  %s1 = inlined_call_operand.vmem [shape: f32[1,128], index: 1, kind: input, shape index: {}]
  %s2 = inlined_call_operand.vmem [shape: f32[1,128], index: 2, kind: input, shape index: {}]
  %s3 = inlined_call_operand.hbm [shape: f32[256,128], index: 3, kind: output, shape index: {}]
  %s4 = sld [smem:[#allocation0]]
  $region22: #{mha_layer1_forward.5} parent=0
    _
  %s6 = ssub.s32 1, %s4
  %s7 = scalar_select 0, %s6, %s4
  $region1: #{mha_layer1_forward.5} parent=0
    #allocation2 [shape = 'u8[131072]{0}', space=vmem, size = 0x20000, scoped, tag = 'output window, operand 0, single buffered']
    #allocation3 [shape = 's32[1]{0}', space=sflag, size = 0x4, scoped, tag = 'scoped memory for mha_layer1_forward.5']
    %8 = vsyncpa [#allocation3], 0
    // Predicated region
    $region2: #{mha_layer1_forward.5} parent=1 // pred_check
      _
    $region3: #{mha_layer1_forward.5} parent=1 // pred_check_branch
      %10 = sbr.rel (0) target = $region5
    $region4: #{mha_layer1_forward.5} parent=1 // pred_region
      _
    $region5: #{mha_layer1_forward.5} parent=1 // pred_fallthru
      _
    // Predicated region
    $region6: #{mha_layer1_forward.5} parent=1 // pred_check
      _
    $region7: #{mha_layer1_forward.5} parent=1 // pred_check_branch
      %12 = sbr.rel (0) target = $region9
    $region8: #{mha_layer1_forward.5} parent=1 // pred_region
      _
    $region9: #{mha_layer1_forward.5} parent=1 // pred_fallthru
      _
    // Predicated region
    $region10: #{mha_layer1_forward.5} parent=1 // pred_check
      _
    $region11: #{mha_layer1_forward.5} parent=1 // pred_check_branch
      %14 = sbr.rel (0) target = $region13
    $region12: #{mha_layer1_forward.5} parent=1 // pred_region
      _
    $region13: #{mha_layer1_forward.5} parent=1 // pred_fallthru
      _
    %v15 = vld [vmem:[%s0] sm:$0xf]
    %v16 = vld [vmem:[%s0 + $0x4] sm:$0xf]
    %v17 = vld [vmem:[%s0 + $0x8] sm:$0xf]
    %v18 = vld [vmem:[%s0 + $0xc] sm:$0xf]
    %v19 = vld [vmem:[%s0 + $0x10] sm:$0xf]
    %v20 = vld [vmem:[%s0 + $0x14] sm:$0xf]
    %v21 = vld [vmem:[%s0 + $0x18] sm:$0xf]
    %v22 = vld [vmem:[%s0 + $0x1c] sm:$0xf]
    %v23 = vld [vmem:[%s0 + $0x20] sm:$0xf]
    %v24 = vld [vmem:[%s0 + $0x24] sm:$0xf]
    %v25 = vld [vmem:[%s0 + $0x28] sm:$0xf]
    %v26 = vld [vmem:[%s0 + $0x2c] sm:$0xf]
    %v27 = vld [vmem:[%s0 + $0x30] sm:$0xf]
    %v28 = vld [vmem:[%s0 + $0x34] sm:$0xf]
    %v29 = vld [vmem:[%s0 + $0x38] sm:$0xf]
    %v30 = vld [vmem:[%s0 + $0x3c] sm:$0xf]
    %v31 = vld [vmem:[%s0 + $0x40] sm:$0xf]
    %v32 = vld [vmem:[%s0 + $0x44] sm:$0xf]
    %v33 = vld [vmem:[%s0 + $0x48] sm:$0xf]
    %v34 = vld [vmem:[%s0 + $0x4c] sm:$0xf]
    %v35 = vld [vmem:[%s0 + $0x50] sm:$0xf]
    %v36 = vld [vmem:[%s0 + $0x54] sm:$0xf]
    %v37 = vld [vmem:[%s0 + $0x58] sm:$0xf]
    %v38 = vld [vmem:[%s0 + $0x5c] sm:$0xf]
    %v39 = vld [vmem:[%s0 + $0x60] sm:$0xf]
    %v40 = vld [vmem:[%s0 + $0x64] sm:$0xf]
    %v41 = vld [vmem:[%s0 + $0x68] sm:$0xf]
    %v42 = vld [vmem:[%s0 + $0x6c] sm:$0xf]
    %v43 = vld [vmem:[%s0 + $0x70] sm:$0xf]
    %v44 = vld [vmem:[%s0 + $0x74] sm:$0xf]
    %v45 = vld [vmem:[%s0 + $0x78] sm:$0xf]
    %v46 = vld [vmem:[%s0 + $0x7c] sm:$0xf]
    %v47 = vunpack.c.l.bf16 %v15
    %v48 = vunpack.c.l.bf16 %v16
    %v49 = vunpack.c.l.bf16 %v17
    %v50 = vunpack.c.l.bf16 %v18
    %v51 = vunpack.c.l.bf16 %v19
    %v52 = vunpack.c.l.bf16 %v20
    %v53 = vunpack.c.l.bf16 %v21
    %v54 = vunpack.c.l.bf16 %v22
    %v55 = vunpack.c.l.bf16 %v23
    %v56 = vunpack.c.l.bf16 %v24
    %v57 = vunpack.c.l.bf16 %v25
    %v58 = vunpack.c.l.bf16 %v26
    %v59 = vunpack.c.l.bf16 %v27
    %v60 = vunpack.c.l.bf16 %v28
    %v61 = vunpack.c.l.bf16 %v29
    %v62 = vunpack.c.l.bf16 %v30
    %v63 = vunpack.c.l.bf16 %v31
    %v64 = vunpack.c.l.bf16 %v32
    %v65 = vunpack.c.l.bf16 %v33
    %v66 = vunpack.c.l.bf16 %v34
    %v67 = vunpack.c.l.bf16 %v35
    %v68 = vunpack.c.l.bf16 %v36
    %v69 = vunpack.c.l.bf16 %v37
    %v70 = vunpack.c.l.bf16 %v38
    %v71 = vunpack.c.l.bf16 %v39
    %v72 = vunpack.c.l.bf16 %v40
    %v73 = vunpack.c.l.bf16 %v41
    %v74 = vunpack.c.l.bf16 %v42
    %v75 = vunpack.c.l.bf16 %v43
    %v76 = vunpack.c.l.bf16 %v44
    %v77 = vunpack.c.l.bf16 %v45
    %v78 = vunpack.c.l.bf16 %v46
    %v79 = vld [vmem:[%s1] sm:$0x1]
    %v81 = vlaneseq
    %v82 = vshrl.u32 %v81, 7
    %v83 = vsub.s32 0, %v82
    %v84 = vrot.slane %v79, %v83
    %v86 = vmul.f32 %v47, %v84
    %v87 = vmul.f32 %v48, %v84
    %v88 = vmul.f32 %v49, %v84
    %v89 = vmul.f32 %v50, %v84
    %v90 = vmul.f32 %v51, %v84
    %v91 = vmul.f32 %v52, %v84
    %v92 = vmul.f32 %v53, %v84
    %v93 = vmul.f32 %v54, %v84
    %v94 = vmul.f32 %v55, %v84
    %v95 = vmul.f32 %v56, %v84
    %v96 = vmul.f32 %v57, %v84
    %v97 = vmul.f32 %v58, %v84
    %v98 = vmul.f32 %v59, %v84
    %v99 = vmul.f32 %v60, %v84
    %v100 = vmul.f32 %v61, %v84
    %v101 = vmul.f32 %v62, %v84
    %v102 = vmul.f32 %v63, %v84
    %v103 = vmul.f32 %v64, %v84
    %v104 = vmul.f32 %v65, %v84
    %v105 = vmul.f32 %v66, %v84
    %v106 = vmul.f32 %v67, %v84
    %v107 = vmul.f32 %v68, %v84
    %v108 = vmul.f32 %v69, %v84
    %v109 = vmul.f32 %v70, %v84
    %v110 = vmul.f32 %v71, %v84
    %v111 = vmul.f32 %v72, %v84
    %v112 = vmul.f32 %v73, %v84
    %v113 = vmul.f32 %v74, %v84
    %v114 = vmul.f32 %v75, %v84
    %v115 = vmul.f32 %v76, %v84
    %v116 = vmul.f32 %v77, %v84
    %v117 = vmul.f32 %v78, %v84
    %v118 = vld [vmem:[%s2] sm:$0x1]
    %v120 = vlaneseq
    %v121 = vshrl.u32 %v120, 7
    %v122 = vsub.s32 0, %v121
    %v123 = vrot.slane %v118, %v122
    %v125 = vadd.f32 %v86, %v123
    %v126 = vadd.f32 %v87, %v123
    %v127 = vadd.f32 %v88, %v123
    %v128 = vadd.f32 %v89, %v123
    %v129 = vadd.f32 %v90, %v123
    %v130 = vadd.f32 %v91, %v123
    %v131 = vadd.f32 %v92, %v123
    %v132 = vadd.f32 %v93, %v123
    %v133 = vadd.f32 %v94, %v123
    %v134 = vadd.f32 %v95, %v123
    %v135 = vadd.f32 %v96, %v123
    %v136 = vadd.f32 %v97, %v123
    %v137 = vadd.f32 %v98, %v123
    %v138 = vadd.f32 %v99, %v123
    %v139 = vadd.f32 %v100, %v123
    %v140 = vadd.f32 %v101, %v123
    %v141 = vadd.f32 %v102, %v123
    %v142 = vadd.f32 %v103, %v123
    %v143 = vadd.f32 %v104, %v123
    %v144 = vadd.f32 %v105, %v123
    %v145 = vadd.f32 %v106, %v123
    %v146 = vadd.f32 %v107, %v123
    %v147 = vadd.f32 %v108, %v123
    %v148 = vadd.f32 %v109, %v123
    %v149 = vadd.f32 %v110, %v123
    %v150 = vadd.f32 %v111, %v123
    %v151 = vadd.f32 %v112, %v123
    %v152 = vadd.f32 %v113, %v123
    %v153 = vadd.f32 %v114, %v123
    %v154 = vadd.f32 %v115, %v123
    %v155 = vadd.f32 %v116, %v123
    %v156 = vadd.f32 %v117, %v123
    %157 = vst [vmem:[#allocation2] sm:$0xff] %v125
    %158 = vst [vmem:[#allocation2 + $0x8] sm:$0xff] %v126
    %159 = vst [vmem:[#allocation2 + $0x10] sm:$0xff] %v127
    %160 = vst [vmem:[#allocation2 + $0x18] sm:$0xff] %v128
    %161 = vst [vmem:[#allocation2 + $0x20] sm:$0xff] %v129
    %162 = vst [vmem:[#allocation2 + $0x28] sm:$0xff] %v130
    %163 = vst [vmem:[#allocation2 + $0x30] sm:$0xff] %v131
    %164 = vst [vmem:[#allocation2 + $0x38] sm:$0xff] %v132
    %165 = vst [vmem:[#allocation2 + $0x40] sm:$0xff] %v133
    %166 = vst [vmem:[#allocation2 + $0x48] sm:$0xff] %v134
    %167 = vst [vmem:[#allocation2 + $0x50] sm:$0xff] %v135
    %168 = vst [vmem:[#allocation2 + $0x58] sm:$0xff] %v136
    %169 = vst [vmem:[#allocation2 + $0x60] sm:$0xff] %v137
    %170 = vst [vmem:[#allocation2 + $0x68] sm:$0xff] %v138
    %171 = vst [vmem:[#allocation2 + $0x70] sm:$0xff] %v139
    %172 = vst [vmem:[#allocation2 + $0x78] sm:$0xff] %v140
    %173 = vst [vmem:[#allocation2 + $0x80] sm:$0xff] %v141
    %174 = vst [vmem:[#allocation2 + $0x88] sm:$0xff] %v142
    %175 = vst [vmem:[#allocation2 + $0x90] sm:$0xff] %v143
    %176 = vst [vmem:[#allocation2 + $0x98] sm:$0xff] %v144
    %177 = vst [vmem:[#allocation2 + $0xa0] sm:$0xff] %v145
    %178 = vst [vmem:[#allocation2 + $0xa8] sm:$0xff] %v146
    %179 = vst [vmem:[#allocation2 + $0xb0] sm:$0xff] %v147
    %180 = vst [vmem:[#allocation2 + $0xb8] sm:$0xff] %v148
    %181 = vst [vmem:[#allocation2 + $0xc0] sm:$0xff] %v149
    %182 = vst [vmem:[#allocation2 + $0xc8] sm:$0xff] %v150
    %183 = vst [vmem:[#allocation2 + $0xd0] sm:$0xff] %v151
    %184 = vst [vmem:[#allocation2 + $0xd8] sm:$0xff] %v152
    %185 = vst [vmem:[#allocation2 + $0xe0] sm:$0xff] %v153
    %186 = vst [vmem:[#allocation2 + $0xe8] sm:$0xff] %v154
    %187 = vst [vmem:[#allocation2 + $0xf0] sm:$0xff] %v155
    %188 = vst [vmem:[#allocation2 + $0xf8] sm:$0xff] %v156
    // Predicated region
    $region14: #{mha_layer1_forward.5} parent=1 // pred_check
      _
    $region15: #{mha_layer1_forward.5} parent=1 // pred_check_branch
      %190 = sbr.rel (0) target = $region17
    $region16: #{mha_layer1_forward.5} parent=1 // pred_region
      %s192 = ssub.s32 4096, 4096
      %193 = vsyncadd [#allocation3], %s192
      %s194 = sshll.u32 [#allocation2], 4
      %s195 = int_to_ptr.vmem [resolvable:$true] %s194
      %200 = dma.vmem_to_hbm [thread:$0]  %s195, 4096, %s3, [#allocation3], 128, 128, 8
    $region17: #{mha_layer1_forward.5} parent=1 // pred_fallthru
      _
    // Predicated region
    $region18: #{mha_layer1_forward.5} parent=1 // pred_check
      _
    $region19: #{mha_layer1_forward.5} parent=1 // pred_check_branch
      %202 = sbr.rel (0) target = $region21
    $region20: #{mha_layer1_forward.5} parent=1 // pred_region
      %203 = dma.done [#allocation3], 4096
    $region21: #{mha_layer1_forward.5} parent=1 // pred_fallthru
      _
    %204 = vsyncpa [#allocation3], 1

// kernel: mha_layer1_forward.4
$region0: #{mha_layer1_forward.4}
  #allocation0 [shape = 'u32[]', space=smem, size = 0x4, offset = 0x4, fixed_abs, tag = 'smem constant byte address 0x4 - core index']
  #allocation1 [shape = 'u32[144,128]{1,0:T(1,128)}', space=vmem, size = 0x12000, scoped, tag = 'internal scratch']
  %s0 = inlined_call_operand.vmem [shape: bf16[256,128], index: 0, kind: input, shape index: {}]
  %s1 = inlined_call_operand.vmem [shape: f32[1,128], index: 1, kind: input, shape index: {}]
  %s2 = inlined_call_operand.vmem [shape: f32[1,128], index: 2, kind: input, shape index: {}]
  %s3 = inlined_call_operand.vmem [shape: bf16[128,512], index: 3, kind: input, shape index: {}]
  %s4 = inlined_call_operand.vmem [shape: f32[1,512], index: 4, kind: input, shape index: {}]
  %s5 = inlined_call_operand.vmem [shape: bf16[512,128], index: 5, kind: input, shape index: {}]
  %s6 = inlined_call_operand.vmem [shape: f32[1,128], index: 6, kind: input, shape index: {}]
  %s7 = inlined_call_operand.vmem [shape: bf16[256,128], index: 7, kind: output, shape index: {0}]
  %s8 = inlined_call_operand.vmem [shape: f32[1,2,128], index: 8, kind: output, shape index: {1}]
  %9 = xla_tuple %s7, %s8
  %s10 = sld [smem:[#allocation0]]
  $region46: #{mha_layer1_forward.4} parent=0
    _
  %s12 = ssub.s32 1, %s10
  %s13 = scalar_select 0, %s12, %s10
  // Predicated region
  $region2: #{mha_layer1_forward.4} parent=0 // pred_check
    _
  $region3: #{mha_layer1_forward.4} parent=0 // pred_check_branch
    %15 = sbr.rel (0) target = $region5
  $region4: #{mha_layer1_forward.4} parent=0 // pred_region
    _
  $region5: #{mha_layer1_forward.4} parent=0 // pred_fallthru
    _
  // Predicated region
  $region6: #{mha_layer1_forward.4} parent=0 // pred_check
    _
  $region7: #{mha_layer1_forward.4} parent=0 // pred_check_branch
    %17 = sbr.rel (0) target = $region9
  $region8: #{mha_layer1_forward.4} parent=0 // pred_region
    _
  $region9: #{mha_layer1_forward.4} parent=0 // pred_fallthru
    _
  // Predicated region
  $region10: #{mha_layer1_forward.4} parent=0 // pred_check
    _
  $region11: #{mha_layer1_forward.4} parent=0 // pred_check_branch
    %19 = sbr.rel (0) target = $region13
  $region12: #{mha_layer1_forward.4} parent=0 // pred_region
    _
  $region13: #{mha_layer1_forward.4} parent=0 // pred_fallthru
    _
  // Predicated region
  $region14: #{mha_layer1_forward.4} parent=0 // pred_check
    _
  $region15: #{mha_layer1_forward.4} parent=0 // pred_check_branch
    %21 = sbr.rel (0) target = $region17
  $region16: #{mha_layer1_forward.4} parent=0 // pred_region
    _
  $region17: #{mha_layer1_forward.4} parent=0 // pred_fallthru
    _
  // Predicated region
  $region18: #{mha_layer1_forward.4} parent=0 // pred_check
    _
  $region19: #{mha_layer1_forward.4} parent=0 // pred_check_branch
    %23 = sbr.rel (0) target = $region21
  $region20: #{mha_layer1_forward.4} parent=0 // pred_region
    _
  $region21: #{mha_layer1_forward.4} parent=0 // pred_fallthru
    _
  // Predicated region
  $region22: #{mha_layer1_forward.4} parent=0 // pred_check
    _
  $region23: #{mha_layer1_forward.4} parent=0 // pred_check_branch
    %25 = sbr.rel (0) target = $region25
  $region24: #{mha_layer1_forward.4} parent=0 // pred_region
    _
  $region25: #{mha_layer1_forward.4} parent=0 // pred_fallthru
    _
  // Predicated region
  $region26: #{mha_layer1_forward.4} parent=0 // pred_check
    _
  $region27: #{mha_layer1_forward.4} parent=0 // pred_check_branch
    %27 = sbr.rel (0) target = $region29
  $region28: #{mha_layer1_forward.4} parent=0 // pred_region
    _
  $region29: #{mha_layer1_forward.4} parent=0 // pred_fallthru
    _
  %v29 = vld [vmem:[%s0] sm:$0xf]
  %v30 = vld [vmem:[%s0 + $0x4] sm:$0xf]
  %v31 = vld [vmem:[%s0 + $0x8] sm:$0xf]
  %v32 = vld [vmem:[%s0 + $0xc] sm:$0xf]
  %v33 = vld [vmem:[%s0 + $0x10] sm:$0xf]
  %v34 = vld [vmem:[%s0 + $0x14] sm:$0xf]
  %v35 = vld [vmem:[%s0 + $0x18] sm:$0xf]
  %v36 = vld [vmem:[%s0 + $0x1c] sm:$0xf]
  %v37 = vld [vmem:[%s0 + $0x20] sm:$0xf]
  %v38 = vld [vmem:[%s0 + $0x24] sm:$0xf]
  %v39 = vld [vmem:[%s0 + $0x28] sm:$0xf]
  %v40 = vld [vmem:[%s0 + $0x2c] sm:$0xf]
  %v41 = vld [vmem:[%s0 + $0x30] sm:$0xf]
  %v42 = vld [vmem:[%s0 + $0x34] sm:$0xf]
  %v43 = vld [vmem:[%s0 + $0x38] sm:$0xf]
  %v44 = vld [vmem:[%s0 + $0x3c] sm:$0xf]
  %v45 = vld [vmem:[%s0 + $0x40] sm:$0xf]
  %v46 = vld [vmem:[%s0 + $0x44] sm:$0xf]
  %v47 = vld [vmem:[%s0 + $0x48] sm:$0xf]
  %v48 = vld [vmem:[%s0 + $0x4c] sm:$0xf]
  %v49 = vld [vmem:[%s0 + $0x50] sm:$0xf]
  %v50 = vld [vmem:[%s0 + $0x54] sm:$0xf]
  %v51 = vld [vmem:[%s0 + $0x58] sm:$0xf]
  %v52 = vld [vmem:[%s0 + $0x5c] sm:$0xf]
  %v53 = vld [vmem:[%s0 + $0x60] sm:$0xf]
  %v54 = vld [vmem:[%s0 + $0x64] sm:$0xf]
  %v55 = vld [vmem:[%s0 + $0x68] sm:$0xf]
  %v56 = vld [vmem:[%s0 + $0x6c] sm:$0xf]
  %v57 = vld [vmem:[%s0 + $0x70] sm:$0xf]
  %v58 = vld [vmem:[%s0 + $0x74] sm:$0xf]
  %v59 = vld [vmem:[%s0 + $0x78] sm:$0xf]
  %v60 = vld [vmem:[%s0 + $0x7c] sm:$0xf]
  %v61 = vunpack.c.l.bf16 %v29
  %v62 = vunpack.c.l.bf16 %v30
  %v63 = vunpack.c.l.bf16 %v31
  %v64 = vunpack.c.l.bf16 %v32
  %v65 = vunpack.c.l.bf16 %v33
  %v66 = vunpack.c.l.bf16 %v34
  %v67 = vunpack.c.l.bf16 %v35
  %v68 = vunpack.c.l.bf16 %v36
  %v69 = vunpack.c.l.bf16 %v37
  %v70 = vunpack.c.l.bf16 %v38
  %v71 = vunpack.c.l.bf16 %v39
  %v72 = vunpack.c.l.bf16 %v40
  %v73 = vunpack.c.l.bf16 %v41
  %v74 = vunpack.c.l.bf16 %v42
  %v75 = vunpack.c.l.bf16 %v43
  %v76 = vunpack.c.l.bf16 %v44
  %v77 = vunpack.c.l.bf16 %v45
  %v78 = vunpack.c.l.bf16 %v46
  %v79 = vunpack.c.l.bf16 %v47
  %v80 = vunpack.c.l.bf16 %v48
  %v81 = vunpack.c.l.bf16 %v49
  %v82 = vunpack.c.l.bf16 %v50
  %v83 = vunpack.c.l.bf16 %v51
  %v84 = vunpack.c.l.bf16 %v52
  %v85 = vunpack.c.l.bf16 %v53
  %v86 = vunpack.c.l.bf16 %v54
  %v87 = vunpack.c.l.bf16 %v55
  %v88 = vunpack.c.l.bf16 %v56
  %v89 = vunpack.c.l.bf16 %v57
  %v90 = vunpack.c.l.bf16 %v58
  %v91 = vunpack.c.l.bf16 %v59
  %v92 = vunpack.c.l.bf16 %v60
  %v93 = vld [vmem:[%s1] sm:$0x1]
  %v95 = vlaneseq
  %v96 = vshrl.u32 %v95, 7
  %v97 = vsub.s32 0, %v96
  %v98 = vrot.slane %v93, %v97
  %v100 = vmul.f32 %v61, %v98
  %v101 = vmul.f32 %v62, %v98
  %v102 = vmul.f32 %v63, %v98
  %v103 = vmul.f32 %v64, %v98
  %v104 = vmul.f32 %v65, %v98
  %v105 = vmul.f32 %v66, %v98
  %v106 = vmul.f32 %v67, %v98
  %v107 = vmul.f32 %v68, %v98
  %v108 = vmul.f32 %v69, %v98
  %v109 = vmul.f32 %v70, %v98
  %v110 = vmul.f32 %v71, %v98
  %v111 = vmul.f32 %v72, %v98
  %v112 = vmul.f32 %v73, %v98
  %v113 = vmul.f32 %v74, %v98
  %v114 = vmul.f32 %v75, %v98
  %v115 = vmul.f32 %v76, %v98
  %v116 = vmul.f32 %v77, %v98
  %v117 = vmul.f32 %v78, %v98
  %v118 = vmul.f32 %v79, %v98
  %v119 = vmul.f32 %v80, %v98
  %v120 = vmul.f32 %v81, %v98
  %v121 = vmul.f32 %v82, %v98
  %v122 = vmul.f32 %v83, %v98
  %v123 = vmul.f32 %v84, %v98
  %v124 = vmul.f32 %v85, %v98
  %v125 = vmul.f32 %v86, %v98
  %v126 = vmul.f32 %v87, %v98
  %v127 = vmul.f32 %v88, %v98
  %v128 = vmul.f32 %v89, %v98
  %v129 = vmul.f32 %v90, %v98
  %v130 = vmul.f32 %v91, %v98
  %v131 = vmul.f32 %v92, %v98
  %v132 = vld [vmem:[%s2] sm:$0x1]
  %v134 = vlaneseq
  %v135 = vshrl.u32 %v134, 7
  %v136 = vsub.s32 0, %v135
  %v137 = vrot.slane %v132, %v136
  %v139 = vadd.f32 %v100, %v137
  %v140 = vadd.f32 %v101, %v137
  %v141 = vadd.f32 %v102, %v137
  %v142 = vadd.f32 %v103, %v137
  %v143 = vadd.f32 %v104, %v137
  %v144 = vadd.f32 %v105, %v137
  %v145 = vadd.f32 %v106, %v137
  %v146 = vadd.f32 %v107, %v137
  %v147 = vadd.f32 %v108, %v137
  %v148 = vadd.f32 %v109, %v137
  %v149 = vadd.f32 %v110, %v137
  %v150 = vadd.f32 %v111, %v137
  %v151 = vadd.f32 %v112, %v137
  %v152 = vadd.f32 %v113, %v137
  %v153 = vadd.f32 %v114, %v137
  %v154 = vadd.f32 %v115, %v137
  %v155 = vadd.f32 %v116, %v137
  %v156 = vadd.f32 %v117, %v137
  %v157 = vadd.f32 %v118, %v137
  %v158 = vadd.f32 %v119, %v137
  %v159 = vadd.f32 %v120, %v137
  %v160 = vadd.f32 %v121, %v137
  %v161 = vadd.f32 %v122, %v137
  %v162 = vadd.f32 %v123, %v137
  %v163 = vadd.f32 %v124, %v137
  %v164 = vadd.f32 %v125, %v137
  %v165 = vadd.f32 %v126, %v137
  %v166 = vadd.f32 %v127, %v137
  %v167 = vadd.f32 %v128, %v137
  %v168 = vadd.f32 %v129, %v137
  %v169 = vadd.f32 %v130, %v137
  %v170 = vadd.f32 %v131, %v137
  %v171 = vpack.c.bf16 %v140, %v139
  %v172 = vpack.c.bf16 %v142, %v141
  %v173 = vpack.c.bf16 %v144, %v143
  %v174 = vpack.c.bf16 %v146, %v145
  %v175 = vpack.c.bf16 %v148, %v147
  %v176 = vpack.c.bf16 %v150, %v149
  %v177 = vpack.c.bf16 %v152, %v151
  %v178 = vpack.c.bf16 %v154, %v153
  %v179 = vpack.c.bf16 %v156, %v155
  %v180 = vpack.c.bf16 %v158, %v157
  %v181 = vpack.c.bf16 %v160, %v159
  %v182 = vpack.c.bf16 %v162, %v161
  %v183 = vpack.c.bf16 %v164, %v163
  %v184 = vpack.c.bf16 %v166, %v165
  %v185 = vpack.c.bf16 %v168, %v167
  %v186 = vpack.c.bf16 %v170, %v169
  %v187 = vld [vmem:[%s3] sm:$0xff]
  %v188 = vld [vmem:[%s3 + $0x8] sm:$0xff]
  %v189 = vld [vmem:[%s3 + $0x10] sm:$0xff]
  %v190 = vld [vmem:[%s3 + $0x18] sm:$0xff]
  %v191 = vld [vmem:[%s3 + $0x20] sm:$0xff]
  %v192 = vld [vmem:[%s3 + $0x28] sm:$0xff]
  %v193 = vld [vmem:[%s3 + $0x30] sm:$0xff]
  %v194 = vld [vmem:[%s3 + $0x38] sm:$0xff]
  %v195 = vld [vmem:[%s3 + $0x40] sm:$0xff]
  %v196 = vld [vmem:[%s3 + $0x48] sm:$0xff]
  %v197 = vld [vmem:[%s3 + $0x50] sm:$0xff]
  %v198 = vld [vmem:[%s3 + $0x58] sm:$0xff]
  %v199 = vld [vmem:[%s3 + $0x60] sm:$0xff]
  %v200 = vld [vmem:[%s3 + $0x68] sm:$0xff]
  %v201 = vld [vmem:[%s3 + $0x70] sm:$0xff]
  %v202 = vld [vmem:[%s3 + $0x78] sm:$0xff]
  %v203 = vld [vmem:[%s3 + $0x80] sm:$0xff]
  %v204 = vld [vmem:[%s3 + $0x88] sm:$0xff]
  %v205 = vld [vmem:[%s3 + $0x90] sm:$0xff]
  %v206 = vld [vmem:[%s3 + $0x98] sm:$0xff]
  %v207 = vld [vmem:[%s3 + $0xa0] sm:$0xff]
  %v208 = vld [vmem:[%s3 + $0xa8] sm:$0xff]
  %v209 = vld [vmem:[%s3 + $0xb0] sm:$0xff]
  %v210 = vld [vmem:[%s3 + $0xb8] sm:$0xff]
  %v211 = vld [vmem:[%s3 + $0xc0] sm:$0xff]
  %v212 = vld [vmem:[%s3 + $0xc8] sm:$0xff]
  %v213 = vld [vmem:[%s3 + $0xd0] sm:$0xff]
  %v214 = vld [vmem:[%s3 + $0xd8] sm:$0xff]
  %v215 = vld [vmem:[%s3 + $0xe0] sm:$0xff]
  %v216 = vld [vmem:[%s3 + $0xe8] sm:$0xff]
  %v217 = vld [vmem:[%s3 + $0xf0] sm:$0xff]
  %v218 = vld [vmem:[%s3 + $0xf8] sm:$0xff]
  %v219 = vld [vmem:[%s4] sm:$0xf]
  %v221 = vlaneseq
  %v222 = vshrl.u32 %v221, 7
  %v223 = vsub.s32 0, %v222
  %v224 = vrot.slane %v219, %v223
  %v225 = vlaneseq
  %v226 = vshrl.u32 %v225, 7
  %v227 = vsub.s32 1, %v226
  %v228 = vrot.slane %v219, %v227
  %v229 = vlaneseq
  %v230 = vshrl.u32 %v229, 7
  %v231 = vsub.s32 2, %v230
  %v232 = vrot.slane %v219, %v231
  %v233 = vlaneseq
  %v234 = vshrl.u32 %v233, 7
  %v235 = vsub.s32 3, %v234
  %v236 = vrot.slane %v219, %v235
  %v273 = vunpack.c.l.b16 %v187
  %v274 = vunpack.c.h.b16 %v187
  %v275 = vunpack.c.l.b16 %v188
  %v276 = vunpack.c.h.b16 %v188
  %v277 = vunpack.c.l.b16 %v189
  %v278 = vunpack.c.h.b16 %v189
  %v279 = vunpack.c.l.b16 %v190
  %v280 = vunpack.c.h.b16 %v190
  %v281 = vunpack.c.l.b16 %v191
  %v282 = vunpack.c.h.b16 %v191
  %v283 = vunpack.c.l.b16 %v192
  %v284 = vunpack.c.h.b16 %v192
  %v285 = vunpack.c.l.b16 %v193
  %v286 = vunpack.c.h.b16 %v193
  %v287 = vunpack.c.l.b16 %v194
  %v288 = vunpack.c.h.b16 %v194
  %v289 = vunpack.c.l.b16 %v195
  %v290 = vunpack.c.h.b16 %v195
  %v291 = vunpack.c.l.b16 %v196
  %v292 = vunpack.c.h.b16 %v196
  %v293 = vunpack.c.l.b16 %v197
  %v294 = vunpack.c.h.b16 %v197
  %v295 = vunpack.c.l.b16 %v198
  %v296 = vunpack.c.h.b16 %v198
  %v297 = vunpack.c.l.b16 %v199
  %v298 = vunpack.c.h.b16 %v199
  %v299 = vunpack.c.l.b16 %v200
  %v300 = vunpack.c.h.b16 %v200
  %v301 = vunpack.c.l.b16 %v201
  %v302 = vunpack.c.h.b16 %v201
  %v303 = vunpack.c.l.b16 %v202
  %v304 = vunpack.c.h.b16 %v202
  %v305 = vunpack.c.l.b16 %v203
  %v306 = vunpack.c.h.b16 %v203
  %v307 = vunpack.c.l.b16 %v204
  %v308 = vunpack.c.h.b16 %v204
  %v309 = vunpack.c.l.b16 %v205
  %v310 = vunpack.c.h.b16 %v205
  %v311 = vunpack.c.l.b16 %v206
  %v312 = vunpack.c.h.b16 %v206
  %v313 = vunpack.c.l.b16 %v207
  %v314 = vunpack.c.h.b16 %v207
  %v315 = vunpack.c.l.b16 %v208
  %v316 = vunpack.c.h.b16 %v208
  %v317 = vunpack.c.l.b16 %v209
  %v318 = vunpack.c.h.b16 %v209
  %v319 = vunpack.c.l.b16 %v210
  %v320 = vunpack.c.h.b16 %v210
  %v321 = vunpack.c.l.b16 %v211
  %v322 = vunpack.c.h.b16 %v211
  %v323 = vunpack.c.l.b16 %v212
  %v324 = vunpack.c.h.b16 %v212
  %v325 = vunpack.c.l.b16 %v213
  %v326 = vunpack.c.h.b16 %v213
  %v327 = vunpack.c.l.b16 %v214
  %v328 = vunpack.c.h.b16 %v214
  %v329 = vunpack.c.l.b16 %v215
  %v330 = vunpack.c.h.b16 %v215
  %v331 = vunpack.c.l.b16 %v216
  %v332 = vunpack.c.h.b16 %v216
  %v333 = vunpack.c.l.b16 %v217
  %v334 = vunpack.c.h.b16 %v217
  %v335 = vunpack.c.l.b16 %v218
  %v336 = vunpack.c.h.b16 %v218
  %v337 = vpack.c.b16 %v277, %v273
  %v338 = vpack.c.b16 %v278, %v274
  %v339 = vpack.c.b16 %v279, %v275
  %v340 = vpack.c.b16 %v280, %v276
  %v341 = vpack.c.b16 %v285, %v281
  %v342 = vpack.c.b16 %v286, %v282
  %v343 = vpack.c.b16 %v287, %v283
  %v344 = vpack.c.b16 %v288, %v284
  %v345 = vpack.c.b16 %v293, %v289
  %v346 = vpack.c.b16 %v294, %v290
  %v347 = vpack.c.b16 %v295, %v291
  %v348 = vpack.c.b16 %v296, %v292
  %v349 = vpack.c.b16 %v301, %v297
  %v350 = vpack.c.b16 %v302, %v298
  %v351 = vpack.c.b16 %v303, %v299
  %v352 = vpack.c.b16 %v304, %v300
  %v353 = vpack.c.b16 %v309, %v305
  %v354 = vpack.c.b16 %v310, %v306
  %v355 = vpack.c.b16 %v311, %v307
  %v356 = vpack.c.b16 %v312, %v308
  %v357 = vpack.c.b16 %v317, %v313
  %v358 = vpack.c.b16 %v318, %v314
  %v359 = vpack.c.b16 %v319, %v315
  %v360 = vpack.c.b16 %v320, %v316
  %v361 = vpack.c.b16 %v325, %v321
  %v362 = vpack.c.b16 %v326, %v322
  %v363 = vpack.c.b16 %v327, %v323
  %v364 = vpack.c.b16 %v328, %v324
  %v365 = vpack.c.b16 %v333, %v329
  %v366 = vpack.c.b16 %v334, %v330
  %v367 = vpack.c.b16 %v335, %v331
  %v368 = vpack.c.b16 %v336, %v332
  %401 = vmatprep.subr.bf16.mxu0 %v338
  %402 = vmatpush1.bf16.msra.mxu0 %v337
  %403 = vmatprep.subr.bf16.mxu0 %v342
  %404 = vmatpush1.bf16.msra.mxu0 %v341
  %405 = vmatprep.subr.bf16.mxu0 %v346
  %406 = vmatpush1.bf16.msra.mxu0 %v345
  %407 = vmatprep.subr.bf16.mxu0 %v350
  %408 = vmatpush1.bf16.msra.mxu0 %v349
  %409 = vmatprep.subr.bf16.mxu0 %v354
  %410 = vmatpush1.bf16.msra.mxu0 %v353
  %411 = vmatprep.subr.bf16.mxu0 %v358
  %412 = vmatpush1.bf16.msra.mxu0 %v357
  %413 = vmatprep.subr.bf16.mxu0 %v362
  %414 = vmatpush1.bf16.msra.mxu0 %v361
  %415 = vmatprep.subr.bf16.mxu0 %v366
  %416 = vmatpush1.bf16.msra.mxu0 %v365
  %417 = vmatprep.subr.bf16.mxu0 0
  %418 = vmatpush1.bf16.msra.mxu0 0
  %419 = vmatprep.subr.bf16.mxu0 0
  %420 = vmatpush1.bf16.msra.mxu0 0
  %421 = vmatprep.subr.bf16.mxu0 0
  %422 = vmatpush1.bf16.msra.mxu0 0
  %423 = vmatprep.subr.bf16.mxu0 0
  %424 = vmatpush1.bf16.msra.mxu0 0
  %425 = vmatprep.subr.bf16.mxu0 0
  %426 = vmatpush1.bf16.msra.mxu0 0
  %427 = vmatprep.subr.bf16.mxu0 0
  %428 = vmatpush1.bf16.msra.mxu0 0
  %429 = vmatprep.subr.bf16.mxu0 0
  %430 = vmatpush1.bf16.msra.mxu0 0
  %431 = vmatprep.subr.bf16.mxu0 0
  %432 = vmatpush1.bf16.msra.mxu0 0
  %433 = vmatprep.mubr.bf16.mxu0 0
  %434 = vmatmul.mubr.bf16.gmra.mrb[0].mxu0 %v171
  %v435 = vpop.f32.mrb[0].mxu0
  %v436 = vadd.f32 %v224, %v435
  %v437 = vpop.f32.mrb[0].mxu0
  %v438 = vadd.f32 %v228, %v437
  %v439 = vpop.f32.mrb[0].mxu0
  %v440 = vadd.f32 %v224, %v439
  %v441 = vpop.f32.mrb[0].mxu0
  %v442 = vadd.f32 %v228, %v441
  %443 = vmatprep.mubr.bf16.mxu0 0
  %444 = vmatmul.mubr.bf16.gmra.mrb[0].mxu0 %v172
  %v445 = vpop.f32.mrb[0].mxu0
  %v446 = vadd.f32 %v224, %v445
  %v447 = vpop.f32.mrb[0].mxu0
  %v448 = vadd.f32 %v228, %v447
  %v449 = vpop.f32.mrb[0].mxu0
  %v450 = vadd.f32 %v224, %v449
  %v451 = vpop.f32.mrb[0].mxu0
  %v452 = vadd.f32 %v228, %v451
  %453 = vmatprep.mubr.bf16.mxu0 0
  %454 = vmatmul.mubr.bf16.gmra.mrb[0].mxu0 %v173
  %v455 = vpop.f32.mrb[0].mxu0
  %v456 = vadd.f32 %v224, %v455
  %v457 = vpop.f32.mrb[0].mxu0
  %v458 = vadd.f32 %v228, %v457
  %v459 = vpop.f32.mrb[0].mxu0
  %v460 = vadd.f32 %v224, %v459
  %v461 = vpop.f32.mrb[0].mxu0
  %v462 = vadd.f32 %v228, %v461
  %463 = vmatprep.mubr.bf16.mxu0 0
  %464 = vmatmul.mubr.bf16.gmra.mrb[0].mxu0 %v174
  %v465 = vpop.f32.mrb[0].mxu0
  %v466 = vadd.f32 %v224, %v465
  %v467 = vpop.f32.mrb[0].mxu0
  %v468 = vadd.f32 %v228, %v467
  %v469 = vpop.f32.mrb[0].mxu0
  %v470 = vadd.f32 %v224, %v469
  %v471 = vpop.f32.mrb[0].mxu0
  %v472 = vadd.f32 %v228, %v471
  %473 = vmatprep.mubr.bf16.mxu0 0
  %474 = vmatmul.mubr.bf16.gmra.mrb[0].mxu0 %v175
  %v475 = vpop.f32.mrb[0].mxu0
  %v476 = vadd.f32 %v224, %v475
  %v477 = vpop.f32.mrb[0].mxu0
  %v478 = vadd.f32 %v228, %v477
  %v479 = vpop.f32.mrb[0].mxu0
  %v480 = vadd.f32 %v224, %v479
  %v481 = vpop.f32.mrb[0].mxu0
  %v482 = vadd.f32 %v228, %v481
  %483 = vmatprep.mubr.bf16.mxu0 0
  %484 = vmatmul.mubr.bf16.gmra.mrb[0].mxu0 %v176
  %v485 = vpop.f32.mrb[0].mxu0
  %v486 = vadd.f32 %v224, %v485
  %v487 = vpop.f32.mrb[0].mxu0
  %v488 = vadd.f32 %v228, %v487
  %v489 = vpop.f32.mrb[0].mxu0
  %v490 = vadd.f32 %v224, %v489
  %v491 = vpop.f32.mrb[0].mxu0
  %v492 = vadd.f32 %v228, %v491
  %493 = vmatprep.mubr.bf16.mxu0 0
  %494 = vmatmul.mubr.bf16.gmra.mrb[0].mxu0 %v177
  %v495 = vpop.f32.mrb[0].mxu0
  %v496 = vadd.f32 %v224, %v495
  %v497 = vpop.f32.mrb[0].mxu0
  %v498 = vadd.f32 %v228, %v497
  %v499 = vpop.f32.mrb[0].mxu0
  %v500 = vadd.f32 %v224, %v499
  %v501 = vpop.f32.mrb[0].mxu0
  %v502 = vadd.f32 %v228, %v501
  %503 = vmatprep.mubr.bf16.mxu0 0
  %504 = vmatmul.mubr.bf16.gmra.mrb[0].mxu0 %v178
  %v505 = vpop.f32.mrb[0].mxu0
  %v506 = vadd.f32 %v224, %v505
  %v507 = vpop.f32.mrb[0].mxu0
  %v508 = vadd.f32 %v228, %v507
  %v509 = vpop.f32.mrb[0].mxu0
  %v510 = vadd.f32 %v224, %v509
  %v511 = vpop.f32.mrb[0].mxu0
  %v512 = vadd.f32 %v228, %v511
  %513 = vmatprep.mubr.bf16.mxu0 0
  %514 = vmatmul.mubr.bf16.gmra.mrb[0].mxu0 %v179
  %v515 = vpop.f32.mrb[0].mxu0
  %v516 = vadd.f32 %v224, %v515
  %v517 = vpop.f32.mrb[0].mxu0
  %v518 = vadd.f32 %v228, %v517
  %v519 = vpop.f32.mrb[0].mxu0
  %v520 = vadd.f32 %v224, %v519
  %v521 = vpop.f32.mrb[0].mxu0
  %v522 = vadd.f32 %v228, %v521
  %523 = vmatprep.mubr.bf16.mxu0 0
  %524 = vmatmul.mubr.bf16.gmra.mrb[0].mxu0 %v180
  %v525 = vpop.f32.mrb[0].mxu0
  %v526 = vadd.f32 %v224, %v525
  %v527 = vpop.f32.mrb[0].mxu0
  %v528 = vadd.f32 %v228, %v527
  %v529 = vpop.f32.mrb[0].mxu0
  %v530 = vadd.f32 %v224, %v529
  %v531 = vpop.f32.mrb[0].mxu0
  %v532 = vadd.f32 %v228, %v531
  %533 = vmatprep.mubr.bf16.mxu0 0
  %534 = vmatmul.mubr.bf16.gmra.mrb[0].mxu0 %v181
  %v535 = vpop.f32.mrb[0].mxu0
  %v536 = vadd.f32 %v224, %v535
  %v537 = vpop.f32.mrb[0].mxu0
  %v538 = vadd.f32 %v228, %v537
  %v539 = vpop.f32.mrb[0].mxu0
  %v540 = vadd.f32 %v224, %v539
  %v541 = vpop.f32.mrb[0].mxu0
  %v542 = vadd.f32 %v228, %v541
  %543 = vmatprep.mubr.bf16.mxu0 0
  %544 = vmatmul.mubr.bf16.gmra.mrb[0].mxu0 %v182
  %v545 = vpop.f32.mrb[0].mxu0
  %v546 = vadd.f32 %v224, %v545
  %v547 = vpop.f32.mrb[0].mxu0
  %v548 = vadd.f32 %v228, %v547
  %v549 = vpop.f32.mrb[0].mxu0
  %v550 = vadd.f32 %v224, %v549
  %v551 = vpop.f32.mrb[0].mxu0
  %v552 = vadd.f32 %v228, %v551
  %553 = vmatprep.mubr.bf16.mxu0 0
  %554 = vmatmul.mubr.bf16.gmra.mrb[0].mxu0 %v183
  %v555 = vpop.f32.mrb[0].mxu0
  %v556 = vadd.f32 %v224, %v555
  %v557 = vpop.f32.mrb[0].mxu0
  %v558 = vadd.f32 %v228, %v557
  %v559 = vpop.f32.mrb[0].mxu0
  %v560 = vadd.f32 %v224, %v559
  %v561 = vpop.f32.mrb[0].mxu0
  %v562 = vadd.f32 %v228, %v561
  %563 = vmatprep.mubr.bf16.mxu0 0
  %564 = vmatmul.mubr.bf16.gmra.mrb[0].mxu0 %v184
  %v565 = vpop.f32.mrb[0].mxu0
  %v566 = vadd.f32 %v224, %v565
  %v567 = vpop.f32.mrb[0].mxu0
  %v568 = vadd.f32 %v228, %v567
  %v569 = vpop.f32.mrb[0].mxu0
  %v570 = vadd.f32 %v224, %v569
  %v571 = vpop.f32.mrb[0].mxu0
  %v572 = vadd.f32 %v228, %v571
  %573 = vmatprep.mubr.bf16.mxu0 0
  %574 = vmatmul.mubr.bf16.gmra.mrb[0].mxu0 %v185
  %v575 = vpop.f32.mrb[0].mxu0
  %v576 = vadd.f32 %v224, %v575
  %v577 = vpop.f32.mrb[0].mxu0
  %v578 = vadd.f32 %v228, %v577
  %v579 = vpop.f32.mrb[0].mxu0
  %v580 = vadd.f32 %v224, %v579
  %v581 = vpop.f32.mrb[0].mxu0
  %v582 = vadd.f32 %v228, %v581
  %583 = vmatprep.mubr.bf16.mxu0 0
  %584 = vmatmul.mubr.bf16.gmra.mrb[0].mxu0 %v186
  %v585 = vpop.f32.mrb[0].mxu0
  %v586 = vadd.f32 %v224, %v585
  %v587 = vpop.f32.mrb[0].mxu0
  %v588 = vadd.f32 %v228, %v587
  %v589 = vpop.f32.mrb[0].mxu0
  %v590 = vadd.f32 %v224, %v589
  %v591 = vpop.f32.mrb[0].mxu0
  %v592 = vadd.f32 %v228, %v591
  %593 = vdwg.mxu0
  %594 = vmatprep.subr.bf16.mxu0 %v340
  %595 = vmatpush1.bf16.msra.mxu0 %v339
  %596 = vmatprep.subr.bf16.mxu0 %v344
  %597 = vmatpush1.bf16.msra.mxu0 %v343
  %598 = vmatprep.subr.bf16.mxu0 %v348
  %599 = vmatpush1.bf16.msra.mxu0 %v347
  %600 = vmatprep.subr.bf16.mxu0 %v352
  %601 = vmatpush1.bf16.msra.mxu0 %v351
  %602 = vmatprep.subr.bf16.mxu0 %v356
  %603 = vmatpush1.bf16.msra.mxu0 %v355
  %604 = vmatprep.subr.bf16.mxu0 %v360
  %605 = vmatpush1.bf16.msra.mxu0 %v359
  %606 = vmatprep.subr.bf16.mxu0 %v364
  %607 = vmatpush1.bf16.msra.mxu0 %v363
  %608 = vmatprep.subr.bf16.mxu0 %v368
  %609 = vmatpush1.bf16.msra.mxu0 %v367
  %610 = vmatprep.subr.bf16.mxu0 0
  %611 = vmatpush1.bf16.msra.mxu0 0
  %612 = vmatprep.subr.bf16.mxu0 0
  %613 = vmatpush1.bf16.msra.mxu0 0
  %614 = vmatprep.subr.bf16.mxu0 0
  %615 = vmatpush1.bf16.msra.mxu0 0
  %616 = vmatprep.subr.bf16.mxu0 0
  %617 = vmatpush1.bf16.msra.mxu0 0
  %618 = vmatprep.subr.bf16.mxu0 0
  %619 = vmatpush1.bf16.msra.mxu0 0
  %620 = vmatprep.subr.bf16.mxu0 0
  %621 = vmatpush1.bf16.msra.mxu0 0
  %622 = vmatprep.subr.bf16.mxu0 0
  %623 = vmatpush1.bf16.msra.mxu0 0
  %624 = vmatprep.subr.bf16.mxu0 0
  %625 = vmatpush1.bf16.msra.mxu0 0
  %626 = vmatprep.mubr.bf16.mxu0 0
  %627 = vmatmul.mubr.bf16.gmra.mrb[0].mxu0 %v171
  %v628 = vpop.f32.mrb[0].mxu0
  %v629 = vadd.f32 %v232, %v628
  %v630 = vpop.f32.mrb[0].mxu0
  %v631 = vadd.f32 %v236, %v630
  %v632 = vpop.f32.mrb[0].mxu0
  %v633 = vadd.f32 %v232, %v632
  %v634 = vpop.f32.mrb[0].mxu0
  %v635 = vadd.f32 %v236, %v634
  %636 = vmatprep.mubr.bf16.mxu0 0
  %637 = vmatmul.mubr.bf16.gmra.mrb[0].mxu0 %v172
  %v638 = vpop.f32.mrb[0].mxu0
  %v639 = vadd.f32 %v232, %v638
  %v640 = vpop.f32.mrb[0].mxu0
  %v641 = vadd.f32 %v236, %v640
  %v642 = vpop.f32.mrb[0].mxu0
  %v643 = vadd.f32 %v232, %v642
  %v644 = vpop.f32.mrb[0].mxu0
  %v645 = vadd.f32 %v236, %v644
  %646 = vmatprep.mubr.bf16.mxu0 0
  %647 = vmatmul.mubr.bf16.gmra.mrb[0].mxu0 %v173
  %v648 = vpop.f32.mrb[0].mxu0
  %v649 = vadd.f32 %v232, %v648
  %v650 = vpop.f32.mrb[0].mxu0
  %v651 = vadd.f32 %v236, %v650
  %v652 = vpop.f32.mrb[0].mxu0
  %v653 = vadd.f32 %v232, %v652
  %v654 = vpop.f32.mrb[0].mxu0
  %v655 = vadd.f32 %v236, %v654
  %656 = vmatprep.mubr.bf16.mxu0 0
  %657 = vmatmul.mubr.bf16.gmra.mrb[0].mxu0 %v174
  %v658 = vpop.f32.mrb[0].mxu0
  %v659 = vadd.f32 %v232, %v658
  %v660 = vpop.f32.mrb[0].mxu0
  %v661 = vadd.f32 %v236, %v660
  %v662 = vpop.f32.mrb[0].mxu0
  %v663 = vadd.f32 %v232, %v662
  %v664 = vpop.f32.mrb[0].mxu0
  %v665 = vadd.f32 %v236, %v664
  %666 = vmatprep.mubr.bf16.mxu0 0
  %667 = vmatmul.mubr.bf16.gmra.mrb[0].mxu0 %v175
  %v668 = vpop.f32.mrb[0].mxu0
  %v669 = vadd.f32 %v232, %v668
  %v670 = vpop.f32.mrb[0].mxu0
  %v671 = vadd.f32 %v236, %v670
  %v672 = vpop.f32.mrb[0].mxu0
  %v673 = vadd.f32 %v232, %v672
  %v674 = vpop.f32.mrb[0].mxu0
  %v675 = vadd.f32 %v236, %v674
  %676 = vmatprep.mubr.bf16.mxu0 0
  %677 = vmatmul.mubr.bf16.gmra.mrb[0].mxu0 %v176
  %v678 = vpop.f32.mrb[0].mxu0
  %v679 = vadd.f32 %v232, %v678
  %v680 = vpop.f32.mrb[0].mxu0
  %v681 = vadd.f32 %v236, %v680
  %v682 = vpop.f32.mrb[0].mxu0
  %v683 = vadd.f32 %v232, %v682
  %v684 = vpop.f32.mrb[0].mxu0
  %v685 = vadd.f32 %v236, %v684
  %686 = vmatprep.mubr.bf16.mxu0 0
  %687 = vmatmul.mubr.bf16.gmra.mrb[0].mxu0 %v177
  %v688 = vpop.f32.mrb[0].mxu0
  %v689 = vadd.f32 %v232, %v688
  %v690 = vpop.f32.mrb[0].mxu0
  %v691 = vadd.f32 %v236, %v690
  %v692 = vpop.f32.mrb[0].mxu0
  %v693 = vadd.f32 %v232, %v692
  %v694 = vpop.f32.mrb[0].mxu0
  %v695 = vadd.f32 %v236, %v694
  %696 = vmatprep.mubr.bf16.mxu0 0
  %697 = vmatmul.mubr.bf16.gmra.mrb[0].mxu0 %v178
  %v698 = vpop.f32.mrb[0].mxu0
  %v699 = vadd.f32 %v232, %v698
  %v700 = vpop.f32.mrb[0].mxu0
  %v701 = vadd.f32 %v236, %v700
  %v702 = vpop.f32.mrb[0].mxu0
  %v703 = vadd.f32 %v232, %v702
  %v704 = vpop.f32.mrb[0].mxu0
  %v705 = vadd.f32 %v236, %v704
  %706 = vmatprep.mubr.bf16.mxu0 0
  %707 = vmatmul.mubr.bf16.gmra.mrb[0].mxu0 %v179
  %v708 = vpop.f32.mrb[0].mxu0
  %v709 = vadd.f32 %v232, %v708
  %v710 = vpop.f32.mrb[0].mxu0
  %v711 = vadd.f32 %v236, %v710
  %v712 = vpop.f32.mrb[0].mxu0
  %v713 = vadd.f32 %v232, %v712
  %v714 = vpop.f32.mrb[0].mxu0
  %v715 = vadd.f32 %v236, %v714
  %716 = vmatprep.mubr.bf16.mxu0 0
  %717 = vmatmul.mubr.bf16.gmra.mrb[0].mxu0 %v180
  %v718 = vpop.f32.mrb[0].mxu0
  %v719 = vadd.f32 %v232, %v718
  %v720 = vpop.f32.mrb[0].mxu0
  %v721 = vadd.f32 %v236, %v720
  %v722 = vpop.f32.mrb[0].mxu0
  %v723 = vadd.f32 %v232, %v722
  %v724 = vpop.f32.mrb[0].mxu0
  %v725 = vadd.f32 %v236, %v724
  %726 = vmatprep.mubr.bf16.mxu0 0
  %727 = vmatmul.mubr.bf16.gmra.mrb[0].mxu0 %v181
  %v728 = vpop.f32.mrb[0].mxu0
  %v729 = vadd.f32 %v232, %v728
  %v730 = vpop.f32.mrb[0].mxu0
  %v731 = vadd.f32 %v236, %v730
  %v732 = vpop.f32.mrb[0].mxu0
  %v733 = vadd.f32 %v232, %v732
  %v734 = vpop.f32.mrb[0].mxu0
  %v735 = vadd.f32 %v236, %v734
  %736 = vmatprep.mubr.bf16.mxu0 0
  %737 = vmatmul.mubr.bf16.gmra.mrb[0].mxu0 %v182
  %v738 = vpop.f32.mrb[0].mxu0
  %v739 = vadd.f32 %v232, %v738
  %v740 = vpop.f32.mrb[0].mxu0
  %v741 = vadd.f32 %v236, %v740
  %v742 = vpop.f32.mrb[0].mxu0
  %v743 = vadd.f32 %v232, %v742
  %v744 = vpop.f32.mrb[0].mxu0
  %v745 = vadd.f32 %v236, %v744
  %746 = vmatprep.mubr.bf16.mxu0 0
  %747 = vmatmul.mubr.bf16.gmra.mrb[0].mxu0 %v183
  %v748 = vpop.f32.mrb[0].mxu0
  %v749 = vadd.f32 %v232, %v748
  %v750 = vpop.f32.mrb[0].mxu0
  %v751 = vadd.f32 %v236, %v750
  %v752 = vpop.f32.mrb[0].mxu0
  %v753 = vadd.f32 %v232, %v752
  %v754 = vpop.f32.mrb[0].mxu0
  %v755 = vadd.f32 %v236, %v754
  %756 = vmatprep.mubr.bf16.mxu0 0
  %757 = vmatmul.mubr.bf16.gmra.mrb[0].mxu0 %v184
  %v758 = vpop.f32.mrb[0].mxu0
  %v759 = vadd.f32 %v232, %v758
  %v760 = vpop.f32.mrb[0].mxu0
  %v761 = vadd.f32 %v236, %v760
  %v762 = vpop.f32.mrb[0].mxu0
  %v763 = vadd.f32 %v232, %v762
  %v764 = vpop.f32.mrb[0].mxu0
  %v765 = vadd.f32 %v236, %v764
  %766 = vmatprep.mubr.bf16.mxu0 0
  %767 = vmatmul.mubr.bf16.gmra.mrb[0].mxu0 %v185
  %v768 = vpop.f32.mrb[0].mxu0
  %v769 = vadd.f32 %v232, %v768
  %v770 = vpop.f32.mrb[0].mxu0
  %v771 = vadd.f32 %v236, %v770
  %v772 = vpop.f32.mrb[0].mxu0
  %v773 = vadd.f32 %v232, %v772
  %v774 = vpop.f32.mrb[0].mxu0
  %v775 = vadd.f32 %v236, %v774
  %776 = vmatprep.mubr.bf16.mxu0 0
  %777 = vmatmul.mubr.bf16.gmra.mrb[0].mxu0 %v186
  %v778 = vpop.f32.mrb[0].mxu0
  %v779 = vadd.f32 %v232, %v778
  %v780 = vpop.f32.mrb[0].mxu0
  %v781 = vadd.f32 %v236, %v780
  %v782 = vpop.f32.mrb[0].mxu0
  %v783 = vadd.f32 %v232, %v782
  %v784 = vpop.f32.mrb[0].mxu0
  %v785 = vadd.f32 %v236, %v784
  %786 = vdwg.mxu0
  %v787 = vmax.f32 %v436, 0.0
  %v788 = vmax.f32 %v438, 0.0
  %v789 = vmax.f32 %v629, 0.0
  %v790 = vmax.f32 %v631, 0.0
  %v791 = vmax.f32 %v440, 0.0
  %v792 = vmax.f32 %v442, 0.0
  %v793 = vmax.f32 %v633, 0.0
  %v794 = vmax.f32 %v635, 0.0
  %v795 = vmax.f32 %v446, 0.0
  %v796 = vmax.f32 %v448, 0.0
  %v797 = vmax.f32 %v639, 0.0
  %v798 = vmax.f32 %v641, 0.0
  %v799 = vmax.f32 %v450, 0.0
  %v800 = vmax.f32 %v452, 0.0
  %v801 = vmax.f32 %v643, 0.0
  %v802 = vmax.f32 %v645, 0.0
  %v803 = vmax.f32 %v456, 0.0
  %v804 = vmax.f32 %v458, 0.0
  %v805 = vmax.f32 %v649, 0.0
  %v806 = vmax.f32 %v651, 0.0
  %v807 = vmax.f32 %v460, 0.0
  %v808 = vmax.f32 %v462, 0.0
  %v809 = vmax.f32 %v653, 0.0
  %v810 = vmax.f32 %v655, 0.0
  %v811 = vmax.f32 %v466, 0.0
  %v812 = vmax.f32 %v468, 0.0
  %v813 = vmax.f32 %v659, 0.0
  %v814 = vmax.f32 %v661, 0.0
  %v815 = vmax.f32 %v470, 0.0
  %v816 = vmax.f32 %v472, 0.0
  %v817 = vmax.f32 %v663, 0.0
  %v818 = vmax.f32 %v665, 0.0
  %v819 = vmax.f32 %v476, 0.0
  %v820 = vmax.f32 %v478, 0.0
  %v821 = vmax.f32 %v669, 0.0
  %v822 = vmax.f32 %v671, 0.0
  %v823 = vmax.f32 %v480, 0.0
  %v824 = vmax.f32 %v482, 0.0
  %v825 = vmax.f32 %v673, 0.0
  %v826 = vmax.f32 %v675, 0.0
  %v827 = vmax.f32 %v486, 0.0
  %v828 = vmax.f32 %v488, 0.0
  %v829 = vmax.f32 %v679, 0.0
  %v830 = vmax.f32 %v681, 0.0
  %v831 = vmax.f32 %v490, 0.0
  %v832 = vmax.f32 %v492, 0.0
  %v833 = vmax.f32 %v683, 0.0
  %v834 = vmax.f32 %v685, 0.0
  %v835 = vmax.f32 %v496, 0.0
  %v836 = vmax.f32 %v498, 0.0
  %v837 = vmax.f32 %v689, 0.0
  %v838 = vmax.f32 %v691, 0.0
  %v839 = vmax.f32 %v500, 0.0
  %v840 = vmax.f32 %v502, 0.0
  %v841 = vmax.f32 %v693, 0.0
  %v842 = vmax.f32 %v695, 0.0
  %v843 = vmax.f32 %v506, 0.0
  %v844 = vmax.f32 %v508, 0.0
  %v845 = vmax.f32 %v699, 0.0
  %v846 = vmax.f32 %v701, 0.0
  %v847 = vmax.f32 %v510, 0.0
  %v848 = vmax.f32 %v512, 0.0
  %v849 = vmax.f32 %v703, 0.0
  %v850 = vmax.f32 %v705, 0.0
  %v851 = vmax.f32 %v516, 0.0
  %v852 = vmax.f32 %v518, 0.0
  %v853 = vmax.f32 %v709, 0.0
  %v854 = vmax.f32 %v711, 0.0
  %v855 = vmax.f32 %v520, 0.0
  %v856 = vmax.f32 %v522, 0.0
  %v857 = vmax.f32 %v713, 0.0
  %v858 = vmax.f32 %v715, 0.0
  %v859 = vmax.f32 %v526, 0.0
  %v860 = vmax.f32 %v528, 0.0
  %v861 = vmax.f32 %v719, 0.0
  %v862 = vmax.f32 %v721, 0.0
  %v863 = vmax.f32 %v530, 0.0
  %v864 = vmax.f32 %v532, 0.0
  %v865 = vmax.f32 %v723, 0.0
  %v866 = vmax.f32 %v725, 0.0
  %v867 = vmax.f32 %v536, 0.0
  %v868 = vmax.f32 %v538, 0.0
  %v869 = vmax.f32 %v729, 0.0
  %v870 = vmax.f32 %v731, 0.0
  %v871 = vmax.f32 %v540, 0.0
  %v872 = vmax.f32 %v542, 0.0
  %v873 = vmax.f32 %v733, 0.0
  %v874 = vmax.f32 %v735, 0.0
  %v875 = vmax.f32 %v546, 0.0
  %v876 = vmax.f32 %v548, 0.0
  %v877 = vmax.f32 %v739, 0.0
  %v878 = vmax.f32 %v741, 0.0
  %v879 = vmax.f32 %v550, 0.0
  %v880 = vmax.f32 %v552, 0.0
  %v881 = vmax.f32 %v743, 0.0
  %v882 = vmax.f32 %v745, 0.0
  %v883 = vmax.f32 %v556, 0.0
  %v884 = vmax.f32 %v558, 0.0
  %v885 = vmax.f32 %v749, 0.0
  %v886 = vmax.f32 %v751, 0.0
  %v887 = vmax.f32 %v560, 0.0
  %v888 = vmax.f32 %v562, 0.0
  %v889 = vmax.f32 %v753, 0.0
  %v890 = vmax.f32 %v755, 0.0
  %v891 = vmax.f32 %v566, 0.0
  %v892 = vmax.f32 %v568, 0.0
  %v893 = vmax.f32 %v759, 0.0
  %v894 = vmax.f32 %v761, 0.0
  %v895 = vmax.f32 %v570, 0.0
  %v896 = vmax.f32 %v572, 0.0
  %v897 = vmax.f32 %v763, 0.0
  %v898 = vmax.f32 %v765, 0.0
  %v899 = vmax.f32 %v576, 0.0
  %v900 = vmax.f32 %v578, 0.0
  %v901 = vmax.f32 %v769, 0.0
  %v902 = vmax.f32 %v771, 0.0
  %v903 = vmax.f32 %v580, 0.0
  %v904 = vmax.f32 %v582, 0.0
  %v905 = vmax.f32 %v773, 0.0
  %v906 = vmax.f32 %v775, 0.0
  %v907 = vmax.f32 %v586, 0.0
  %v908 = vmax.f32 %v588, 0.0
  %v909 = vmax.f32 %v779, 0.0
  %v910 = vmax.f32 %v781, 0.0
  %v911 = vmax.f32 %v590, 0.0
  %v912 = vmax.f32 %v592, 0.0
  %v913 = vmax.f32 %v783, 0.0
  %v914 = vmax.f32 %v785, 0.0
  %v915 = vpack.c.bf16 %v791, %v787
  %v916 = vpack.c.bf16 %v792, %v788
  %v917 = vpack.c.bf16 %v793, %v789
  %v918 = vpack.c.bf16 %v794, %v790
  %v919 = vpack.c.bf16 %v799, %v795
  %v920 = vpack.c.bf16 %v800, %v796
  %v921 = vpack.c.bf16 %v801, %v797
  %v922 = vpack.c.bf16 %v802, %v798
  %v923 = vpack.c.bf16 %v807, %v803
  %v924 = vpack.c.bf16 %v808, %v804
  %v925 = vpack.c.bf16 %v809, %v805
  %v926 = vpack.c.bf16 %v810, %v806
  %v927 = vpack.c.bf16 %v815, %v811
  %v928 = vpack.c.bf16 %v816, %v812
  %v929 = vpack.c.bf16 %v817, %v813
  %v930 = vpack.c.bf16 %v818, %v814
  %v931 = vpack.c.bf16 %v823, %v819
  %v932 = vpack.c.bf16 %v824, %v820
  %v933 = vpack.c.bf16 %v825, %v821
  %v934 = vpack.c.bf16 %v826, %v822
  %v935 = vpack.c.bf16 %v831, %v827
  %v936 = vpack.c.bf16 %v832, %v828
  %v937 = vpack.c.bf16 %v833, %v829
  %v938 = vpack.c.bf16 %v834, %v830
  %v939 = vpack.c.bf16 %v839, %v835
  %v940 = vpack.c.bf16 %v840, %v836
  %v941 = vpack.c.bf16 %v841, %v837
  %v942 = vpack.c.bf16 %v842, %v838
  %v943 = vpack.c.bf16 %v847, %v843
  %v944 = vpack.c.bf16 %v848, %v844
  %v945 = vpack.c.bf16 %v849, %v845
  %v946 = vpack.c.bf16 %v850, %v846
  %v947 = vpack.c.bf16 %v855, %v851
  %v948 = vpack.c.bf16 %v856, %v852
  %v949 = vpack.c.bf16 %v857, %v853
  %v950 = vpack.c.bf16 %v858, %v854
  %v951 = vpack.c.bf16 %v863, %v859
  %v952 = vpack.c.bf16 %v864, %v860
  %v953 = vpack.c.bf16 %v865, %v861
  %v954 = vpack.c.bf16 %v866, %v862
  %v955 = vpack.c.bf16 %v871, %v867
  %v956 = vpack.c.bf16 %v872, %v868
  %v957 = vpack.c.bf16 %v873, %v869
  %v958 = vpack.c.bf16 %v874, %v870
  %v959 = vpack.c.bf16 %v879, %v875
  %v960 = vpack.c.bf16 %v880, %v876
  %v961 = vpack.c.bf16 %v881, %v877
  %v962 = vpack.c.bf16 %v882, %v878
  %v963 = vpack.c.bf16 %v887, %v883
  %v964 = vpack.c.bf16 %v888, %v884
  %v965 = vpack.c.bf16 %v889, %v885
  %v966 = vpack.c.bf16 %v890, %v886
  %v967 = vpack.c.bf16 %v895, %v891
  %v968 = vpack.c.bf16 %v896, %v892
  %v969 = vpack.c.bf16 %v897, %v893
  %v970 = vpack.c.bf16 %v898, %v894
  %v971 = vpack.c.bf16 %v903, %v899
  %v972 = vpack.c.bf16 %v904, %v900
  %v973 = vpack.c.bf16 %v905, %v901
  %v974 = vpack.c.bf16 %v906, %v902
  %v975 = vpack.c.bf16 %v911, %v907
  %v976 = vpack.c.bf16 %v912, %v908
  %v977 = vpack.c.bf16 %v913, %v909
  %v978 = vpack.c.bf16 %v914, %v910
  %v979 = vld [vmem:[%s5] sm:$0xf]
  %v980 = vld [vmem:[%s5 + $0x4] sm:$0xf]
  %v981 = vld [vmem:[%s5 + $0x8] sm:$0xf]
  %v982 = vld [vmem:[%s5 + $0xc] sm:$0xf]
  %v983 = vld [vmem:[%s5 + $0x10] sm:$0xf]
  %v984 = vld [vmem:[%s5 + $0x14] sm:$0xf]
  %v985 = vld [vmem:[%s5 + $0x18] sm:$0xf]
  %v986 = vld [vmem:[%s5 + $0x1c] sm:$0xf]
  %v987 = vld [vmem:[%s5 + $0x20] sm:$0xf]
  %v988 = vld [vmem:[%s5 + $0x24] sm:$0xf]
  %v989 = vld [vmem:[%s5 + $0x28] sm:$0xf]
  %v990 = vld [vmem:[%s5 + $0x2c] sm:$0xf]
  %v991 = vld [vmem:[%s5 + $0x30] sm:$0xf]
  %v992 = vld [vmem:[%s5 + $0x34] sm:$0xf]
  %v993 = vld [vmem:[%s5 + $0x38] sm:$0xf]
  %v994 = vld [vmem:[%s5 + $0x3c] sm:$0xf]
  %v995 = vld [vmem:[%s5 + $0x40] sm:$0xf]
  %v996 = vld [vmem:[%s5 + $0x44] sm:$0xf]
  %v997 = vld [vmem:[%s5 + $0x48] sm:$0xf]
  %v998 = vld [vmem:[%s5 + $0x4c] sm:$0xf]
  %v999 = vld [vmem:[%s5 + $0x50] sm:$0xf]
  %v1000 = vld [vmem:[%s5 + $0x54] sm:$0xf]
  %v1001 = vld [vmem:[%s5 + $0x58] sm:$0xf]
  %v1002 = vld [vmem:[%s5 + $0x5c] sm:$0xf]
  %v1003 = vld [vmem:[%s5 + $0x60] sm:$0xf]
  %v1004 = vld [vmem:[%s5 + $0x64] sm:$0xf]
  %v1005 = vld [vmem:[%s5 + $0x68] sm:$0xf]
  %v1006 = vld [vmem:[%s5 + $0x6c] sm:$0xf]
  %v1007 = vld [vmem:[%s5 + $0x70] sm:$0xf]
  %v1008 = vld [vmem:[%s5 + $0x74] sm:$0xf]
  %v1009 = vld [vmem:[%s5 + $0x78] sm:$0xf]
  %v1010 = vld [vmem:[%s5 + $0x7c] sm:$0xf]
  %v1011 = vld [vmem:[%s5 + $0x80] sm:$0xf]
  %v1012 = vld [vmem:[%s5 + $0x84] sm:$0xf]
  %v1013 = vld [vmem:[%s5 + $0x88] sm:$0xf]
  %v1014 = vld [vmem:[%s5 + $0x8c] sm:$0xf]
  %v1015 = vld [vmem:[%s5 + $0x90] sm:$0xf]
  %v1016 = vld [vmem:[%s5 + $0x94] sm:$0xf]
  %v1017 = vld [vmem:[%s5 + $0x98] sm:$0xf]
  %v1018 = vld [vmem:[%s5 + $0x9c] sm:$0xf]
  %v1019 = vld [vmem:[%s5 + $0xa0] sm:$0xf]
  %v1020 = vld [vmem:[%s5 + $0xa4] sm:$0xf]
  %v1021 = vld [vmem:[%s5 + $0xa8] sm:$0xf]
  %v1022 = vld [vmem:[%s5 + $0xac] sm:$0xf]
  %v1023 = vld [vmem:[%s5 + $0xb0] sm:$0xf]
  %v1024 = vld [vmem:[%s5 + $0xb4] sm:$0xf]
  %v1025 = vld [vmem:[%s5 + $0xb8] sm:$0xf]
  %v1026 = vld [vmem:[%s5 + $0xbc] sm:$0xf]
  %v1027 = vld [vmem:[%s5 + $0xc0] sm:$0xf]
  %v1028 = vld [vmem:[%s5 + $0xc4] sm:$0xf]
  %v1029 = vld [vmem:[%s5 + $0xc8] sm:$0xf]
  %v1030 = vld [vmem:[%s5 + $0xcc] sm:$0xf]
  %v1031 = vld [vmem:[%s5 + $0xd0] sm:$0xf]
  %v1032 = vld [vmem:[%s5 + $0xd4] sm:$0xf]
  %v1033 = vld [vmem:[%s5 + $0xd8] sm:$0xf]
  %v1034 = vld [vmem:[%s5 + $0xdc] sm:$0xf]
  %v1035 = vld [vmem:[%s5 + $0xe0] sm:$0xf]
  %v1036 = vld [vmem:[%s5 + $0xe4] sm:$0xf]
  %v1037 = vld [vmem:[%s5 + $0xe8] sm:$0xf]
  %v1038 = vld [vmem:[%s5 + $0xec] sm:$0xf]
  %v1039 = vld [vmem:[%s5 + $0xf0] sm:$0xf]
  %v1040 = vld [vmem:[%s5 + $0xf4] sm:$0xf]
  %v1041 = vld [vmem:[%s5 + $0xf8] sm:$0xf]
  %v1042 = vld [vmem:[%s5 + $0xfc] sm:$0xf]
  %v1043 = vld [vmem:[%s6] sm:$0x1]
  %v1045 = vlaneseq
  %v1046 = vshrl.u32 %v1045, 7
  %v1047 = vsub.s32 0, %v1046
  %v1048 = vrot.slane %v1043, %v1047
  %v1114 = vunpack.c.l.b16 %v979
  %v1115 = vunpack.c.l.b16 %v980
  %v1116 = vunpack.c.l.b16 %v981
  %v1117 = vunpack.c.l.b16 %v982
  %v1118 = vunpack.c.l.b16 %v983
  %v1119 = vunpack.c.l.b16 %v984
  %v1120 = vunpack.c.l.b16 %v985
  %v1121 = vunpack.c.l.b16 %v986
  %v1122 = vunpack.c.l.b16 %v987
  %v1123 = vunpack.c.l.b16 %v988
  %v1124 = vunpack.c.l.b16 %v989
  %v1125 = vunpack.c.l.b16 %v990
  %v1126 = vunpack.c.l.b16 %v991
  %v1127 = vunpack.c.l.b16 %v992
  %v1128 = vunpack.c.l.b16 %v993
  %v1129 = vunpack.c.l.b16 %v994
  %v1130 = vunpack.c.l.b16 %v995
  %v1131 = vunpack.c.l.b16 %v996
  %v1132 = vunpack.c.l.b16 %v997
  %v1133 = vunpack.c.l.b16 %v998
  %v1134 = vunpack.c.l.b16 %v999
  %v1135 = vunpack.c.l.b16 %v1000
  %v1136 = vunpack.c.l.b16 %v1001
  %v1137 = vunpack.c.l.b16 %v1002
  %v1138 = vunpack.c.l.b16 %v1003
  %v1139 = vunpack.c.l.b16 %v1004
  %v1140 = vunpack.c.l.b16 %v1005
  %v1141 = vunpack.c.l.b16 %v1006
  %v1142 = vunpack.c.l.b16 %v1007
  %v1143 = vunpack.c.l.b16 %v1008
  %v1144 = vunpack.c.l.b16 %v1009
  %v1145 = vunpack.c.l.b16 %v1010
  %v1146 = vunpack.c.l.b16 %v1011
  %v1147 = vunpack.c.l.b16 %v1012
  %v1148 = vunpack.c.l.b16 %v1013
  %v1149 = vunpack.c.l.b16 %v1014
  %v1150 = vunpack.c.l.b16 %v1015
  %v1151 = vunpack.c.l.b16 %v1016
  %v1152 = vunpack.c.l.b16 %v1017
  %v1153 = vunpack.c.l.b16 %v1018
  %v1154 = vunpack.c.l.b16 %v1019
  %v1155 = vunpack.c.l.b16 %v1020
  %v1156 = vunpack.c.l.b16 %v1021
  %v1157 = vunpack.c.l.b16 %v1022
  %v1158 = vunpack.c.l.b16 %v1023
  %v1159 = vunpack.c.l.b16 %v1024
  %v1160 = vunpack.c.l.b16 %v1025
  %v1161 = vunpack.c.l.b16 %v1026
  %v1162 = vunpack.c.l.b16 %v1027
  %v1163 = vunpack.c.l.b16 %v1028
  %v1164 = vunpack.c.l.b16 %v1029
  %v1165 = vunpack.c.l.b16 %v1030
  %v1166 = vunpack.c.l.b16 %v1031
  %v1167 = vunpack.c.l.b16 %v1032
  %v1168 = vunpack.c.l.b16 %v1033
  %v1169 = vunpack.c.l.b16 %v1034
  %v1170 = vunpack.c.l.b16 %v1035
  %v1171 = vunpack.c.l.b16 %v1036
  %v1172 = vunpack.c.l.b16 %v1037
  %v1173 = vunpack.c.l.b16 %v1038
  %v1174 = vunpack.c.l.b16 %v1039
  %v1175 = vunpack.c.l.b16 %v1040
  %v1176 = vunpack.c.l.b16 %v1041
  %v1177 = vunpack.c.l.b16 %v1042
  %v1178 = vpack.c.b16 %v1115, %v1114
  %v1179 = vpack.c.b16 %v1117, %v1116
  %v1180 = vpack.c.b16 %v1119, %v1118
  %v1181 = vpack.c.b16 %v1121, %v1120
  %v1182 = vpack.c.b16 %v1123, %v1122
  %v1183 = vpack.c.b16 %v1125, %v1124
  %v1184 = vpack.c.b16 %v1127, %v1126
  %v1185 = vpack.c.b16 %v1129, %v1128
  %v1186 = vpack.c.b16 %v1131, %v1130
  %v1187 = vpack.c.b16 %v1133, %v1132
  %v1188 = vpack.c.b16 %v1135, %v1134
  %v1189 = vpack.c.b16 %v1137, %v1136
  %v1190 = vpack.c.b16 %v1139, %v1138
  %v1191 = vpack.c.b16 %v1141, %v1140
  %v1192 = vpack.c.b16 %v1143, %v1142
  %v1193 = vpack.c.b16 %v1145, %v1144
  %v1194 = vpack.c.b16 %v1147, %v1146
  %v1195 = vpack.c.b16 %v1149, %v1148
  %v1196 = vpack.c.b16 %v1151, %v1150
  %v1197 = vpack.c.b16 %v1153, %v1152
  %v1198 = vpack.c.b16 %v1155, %v1154
  %v1199 = vpack.c.b16 %v1157, %v1156
  %v1200 = vpack.c.b16 %v1159, %v1158
  %v1201 = vpack.c.b16 %v1161, %v1160
  %v1202 = vpack.c.b16 %v1163, %v1162
  %v1203 = vpack.c.b16 %v1165, %v1164
  %v1204 = vpack.c.b16 %v1167, %v1166
  %v1205 = vpack.c.b16 %v1169, %v1168
  %v1206 = vpack.c.b16 %v1171, %v1170
  %v1207 = vpack.c.b16 %v1173, %v1172
  %v1208 = vpack.c.b16 %v1175, %v1174
  %v1209 = vpack.c.b16 %v1177, %v1176
  %1242 = vmatprep.subr.bf16.mxu0 0
  %1243 = vmatpush1.bf16.msra.mxu0 %v1178
  %1244 = vmatprep.subr.bf16.mxu0 0
  %1245 = vmatpush1.bf16.msra.mxu0 %v1179
  %1246 = vmatprep.subr.bf16.mxu0 0
  %1247 = vmatpush1.bf16.msra.mxu0 %v1180
  %1248 = vmatprep.subr.bf16.mxu0 0
  %1249 = vmatpush1.bf16.msra.mxu0 %v1181
  %1250 = vmatprep.subr.bf16.mxu0 0
  %1251 = vmatpush1.bf16.msra.mxu0 %v1182
  %1252 = vmatprep.subr.bf16.mxu0 0
  %1253 = vmatpush1.bf16.msra.mxu0 %v1183
  %1254 = vmatprep.subr.bf16.mxu0 0
  %1255 = vmatpush1.bf16.msra.mxu0 %v1184
  %1256 = vmatprep.subr.bf16.mxu0 0
  %1257 = vmatpush1.bf16.msra.mxu0 %v1185
  %1258 = vmatprep.subr.bf16.mxu0 0
  %1259 = vmatpush1.bf16.msra.mxu0 %v1186
  %1260 = vmatprep.subr.bf16.mxu0 0
  %1261 = vmatpush1.bf16.msra.mxu0 %v1187
  %1262 = vmatprep.subr.bf16.mxu0 0
  %1263 = vmatpush1.bf16.msra.mxu0 %v1188
  %1264 = vmatprep.subr.bf16.mxu0 0
  %1265 = vmatpush1.bf16.msra.mxu0 %v1189
  %1266 = vmatprep.subr.bf16.mxu0 0
  %1267 = vmatpush1.bf16.msra.mxu0 %v1190
  %1268 = vmatprep.subr.bf16.mxu0 0
  %1269 = vmatpush1.bf16.msra.mxu0 %v1191
  %1270 = vmatprep.subr.bf16.mxu0 0
  %1271 = vmatpush1.bf16.msra.mxu0 %v1192
  %1272 = vmatprep.subr.bf16.mxu0 0
  %1273 = vmatpush1.bf16.msra.mxu0 %v1193
  %1274 = vmatprep.mubr.bf16.mxu0 %v916
  %1275 = vmatmul.mubr.bf16.gmra.mrb[0].mxu0 %v915
  %v1276 = vpop.f32.mrb[0].mxu0
  %v1277 = vadd.f32 %v1048, %v1276
  %v1278 = vpop.f32.mrb[0].mxu0
  %v1279 = vpop.f32.mrb[0].mxu0
  %v1280 = vadd.f32 %v1048, %v1279
  %v1281 = vpop.f32.mrb[0].mxu0
  %1282 = vmatprep.mubr.bf16.mxu0 %v920
  %1283 = vmatmul.mubr.bf16.gmra.mrb[0].mxu0 %v919
  %v1284 = vpop.f32.mrb[0].mxu0
  %v1285 = vadd.f32 %v1048, %v1284
  %v1286 = vpop.f32.mrb[0].mxu0
  %v1287 = vpop.f32.mrb[0].mxu0
  %v1288 = vadd.f32 %v1048, %v1287
  %v1289 = vpop.f32.mrb[0].mxu0
  %1290 = vmatprep.mubr.bf16.mxu0 %v924
  %1291 = vmatmul.mubr.bf16.gmra.mrb[0].mxu0 %v923
  %v1292 = vpop.f32.mrb[0].mxu0
  %v1293 = vadd.f32 %v1048, %v1292
  %v1294 = vpop.f32.mrb[0].mxu0
  %v1295 = vpop.f32.mrb[0].mxu0
  %v1296 = vadd.f32 %v1048, %v1295
  %v1297 = vpop.f32.mrb[0].mxu0
  %1298 = vmatprep.mubr.bf16.mxu0 %v928
  %1299 = vmatmul.mubr.bf16.gmra.mrb[0].mxu0 %v927
  %v1300 = vpop.f32.mrb[0].mxu0
  %v1301 = vadd.f32 %v1048, %v1300
  %v1302 = vpop.f32.mrb[0].mxu0
  %v1303 = vpop.f32.mrb[0].mxu0
  %v1304 = vadd.f32 %v1048, %v1303
  %v1305 = vpop.f32.mrb[0].mxu0
  %1306 = vmatprep.mubr.bf16.mxu0 %v932
  %1307 = vmatmul.mubr.bf16.gmra.mrb[0].mxu0 %v931
  %v1308 = vpop.f32.mrb[0].mxu0
  %v1309 = vadd.f32 %v1048, %v1308
  %v1310 = vpop.f32.mrb[0].mxu0
  %v1311 = vpop.f32.mrb[0].mxu0
  %v1312 = vadd.f32 %v1048, %v1311
  %v1313 = vpop.f32.mrb[0].mxu0
  %1314 = vmatprep.mubr.bf16.mxu0 %v936
  %1315 = vmatmul.mubr.bf16.gmra.mrb[0].mxu0 %v935
  %v1316 = vpop.f32.mrb[0].mxu0
  %v1317 = vadd.f32 %v1048, %v1316
  %v1318 = vpop.f32.mrb[0].mxu0
  %v1319 = vpop.f32.mrb[0].mxu0
  %v1320 = vadd.f32 %v1048, %v1319
  %v1321 = vpop.f32.mrb[0].mxu0
  %1322 = vmatprep.mubr.bf16.mxu0 %v940
  %1323 = vmatmul.mubr.bf16.gmra.mrb[0].mxu0 %v939
  %v1324 = vpop.f32.mrb[0].mxu0
  %v1325 = vadd.f32 %v1048, %v1324
  %v1326 = vpop.f32.mrb[0].mxu0
  %v1327 = vpop.f32.mrb[0].mxu0
  %v1328 = vadd.f32 %v1048, %v1327
  %v1329 = vpop.f32.mrb[0].mxu0
  %1330 = vmatprep.mubr.bf16.mxu0 %v944
  %1331 = vmatmul.mubr.bf16.gmra.mrb[0].mxu0 %v943
  %v1332 = vpop.f32.mrb[0].mxu0
  %v1333 = vadd.f32 %v1048, %v1332
  %v1334 = vpop.f32.mrb[0].mxu0
  %v1335 = vpop.f32.mrb[0].mxu0
  %v1336 = vadd.f32 %v1048, %v1335
  %v1337 = vpop.f32.mrb[0].mxu0
  %1338 = vmatprep.mubr.bf16.mxu0 %v948
  %1339 = vmatmul.mubr.bf16.gmra.mrb[0].mxu0 %v947
  %v1340 = vpop.f32.mrb[0].mxu0
  %v1341 = vadd.f32 %v1048, %v1340
  %v1342 = vpop.f32.mrb[0].mxu0
  %v1343 = vpop.f32.mrb[0].mxu0
  %v1344 = vadd.f32 %v1048, %v1343
  %v1345 = vpop.f32.mrb[0].mxu0
  %1346 = vmatprep.mubr.bf16.mxu0 %v952
  %1347 = vmatmul.mubr.bf16.gmra.mrb[0].mxu0 %v951
  %v1348 = vpop.f32.mrb[0].mxu0
  %v1349 = vadd.f32 %v1048, %v1348
  %v1350 = vpop.f32.mrb[0].mxu0
  %v1351 = vpop.f32.mrb[0].mxu0
  %v1352 = vadd.f32 %v1048, %v1351
  %v1353 = vpop.f32.mrb[0].mxu0
  %1354 = vmatprep.mubr.bf16.mxu0 %v956
  %1355 = vmatmul.mubr.bf16.gmra.mrb[0].mxu0 %v955
  %v1356 = vpop.f32.mrb[0].mxu0
  %v1357 = vadd.f32 %v1048, %v1356
  %v1358 = vpop.f32.mrb[0].mxu0
  %v1359 = vpop.f32.mrb[0].mxu0
  %v1360 = vadd.f32 %v1048, %v1359
  %v1361 = vpop.f32.mrb[0].mxu0
  %1362 = vmatprep.mubr.bf16.mxu0 %v960
  %1363 = vmatmul.mubr.bf16.gmra.mrb[0].mxu0 %v959
  %v1364 = vpop.f32.mrb[0].mxu0
  %v1365 = vadd.f32 %v1048, %v1364
  %v1366 = vpop.f32.mrb[0].mxu0
  %v1367 = vpop.f32.mrb[0].mxu0
  %v1368 = vadd.f32 %v1048, %v1367
  %v1369 = vpop.f32.mrb[0].mxu0
  %1370 = vmatprep.mubr.bf16.mxu0 %v964
  %1371 = vmatmul.mubr.bf16.gmra.mrb[0].mxu0 %v963
  %v1372 = vpop.f32.mrb[0].mxu0
  %v1373 = vadd.f32 %v1048, %v1372
  %v1374 = vpop.f32.mrb[0].mxu0
  %v1375 = vpop.f32.mrb[0].mxu0
  %v1376 = vadd.f32 %v1048, %v1375
  %v1377 = vpop.f32.mrb[0].mxu0
  %1378 = vmatprep.mubr.bf16.mxu0 %v968
  %1379 = vmatmul.mubr.bf16.gmra.mrb[0].mxu0 %v967
  %v1380 = vpop.f32.mrb[0].mxu0
  %v1381 = vadd.f32 %v1048, %v1380
  %v1382 = vpop.f32.mrb[0].mxu0
  %v1383 = vpop.f32.mrb[0].mxu0
  %v1384 = vadd.f32 %v1048, %v1383
  %v1385 = vpop.f32.mrb[0].mxu0
  %1386 = vmatprep.mubr.bf16.mxu0 %v972
  %1387 = vmatmul.mubr.bf16.gmra.mrb[0].mxu0 %v971
  %v1388 = vpop.f32.mrb[0].mxu0
  %v1389 = vadd.f32 %v1048, %v1388
  %v1390 = vpop.f32.mrb[0].mxu0
  %v1391 = vpop.f32.mrb[0].mxu0
  %v1392 = vadd.f32 %v1048, %v1391
  %v1393 = vpop.f32.mrb[0].mxu0
  %1394 = vmatprep.mubr.bf16.mxu0 %v976
  %1395 = vmatmul.mubr.bf16.gmra.mrb[0].mxu0 %v975
  %v1396 = vpop.f32.mrb[0].mxu0
  %v1397 = vadd.f32 %v1048, %v1396
  %v1398 = vpop.f32.mrb[0].mxu0
  %v1399 = vpop.f32.mrb[0].mxu0
  %v1400 = vadd.f32 %v1048, %v1399
  %v1401 = vpop.f32.mrb[0].mxu0
  %1402 = vdwg.mxu0
  %1403 = vmatprep.subr.bf16.mxu0 0
  %1404 = vmatpush1.bf16.msra.mxu0 %v1194
  %1405 = vmatprep.subr.bf16.mxu0 0
  %1406 = vmatpush1.bf16.msra.mxu0 %v1195
  %1407 = vmatprep.subr.bf16.mxu0 0
  %1408 = vmatpush1.bf16.msra.mxu0 %v1196
  %1409 = vmatprep.subr.bf16.mxu0 0
  %1410 = vmatpush1.bf16.msra.mxu0 %v1197
  %1411 = vmatprep.subr.bf16.mxu0 0
  %1412 = vmatpush1.bf16.msra.mxu0 %v1198
  %1413 = vmatprep.subr.bf16.mxu0 0
  %1414 = vmatpush1.bf16.msra.mxu0 %v1199
  %1415 = vmatprep.subr.bf16.mxu0 0
  %1416 = vmatpush1.bf16.msra.mxu0 %v1200
  %1417 = vmatprep.subr.bf16.mxu0 0
  %1418 = vmatpush1.bf16.msra.mxu0 %v1201
  %1419 = vmatprep.subr.bf16.mxu0 0
  %1420 = vmatpush1.bf16.msra.mxu0 %v1202
  %1421 = vmatprep.subr.bf16.mxu0 0
  %1422 = vmatpush1.bf16.msra.mxu0 %v1203
  %1423 = vmatprep.subr.bf16.mxu0 0
  %1424 = vmatpush1.bf16.msra.mxu0 %v1204
  %1425 = vmatprep.subr.bf16.mxu0 0
  %1426 = vmatpush1.bf16.msra.mxu0 %v1205
  %1427 = vmatprep.subr.bf16.mxu0 0
  %1428 = vmatpush1.bf16.msra.mxu0 %v1206
  %1429 = vmatprep.subr.bf16.mxu0 0
  %1430 = vmatpush1.bf16.msra.mxu0 %v1207
  %1431 = vmatprep.subr.bf16.mxu0 0
  %1432 = vmatpush1.bf16.msra.mxu0 %v1208
  %1433 = vmatprep.subr.bf16.mxu0 0
  %1434 = vmatpush1.bf16.msra.mxu0 %v1209
  %1435 = vmatprep.mubr.bf16.mxu0 %v918
  %1436 = vmatmul.mubr.bf16.gmra.mrb[0].mxu0 %v917
  %v1437 = vpop.f32.mrb[0].mxu0
  %v1438 = vadd.f32 %v1277, %v1437
  %v1439 = vpop.f32.mrb[0].mxu0
  %v1440 = vpop.f32.mrb[0].mxu0
  %v1441 = vadd.f32 %v1280, %v1440
  %v1442 = vpop.f32.mrb[0].mxu0
  %1443 = vmatprep.mubr.bf16.mxu0 %v922
  %1444 = vmatmul.mubr.bf16.gmra.mrb[0].mxu0 %v921
  %v1445 = vpop.f32.mrb[0].mxu0
  %v1446 = vadd.f32 %v1285, %v1445
  %v1447 = vpop.f32.mrb[0].mxu0
  %v1448 = vpop.f32.mrb[0].mxu0
  %v1449 = vadd.f32 %v1288, %v1448
  %v1450 = vpop.f32.mrb[0].mxu0
  %1451 = vmatprep.mubr.bf16.mxu0 %v926
  %1452 = vmatmul.mubr.bf16.gmra.mrb[0].mxu0 %v925
  %v1453 = vpop.f32.mrb[0].mxu0
  %v1454 = vadd.f32 %v1293, %v1453
  %v1455 = vpop.f32.mrb[0].mxu0
  %v1456 = vpop.f32.mrb[0].mxu0
  %v1457 = vadd.f32 %v1296, %v1456
  %v1458 = vpop.f32.mrb[0].mxu0
  %1459 = vmatprep.mubr.bf16.mxu0 %v930
  %1460 = vmatmul.mubr.bf16.gmra.mrb[0].mxu0 %v929
  %v1461 = vpop.f32.mrb[0].mxu0
  %v1462 = vadd.f32 %v1301, %v1461
  %v1463 = vpop.f32.mrb[0].mxu0
  %v1464 = vpop.f32.mrb[0].mxu0
  %v1465 = vadd.f32 %v1304, %v1464
  %v1466 = vpop.f32.mrb[0].mxu0
  %1467 = vmatprep.mubr.bf16.mxu0 %v934
  %1468 = vmatmul.mubr.bf16.gmra.mrb[0].mxu0 %v933
  %v1469 = vpop.f32.mrb[0].mxu0
  %v1470 = vadd.f32 %v1309, %v1469
  %v1471 = vpop.f32.mrb[0].mxu0
  %v1472 = vpop.f32.mrb[0].mxu0
  %v1473 = vadd.f32 %v1312, %v1472
  %v1474 = vpop.f32.mrb[0].mxu0
  %1475 = vmatprep.mubr.bf16.mxu0 %v938
  %1476 = vmatmul.mubr.bf16.gmra.mrb[0].mxu0 %v937
  %v1477 = vpop.f32.mrb[0].mxu0
  %v1478 = vadd.f32 %v1317, %v1477
  %v1479 = vpop.f32.mrb[0].mxu0
  %v1480 = vpop.f32.mrb[0].mxu0
  %v1481 = vadd.f32 %v1320, %v1480
  %v1482 = vpop.f32.mrb[0].mxu0
  %1483 = vmatprep.mubr.bf16.mxu0 %v942
  %1484 = vmatmul.mubr.bf16.gmra.mrb[0].mxu0 %v941
  %v1485 = vpop.f32.mrb[0].mxu0
  %v1486 = vadd.f32 %v1325, %v1485
  %v1487 = vpop.f32.mrb[0].mxu0
  %v1488 = vpop.f32.mrb[0].mxu0
  %v1489 = vadd.f32 %v1328, %v1488
  %v1490 = vpop.f32.mrb[0].mxu0
  %1491 = vmatprep.mubr.bf16.mxu0 %v946
  %1492 = vmatmul.mubr.bf16.gmra.mrb[0].mxu0 %v945
  %v1493 = vpop.f32.mrb[0].mxu0
  %v1494 = vadd.f32 %v1333, %v1493
  %v1495 = vpop.f32.mrb[0].mxu0
  %v1496 = vpop.f32.mrb[0].mxu0
  %v1497 = vadd.f32 %v1336, %v1496
  %v1498 = vpop.f32.mrb[0].mxu0
  %1499 = vmatprep.mubr.bf16.mxu0 %v950
  %1500 = vmatmul.mubr.bf16.gmra.mrb[0].mxu0 %v949
  %v1501 = vpop.f32.mrb[0].mxu0
  %v1502 = vadd.f32 %v1341, %v1501
  %v1503 = vpop.f32.mrb[0].mxu0
  %v1504 = vpop.f32.mrb[0].mxu0
  %v1505 = vadd.f32 %v1344, %v1504
  %v1506 = vpop.f32.mrb[0].mxu0
  %1507 = vmatprep.mubr.bf16.mxu0 %v954
  %1508 = vmatmul.mubr.bf16.gmra.mrb[0].mxu0 %v953
  %v1509 = vpop.f32.mrb[0].mxu0
  %v1510 = vadd.f32 %v1349, %v1509
  %v1511 = vpop.f32.mrb[0].mxu0
  %v1512 = vpop.f32.mrb[0].mxu0
  %v1513 = vadd.f32 %v1352, %v1512
  %v1514 = vpop.f32.mrb[0].mxu0
  %1515 = vmatprep.mubr.bf16.mxu0 %v958
  %1516 = vmatmul.mubr.bf16.gmra.mrb[0].mxu0 %v957
  %v1517 = vpop.f32.mrb[0].mxu0
  %v1518 = vadd.f32 %v1357, %v1517
  %v1519 = vpop.f32.mrb[0].mxu0
  %v1520 = vpop.f32.mrb[0].mxu0
  %v1521 = vadd.f32 %v1360, %v1520
  %v1522 = vpop.f32.mrb[0].mxu0
  %1523 = vmatprep.mubr.bf16.mxu0 %v962
  %1524 = vmatmul.mubr.bf16.gmra.mrb[0].mxu0 %v961
  %v1525 = vpop.f32.mrb[0].mxu0
  %v1526 = vadd.f32 %v1365, %v1525
  %v1527 = vpop.f32.mrb[0].mxu0
  %v1528 = vpop.f32.mrb[0].mxu0
  %v1529 = vadd.f32 %v1368, %v1528
  %v1530 = vpop.f32.mrb[0].mxu0
  %1531 = vmatprep.mubr.bf16.mxu0 %v966
  %1532 = vmatmul.mubr.bf16.gmra.mrb[0].mxu0 %v965
  %v1533 = vpop.f32.mrb[0].mxu0
  %v1534 = vadd.f32 %v1373, %v1533
  %v1535 = vpop.f32.mrb[0].mxu0
  %v1536 = vpop.f32.mrb[0].mxu0
  %v1537 = vadd.f32 %v1376, %v1536
  %v1538 = vpop.f32.mrb[0].mxu0
  %1539 = vmatprep.mubr.bf16.mxu0 %v970
  %1540 = vmatmul.mubr.bf16.gmra.mrb[0].mxu0 %v969
  %v1541 = vpop.f32.mrb[0].mxu0
  %v1542 = vadd.f32 %v1381, %v1541
  %v1543 = vpop.f32.mrb[0].mxu0
  %v1544 = vpop.f32.mrb[0].mxu0
  %v1545 = vadd.f32 %v1384, %v1544
  %v1546 = vpop.f32.mrb[0].mxu0
  %1547 = vmatprep.mubr.bf16.mxu0 %v974
  %1548 = vmatmul.mubr.bf16.gmra.mrb[0].mxu0 %v973
  %v1549 = vpop.f32.mrb[0].mxu0
  %v1550 = vadd.f32 %v1389, %v1549
  %v1551 = vpop.f32.mrb[0].mxu0
  %v1552 = vpop.f32.mrb[0].mxu0
  %v1553 = vadd.f32 %v1392, %v1552
  %v1554 = vpop.f32.mrb[0].mxu0
  %1555 = vmatprep.mubr.bf16.mxu0 %v978
  %1556 = vmatmul.mubr.bf16.gmra.mrb[0].mxu0 %v977
  %v1557 = vpop.f32.mrb[0].mxu0
  %v1558 = vadd.f32 %v1397, %v1557
  %v1559 = vpop.f32.mrb[0].mxu0
  %v1560 = vpop.f32.mrb[0].mxu0
  %v1561 = vadd.f32 %v1400, %v1560
  %v1562 = vpop.f32.mrb[0].mxu0
  %1563 = vdwg.mxu0
  %v1564 = vadd.f32 %v139, %v1438
  %v1565 = vadd.f32 %v140, %v1441
  %v1566 = vadd.f32 %v141, %v1446
  %v1567 = vadd.f32 %v142, %v1449
  %v1568 = vadd.f32 %v143, %v1454
  %v1569 = vadd.f32 %v144, %v1457
  %v1570 = vadd.f32 %v145, %v1462
  %v1571 = vadd.f32 %v146, %v1465
  %v1572 = vadd.f32 %v147, %v1470
  %v1573 = vadd.f32 %v148, %v1473
  %v1574 = vadd.f32 %v149, %v1478
  %v1575 = vadd.f32 %v150, %v1481
  %v1576 = vadd.f32 %v151, %v1486
  %v1577 = vadd.f32 %v152, %v1489
  %v1578 = vadd.f32 %v153, %v1494
  %v1579 = vadd.f32 %v154, %v1497
  %v1580 = vadd.f32 %v155, %v1502
  %v1581 = vadd.f32 %v156, %v1505
  %v1582 = vadd.f32 %v157, %v1510
  %v1583 = vadd.f32 %v158, %v1513
  %v1584 = vadd.f32 %v159, %v1518
  %v1585 = vadd.f32 %v160, %v1521
  %v1586 = vadd.f32 %v161, %v1526
  %v1587 = vadd.f32 %v162, %v1529
  %v1588 = vadd.f32 %v163, %v1534
  %v1589 = vadd.f32 %v164, %v1537
  %v1590 = vadd.f32 %v165, %v1542
  %v1591 = vadd.f32 %v166, %v1545
  %v1592 = vadd.f32 %v167, %v1550
  %v1593 = vadd.f32 %v168, %v1553
  %v1594 = vadd.f32 %v169, %v1558
  %v1595 = vadd.f32 %v170, %v1561
  %v1596 = vmul.f32 %v1564, 2.0
  %v1597 = vmul.f32 %v1565, 2.0
  %v1598 = vmul.f32 %v1566, 2.0
  %v1599 = vmul.f32 %v1567, 2.0
  %v1600 = vmul.f32 %v1568, 2.0
  %v1601 = vmul.f32 %v1569, 2.0
  %v1602 = vmul.f32 %v1570, 2.0
  %v1603 = vmul.f32 %v1571, 2.0
  %v1604 = vmul.f32 %v1572, 2.0
  %v1605 = vmul.f32 %v1573, 2.0
  %v1606 = vmul.f32 %v1574, 2.0
  %v1607 = vmul.f32 %v1575, 2.0
  %v1608 = vmul.f32 %v1576, 2.0
  %v1609 = vmul.f32 %v1577, 2.0
  %v1610 = vmul.f32 %v1578, 2.0
  %v1611 = vmul.f32 %v1579, 2.0
  %v1612 = vmul.f32 %v1580, 2.0
  %v1613 = vmul.f32 %v1581, 2.0
  %v1614 = vmul.f32 %v1582, 2.0
  %v1615 = vmul.f32 %v1583, 2.0
  %v1616 = vmul.f32 %v1584, 2.0
  %v1617 = vmul.f32 %v1585, 2.0
  %v1618 = vmul.f32 %v1586, 2.0
  %v1619 = vmul.f32 %v1587, 2.0
  %v1620 = vmul.f32 %v1588, 2.0
  %v1621 = vmul.f32 %v1589, 2.0
  %v1622 = vmul.f32 %v1590, 2.0
  %v1623 = vmul.f32 %v1591, 2.0
  %v1624 = vmul.f32 %v1592, 2.0
  %v1625 = vmul.f32 %v1593, 2.0
  %v1626 = vmul.f32 %v1594, 2.0
  %v1627 = vmul.f32 %v1595, 2.0
  %v1628 = vpack.c.bf16 %v1597, %v1596
  %v1629 = vpack.c.bf16 %v1599, %v1598
  %v1630 = vpack.c.bf16 %v1601, %v1600
  %v1631 = vpack.c.bf16 %v1603, %v1602
  %v1632 = vpack.c.bf16 %v1605, %v1604
  %v1633 = vpack.c.bf16 %v1607, %v1606
  %v1634 = vpack.c.bf16 %v1609, %v1608
  %v1635 = vpack.c.bf16 %v1611, %v1610
  %v1636 = vpack.c.bf16 %v1613, %v1612
  %v1637 = vpack.c.bf16 %v1615, %v1614
  %v1638 = vpack.c.bf16 %v1617, %v1616
  %v1639 = vpack.c.bf16 %v1619, %v1618
  %v1640 = vpack.c.bf16 %v1621, %v1620
  %v1641 = vpack.c.bf16 %v1623, %v1622
  %v1642 = vpack.c.bf16 %v1625, %v1624
  %v1643 = vpack.c.bf16 %v1627, %v1626
  %v1660 = vunpack.c.l.b16 %v1628
  %v1661 = vunpack.c.h.b16 %v1628
  %v1662 = vunpack.c.l.b16 %v1629
  %v1663 = vunpack.c.h.b16 %v1629
  %v1664 = vunpack.c.l.b16 %v1630
  %v1665 = vunpack.c.h.b16 %v1630
  %v1666 = vunpack.c.l.b16 %v1631
  %v1667 = vunpack.c.h.b16 %v1631
  %v1668 = vunpack.c.l.b16 %v1632
  %v1669 = vunpack.c.h.b16 %v1632
  %v1670 = vunpack.c.l.b16 %v1633
  %v1671 = vunpack.c.h.b16 %v1633
  %v1672 = vunpack.c.l.b16 %v1634
  %v1673 = vunpack.c.h.b16 %v1634
  %v1674 = vunpack.c.l.b16 %v1635
  %v1675 = vunpack.c.h.b16 %v1635
  %v1676 = vunpack.c.l.b16 %v1636
  %v1677 = vunpack.c.h.b16 %v1636
  %v1678 = vunpack.c.l.b16 %v1637
  %v1679 = vunpack.c.h.b16 %v1637
  %v1680 = vunpack.c.l.b16 %v1638
  %v1681 = vunpack.c.h.b16 %v1638
  %v1682 = vunpack.c.l.b16 %v1639
  %v1683 = vunpack.c.h.b16 %v1639
  %v1684 = vunpack.c.l.b16 %v1640
  %v1685 = vunpack.c.h.b16 %v1640
  %v1686 = vunpack.c.l.b16 %v1641
  %v1687 = vunpack.c.h.b16 %v1641
  %v1688 = vunpack.c.l.b16 %v1642
  %v1689 = vunpack.c.h.b16 %v1642
  %v1690 = vunpack.c.l.b16 %v1643
  %v1691 = vunpack.c.h.b16 %v1643
  %v1692 = vpack.c.b16 %v1660, %v1660
  %v1693 = vpack.c.b16 %v1661, %v1661
  %v1694 = vpack.c.b16 %v1662, %v1662
  %v1695 = vpack.c.b16 %v1663, %v1663
  %v1696 = vpack.c.b16 %v1664, %v1664
  %v1697 = vpack.c.b16 %v1665, %v1665
  %v1698 = vpack.c.b16 %v1666, %v1666
  %v1699 = vpack.c.b16 %v1667, %v1667
  %v1700 = vpack.c.b16 %v1668, %v1668
  %v1701 = vpack.c.b16 %v1669, %v1669
  %v1702 = vpack.c.b16 %v1670, %v1670
  %v1703 = vpack.c.b16 %v1671, %v1671
  %v1704 = vpack.c.b16 %v1672, %v1672
  %v1705 = vpack.c.b16 %v1673, %v1673
  %v1706 = vpack.c.b16 %v1674, %v1674
  %v1707 = vpack.c.b16 %v1675, %v1675
  %v1708 = vpack.c.b16 %v1676, %v1676
  %v1709 = vpack.c.b16 %v1677, %v1677
  %v1710 = vpack.c.b16 %v1678, %v1678
  %v1711 = vpack.c.b16 %v1679, %v1679
  %v1712 = vpack.c.b16 %v1680, %v1680
  %v1713 = vpack.c.b16 %v1681, %v1681
  %v1714 = vpack.c.b16 %v1682, %v1682
  %v1715 = vpack.c.b16 %v1683, %v1683
  %v1716 = vpack.c.b16 %v1684, %v1684
  %v1717 = vpack.c.b16 %v1685, %v1685
  %v1718 = vpack.c.b16 %v1686, %v1686
  %v1719 = vpack.c.b16 %v1687, %v1687
  %v1720 = vpack.c.b16 %v1688, %v1688
  %v1721 = vpack.c.b16 %v1689, %v1689
  %v1722 = vpack.c.b16 %v1690, %v1690
  %v1723 = vpack.c.b16 %v1691, %v1691
  %1756 = vst [vmem:[%s7] sm:$0xf] %v1692
  %1757 = vst [vmem:[%s7 + $0x4] sm:$0xf] %v1693
  %1758 = vst [vmem:[%s7 + $0x8] sm:$0xf] %v1694
  %1759 = vst [vmem:[%s7 + $0xc] sm:$0xf] %v1695
  %1760 = vst [vmem:[%s7 + $0x10] sm:$0xf] %v1696
  %1761 = vst [vmem:[%s7 + $0x14] sm:$0xf] %v1697
  %1762 = vst [vmem:[%s7 + $0x18] sm:$0xf] %v1698
  %1763 = vst [vmem:[%s7 + $0x1c] sm:$0xf] %v1699
  %1764 = vst [vmem:[%s7 + $0x20] sm:$0xf] %v1700
  %1765 = vst [vmem:[%s7 + $0x24] sm:$0xf] %v1701
  %1766 = vst [vmem:[%s7 + $0x28] sm:$0xf] %v1702
  %1767 = vst [vmem:[%s7 + $0x2c] sm:$0xf] %v1703
  %1768 = vst [vmem:[%s7 + $0x30] sm:$0xf] %v1704
  %1769 = vst [vmem:[%s7 + $0x34] sm:$0xf] %v1705
  %1770 = vst [vmem:[%s7 + $0x38] sm:$0xf] %v1706
  %1771 = vst [vmem:[%s7 + $0x3c] sm:$0xf] %v1707
  %1772 = vst [vmem:[%s7 + $0x40] sm:$0xf] %v1708
  %1773 = vst [vmem:[%s7 + $0x44] sm:$0xf] %v1709
  %1774 = vst [vmem:[%s7 + $0x48] sm:$0xf] %v1710
  %1775 = vst [vmem:[%s7 + $0x4c] sm:$0xf] %v1711
  %1776 = vst [vmem:[%s7 + $0x50] sm:$0xf] %v1712
  %1777 = vst [vmem:[%s7 + $0x54] sm:$0xf] %v1713
  %1778 = vst [vmem:[%s7 + $0x58] sm:$0xf] %v1714
  %1779 = vst [vmem:[%s7 + $0x5c] sm:$0xf] %v1715
  %1780 = vst [vmem:[%s7 + $0x60] sm:$0xf] %v1716
  %1781 = vst [vmem:[%s7 + $0x64] sm:$0xf] %v1717
  %1782 = vst [vmem:[%s7 + $0x68] sm:$0xf] %v1718
  %1783 = vst [vmem:[%s7 + $0x6c] sm:$0xf] %v1719
  %1784 = vst [vmem:[%s7 + $0x70] sm:$0xf] %v1720
  %1785 = vst [vmem:[%s7 + $0x74] sm:$0xf] %v1721
  %1786 = vst [vmem:[%s7 + $0x78] sm:$0xf] %v1722
  %1787 = vst [vmem:[%s7 + $0x7c] sm:$0xf] %v1723
  %v1788 = vadd.f32 %v1596, %v1597
  %v1789 = vadd.f32 %v1788, %v1598
  %v1790 = vadd.f32 %v1789, %v1599
  %v1791 = vadd.f32 %v1790, %v1600
  %v1792 = vadd.f32 %v1791, %v1601
  %v1793 = vadd.f32 %v1792, %v1602
  %v1794 = vadd.f32 %v1793, %v1603
  %v1795 = vadd.f32 %v1794, %v1604
  %v1796 = vadd.f32 %v1795, %v1605
  %v1797 = vadd.f32 %v1796, %v1606
  %v1798 = vadd.f32 %v1797, %v1607
  %v1799 = vadd.f32 %v1798, %v1608
  %v1800 = vadd.f32 %v1799, %v1609
  %v1801 = vadd.f32 %v1800, %v1610
  %v1802 = vadd.f32 %v1801, %v1611
  %v1803 = vadd.f32 %v1802, %v1612
  %v1804 = vadd.f32 %v1803, %v1613
  %v1805 = vadd.f32 %v1804, %v1614
  %v1806 = vadd.f32 %v1805, %v1615
  %v1807 = vadd.f32 %v1806, %v1616
  %v1808 = vadd.f32 %v1807, %v1617
  %v1809 = vadd.f32 %v1808, %v1618
  %v1810 = vadd.f32 %v1809, %v1619
  %v1811 = vadd.f32 %v1810, %v1620
  %v1812 = vadd.f32 %v1811, %v1621
  %v1813 = vadd.f32 %v1812, %v1622
  %v1814 = vadd.f32 %v1813, %v1623
  %v1815 = vadd.f32 %v1814, %v1624
  %v1816 = vadd.f32 %v1815, %v1625
  %v1817 = vadd.f32 %v1816, %v1626
  %v1818 = vadd.f32 %v1817, %v1627
  %v1819 = vrot.slane %v1818, 4
  %v1820 = vadd.f32 %v1818, %v1819
  %v1821 = vrot.slane %v1820, 2
  %v1822 = vadd.f32 %v1820, %v1821
  %v1823 = vrot.slane %v1822, 1
  %v1824 = vadd.f32 %v1822, %v1823
  %v1825 = vmul.f32 %v1596, %v1596
  %v1826 = vmul.f32 %v1597, %v1597
  %v1827 = vmul.f32 %v1598, %v1598
  %v1828 = vmul.f32 %v1599, %v1599
  %v1829 = vmul.f32 %v1600, %v1600
  %v1830 = vmul.f32 %v1601, %v1601
  %v1831 = vmul.f32 %v1602, %v1602
  %v1832 = vmul.f32 %v1603, %v1603
  %v1833 = vmul.f32 %v1604, %v1604
  %v1834 = vmul.f32 %v1605, %v1605
  %v1835 = vmul.f32 %v1606, %v1606
  %v1836 = vmul.f32 %v1607, %v1607
  %v1837 = vmul.f32 %v1608, %v1608
  %v1838 = vmul.f32 %v1609, %v1609
  %v1839 = vmul.f32 %v1610, %v1610
  %v1840 = vmul.f32 %v1611, %v1611
  %v1841 = vmul.f32 %v1612, %v1612
  %v1842 = vmul.f32 %v1613, %v1613
  %v1843 = vmul.f32 %v1614, %v1614
  %v1844 = vmul.f32 %v1615, %v1615
  %v1845 = vmul.f32 %v1616, %v1616
  %v1846 = vmul.f32 %v1617, %v1617
  %v1847 = vmul.f32 %v1618, %v1618
  %v1848 = vmul.f32 %v1619, %v1619
  %v1849 = vmul.f32 %v1620, %v1620
  %v1850 = vmul.f32 %v1621, %v1621
  %v1851 = vmul.f32 %v1622, %v1622
  %v1852 = vmul.f32 %v1623, %v1623
  %v1853 = vmul.f32 %v1624, %v1624
  %v1854 = vmul.f32 %v1625, %v1625
  %v1855 = vmul.f32 %v1626, %v1626
  %v1856 = vmul.f32 %v1627, %v1627
  %v1857 = vadd.f32 %v1825, %v1826
  %v1858 = vadd.f32 %v1857, %v1827
  %v1859 = vadd.f32 %v1858, %v1828
  %v1860 = vadd.f32 %v1859, %v1829
  %v1861 = vadd.f32 %v1860, %v1830
  %v1862 = vadd.f32 %v1861, %v1831
  %v1863 = vadd.f32 %v1862, %v1832
  %v1864 = vadd.f32 %v1863, %v1833
  %v1865 = vadd.f32 %v1864, %v1834
  %v1866 = vadd.f32 %v1865, %v1835
  %v1867 = vadd.f32 %v1866, %v1836
  %v1868 = vadd.f32 %v1867, %v1837
  %v1869 = vadd.f32 %v1868, %v1838
  %v1870 = vadd.f32 %v1869, %v1839
  %v1871 = vadd.f32 %v1870, %v1840
  %v1872 = vadd.f32 %v1871, %v1841
  %v1873 = vadd.f32 %v1872, %v1842
  %v1874 = vadd.f32 %v1873, %v1843
  %v1875 = vadd.f32 %v1874, %v1844
  %v1876 = vadd.f32 %v1875, %v1845
  %v1877 = vadd.f32 %v1876, %v1846
  %v1878 = vadd.f32 %v1877, %v1847
  %v1879 = vadd.f32 %v1878, %v1848
  %v1880 = vadd.f32 %v1879, %v1849
  %v1881 = vadd.f32 %v1880, %v1850
  %v1882 = vadd.f32 %v1881, %v1851
  %v1883 = vadd.f32 %v1882, %v1852
  %v1884 = vadd.f32 %v1883, %v1853
  %v1885 = vadd.f32 %v1884, %v1854
  %v1886 = vadd.f32 %v1885, %v1855
  %v1887 = vadd.f32 %v1886, %v1856
  %v1888 = vrot.slane %v1887, 4
  %v1889 = vadd.f32 %v1887, %v1888
  %v1890 = vrot.slane %v1889, 2
  %v1891 = vadd.f32 %v1889, %v1890
  %v1892 = vrot.slane %v1891, 1
  %v1893 = vadd.f32 %v1891, %v1892
  %vm1894 = vcmask 1040384
  %v1895 = vsel %vm1894, %v1824, %v1893
  %1896 = vst [vmem:[%s8] sm:$0x3] %v1895
  // Predicated region
  $region30: #{mha_layer1_forward.4} parent=0 // pred_check
    _
  $region31: #{mha_layer1_forward.4} parent=0 // pred_check_branch
    %1898 = sbr.rel (0) target = $region33
  $region32: #{mha_layer1_forward.4} parent=0 // pred_region
    _
  $region33: #{mha_layer1_forward.4} parent=0 // pred_fallthru
    _
  // Predicated region
  $region34: #{mha_layer1_forward.4} parent=0 // pred_check
    _
  $region35: #{mha_layer1_forward.4} parent=0 // pred_check_branch
    %1900 = sbr.rel (0) target = $region37
  $region36: #{mha_layer1_forward.4} parent=0 // pred_region
    _
  $region37: #{mha_layer1_forward.4} parent=0 // pred_fallthru
    _
  // Predicated region
  $region38: #{mha_layer1_forward.4} parent=0 // pred_check
    _
  $region39: #{mha_layer1_forward.4} parent=0 // pred_check_branch
    %1902 = sbr.rel (0) target = $region41
  $region40: #{mha_layer1_forward.4} parent=0 // pred_region
    _
  $region41: #{mha_layer1_forward.4} parent=0 // pred_fallthru
    _
  // Predicated region
  $region42: #{mha_layer1_forward.4} parent=0 // pred_check
    _
  $region43: #{mha_layer1_forward.4} parent=0 // pred_check_branch
    %1904 = sbr.rel (0) target = $region45
  $region44: #{mha_layer1_forward.4} parent=0 // pred_region
    _
  $region45: #{mha_layer1_forward.4} parent=0 // pred_fallthru
    _

// kernel: mha_layer1_forward.3
$region0: #{mha_layer1_forward.3}
  #allocation0 [shape = 'u32[]', space=smem, size = 0x4, offset = 0x4, fixed_abs, tag = 'smem constant byte address 0x4 - core index']
  #allocation1 [shape = 'u32[144,128]{1,0:T(1,128)}', space=vmem, size = 0x12000, scoped, tag = 'internal scratch']
  #allocation2 [shape = 'f32[128,128]{1,0:T(8,128)}', space=vmem, size = 0x10000, scoped, tag = 'scratch operand']
  %s0 = inlined_call_operand.vmem [shape: f32[256,128], index: 0, kind: input, shape index: {}]
  %s1 = inlined_call_operand.vmem [shape: bf16[8,128,16], index: 1, kind: input, shape index: {}]
  %s2 = inlined_call_operand.vmem [shape: bf16[8,128,16], index: 2, kind: input, shape index: {}]
  %s3 = inlined_call_operand.vmem [shape: bf16[8,128,16], index: 3, kind: input, shape index: {}]
  %s4 = inlined_call_operand.vmem [shape: bf16[8,16,128], index: 4, kind: input, shape index: {}]
  %s5 = inlined_call_operand.vmem [shape: bf16[256,128], index: 5, kind: output, shape index: {0}]
  %s6 = inlined_call_operand.vmem [shape: f32[2,2,128], index: 6, kind: output, shape index: {1}]
  %7 = xla_tuple %s5, %s6
  %s8 = sld [smem:[#allocation0]]
  $region61: #{mha_layer1_forward.3} parent=0
    _
  %s10 = ssub.s32 1, %s8
  %s11 = scalar_select 0, %s10, %s8
  loop: start=0, step=1, limit=4
  $region2: #{mha_layer1_forward.3} parent=0 // loop_pre_header
    _
  $region3: #{mha_layer1_forward.3} parent=0 // loop_header
    %s13 = sphi 0, %s17
    %p14 = scmp.ge.s32.totalorder %s13, 4
    %s23 = sphi 0, %s25
    %s26 = sphi 0, %s23
    %s27 = sphi 0, %s26
    %s43 = sphi 0, %s27
    %s47 = sphi 0, %s47
    %s49 = sphi 0, %s47
    %s50 = sphi 0, %s49
    %s64 = sphi 0, %s50
    %s68 = sphi 0, %s68
    %s70 = sphi 0, %s68
    %s71 = sphi 0, %s70
    %s85 = sphi 0, %s71
    %s89 = sphi 0, %s89
    %s91 = sphi 0, %s89
    %s92 = sphi 0, %s91
    %s106 = sphi 0, %s92
    %s110 = sphi 0, %s110
    %s112 = sphi 0, %s110
    %s113 = sphi 0, %s112
    %s127 = sphi 0, %s113
    %s133 = sphi 0, %s135
    %s136 = sphi 0, %s133
    %s137 = sphi 0, %s136
    %s153 = sphi 0, %s137
    %s159 = sphi 0, %s161
    %s162 = sphi 0, %s159
    %s163 = sphi 0, %s162
    %s179 = sphi 0, %s163
  $region4: #{mha_layer1_forward.3} parent=0 // loop_header_branch
    %16 = sbr.rel (%p14) target = $region8
  $region5: #{mha_layer1_forward.3} parent=0 // loop_body
    %s18 = ssub.s32 %s13, 1
    %s19 = ssub.s32 %s13, 2
    %s20 = sadd.s32 %s13, 1
    %s21 = ssub.s32 %s13, %s20
    %p22 = scmp.eq.s32.totalorder %s21, 0
    %s24 = sadd.s32 %s23, 1
    %s25 = scalar_select %p22, %s23, %s24
    %p28 = pneg %p22
    %p29 = scmp.eq.s32.totalorder %s13, 1
    %p30 = por %p28, %p29
    %p31 = scmp.ne.s32.totalorder %s23, %s26
    %p32 = scmp.eq.s32.totalorder %s13, 0
    %p33 = por %p31, %p32
    %p34 = scmp.ne.s32.totalorder %s23, %s26
    %p35 = scmp.eq.s32.totalorder %s18, 1
    %p36 = por %p34, %p35
    %p37 = scmp.ne.s32.totalorder %s26, %s27
    %p38 = scmp.eq.s32.totalorder %s18, 0
    %p39 = por %p37, %p38
    %p40 = scmp.ne.s32.totalorder %s26, %s27
    %p41 = scmp.eq.s32.totalorder %s19, 1
    %p42 = por %p40, %p41
    %p44 = scmp.ne.s32.totalorder %s27, %s43
    %p45 = scmp.eq.s32.totalorder %s19, 0
    %p46 = por %p44, %p45
    %s48 = sadd.s32 %s47, 1
    %p51 = scmp.eq.s32.totalorder %s13, 1
    %p52 = scmp.ne.s32.totalorder %s47, %s49
    %p53 = scmp.eq.s32.totalorder %s13, 0
    %p54 = por %p52, %p53
    %p55 = scmp.ne.s32.totalorder %s47, %s49
    %p56 = scmp.eq.s32.totalorder %s18, 1
    %p57 = por %p55, %p56
    %p58 = scmp.ne.s32.totalorder %s49, %s50
    %p59 = scmp.eq.s32.totalorder %s18, 0
    %p60 = por %p58, %p59
    %p61 = scmp.ne.s32.totalorder %s49, %s50
    %p62 = scmp.eq.s32.totalorder %s19, 1
    %p63 = por %p61, %p62
    %p65 = scmp.ne.s32.totalorder %s50, %s64
    %p66 = scmp.eq.s32.totalorder %s19, 0
    %p67 = por %p65, %p66
    %s69 = sadd.s32 %s68, 1
    %p72 = scmp.eq.s32.totalorder %s13, 1
    %p73 = scmp.ne.s32.totalorder %s68, %s70
    %p74 = scmp.eq.s32.totalorder %s13, 0
    %p75 = por %p73, %p74
    %p76 = scmp.ne.s32.totalorder %s68, %s70
    %p77 = scmp.eq.s32.totalorder %s18, 1
    %p78 = por %p76, %p77
    %p79 = scmp.ne.s32.totalorder %s70, %s71
    %p80 = scmp.eq.s32.totalorder %s18, 0
    %p81 = por %p79, %p80
    %p82 = scmp.ne.s32.totalorder %s70, %s71
    %p83 = scmp.eq.s32.totalorder %s19, 1
    %p84 = por %p82, %p83
    %p86 = scmp.ne.s32.totalorder %s71, %s85
    %p87 = scmp.eq.s32.totalorder %s19, 0
    %p88 = por %p86, %p87
    %s90 = sadd.s32 %s89, 1
    %p93 = scmp.eq.s32.totalorder %s13, 1
    %p94 = scmp.ne.s32.totalorder %s89, %s91
    %p95 = scmp.eq.s32.totalorder %s13, 0
    %p96 = por %p94, %p95
    %p97 = scmp.ne.s32.totalorder %s89, %s91
    %p98 = scmp.eq.s32.totalorder %s18, 1
    %p99 = por %p97, %p98
    %p100 = scmp.ne.s32.totalorder %s91, %s92
    %p101 = scmp.eq.s32.totalorder %s18, 0
    %p102 = por %p100, %p101
    %p103 = scmp.ne.s32.totalorder %s91, %s92
    %p104 = scmp.eq.s32.totalorder %s19, 1
    %p105 = por %p103, %p104
    %p107 = scmp.ne.s32.totalorder %s92, %s106
    %p108 = scmp.eq.s32.totalorder %s19, 0
    %p109 = por %p107, %p108
    %s111 = sadd.s32 %s110, 1
    %p114 = scmp.eq.s32.totalorder %s13, 1
    %p115 = scmp.ne.s32.totalorder %s110, %s112
    %p116 = scmp.eq.s32.totalorder %s13, 0
    %p117 = por %p115, %p116
    %p118 = scmp.ne.s32.totalorder %s110, %s112
    %p119 = scmp.eq.s32.totalorder %s18, 1
    %p120 = por %p118, %p119
    %p121 = scmp.ne.s32.totalorder %s112, %s113
    %p122 = scmp.eq.s32.totalorder %s18, 0
    %p123 = por %p121, %p122
    %p124 = scmp.ne.s32.totalorder %s112, %s113
    %p125 = scmp.eq.s32.totalorder %s19, 1
    %p126 = por %p124, %p125
    %p128 = scmp.ne.s32.totalorder %s113, %s127
    %p129 = scmp.eq.s32.totalorder %s19, 0
    %p130 = por %p128, %p129
    %s131 = ssub.s32 %s13, %s20
    %p132 = scmp.eq.s32.totalorder %s131, 0
    %s134 = sadd.s32 %s133, 1
    %s135 = scalar_select %p132, %s133, %s134
    %p138 = pneg %p132
    %p139 = scmp.eq.s32.totalorder %s13, 1
    %p140 = por %p138, %p139
    %p141 = scmp.ne.s32.totalorder %s133, %s136
    %p142 = scmp.eq.s32.totalorder %s13, 0
    %p143 = por %p141, %p142
    %p144 = scmp.ne.s32.totalorder %s133, %s136
    %p145 = scmp.eq.s32.totalorder %s18, 1
    %p146 = por %p144, %p145
    %p147 = scmp.ne.s32.totalorder %s136, %s137
    %p148 = scmp.eq.s32.totalorder %s18, 0
    %p149 = por %p147, %p148
    %p150 = scmp.ne.s32.totalorder %s136, %s137
    %p151 = scmp.eq.s32.totalorder %s19, 1
    %p152 = por %p150, %p151
    %p154 = scmp.ne.s32.totalorder %s137, %s153
    %p155 = scmp.eq.s32.totalorder %s19, 0
    %p156 = por %p154, %p155
    %s157 = ssub.s32 %s13, %s20
    %p158 = scmp.eq.s32.totalorder %s157, 0
    %s160 = sadd.s32 %s159, 1
    %s161 = scalar_select %p158, %s159, %s160
    %p164 = pneg %p158
    %p165 = scmp.eq.s32.totalorder %s13, 1
    %p166 = por %p164, %p165
    %p167 = scmp.ne.s32.totalorder %s159, %s162
    %p168 = scmp.eq.s32.totalorder %s13, 0
    %p169 = por %p167, %p168
    %p170 = scmp.ne.s32.totalorder %s159, %s162
    %p171 = scmp.eq.s32.totalorder %s18, 1
    %p172 = por %p170, %p171
    %p173 = scmp.ne.s32.totalorder %s162, %s163
    %p174 = scmp.eq.s32.totalorder %s18, 0
    %p175 = por %p173, %p174
    %p176 = scmp.ne.s32.totalorder %s162, %s163
    %p177 = scmp.eq.s32.totalorder %s19, 1
    %p178 = por %p176, %p177
    %p180 = scmp.ne.s32.totalorder %s163, %s179
    %p181 = scmp.eq.s32.totalorder %s19, 0
    %p182 = por %p180, %p181
    %p183 = scmp.le.s32.totalorder 1, %s13
    %p184 = scmp.lt.s32.totalorder %s13, 3
    %p185 = pnand %p183, %p184
    %p186 = pneg %p185
    // Predicated region
    $region9: #{mha_layer1_forward.3} parent=5 // pred_check
      _
    $region10: #{mha_layer1_forward.3} parent=5 // pred_check_branch
      %188 = sbr.rel (%p185) target = $region12
    $region11: #{mha_layer1_forward.3} parent=5 // pred_region
      %s189 = ssub.s32 %s13, 1
      // Predicated region
      $region13: #{mha_layer1_forward.3} parent=11 // pred_check
        %p190 = pneg %p60
      $region14: #{mha_layer1_forward.3} parent=11 // pred_check_branch
        %192 = sbr.rel (%p190) target = $region16
      $region15: #{mha_layer1_forward.3} parent=11 // pred_region
        _
      $region16: #{mha_layer1_forward.3} parent=11 // pred_fallthru
        _
      // Predicated region
      $region17: #{mha_layer1_forward.3} parent=11 // pred_check
        %p193 = pneg %p81
      $region18: #{mha_layer1_forward.3} parent=11 // pred_check_branch
        %195 = sbr.rel (%p193) target = $region20
      $region19: #{mha_layer1_forward.3} parent=11 // pred_region
        _
      $region20: #{mha_layer1_forward.3} parent=11 // pred_fallthru
        _
      // Predicated region
      $region21: #{mha_layer1_forward.3} parent=11 // pred_check
        %p196 = pneg %p102
      $region22: #{mha_layer1_forward.3} parent=11 // pred_check_branch
        %198 = sbr.rel (%p196) target = $region24
      $region23: #{mha_layer1_forward.3} parent=11 // pred_region
        _
      $region24: #{mha_layer1_forward.3} parent=11 // pred_fallthru
        _
      // Predicated region
      $region25: #{mha_layer1_forward.3} parent=11 // pred_check
        %p199 = pneg %p123
      $region26: #{mha_layer1_forward.3} parent=11 // pred_check_branch
        %201 = sbr.rel (%p199) target = $region28
      $region27: #{mha_layer1_forward.3} parent=11 // pred_region
        _
      $region28: #{mha_layer1_forward.3} parent=11 // pred_fallthru
        _
    $region12: #{mha_layer1_forward.3} parent=5 // pred_fallthru
      _
    %p202 = scmp.lt.s32.totalorder %s13, 2
    // Predicated region
    $region29: #{mha_layer1_forward.3} parent=5 // pred_check
      %p203 = pneg %p202
    $region30: #{mha_layer1_forward.3} parent=5 // pred_check_branch
      %205 = sbr.rel (%p203) target = $region32
    $region31: #{mha_layer1_forward.3} parent=5 // pred_region
      // Predicated region
      $region33: #{mha_layer1_forward.3} parent=31 // pred_check
        %p206 = pneg %p33
      $region34: #{mha_layer1_forward.3} parent=31 // pred_check_branch
        %208 = sbr.rel (%p206) target = $region36
      $region35: #{mha_layer1_forward.3} parent=31 // pred_region
        %s209 = smul.u32 16, %s13
        %p210 = scmp.lt.s32.totalorder %s209, 31
        %s211 = scalar_select %p210, %s209, 31
        %s212 = smul.addr %s211, 8
        %s213 = scalar_lea.vmem %s0, %s212
        %s214 = smul.u32 16, %s13
      $region36: #{mha_layer1_forward.3} parent=31 // pred_fallthru
        _
    $region32: #{mha_layer1_forward.3} parent=5 // pred_fallthru
      _
    %p215 = scmp.le.s32.totalorder 1, %s13
    %p216 = scmp.lt.s32.totalorder %s13, 3
    %p217 = pnand %p215, %p216
    %p218 = pneg %p217
    // Predicated region
    $region37: #{mha_layer1_forward.3} parent=5 // pred_check
      _
    $region38: #{mha_layer1_forward.3} parent=5 // pred_check_branch
      %220 = sbr.rel (%p217) target = $region40
    $region39: #{mha_layer1_forward.3} parent=5 // pred_region
      %s221 = ssub.s32 %s13, 1
      %s222 = smul.u32 16, %s18
      %p223 = scmp.lt.s32.totalorder %s222, 31
      %s224 = scalar_select %p223, %s222, 31
      %s225 = smul.addr %s224, 8
      %s226 = scalar_lea.vmem %s0, %s225
      %p227 = pneg %p39
      %p228 = pneg %p36
      %p229 = pneg %p60
      %p230 = pneg %p57
      %p231 = pneg %p81
      %p232 = pneg %p78
      %p233 = pneg %p102
      %p234 = pneg %p99
      %p235 = pneg %p123
      %p236 = pneg %p120
      %p237 = pneg %p149
      %p238 = pneg %p146
      %s239 = smul.u32 16, %s18
      %p240 = scmp.lt.s32.totalorder %s239, 31
      %s241 = scalar_select %p240, %s239, 31
      %s242 = smul.addr %s241, 4
      %s243 = scalar_lea.vmem %s5, %s242
      %p244 = pneg %p175
      %p245 = pneg %p172
      %p246 = scmp.lt.s32.totalorder %s18, 1
      %s247 = scalar_select %p246, %s18, 1
      %s248 = smul.addr %s247, 2
      %s249 = scalar_lea.vmem %s6, %s248
      %s250 = smul.u32 16, %s18
      %p251 = scmp.lt.s32.totalorder %s250, 31
      %s252 = scalar_select %p251, %s250, 31
      %s253 = smul.addr %s252, 8
      %s254 = scalar_lea.vmem %s0, %s253
      %s255 = smul.u32 16, %s18
      %s256 = smul.u32 16, %s18
      %p257 = scmp.lt.s32.totalorder %s256, 31
      %s258 = scalar_select %p257, %s256, 31
      %s259 = smul.addr %s258, 4
      %s260 = scalar_lea.vmem %s5, %s259
      %s261 = smul.u32 16, %s18
      %p262 = scmp.lt.s32.totalorder %s18, 1
      %s263 = scalar_select %p262, %s18, 1
      %s264 = smul.addr %s263, 2
      %s265 = scalar_lea.vmem %s6, %s264
      %v267 = vld [vmem:[%s254] sm:$0xff]
      %v268 = vld [vmem:[%s254 + $0x8] sm:$0xff]
      %v269 = vld [vmem:[%s254 + $0x10] sm:$0xff]
      %v270 = vld [vmem:[%s254 + $0x18] sm:$0xff]
      %v271 = vld [vmem:[%s254 + $0x20] sm:$0xff]
      %v272 = vld [vmem:[%s254 + $0x28] sm:$0xff]
      %v273 = vld [vmem:[%s254 + $0x30] sm:$0xff]
      %v274 = vld [vmem:[%s254 + $0x38] sm:$0xff]
      %v275 = vld [vmem:[%s254 + $0x40] sm:$0xff]
      %v276 = vld [vmem:[%s254 + $0x48] sm:$0xff]
      %v277 = vld [vmem:[%s254 + $0x50] sm:$0xff]
      %v278 = vld [vmem:[%s254 + $0x58] sm:$0xff]
      %v279 = vld [vmem:[%s254 + $0x60] sm:$0xff]
      %v280 = vld [vmem:[%s254 + $0x68] sm:$0xff]
      %v281 = vld [vmem:[%s254 + $0x70] sm:$0xff]
      %v282 = vld [vmem:[%s254 + $0x78] sm:$0xff]
      %v283 = vpack.c.bf16 %v268, %v267
      %v284 = vpack.c.bf16 %v270, %v269
      %v285 = vpack.c.bf16 %v272, %v271
      %v286 = vpack.c.bf16 %v274, %v273
      %v287 = vpack.c.bf16 %v276, %v275
      %v288 = vpack.c.bf16 %v278, %v277
      %v289 = vpack.c.bf16 %v280, %v279
      %v290 = vpack.c.bf16 %v282, %v281
      %291 = vst [vmem:[#allocation2] sm:$0xff] 0.0
      %292 = vst [vmem:[#allocation2 + $0x8] sm:$0xff] 0.0
      %293 = vst [vmem:[#allocation2 + $0x10] sm:$0xff] 0.0
      %294 = vst [vmem:[#allocation2 + $0x18] sm:$0xff] 0.0
      %295 = vst [vmem:[#allocation2 + $0x20] sm:$0xff] 0.0
      %296 = vst [vmem:[#allocation2 + $0x28] sm:$0xff] 0.0
      %297 = vst [vmem:[#allocation2 + $0x30] sm:$0xff] 0.0
      %298 = vst [vmem:[#allocation2 + $0x38] sm:$0xff] 0.0
      %299 = vst [vmem:[#allocation2 + $0x40] sm:$0xff] 0.0
      %300 = vst [vmem:[#allocation2 + $0x48] sm:$0xff] 0.0
      %301 = vst [vmem:[#allocation2 + $0x50] sm:$0xff] 0.0
      %302 = vst [vmem:[#allocation2 + $0x58] sm:$0xff] 0.0
      %303 = vst [vmem:[#allocation2 + $0x60] sm:$0xff] 0.0
      %304 = vst [vmem:[#allocation2 + $0x68] sm:$0xff] 0.0
      %305 = vst [vmem:[#allocation2 + $0x70] sm:$0xff] 0.0
      %306 = vst [vmem:[#allocation2 + $0x78] sm:$0xff] 0.0
      %v307 = vld [vmem:[%s1] sm:$0xf]
      %v308 = vld [vmem:[%s1 + $0x4] sm:$0xf]
      %v309 = vld [vmem:[%s1 + $0x8] sm:$0xf]
      %v310 = vld [vmem:[%s1 + $0xc] sm:$0xf]
      %v311 = vld [vmem:[%s1 + $0x10] sm:$0xf]
      %v312 = vld [vmem:[%s1 + $0x14] sm:$0xf]
      %v313 = vld [vmem:[%s1 + $0x18] sm:$0xf]
      %v314 = vld [vmem:[%s1 + $0x1c] sm:$0xf]
      %v315 = vld [vmem:[%s1 + $0x20] sm:$0xf]
      %v316 = vld [vmem:[%s1 + $0x24] sm:$0xf]
      %v317 = vld [vmem:[%s1 + $0x28] sm:$0xf]
      %v318 = vld [vmem:[%s1 + $0x2c] sm:$0xf]
      %v319 = vld [vmem:[%s1 + $0x30] sm:$0xf]
      %v320 = vld [vmem:[%s1 + $0x34] sm:$0xf]
      %v321 = vld [vmem:[%s1 + $0x38] sm:$0xf]
      %v322 = vld [vmem:[%s1 + $0x3c] sm:$0xf]
      %v339 = vunpack.c.l.b16 %v307
      %v340 = vunpack.c.l.b16 %v308
      %v341 = vunpack.c.l.b16 %v309
      %v342 = vunpack.c.l.b16 %v310
      %v343 = vunpack.c.l.b16 %v311
      %v344 = vunpack.c.l.b16 %v312
      %v345 = vunpack.c.l.b16 %v313
      %v346 = vunpack.c.l.b16 %v314
      %v347 = vunpack.c.l.b16 %v315
      %v348 = vunpack.c.l.b16 %v316
      %v349 = vunpack.c.l.b16 %v317
      %v350 = vunpack.c.l.b16 %v318
      %v351 = vunpack.c.l.b16 %v319
      %v352 = vunpack.c.l.b16 %v320
      %v353 = vunpack.c.l.b16 %v321
      %v354 = vunpack.c.l.b16 %v322
      %v355 = vpack.c.b16 %v340, %v339
      %v356 = vpack.c.b16 %v342, %v341
      %v357 = vpack.c.b16 %v344, %v343
      %v358 = vpack.c.b16 %v346, %v345
      %v359 = vpack.c.b16 %v348, %v347
      %v360 = vpack.c.b16 %v350, %v349
      %v361 = vpack.c.b16 %v352, %v351
      %v362 = vpack.c.b16 %v354, %v353
      %371 = vmatprep.subr.bf16.mxu0 0
      %372 = vmatpush1.bf16.msra.mxu0 %v355
      %373 = vmatprep.subr.bf16.mxu0 0
      %374 = vmatpush1.bf16.msra.mxu0 %v356
      %375 = vmatprep.subr.bf16.mxu0 0
      %376 = vmatpush1.bf16.msra.mxu0 %v357
      %377 = vmatprep.subr.bf16.mxu0 0
      %378 = vmatpush1.bf16.msra.mxu0 %v358
      %379 = vmatprep.subr.bf16.mxu0 0
      %380 = vmatpush1.bf16.msra.mxu0 %v359
      %381 = vmatprep.subr.bf16.mxu0 0
      %382 = vmatpush1.bf16.msra.mxu0 %v360
      %383 = vmatprep.subr.bf16.mxu0 0
      %384 = vmatpush1.bf16.msra.mxu0 %v361
      %385 = vmatprep.subr.bf16.mxu0 0
      %386 = vmatpush1.bf16.msra.mxu0 %v362
      %387 = vmatprep.subr.bf16.mxu0 0
      %388 = vmatpush1.bf16.msra.mxu0 0
      %389 = vmatprep.subr.bf16.mxu0 0
      %390 = vmatpush1.bf16.msra.mxu0 0
      %391 = vmatprep.subr.bf16.mxu0 0
      %392 = vmatpush1.bf16.msra.mxu0 0
      %393 = vmatprep.subr.bf16.mxu0 0
      %394 = vmatpush1.bf16.msra.mxu0 0
      %395 = vmatprep.subr.bf16.mxu0 0
      %396 = vmatpush1.bf16.msra.mxu0 0
      %397 = vmatprep.subr.bf16.mxu0 0
      %398 = vmatpush1.bf16.msra.mxu0 0
      %399 = vmatprep.subr.bf16.mxu0 0
      %400 = vmatpush1.bf16.msra.mxu0 0
      %401 = vmatprep.subr.bf16.mxu0 0
      %402 = vmatpush1.bf16.msra.mxu0 0
      %403 = vmatprep.mubr.bf16.mxu0 0
      %404 = vmatmul.mubr.bf16.gmra.mrb[0].mxu0 %v283
      %v405 = vpop.f32.mrb[0].mxu0
      %v406 = vadd.f32 0.0, %v405
      %v407 = vpop.f32.mrb[0].mxu0
      %v408 = vpop.f32.mrb[0].mxu0
      %v409 = vadd.f32 0.0, %v408
      %v410 = vpop.f32.mrb[0].mxu0
      %411 = vmatprep.mubr.bf16.mxu0 0
      %412 = vmatmul.mubr.bf16.gmra.mrb[0].mxu0 %v284
      %v413 = vpop.f32.mrb[0].mxu0
      %v414 = vadd.f32 0.0, %v413
      %v415 = vpop.f32.mrb[0].mxu0
      %v416 = vpop.f32.mrb[0].mxu0
      %v417 = vadd.f32 0.0, %v416
      %v418 = vpop.f32.mrb[0].mxu0
      %419 = vmatprep.mubr.bf16.mxu0 0
      %420 = vmatmul.mubr.bf16.gmra.mrb[0].mxu0 %v285
      %v421 = vpop.f32.mrb[0].mxu0
      %v422 = vadd.f32 0.0, %v421
      %v423 = vpop.f32.mrb[0].mxu0
      %v424 = vpop.f32.mrb[0].mxu0
      %v425 = vadd.f32 0.0, %v424
      %v426 = vpop.f32.mrb[0].mxu0
      %427 = vmatprep.mubr.bf16.mxu0 0
      %428 = vmatmul.mubr.bf16.gmra.mrb[0].mxu0 %v286
      %v429 = vpop.f32.mrb[0].mxu0
      %v430 = vadd.f32 0.0, %v429
      %v431 = vpop.f32.mrb[0].mxu0
      %v432 = vpop.f32.mrb[0].mxu0
      %v433 = vadd.f32 0.0, %v432
      %v434 = vpop.f32.mrb[0].mxu0
      %435 = vmatprep.mubr.bf16.mxu0 0
      %436 = vmatmul.mubr.bf16.gmra.mrb[0].mxu0 %v287
      %v437 = vpop.f32.mrb[0].mxu0
      %v438 = vadd.f32 0.0, %v437
      %v439 = vpop.f32.mrb[0].mxu0
      %v440 = vpop.f32.mrb[0].mxu0
      %v441 = vadd.f32 0.0, %v440
      %v442 = vpop.f32.mrb[0].mxu0
      %443 = vmatprep.mubr.bf16.mxu0 0
      %444 = vmatmul.mubr.bf16.gmra.mrb[0].mxu0 %v288
      %v445 = vpop.f32.mrb[0].mxu0
      %v446 = vadd.f32 0.0, %v445
      %v447 = vpop.f32.mrb[0].mxu0
      %v448 = vpop.f32.mrb[0].mxu0
      %v449 = vadd.f32 0.0, %v448
      %v450 = vpop.f32.mrb[0].mxu0
      %451 = vmatprep.mubr.bf16.mxu0 0
      %452 = vmatmul.mubr.bf16.gmra.mrb[0].mxu0 %v289
      %v453 = vpop.f32.mrb[0].mxu0
      %v454 = vadd.f32 0.0, %v453
      %v455 = vpop.f32.mrb[0].mxu0
      %v456 = vpop.f32.mrb[0].mxu0
      %v457 = vadd.f32 0.0, %v456
      %v458 = vpop.f32.mrb[0].mxu0
      %459 = vmatprep.mubr.bf16.mxu0 0
      %460 = vmatmul.mubr.bf16.gmra.mrb[0].mxu0 %v290
      %v461 = vpop.f32.mrb[0].mxu0
      %v462 = vadd.f32 0.0, %v461
      %v463 = vpop.f32.mrb[0].mxu0
      %v464 = vpop.f32.mrb[0].mxu0
      %v465 = vadd.f32 0.0, %v464
      %v466 = vpop.f32.mrb[0].mxu0
      %467 = vdwg.mxu0
      %v468 = vpack.c.bf16 %v409, %v406
      %v469 = vpack.c.bf16 %v417, %v414
      %v470 = vpack.c.bf16 %v425, %v422
      %v471 = vpack.c.bf16 %v433, %v430
      %v472 = vpack.c.bf16 %v441, %v438
      %v473 = vpack.c.bf16 %v449, %v446
      %v474 = vpack.c.bf16 %v457, %v454
      %v475 = vpack.c.bf16 %v465, %v462
      %v476 = vld [vmem:[%s2] sm:$0xf]
      %v477 = vld [vmem:[%s2 + $0x4] sm:$0xf]
      %v478 = vld [vmem:[%s2 + $0x8] sm:$0xf]
      %v479 = vld [vmem:[%s2 + $0xc] sm:$0xf]
      %v480 = vld [vmem:[%s2 + $0x10] sm:$0xf]
      %v481 = vld [vmem:[%s2 + $0x14] sm:$0xf]
      %v482 = vld [vmem:[%s2 + $0x18] sm:$0xf]
      %v483 = vld [vmem:[%s2 + $0x1c] sm:$0xf]
      %v484 = vld [vmem:[%s2 + $0x20] sm:$0xf]
      %v485 = vld [vmem:[%s2 + $0x24] sm:$0xf]
      %v486 = vld [vmem:[%s2 + $0x28] sm:$0xf]
      %v487 = vld [vmem:[%s2 + $0x2c] sm:$0xf]
      %v488 = vld [vmem:[%s2 + $0x30] sm:$0xf]
      %v489 = vld [vmem:[%s2 + $0x34] sm:$0xf]
      %v490 = vld [vmem:[%s2 + $0x38] sm:$0xf]
      %v491 = vld [vmem:[%s2 + $0x3c] sm:$0xf]
      %v508 = vunpack.c.l.b16 %v476
      %v509 = vunpack.c.l.b16 %v477
      %v510 = vunpack.c.l.b16 %v478
      %v511 = vunpack.c.l.b16 %v479
      %v512 = vunpack.c.l.b16 %v480
      %v513 = vunpack.c.l.b16 %v481
      %v514 = vunpack.c.l.b16 %v482
      %v515 = vunpack.c.l.b16 %v483
      %v516 = vunpack.c.l.b16 %v484
      %v517 = vunpack.c.l.b16 %v485
      %v518 = vunpack.c.l.b16 %v486
      %v519 = vunpack.c.l.b16 %v487
      %v520 = vunpack.c.l.b16 %v488
      %v521 = vunpack.c.l.b16 %v489
      %v522 = vunpack.c.l.b16 %v490
      %v523 = vunpack.c.l.b16 %v491
      %v524 = vpack.c.b16 %v509, %v508
      %v525 = vpack.c.b16 %v511, %v510
      %v526 = vpack.c.b16 %v513, %v512
      %v527 = vpack.c.b16 %v515, %v514
      %v528 = vpack.c.b16 %v517, %v516
      %v529 = vpack.c.b16 %v519, %v518
      %v530 = vpack.c.b16 %v521, %v520
      %v531 = vpack.c.b16 %v523, %v522
      %540 = vmatprep.subr.bf16.mxu0 0
      %541 = vmatpush1.bf16.msra.mxu0 %v524
      %542 = vmatprep.subr.bf16.mxu0 0
      %543 = vmatpush1.bf16.msra.mxu0 %v525
      %544 = vmatprep.subr.bf16.mxu0 0
      %545 = vmatpush1.bf16.msra.mxu0 %v526
      %546 = vmatprep.subr.bf16.mxu0 0
      %547 = vmatpush1.bf16.msra.mxu0 %v527
      %548 = vmatprep.subr.bf16.mxu0 0
      %549 = vmatpush1.bf16.msra.mxu0 %v528
      %550 = vmatprep.subr.bf16.mxu0 0
      %551 = vmatpush1.bf16.msra.mxu0 %v529
      %552 = vmatprep.subr.bf16.mxu0 0
      %553 = vmatpush1.bf16.msra.mxu0 %v530
      %554 = vmatprep.subr.bf16.mxu0 0
      %555 = vmatpush1.bf16.msra.mxu0 %v531
      %556 = vmatprep.subr.bf16.mxu0 0
      %557 = vmatpush1.bf16.msra.mxu0 0
      %558 = vmatprep.subr.bf16.mxu0 0
      %559 = vmatpush1.bf16.msra.mxu0 0
      %560 = vmatprep.subr.bf16.mxu0 0
      %561 = vmatpush1.bf16.msra.mxu0 0
      %562 = vmatprep.subr.bf16.mxu0 0
      %563 = vmatpush1.bf16.msra.mxu0 0
      %564 = vmatprep.subr.bf16.mxu0 0
      %565 = vmatpush1.bf16.msra.mxu0 0
      %566 = vmatprep.subr.bf16.mxu0 0
      %567 = vmatpush1.bf16.msra.mxu0 0
      %568 = vmatprep.subr.bf16.mxu0 0
      %569 = vmatpush1.bf16.msra.mxu0 0
      %570 = vmatprep.subr.bf16.mxu0 0
      %571 = vmatpush1.bf16.msra.mxu0 0
      %572 = vmatprep.mubr.bf16.mxu0 0
      %573 = vmatmul.mubr.bf16.gmra.mrb[0].mxu0 %v283
      %v574 = vpop.f32.mrb[0].mxu0
      %v575 = vadd.f32 0.0, %v574
      %v576 = vpop.f32.mrb[0].mxu0
      %v577 = vpop.f32.mrb[0].mxu0
      %v578 = vadd.f32 0.0, %v577
      %v579 = vpop.f32.mrb[0].mxu0
      %580 = vmatprep.mubr.bf16.mxu0 0
      %581 = vmatmul.mubr.bf16.gmra.mrb[0].mxu0 %v284
      %v582 = vpop.f32.mrb[0].mxu0
      %v583 = vadd.f32 0.0, %v582
      %v584 = vpop.f32.mrb[0].mxu0
      %v585 = vpop.f32.mrb[0].mxu0
      %v586 = vadd.f32 0.0, %v585
      %v587 = vpop.f32.mrb[0].mxu0
      %588 = vmatprep.mubr.bf16.mxu0 0
      %589 = vmatmul.mubr.bf16.gmra.mrb[0].mxu0 %v285
      %v590 = vpop.f32.mrb[0].mxu0
      %v591 = vadd.f32 0.0, %v590
      %v592 = vpop.f32.mrb[0].mxu0
      %v593 = vpop.f32.mrb[0].mxu0
      %v594 = vadd.f32 0.0, %v593
      %v595 = vpop.f32.mrb[0].mxu0
      %596 = vmatprep.mubr.bf16.mxu0 0
      %597 = vmatmul.mubr.bf16.gmra.mrb[0].mxu0 %v286
      %v598 = vpop.f32.mrb[0].mxu0
      %v599 = vadd.f32 0.0, %v598
      %v600 = vpop.f32.mrb[0].mxu0
      %v601 = vpop.f32.mrb[0].mxu0
      %v602 = vadd.f32 0.0, %v601
      %v603 = vpop.f32.mrb[0].mxu0
      %604 = vmatprep.mubr.bf16.mxu0 0
      %605 = vmatmul.mubr.bf16.gmra.mrb[0].mxu0 %v287
      %v606 = vpop.f32.mrb[0].mxu0
      %v607 = vadd.f32 0.0, %v606
      %v608 = vpop.f32.mrb[0].mxu0
      %v609 = vpop.f32.mrb[0].mxu0
      %v610 = vadd.f32 0.0, %v609
      %v611 = vpop.f32.mrb[0].mxu0
      %612 = vmatprep.mubr.bf16.mxu0 0
      %613 = vmatmul.mubr.bf16.gmra.mrb[0].mxu0 %v288
      %v614 = vpop.f32.mrb[0].mxu0
      %v615 = vadd.f32 0.0, %v614
      %v616 = vpop.f32.mrb[0].mxu0
      %v617 = vpop.f32.mrb[0].mxu0
      %v618 = vadd.f32 0.0, %v617
      %v619 = vpop.f32.mrb[0].mxu0
      %620 = vmatprep.mubr.bf16.mxu0 0
      %621 = vmatmul.mubr.bf16.gmra.mrb[0].mxu0 %v289
      %v622 = vpop.f32.mrb[0].mxu0
      %v623 = vadd.f32 0.0, %v622
      %v624 = vpop.f32.mrb[0].mxu0
      %v625 = vpop.f32.mrb[0].mxu0
      %v626 = vadd.f32 0.0, %v625
      %v627 = vpop.f32.mrb[0].mxu0
      %628 = vmatprep.mubr.bf16.mxu0 0
      %629 = vmatmul.mubr.bf16.gmra.mrb[0].mxu0 %v290
      %v630 = vpop.f32.mrb[0].mxu0
      %v631 = vadd.f32 0.0, %v630
      %v632 = vpop.f32.mrb[0].mxu0
      %v633 = vpop.f32.mrb[0].mxu0
      %v634 = vadd.f32 0.0, %v633
      %v635 = vpop.f32.mrb[0].mxu0
      %636 = vdwg.mxu0
      %v637 = vpack.c.bf16 %v578, %v575
      %v638 = vpack.c.bf16 %v586, %v583
      %v639 = vpack.c.bf16 %v594, %v591
      %v640 = vpack.c.bf16 %v602, %v599
      %v641 = vpack.c.bf16 %v610, %v607
      %v642 = vpack.c.bf16 %v618, %v615
      %v643 = vpack.c.bf16 %v626, %v623
      %v644 = vpack.c.bf16 %v634, %v631
      %v645 = vld [vmem:[%s3] sm:$0xf]
      %v646 = vld [vmem:[%s3 + $0x4] sm:$0xf]
      %v647 = vld [vmem:[%s3 + $0x8] sm:$0xf]
      %v648 = vld [vmem:[%s3 + $0xc] sm:$0xf]
      %v649 = vld [vmem:[%s3 + $0x10] sm:$0xf]
      %v650 = vld [vmem:[%s3 + $0x14] sm:$0xf]
      %v651 = vld [vmem:[%s3 + $0x18] sm:$0xf]
      %v652 = vld [vmem:[%s3 + $0x1c] sm:$0xf]
      %v653 = vld [vmem:[%s3 + $0x20] sm:$0xf]
      %v654 = vld [vmem:[%s3 + $0x24] sm:$0xf]
      %v655 = vld [vmem:[%s3 + $0x28] sm:$0xf]
      %v656 = vld [vmem:[%s3 + $0x2c] sm:$0xf]
      %v657 = vld [vmem:[%s3 + $0x30] sm:$0xf]
      %v658 = vld [vmem:[%s3 + $0x34] sm:$0xf]
      %v659 = vld [vmem:[%s3 + $0x38] sm:$0xf]
      %v660 = vld [vmem:[%s3 + $0x3c] sm:$0xf]
      %v677 = vunpack.c.l.b16 %v645
      %v678 = vunpack.c.l.b16 %v646
      %v679 = vunpack.c.l.b16 %v647
      %v680 = vunpack.c.l.b16 %v648
      %v681 = vunpack.c.l.b16 %v649
      %v682 = vunpack.c.l.b16 %v650
      %v683 = vunpack.c.l.b16 %v651
      %v684 = vunpack.c.l.b16 %v652
      %v685 = vunpack.c.l.b16 %v653
      %v686 = vunpack.c.l.b16 %v654
      %v687 = vunpack.c.l.b16 %v655
      %v688 = vunpack.c.l.b16 %v656
      %v689 = vunpack.c.l.b16 %v657
      %v690 = vunpack.c.l.b16 %v658
      %v691 = vunpack.c.l.b16 %v659
      %v692 = vunpack.c.l.b16 %v660
      %v693 = vpack.c.b16 %v678, %v677
      %v694 = vpack.c.b16 %v680, %v679
      %v695 = vpack.c.b16 %v682, %v681
      %v696 = vpack.c.b16 %v684, %v683
      %v697 = vpack.c.b16 %v686, %v685
      %v698 = vpack.c.b16 %v688, %v687
      %v699 = vpack.c.b16 %v690, %v689
      %v700 = vpack.c.b16 %v692, %v691
      %709 = vmatprep.subr.bf16.mxu0 0
      %710 = vmatpush1.bf16.msra.mxu0 %v693
      %711 = vmatprep.subr.bf16.mxu0 0
      %712 = vmatpush1.bf16.msra.mxu0 %v694
      %713 = vmatprep.subr.bf16.mxu0 0
      %714 = vmatpush1.bf16.msra.mxu0 %v695
      %715 = vmatprep.subr.bf16.mxu0 0
      %716 = vmatpush1.bf16.msra.mxu0 %v696
      %717 = vmatprep.subr.bf16.mxu0 0
      %718 = vmatpush1.bf16.msra.mxu0 %v697
      %719 = vmatprep.subr.bf16.mxu0 0
      %720 = vmatpush1.bf16.msra.mxu0 %v698
      %721 = vmatprep.subr.bf16.mxu0 0
      %722 = vmatpush1.bf16.msra.mxu0 %v699
      %723 = vmatprep.subr.bf16.mxu0 0
      %724 = vmatpush1.bf16.msra.mxu0 %v700
      %725 = vmatprep.subr.bf16.mxu0 0
      %726 = vmatpush1.bf16.msra.mxu0 0
      %727 = vmatprep.subr.bf16.mxu0 0
      %728 = vmatpush1.bf16.msra.mxu0 0
      %729 = vmatprep.subr.bf16.mxu0 0
      %730 = vmatpush1.bf16.msra.mxu0 0
      %731 = vmatprep.subr.bf16.mxu0 0
      %732 = vmatpush1.bf16.msra.mxu0 0
      %733 = vmatprep.subr.bf16.mxu0 0
      %734 = vmatpush1.bf16.msra.mxu0 0
      %735 = vmatprep.subr.bf16.mxu0 0
      %736 = vmatpush1.bf16.msra.mxu0 0
      %737 = vmatprep.subr.bf16.mxu0 0
      %738 = vmatpush1.bf16.msra.mxu0 0
      %739 = vmatprep.subr.bf16.mxu0 0
      %740 = vmatpush1.bf16.msra.mxu0 0
      %741 = vmatprep.mubr.bf16.mxu0 0
      %742 = vmatmul.mubr.bf16.gmra.mrb[0].mxu0 %v283
      %v743 = vpop.f32.mrb[0].mxu0
      %v744 = vadd.f32 0.0, %v743
      %v745 = vpop.f32.mrb[0].mxu0
      %v746 = vpop.f32.mrb[0].mxu0
      %v747 = vadd.f32 0.0, %v746
      %v748 = vpop.f32.mrb[0].mxu0
      %749 = vmatprep.mubr.bf16.mxu0 0
      %750 = vmatmul.mubr.bf16.gmra.mrb[0].mxu0 %v284
      %v751 = vpop.f32.mrb[0].mxu0
      %v752 = vadd.f32 0.0, %v751
      %v753 = vpop.f32.mrb[0].mxu0
      %v754 = vpop.f32.mrb[0].mxu0
      %v755 = vadd.f32 0.0, %v754
      %v756 = vpop.f32.mrb[0].mxu0
      %757 = vmatprep.mubr.bf16.mxu0 0
      %758 = vmatmul.mubr.bf16.gmra.mrb[0].mxu0 %v285
      %v759 = vpop.f32.mrb[0].mxu0
      %v760 = vadd.f32 0.0, %v759
      %v761 = vpop.f32.mrb[0].mxu0
      %v762 = vpop.f32.mrb[0].mxu0
      %v763 = vadd.f32 0.0, %v762
      %v764 = vpop.f32.mrb[0].mxu0
      %765 = vmatprep.mubr.bf16.mxu0 0
      %766 = vmatmul.mubr.bf16.gmra.mrb[0].mxu0 %v286
      %v767 = vpop.f32.mrb[0].mxu0
      %v768 = vadd.f32 0.0, %v767
      %v769 = vpop.f32.mrb[0].mxu0
      %v770 = vpop.f32.mrb[0].mxu0
      %v771 = vadd.f32 0.0, %v770
      %v772 = vpop.f32.mrb[0].mxu0
      %773 = vmatprep.mubr.bf16.mxu0 0
      %774 = vmatmul.mubr.bf16.gmra.mrb[0].mxu0 %v287
      %v775 = vpop.f32.mrb[0].mxu0
      %v776 = vadd.f32 0.0, %v775
      %v777 = vpop.f32.mrb[0].mxu0
      %v778 = vpop.f32.mrb[0].mxu0
      %v779 = vadd.f32 0.0, %v778
      %v780 = vpop.f32.mrb[0].mxu0
      %781 = vmatprep.mubr.bf16.mxu0 0
      %782 = vmatmul.mubr.bf16.gmra.mrb[0].mxu0 %v288
      %v783 = vpop.f32.mrb[0].mxu0
      %v784 = vadd.f32 0.0, %v783
      %v785 = vpop.f32.mrb[0].mxu0
      %v786 = vpop.f32.mrb[0].mxu0
      %v787 = vadd.f32 0.0, %v786
      %v788 = vpop.f32.mrb[0].mxu0
      %789 = vmatprep.mubr.bf16.mxu0 0
      %790 = vmatmul.mubr.bf16.gmra.mrb[0].mxu0 %v289
      %v791 = vpop.f32.mrb[0].mxu0
      %v792 = vadd.f32 0.0, %v791
      %v793 = vpop.f32.mrb[0].mxu0
      %v794 = vpop.f32.mrb[0].mxu0
      %v795 = vadd.f32 0.0, %v794
      %v796 = vpop.f32.mrb[0].mxu0
      %797 = vmatprep.mubr.bf16.mxu0 0
      %798 = vmatmul.mubr.bf16.gmra.mrb[0].mxu0 %v290
      %v799 = vpop.f32.mrb[0].mxu0
      %v800 = vadd.f32 0.0, %v799
      %v801 = vpop.f32.mrb[0].mxu0
      %v802 = vpop.f32.mrb[0].mxu0
      %v803 = vadd.f32 0.0, %v802
      %v804 = vpop.f32.mrb[0].mxu0
      %805 = vdwg.mxu0
      %v806 = vpack.c.bf16 %v747, %v744
      %v807 = vpack.c.bf16 %v755, %v752
      %v808 = vpack.c.bf16 %v763, %v760
      %v809 = vpack.c.bf16 %v771, %v768
      %v810 = vpack.c.bf16 %v779, %v776
      %v811 = vpack.c.bf16 %v787, %v784
      %v812 = vpack.c.bf16 %v795, %v792
      %v813 = vpack.c.bf16 %v803, %v800
      %vm814 = vcmask 130048
      %v816 = vsel %vm814, %v468, 0
      %v819 = vsel %vm814, %v469, 0
      %v822 = vsel %vm814, %v470, 0
      %v825 = vsel %vm814, %v471, 0
      %v828 = vsel %vm814, %v472, 0
      %v831 = vsel %vm814, %v473, 0
      %v834 = vsel %vm814, %v474, 0
      %v837 = vsel %vm814, %v475, 0
      %v840 = vsel %vm814, %v637, 0
      %v843 = vsel %vm814, %v638, 0
      %v846 = vsel %vm814, %v639, 0
      %v849 = vsel %vm814, %v640, 0
      %v852 = vsel %vm814, %v641, 0
      %v855 = vsel %vm814, %v642, 0
      %v858 = vsel %vm814, %v643, 0
      %v861 = vsel %vm814, %v644, 0
      %863 = vmatprep.subr.bf16.mxu0 0
      %864 = vmatpush1.bf16.xpose.msra.mxu0 %v840
      %865 = vmatprep.subr.bf16.mxu0 0
      %866 = vmatpush1.bf16.xpose.msra.mxu0 %v843
      %867 = vmatprep.subr.bf16.mxu0 0
      %868 = vmatpush1.bf16.xpose.msra.mxu0 %v846
      %869 = vmatprep.subr.bf16.mxu0 0
      %870 = vmatpush1.bf16.xpose.msra.mxu0 %v849
      %871 = vmatprep.subr.bf16.mxu0 0
      %872 = vmatpush1.bf16.xpose.msra.mxu0 %v852
      %873 = vmatprep.subr.bf16.mxu0 0
      %874 = vmatpush1.bf16.xpose.msra.mxu0 %v855
      %875 = vmatprep.subr.bf16.mxu0 0
      %876 = vmatpush1.bf16.xpose.msra.mxu0 %v858
      %877 = vmatprep.subr.bf16.mxu0 0
      %878 = vmatpush1.bf16.xpose.msra.mxu0 %v861
      %879 = vmatprep.subr.bf16.mxu0 0
      %880 = vmatpush1.bf16.xpose.msra.mxu0 0
      %881 = vmatprep.subr.bf16.mxu0 0
      %882 = vmatpush1.bf16.xpose.msra.mxu0 0
      %883 = vmatprep.subr.bf16.mxu0 0
      %884 = vmatpush1.bf16.xpose.msra.mxu0 0
      %885 = vmatprep.subr.bf16.mxu0 0
      %886 = vmatpush1.bf16.xpose.msra.mxu0 0
      %887 = vmatprep.subr.bf16.mxu0 0
      %888 = vmatpush1.bf16.xpose.msra.mxu0 0
      %889 = vmatprep.subr.bf16.mxu0 0
      %890 = vmatpush1.bf16.xpose.msra.mxu0 0
      %891 = vmatprep.subr.bf16.mxu0 0
      %892 = vmatpush1.bf16.xpose.msra.mxu0 0
      %893 = vmatprep.subr.bf16.mxu0 0
      %894 = vmatpush1.bf16.xpose.msra.mxu0 0
      %895 = vmatprep.mubr.bf16.mxu0 0
      %896 = vmatmul.mubr.bf16.gmra.mrb[0].mxu0 %v816
      %v897 = vpop.f32.mrb[0].mxu0
      %v898 = vadd.f32 0.0, %v897
      %v899 = vpop.f32.mrb[0].mxu0
      %v900 = vpop.f32.mrb[0].mxu0
      %v901 = vadd.f32 0.0, %v900
      %v902 = vpop.f32.mrb[0].mxu0
      %903 = vmatprep.mubr.bf16.mxu0 0
      %904 = vmatmul.mubr.bf16.gmra.mrb[0].mxu0 %v819
      %v905 = vpop.f32.mrb[0].mxu0
      %v906 = vadd.f32 0.0, %v905
      %v907 = vpop.f32.mrb[0].mxu0
      %v908 = vpop.f32.mrb[0].mxu0
      %v909 = vadd.f32 0.0, %v908
      %v910 = vpop.f32.mrb[0].mxu0
      %911 = vmatprep.mubr.bf16.mxu0 0
      %912 = vmatmul.mubr.bf16.gmra.mrb[0].mxu0 %v822
      %v913 = vpop.f32.mrb[0].mxu0
      %v914 = vadd.f32 0.0, %v913
      %v915 = vpop.f32.mrb[0].mxu0
      %v916 = vpop.f32.mrb[0].mxu0
      %v917 = vadd.f32 0.0, %v916
      %v918 = vpop.f32.mrb[0].mxu0
      %919 = vmatprep.mubr.bf16.mxu0 0
      %920 = vmatmul.mubr.bf16.gmra.mrb[0].mxu0 %v825
      %v921 = vpop.f32.mrb[0].mxu0
      %v922 = vadd.f32 0.0, %v921
      %v923 = vpop.f32.mrb[0].mxu0
      %v924 = vpop.f32.mrb[0].mxu0
      %v925 = vadd.f32 0.0, %v924
      %v926 = vpop.f32.mrb[0].mxu0
      %927 = vmatprep.mubr.bf16.mxu0 0
      %928 = vmatmul.mubr.bf16.gmra.mrb[0].mxu0 %v828
      %v929 = vpop.f32.mrb[0].mxu0
      %v930 = vadd.f32 0.0, %v929
      %v931 = vpop.f32.mrb[0].mxu0
      %v932 = vpop.f32.mrb[0].mxu0
      %v933 = vadd.f32 0.0, %v932
      %v934 = vpop.f32.mrb[0].mxu0
      %935 = vmatprep.mubr.bf16.mxu0 0
      %936 = vmatmul.mubr.bf16.gmra.mrb[0].mxu0 %v831
      %v937 = vpop.f32.mrb[0].mxu0
      %v938 = vadd.f32 0.0, %v937
      %v939 = vpop.f32.mrb[0].mxu0
      %v940 = vpop.f32.mrb[0].mxu0
      %v941 = vadd.f32 0.0, %v940
      %v942 = vpop.f32.mrb[0].mxu0
      %943 = vmatprep.mubr.bf16.mxu0 0
      %944 = vmatmul.mubr.bf16.gmra.mrb[0].mxu0 %v834
      %v945 = vpop.f32.mrb[0].mxu0
      %v946 = vadd.f32 0.0, %v945
      %v947 = vpop.f32.mrb[0].mxu0
      %v948 = vpop.f32.mrb[0].mxu0
      %v949 = vadd.f32 0.0, %v948
      %v950 = vpop.f32.mrb[0].mxu0
      %951 = vmatprep.mubr.bf16.mxu0 0
      %952 = vmatmul.mubr.bf16.gmra.mrb[0].mxu0 %v837
      %v953 = vpop.f32.mrb[0].mxu0
      %v954 = vadd.f32 0.0, %v953
      %v955 = vpop.f32.mrb[0].mxu0
      %v956 = vpop.f32.mrb[0].mxu0
      %v957 = vadd.f32 0.0, %v956
      %v958 = vpop.f32.mrb[0].mxu0
      %959 = vdwg.mxu0
      %960 = vmax.xlane.f32.xlu0 %v898
      %v961 = vpop.xlane.xlu0 %960
      %962 = vmax.xlane.f32.xlu0 %v901
      %v963 = vpop.xlane.xlu0 %962
      %964 = vmax.xlane.f32.xlu0 %v906
      %v965 = vpop.xlane.xlu0 %964
      %966 = vmax.xlane.f32.xlu0 %v909
      %v967 = vpop.xlane.xlu0 %966
      %968 = vmax.xlane.f32.xlu0 %v914
      %v969 = vpop.xlane.xlu0 %968
      %970 = vmax.xlane.f32.xlu0 %v917
      %v971 = vpop.xlane.xlu0 %970
      %972 = vmax.xlane.f32.xlu0 %v922
      %v973 = vpop.xlane.xlu0 %972
      %974 = vmax.xlane.f32.xlu0 %v925
      %v975 = vpop.xlane.xlu0 %974
      %976 = vmax.xlane.f32.xlu0 %v930
      %v977 = vpop.xlane.xlu0 %976
      %978 = vmax.xlane.f32.xlu0 %v933
      %v979 = vpop.xlane.xlu0 %978
      %980 = vmax.xlane.f32.xlu0 %v938
      %v981 = vpop.xlane.xlu0 %980
      %982 = vmax.xlane.f32.xlu0 %v941
      %v983 = vpop.xlane.xlu0 %982
      %984 = vmax.xlane.f32.xlu0 %v946
      %v985 = vpop.xlane.xlu0 %984
      %986 = vmax.xlane.f32.xlu0 %v949
      %v987 = vpop.xlane.xlu0 %986
      %988 = vmax.xlane.f32.xlu0 %v954
      %v989 = vpop.xlane.xlu0 %988
      %990 = vmax.xlane.f32.xlu0 %v957
      %v991 = vpop.xlane.xlu0 %990
      %v992 = vsub.f32 %v898, %v961
      %v993 = vsub.f32 %v901, %v963
      %v994 = vsub.f32 %v906, %v965
      %v995 = vsub.f32 %v909, %v967
      %v996 = vsub.f32 %v914, %v969
      %v997 = vsub.f32 %v917, %v971
      %v998 = vsub.f32 %v922, %v973
      %v999 = vsub.f32 %v925, %v975
      %v1000 = vsub.f32 %v930, %v977
      %v1001 = vsub.f32 %v933, %v979
      %v1002 = vsub.f32 %v938, %v981
      %v1003 = vsub.f32 %v941, %v983
      %v1004 = vsub.f32 %v946, %v985
      %v1005 = vsub.f32 %v949, %v987
      %v1006 = vsub.f32 %v954, %v989
      %v1007 = vsub.f32 %v957, %v991
      %v1008 = vmul.f32 %v992, 1.442695
      %v1009 = vpow.pop %v1008
      %v1010 = vmul.f32 %v993, 1.442695
      %v1011 = vpow.pop %v1010
      %v1012 = vmul.f32 %v994, 1.442695
      %v1013 = vpow.pop %v1012
      %v1014 = vmul.f32 %v995, 1.442695
      %v1015 = vpow.pop %v1014
      %v1016 = vmul.f32 %v996, 1.442695
      %v1017 = vpow.pop %v1016
      %v1018 = vmul.f32 %v997, 1.442695
      %v1019 = vpow.pop %v1018
      %v1020 = vmul.f32 %v998, 1.442695
      %v1021 = vpow.pop %v1020
      %v1022 = vmul.f32 %v999, 1.442695
      %v1023 = vpow.pop %v1022
      %v1024 = vmul.f32 %v1000, 1.442695
      %v1025 = vpow.pop %v1024
      %v1026 = vmul.f32 %v1001, 1.442695
      %v1027 = vpow.pop %v1026
      %v1028 = vmul.f32 %v1002, 1.442695
      %v1029 = vpow.pop %v1028
      %v1030 = vmul.f32 %v1003, 1.442695
      %v1031 = vpow.pop %v1030
      %v1032 = vmul.f32 %v1004, 1.442695
      %v1033 = vpow.pop %v1032
      %v1034 = vmul.f32 %v1005, 1.442695
      %v1035 = vpow.pop %v1034
      %v1036 = vmul.f32 %v1006, 1.442695
      %v1037 = vpow.pop %v1036
      %v1038 = vmul.f32 %v1007, 1.442695
      %v1039 = vpow.pop %v1038
      %1040 = vadd.xlane.f32.xlu0 %v1009
      %v1041 = vpop.xlane.xlu0 %1040
      %1042 = vadd.xlane.f32.xlu0 %v1011
      %v1043 = vpop.xlane.xlu0 %1042
      %1044 = vadd.xlane.f32.xlu0 %v1013
      %v1045 = vpop.xlane.xlu0 %1044
      %1046 = vadd.xlane.f32.xlu0 %v1015
      %v1047 = vpop.xlane.xlu0 %1046
      %1048 = vadd.xlane.f32.xlu0 %v1017
      %v1049 = vpop.xlane.xlu0 %1048
      %1050 = vadd.xlane.f32.xlu0 %v1019
      %v1051 = vpop.xlane.xlu0 %1050
      %1052 = vadd.xlane.f32.xlu0 %v1021
      %v1053 = vpop.xlane.xlu0 %1052
      %1054 = vadd.xlane.f32.xlu0 %v1023
      %v1055 = vpop.xlane.xlu0 %1054
      %1056 = vadd.xlane.f32.xlu0 %v1025
      %v1057 = vpop.xlane.xlu0 %1056
      %1058 = vadd.xlane.f32.xlu0 %v1027
      %v1059 = vpop.xlane.xlu0 %1058
      %1060 = vadd.xlane.f32.xlu0 %v1029
      %v1061 = vpop.xlane.xlu0 %1060
      %1062 = vadd.xlane.f32.xlu0 %v1031
      %v1063 = vpop.xlane.xlu0 %1062
      %1064 = vadd.xlane.f32.xlu0 %v1033
      %v1065 = vpop.xlane.xlu0 %1064
      %1066 = vadd.xlane.f32.xlu0 %v1035
      %v1067 = vpop.xlane.xlu0 %1066
      %1068 = vadd.xlane.f32.xlu0 %v1037
      %v1069 = vpop.xlane.xlu0 %1068
      %1070 = vadd.xlane.f32.xlu0 %v1039
      %v1071 = vpop.xlane.xlu0 %1070
      %v1072 = vrcp.pop %v1041
      %v1073 = vrcp.pop %v1043
      %v1074 = vrcp.pop %v1045
      %v1075 = vrcp.pop %v1047
      %v1076 = vrcp.pop %v1049
      %v1077 = vrcp.pop %v1051
      %v1078 = vrcp.pop %v1053
      %v1079 = vrcp.pop %v1055
      %v1080 = vrcp.pop %v1057
      %v1081 = vrcp.pop %v1059
      %v1082 = vrcp.pop %v1061
      %v1083 = vrcp.pop %v1063
      %v1084 = vrcp.pop %v1065
      %v1085 = vrcp.pop %v1067
      %v1086 = vrcp.pop %v1069
      %v1087 = vrcp.pop %v1071
      %v1088 = vmul.f32 %v1009, %v1072
      %v1089 = vmul.f32 %v1011, %v1073
      %v1090 = vmul.f32 %v1013, %v1074
      %v1091 = vmul.f32 %v1015, %v1075
      %v1092 = vmul.f32 %v1017, %v1076
      %v1093 = vmul.f32 %v1019, %v1077
      %v1094 = vmul.f32 %v1021, %v1078
      %v1095 = vmul.f32 %v1023, %v1079
      %v1096 = vmul.f32 %v1025, %v1080
      %v1097 = vmul.f32 %v1027, %v1081
      %v1098 = vmul.f32 %v1029, %v1082
      %v1099 = vmul.f32 %v1031, %v1083
      %v1100 = vmul.f32 %v1033, %v1084
      %v1101 = vmul.f32 %v1035, %v1085
      %v1102 = vmul.f32 %v1037, %v1086
      %v1103 = vmul.f32 %v1039, %v1087
      %v1104 = vpack.c.bf16 %v1089, %v1088
      %v1105 = vpack.c.bf16 %v1091, %v1090
      %v1106 = vpack.c.bf16 %v1093, %v1092
      %v1107 = vpack.c.bf16 %v1095, %v1094
      %v1108 = vpack.c.bf16 %v1097, %v1096
      %v1109 = vpack.c.bf16 %v1099, %v1098
      %v1110 = vpack.c.bf16 %v1101, %v1100
      %v1111 = vpack.c.bf16 %v1103, %v1102
      %1112 = vmatprep.subr.bf16.mxu0 0
      %1113 = vmatpush1.bf16.msra.mxu0 %v806
      %1114 = vmatprep.subr.bf16.mxu0 0
      %1115 = vmatpush1.bf16.msra.mxu0 %v807
      %1116 = vmatprep.subr.bf16.mxu0 0
      %1117 = vmatpush1.bf16.msra.mxu0 %v808
      %1118 = vmatprep.subr.bf16.mxu0 0
      %1119 = vmatpush1.bf16.msra.mxu0 %v809
      %1120 = vmatprep.subr.bf16.mxu0 0
      %1121 = vmatpush1.bf16.msra.mxu0 %v810
      %1122 = vmatprep.subr.bf16.mxu0 0
      %1123 = vmatpush1.bf16.msra.mxu0 %v811
      %1124 = vmatprep.subr.bf16.mxu0 0
      %1125 = vmatpush1.bf16.msra.mxu0 %v812
      %1126 = vmatprep.subr.bf16.mxu0 0
      %1127 = vmatpush1.bf16.msra.mxu0 %v813
      %1128 = vmatprep.subr.bf16.mxu0 0
      %1129 = vmatpush1.bf16.msra.mxu0 0
      %1130 = vmatprep.subr.bf16.mxu0 0
      %1131 = vmatpush1.bf16.msra.mxu0 0
      %1132 = vmatprep.subr.bf16.mxu0 0
      %1133 = vmatpush1.bf16.msra.mxu0 0
      %1134 = vmatprep.subr.bf16.mxu0 0
      %1135 = vmatpush1.bf16.msra.mxu0 0
      %1136 = vmatprep.subr.bf16.mxu0 0
      %1137 = vmatpush1.bf16.msra.mxu0 0
      %1138 = vmatprep.subr.bf16.mxu0 0
      %1139 = vmatpush1.bf16.msra.mxu0 0
      %1140 = vmatprep.subr.bf16.mxu0 0
      %1141 = vmatpush1.bf16.msra.mxu0 0
      %1142 = vmatprep.subr.bf16.mxu0 0
      %1143 = vmatpush1.bf16.msra.mxu0 0
      %1144 = vmatprep.mubr.bf16.mxu0 0
      %1145 = vmatmul.mubr.bf16.gmra.mrb[0].mxu0 %v1104
      %v1146 = vpop.f32.mrb[0].mxu0
      %v1147 = vadd.f32 0.0, %v1146
      %v1148 = vpop.f32.mrb[0].mxu0
      %v1149 = vpop.f32.mrb[0].mxu0
      %v1150 = vadd.f32 0.0, %v1149
      %v1151 = vpop.f32.mrb[0].mxu0
      %1152 = vmatprep.mubr.bf16.mxu0 0
      %1153 = vmatmul.mubr.bf16.gmra.mrb[0].mxu0 %v1105
      %v1154 = vpop.f32.mrb[0].mxu0
      %v1155 = vadd.f32 0.0, %v1154
      %v1156 = vpop.f32.mrb[0].mxu0
      %v1157 = vpop.f32.mrb[0].mxu0
      %v1158 = vadd.f32 0.0, %v1157
      %v1159 = vpop.f32.mrb[0].mxu0
      %1160 = vmatprep.mubr.bf16.mxu0 0
      %1161 = vmatmul.mubr.bf16.gmra.mrb[0].mxu0 %v1106
      %v1162 = vpop.f32.mrb[0].mxu0
      %v1163 = vadd.f32 0.0, %v1162
      %v1164 = vpop.f32.mrb[0].mxu0
      %v1165 = vpop.f32.mrb[0].mxu0
      %v1166 = vadd.f32 0.0, %v1165
      %v1167 = vpop.f32.mrb[0].mxu0
      %1168 = vmatprep.mubr.bf16.mxu0 0
      %1169 = vmatmul.mubr.bf16.gmra.mrb[0].mxu0 %v1107
      %v1170 = vpop.f32.mrb[0].mxu0
      %v1171 = vadd.f32 0.0, %v1170
      %v1172 = vpop.f32.mrb[0].mxu0
      %v1173 = vpop.f32.mrb[0].mxu0
      %v1174 = vadd.f32 0.0, %v1173
      %v1175 = vpop.f32.mrb[0].mxu0
      %1176 = vmatprep.mubr.bf16.mxu0 0
      %1177 = vmatmul.mubr.bf16.gmra.mrb[0].mxu0 %v1108
      %v1178 = vpop.f32.mrb[0].mxu0
      %v1179 = vadd.f32 0.0, %v1178
      %v1180 = vpop.f32.mrb[0].mxu0
      %v1181 = vpop.f32.mrb[0].mxu0
      %v1182 = vadd.f32 0.0, %v1181
      %v1183 = vpop.f32.mrb[0].mxu0
      %1184 = vmatprep.mubr.bf16.mxu0 0
      %1185 = vmatmul.mubr.bf16.gmra.mrb[0].mxu0 %v1109
      %v1186 = vpop.f32.mrb[0].mxu0
      %v1187 = vadd.f32 0.0, %v1186
      %v1188 = vpop.f32.mrb[0].mxu0
      %v1189 = vpop.f32.mrb[0].mxu0
      %v1190 = vadd.f32 0.0, %v1189
      %v1191 = vpop.f32.mrb[0].mxu0
      %1192 = vmatprep.mubr.bf16.mxu0 0
      %1193 = vmatmul.mubr.bf16.gmra.mrb[0].mxu0 %v1110
      %v1194 = vpop.f32.mrb[0].mxu0
      %v1195 = vadd.f32 0.0, %v1194
      %v1196 = vpop.f32.mrb[0].mxu0
      %v1197 = vpop.f32.mrb[0].mxu0
      %v1198 = vadd.f32 0.0, %v1197
      %v1199 = vpop.f32.mrb[0].mxu0
      %1200 = vmatprep.mubr.bf16.mxu0 0
      %1201 = vmatmul.mubr.bf16.gmra.mrb[0].mxu0 %v1111
      %v1202 = vpop.f32.mrb[0].mxu0
      %v1203 = vadd.f32 0.0, %v1202
      %v1204 = vpop.f32.mrb[0].mxu0
      %v1205 = vpop.f32.mrb[0].mxu0
      %v1206 = vadd.f32 0.0, %v1205
      %v1207 = vpop.f32.mrb[0].mxu0
      %1208 = vdwg.mxu0
      %v1209 = vpack.c.bf16 %v1150, %v1147
      %v1210 = vpack.c.bf16 %v1158, %v1155
      %v1211 = vpack.c.bf16 %v1166, %v1163
      %v1212 = vpack.c.bf16 %v1174, %v1171
      %v1213 = vpack.c.bf16 %v1182, %v1179
      %v1214 = vpack.c.bf16 %v1190, %v1187
      %v1215 = vpack.c.bf16 %v1198, %v1195
      %v1216 = vpack.c.bf16 %v1206, %v1203
      %v1217 = vld [vmem:[#allocation2] sm:$0xff]
      %v1218 = vld [vmem:[#allocation2 + $0x8] sm:$0xff]
      %v1219 = vld [vmem:[#allocation2 + $0x10] sm:$0xff]
      %v1220 = vld [vmem:[#allocation2 + $0x18] sm:$0xff]
      %v1221 = vld [vmem:[#allocation2 + $0x20] sm:$0xff]
      %v1222 = vld [vmem:[#allocation2 + $0x28] sm:$0xff]
      %v1223 = vld [vmem:[#allocation2 + $0x30] sm:$0xff]
      %v1224 = vld [vmem:[#allocation2 + $0x38] sm:$0xff]
      %v1225 = vld [vmem:[#allocation2 + $0x40] sm:$0xff]
      %v1226 = vld [vmem:[#allocation2 + $0x48] sm:$0xff]
      %v1227 = vld [vmem:[#allocation2 + $0x50] sm:$0xff]
      %v1228 = vld [vmem:[#allocation2 + $0x58] sm:$0xff]
      %v1229 = vld [vmem:[#allocation2 + $0x60] sm:$0xff]
      %v1230 = vld [vmem:[#allocation2 + $0x68] sm:$0xff]
      %v1231 = vld [vmem:[#allocation2 + $0x70] sm:$0xff]
      %v1232 = vld [vmem:[#allocation2 + $0x78] sm:$0xff]
      %v1233 = vld [vmem:[%s4] sm:$0xf]
      %v1234 = vld [vmem:[%s4 + $0x4] sm:$0xf]
      %v1237 = vunpack.c.l.b16 %v1233
      %v1238 = vunpack.c.l.b16 %v1234
      %v1239 = vpack.c.b16 %v1238, %v1237
      %v1242 = vsel %vm814, %v1209, 0
      %v1245 = vsel %vm814, %v1210, 0
      %v1248 = vsel %vm814, %v1211, 0
      %v1251 = vsel %vm814, %v1212, 0
      %v1254 = vsel %vm814, %v1213, 0
      %v1257 = vsel %vm814, %v1214, 0
      %v1260 = vsel %vm814, %v1215, 0
      %v1263 = vsel %vm814, %v1216, 0
      %1265 = vmatprep.subr.bf16.mxu0 0
      %1266 = vmatpush1.bf16.msra.mxu0 %v1239
      %1267 = vmatprep.subr.bf16.mxu0 0
      %1268 = vmatpush1.bf16.msra.mxu0 0
      %1269 = vmatprep.subr.bf16.mxu0 0
      %1270 = vmatpush1.bf16.msra.mxu0 0
      %1271 = vmatprep.subr.bf16.mxu0 0
      %1272 = vmatpush1.bf16.msra.mxu0 0
      %1273 = vmatprep.subr.bf16.mxu0 0
      %1274 = vmatpush1.bf16.msra.mxu0 0
      %1275 = vmatprep.subr.bf16.mxu0 0
      %1276 = vmatpush1.bf16.msra.mxu0 0
      %1277 = vmatprep.subr.bf16.mxu0 0
      %1278 = vmatpush1.bf16.msra.mxu0 0
      %1279 = vmatprep.subr.bf16.mxu0 0
      %1280 = vmatpush1.bf16.msra.mxu0 0
      %1281 = vmatprep.subr.bf16.mxu0 0
      %1282 = vmatpush1.bf16.msra.mxu0 0
      %1283 = vmatprep.subr.bf16.mxu0 0
      %1284 = vmatpush1.bf16.msra.mxu0 0
      %1285 = vmatprep.subr.bf16.mxu0 0
      %1286 = vmatpush1.bf16.msra.mxu0 0
      %1287 = vmatprep.subr.bf16.mxu0 0
      %1288 = vmatpush1.bf16.msra.mxu0 0
      %1289 = vmatprep.subr.bf16.mxu0 0
      %1290 = vmatpush1.bf16.msra.mxu0 0
      %1291 = vmatprep.subr.bf16.mxu0 0
      %1292 = vmatpush1.bf16.msra.mxu0 0
      %1293 = vmatprep.subr.bf16.mxu0 0
      %1294 = vmatpush1.bf16.msra.mxu0 0
      %1295 = vmatprep.subr.bf16.mxu0 0
      %1296 = vmatpush1.bf16.msra.mxu0 0
      %1297 = vmatprep.mubr.bf16.mxu0 0
      %1298 = vmatmul.mubr.bf16.gmra.mrb[0].mxu0 %v1242
      %v1299 = vpop.f32.mrb[0].mxu0
      %v1300 = vadd.f32 0.0, %v1299
      %v1301 = vpop.f32.mrb[0].mxu0
      %v1302 = vpop.f32.mrb[0].mxu0
      %v1303 = vadd.f32 0.0, %v1302
      %v1304 = vpop.f32.mrb[0].mxu0
      %1305 = vmatprep.mubr.bf16.mxu0 0
      %1306 = vmatmul.mubr.bf16.gmra.mrb[0].mxu0 %v1245
      %v1307 = vpop.f32.mrb[0].mxu0
      %v1308 = vadd.f32 0.0, %v1307
      %v1309 = vpop.f32.mrb[0].mxu0
      %v1310 = vpop.f32.mrb[0].mxu0
      %v1311 = vadd.f32 0.0, %v1310
      %v1312 = vpop.f32.mrb[0].mxu0
      %1313 = vmatprep.mubr.bf16.mxu0 0
      %1314 = vmatmul.mubr.bf16.gmra.mrb[0].mxu0 %v1248
      %v1315 = vpop.f32.mrb[0].mxu0
      %v1316 = vadd.f32 0.0, %v1315
      %v1317 = vpop.f32.mrb[0].mxu0
      %v1318 = vpop.f32.mrb[0].mxu0
      %v1319 = vadd.f32 0.0, %v1318
      %v1320 = vpop.f32.mrb[0].mxu0
      %1321 = vmatprep.mubr.bf16.mxu0 0
      %1322 = vmatmul.mubr.bf16.gmra.mrb[0].mxu0 %v1251
      %v1323 = vpop.f32.mrb[0].mxu0
      %v1324 = vadd.f32 0.0, %v1323
      %v1325 = vpop.f32.mrb[0].mxu0
      %v1326 = vpop.f32.mrb[0].mxu0
      %v1327 = vadd.f32 0.0, %v1326
      %v1328 = vpop.f32.mrb[0].mxu0
      %1329 = vmatprep.mubr.bf16.mxu0 0
      %1330 = vmatmul.mubr.bf16.gmra.mrb[0].mxu0 %v1254
      %v1331 = vpop.f32.mrb[0].mxu0
      %v1332 = vadd.f32 0.0, %v1331
      %v1333 = vpop.f32.mrb[0].mxu0
      %v1334 = vpop.f32.mrb[0].mxu0
      %v1335 = vadd.f32 0.0, %v1334
      %v1336 = vpop.f32.mrb[0].mxu0
      %1337 = vmatprep.mubr.bf16.mxu0 0
      %1338 = vmatmul.mubr.bf16.gmra.mrb[0].mxu0 %v1257
      %v1339 = vpop.f32.mrb[0].mxu0
      %v1340 = vadd.f32 0.0, %v1339
      %v1341 = vpop.f32.mrb[0].mxu0
      %v1342 = vpop.f32.mrb[0].mxu0
      %v1343 = vadd.f32 0.0, %v1342
      %v1344 = vpop.f32.mrb[0].mxu0
      %1345 = vmatprep.mubr.bf16.mxu0 0
      %1346 = vmatmul.mubr.bf16.gmra.mrb[0].mxu0 %v1260
      %v1347 = vpop.f32.mrb[0].mxu0
      %v1348 = vadd.f32 0.0, %v1347
      %v1349 = vpop.f32.mrb[0].mxu0
      %v1350 = vpop.f32.mrb[0].mxu0
      %v1351 = vadd.f32 0.0, %v1350
      %v1352 = vpop.f32.mrb[0].mxu0
      %1353 = vmatprep.mubr.bf16.mxu0 0
      %1354 = vmatmul.mubr.bf16.gmra.mrb[0].mxu0 %v1263
      %v1355 = vpop.f32.mrb[0].mxu0
      %v1356 = vadd.f32 0.0, %v1355
      %v1357 = vpop.f32.mrb[0].mxu0
      %v1358 = vpop.f32.mrb[0].mxu0
      %v1359 = vadd.f32 0.0, %v1358
      %v1360 = vpop.f32.mrb[0].mxu0
      %1361 = vdwg.mxu0
      %v1362 = vadd.f32 %v1217, %v1300
      %v1363 = vadd.f32 %v1218, %v1303
      %v1364 = vadd.f32 %v1219, %v1308
      %v1365 = vadd.f32 %v1220, %v1311
      %v1366 = vadd.f32 %v1221, %v1316
      %v1367 = vadd.f32 %v1222, %v1319
      %v1368 = vadd.f32 %v1223, %v1324
      %v1369 = vadd.f32 %v1224, %v1327
      %v1370 = vadd.f32 %v1225, %v1332
      %v1371 = vadd.f32 %v1226, %v1335
      %v1372 = vadd.f32 %v1227, %v1340
      %v1373 = vadd.f32 %v1228, %v1343
      %v1374 = vadd.f32 %v1229, %v1348
      %v1375 = vadd.f32 %v1230, %v1351
      %v1376 = vadd.f32 %v1231, %v1356
      %v1377 = vadd.f32 %v1232, %v1359
      %1378 = vst [vmem:[#allocation2] sm:$0xff] %v1362
      %1379 = vst [vmem:[#allocation2 + $0x8] sm:$0xff] %v1363
      %1380 = vst [vmem:[#allocation2 + $0x10] sm:$0xff] %v1364
      %1381 = vst [vmem:[#allocation2 + $0x18] sm:$0xff] %v1365
      %1382 = vst [vmem:[#allocation2 + $0x20] sm:$0xff] %v1366
      %1383 = vst [vmem:[#allocation2 + $0x28] sm:$0xff] %v1367
      %1384 = vst [vmem:[#allocation2 + $0x30] sm:$0xff] %v1368
      %1385 = vst [vmem:[#allocation2 + $0x38] sm:$0xff] %v1369
      %1386 = vst [vmem:[#allocation2 + $0x40] sm:$0xff] %v1370
      %1387 = vst [vmem:[#allocation2 + $0x48] sm:$0xff] %v1371
      %1388 = vst [vmem:[#allocation2 + $0x50] sm:$0xff] %v1372
      %1389 = vst [vmem:[#allocation2 + $0x58] sm:$0xff] %v1373
      %1390 = vst [vmem:[#allocation2 + $0x60] sm:$0xff] %v1374
      %1391 = vst [vmem:[#allocation2 + $0x68] sm:$0xff] %v1375
      %1392 = vst [vmem:[#allocation2 + $0x70] sm:$0xff] %v1376
      %1393 = vst [vmem:[#allocation2 + $0x78] sm:$0xff] %v1377
      %s1394 = scalar_lea.vmem %s1, 64
      %v1395 = vld [vmem:[%s1394] sm:$0xf]
      %v1396 = vld [vmem:[%s1394 + $0x4] sm:$0xf]
      %v1397 = vld [vmem:[%s1394 + $0x8] sm:$0xf]
      %v1398 = vld [vmem:[%s1394 + $0xc] sm:$0xf]
      %v1399 = vld [vmem:[%s1394 + $0x10] sm:$0xf]
      %v1400 = vld [vmem:[%s1394 + $0x14] sm:$0xf]
      %v1401 = vld [vmem:[%s1394 + $0x18] sm:$0xf]
      %v1402 = vld [vmem:[%s1394 + $0x1c] sm:$0xf]
      %v1403 = vld [vmem:[%s1394 + $0x20] sm:$0xf]
      %v1404 = vld [vmem:[%s1394 + $0x24] sm:$0xf]
      %v1405 = vld [vmem:[%s1394 + $0x28] sm:$0xf]
      %v1406 = vld [vmem:[%s1394 + $0x2c] sm:$0xf]
      %v1407 = vld [vmem:[%s1394 + $0x30] sm:$0xf]
      %v1408 = vld [vmem:[%s1394 + $0x34] sm:$0xf]
      %v1409 = vld [vmem:[%s1394 + $0x38] sm:$0xf]
      %v1410 = vld [vmem:[%s1394 + $0x3c] sm:$0xf]
      %v1427 = vunpack.c.l.b16 %v1395
      %v1428 = vunpack.c.l.b16 %v1396
      %v1429 = vunpack.c.l.b16 %v1397
      %v1430 = vunpack.c.l.b16 %v1398
      %v1431 = vunpack.c.l.b16 %v1399
      %v1432 = vunpack.c.l.b16 %v1400
      %v1433 = vunpack.c.l.b16 %v1401
      %v1434 = vunpack.c.l.b16 %v1402
      %v1435 = vunpack.c.l.b16 %v1403
      %v1436 = vunpack.c.l.b16 %v1404
      %v1437 = vunpack.c.l.b16 %v1405
      %v1438 = vunpack.c.l.b16 %v1406
      %v1439 = vunpack.c.l.b16 %v1407
      %v1440 = vunpack.c.l.b16 %v1408
      %v1441 = vunpack.c.l.b16 %v1409
      %v1442 = vunpack.c.l.b16 %v1410
      %v1443 = vpack.c.b16 %v1428, %v1427
      %v1444 = vpack.c.b16 %v1430, %v1429
      %v1445 = vpack.c.b16 %v1432, %v1431
      %v1446 = vpack.c.b16 %v1434, %v1433
      %v1447 = vpack.c.b16 %v1436, %v1435
      %v1448 = vpack.c.b16 %v1438, %v1437
      %v1449 = vpack.c.b16 %v1440, %v1439
      %v1450 = vpack.c.b16 %v1442, %v1441
      %1459 = vmatprep.subr.bf16.mxu0 0
      %1460 = vmatpush1.bf16.msra.mxu0 %v1443
      %1461 = vmatprep.subr.bf16.mxu0 0
      %1462 = vmatpush1.bf16.msra.mxu0 %v1444
      %1463 = vmatprep.subr.bf16.mxu0 0
      %1464 = vmatpush1.bf16.msra.mxu0 %v1445
      %1465 = vmatprep.subr.bf16.mxu0 0
      %1466 = vmatpush1.bf16.msra.mxu0 %v1446
      %1467 = vmatprep.subr.bf16.mxu0 0
      %1468 = vmatpush1.bf16.msra.mxu0 %v1447
      %1469 = vmatprep.subr.bf16.mxu0 0
      %1470 = vmatpush1.bf16.msra.mxu0 %v1448
      %1471 = vmatprep.subr.bf16.mxu0 0
      %1472 = vmatpush1.bf16.msra.mxu0 %v1449
      %1473 = vmatprep.subr.bf16.mxu0 0
      %1474 = vmatpush1.bf16.msra.mxu0 %v1450
      %1475 = vmatprep.subr.bf16.mxu0 0
      %1476 = vmatpush1.bf16.msra.mxu0 0
      %1477 = vmatprep.subr.bf16.mxu0 0
      %1478 = vmatpush1.bf16.msra.mxu0 0
      %1479 = vmatprep.subr.bf16.mxu0 0
      %1480 = vmatpush1.bf16.msra.mxu0 0
      %1481 = vmatprep.subr.bf16.mxu0 0
      %1482 = vmatpush1.bf16.msra.mxu0 0
      %1483 = vmatprep.subr.bf16.mxu0 0
      %1484 = vmatpush1.bf16.msra.mxu0 0
      %1485 = vmatprep.subr.bf16.mxu0 0
      %1486 = vmatpush1.bf16.msra.mxu0 0
      %1487 = vmatprep.subr.bf16.mxu0 0
      %1488 = vmatpush1.bf16.msra.mxu0 0
      %1489 = vmatprep.subr.bf16.mxu0 0
      %1490 = vmatpush1.bf16.msra.mxu0 0
      %1491 = vmatprep.mubr.bf16.mxu0 0
      %1492 = vmatmul.mubr.bf16.gmra.mrb[0].mxu0 %v283
      %v1493 = vpop.f32.mrb[0].mxu0
      %v1494 = vadd.f32 0.0, %v1493
      %v1495 = vpop.f32.mrb[0].mxu0
      %v1496 = vpop.f32.mrb[0].mxu0
      %v1497 = vadd.f32 0.0, %v1496
      %v1498 = vpop.f32.mrb[0].mxu0
      %1499 = vmatprep.mubr.bf16.mxu0 0
      %1500 = vmatmul.mubr.bf16.gmra.mrb[0].mxu0 %v284
      %v1501 = vpop.f32.mrb[0].mxu0
      %v1502 = vadd.f32 0.0, %v1501
      %v1503 = vpop.f32.mrb[0].mxu0
      %v1504 = vpop.f32.mrb[0].mxu0
      %v1505 = vadd.f32 0.0, %v1504
      %v1506 = vpop.f32.mrb[0].mxu0
      %1507 = vmatprep.mubr.bf16.mxu0 0
      %1508 = vmatmul.mubr.bf16.gmra.mrb[0].mxu0 %v285
      %v1509 = vpop.f32.mrb[0].mxu0
      %v1510 = vadd.f32 0.0, %v1509
      %v1511 = vpop.f32.mrb[0].mxu0
      %v1512 = vpop.f32.mrb[0].mxu0
      %v1513 = vadd.f32 0.0, %v1512
      %v1514 = vpop.f32.mrb[0].mxu0
      %1515 = vmatprep.mubr.bf16.mxu0 0
      %1516 = vmatmul.mubr.bf16.gmra.mrb[0].mxu0 %v286
      %v1517 = vpop.f32.mrb[0].mxu0
      %v1518 = vadd.f32 0.0, %v1517
      %v1519 = vpop.f32.mrb[0].mxu0
      %v1520 = vpop.f32.mrb[0].mxu0
      %v1521 = vadd.f32 0.0, %v1520
      %v1522 = vpop.f32.mrb[0].mxu0
      %1523 = vmatprep.mubr.bf16.mxu0 0
      %1524 = vmatmul.mubr.bf16.gmra.mrb[0].mxu0 %v287
      %v1525 = vpop.f32.mrb[0].mxu0
      %v1526 = vadd.f32 0.0, %v1525
      %v1527 = vpop.f32.mrb[0].mxu0
      %v1528 = vpop.f32.mrb[0].mxu0
      %v1529 = vadd.f32 0.0, %v1528
      %v1530 = vpop.f32.mrb[0].mxu0
      %1531 = vmatprep.mubr.bf16.mxu0 0
      %1532 = vmatmul.mubr.bf16.gmra.mrb[0].mxu0 %v288
      %v1533 = vpop.f32.mrb[0].mxu0
      %v1534 = vadd.f32 0.0, %v1533
      %v1535 = vpop.f32.mrb[0].mxu0
      %v1536 = vpop.f32.mrb[0].mxu0
      %v1537 = vadd.f32 0.0, %v1536
      %v1538 = vpop.f32.mrb[0].mxu0
      %1539 = vmatprep.mubr.bf16.mxu0 0
      %1540 = vmatmul.mubr.bf16.gmra.mrb[0].mxu0 %v289
      %v1541 = vpop.f32.mrb[0].mxu0
      %v1542 = vadd.f32 0.0, %v1541
      %v1543 = vpop.f32.mrb[0].mxu0
      %v1544 = vpop.f32.mrb[0].mxu0
      %v1545 = vadd.f32 0.0, %v1544
      %v1546 = vpop.f32.mrb[0].mxu0
      %1547 = vmatprep.mubr.bf16.mxu0 0
      %1548 = vmatmul.mubr.bf16.gmra.mrb[0].mxu0 %v290
      %v1549 = vpop.f32.mrb[0].mxu0
      %v1550 = vadd.f32 0.0, %v1549
      %v1551 = vpop.f32.mrb[0].mxu0
      %v1552 = vpop.f32.mrb[0].mxu0
      %v1553 = vadd.f32 0.0, %v1552
      %v1554 = vpop.f32.mrb[0].mxu0
      %1555 = vdwg.mxu0
      %v1556 = vpack.c.bf16 %v1497, %v1494
      %v1557 = vpack.c.bf16 %v1505, %v1502
      %v1558 = vpack.c.bf16 %v1513, %v1510
      %v1559 = vpack.c.bf16 %v1521, %v1518
      %v1560 = vpack.c.bf16 %v1529, %v1526
      %v1561 = vpack.c.bf16 %v1537, %v1534
      %v1562 = vpack.c.bf16 %v1545, %v1542
      %v1563 = vpack.c.bf16 %v1553, %v1550
      %s1564 = scalar_lea.vmem %s2, 64
      %v1565 = vld [vmem:[%s1564] sm:$0xf]
      %v1566 = vld [vmem:[%s1564 + $0x4] sm:$0xf]
      %v1567 = vld [vmem:[%s1564 + $0x8] sm:$0xf]
      %v1568 = vld [vmem:[%s1564 + $0xc] sm:$0xf]
      %v1569 = vld [vmem:[%s1564 + $0x10] sm:$0xf]
      %v1570 = vld [vmem:[%s1564 + $0x14] sm:$0xf]
      %v1571 = vld [vmem:[%s1564 + $0x18] sm:$0xf]
      %v1572 = vld [vmem:[%s1564 + $0x1c] sm:$0xf]
      %v1573 = vld [vmem:[%s1564 + $0x20] sm:$0xf]
      %v1574 = vld [vmem:[%s1564 + $0x24] sm:$0xf]
      %v1575 = vld [vmem:[%s1564 + $0x28] sm:$0xf]
      %v1576 = vld [vmem:[%s1564 + $0x2c] sm:$0xf]
      %v1577 = vld [vmem:[%s1564 + $0x30] sm:$0xf]
      %v1578 = vld [vmem:[%s1564 + $0x34] sm:$0xf]
      %v1579 = vld [vmem:[%s1564 + $0x38] sm:$0xf]
      %v1580 = vld [vmem:[%s1564 + $0x3c] sm:$0xf]
      %v1597 = vunpack.c.l.b16 %v1565
      %v1598 = vunpack.c.l.b16 %v1566
      %v1599 = vunpack.c.l.b16 %v1567
      %v1600 = vunpack.c.l.b16 %v1568
      %v1601 = vunpack.c.l.b16 %v1569
      %v1602 = vunpack.c.l.b16 %v1570
      %v1603 = vunpack.c.l.b16 %v1571
      %v1604 = vunpack.c.l.b16 %v1572
      %v1605 = vunpack.c.l.b16 %v1573
      %v1606 = vunpack.c.l.b16 %v1574
      %v1607 = vunpack.c.l.b16 %v1575
      %v1608 = vunpack.c.l.b16 %v1576
      %v1609 = vunpack.c.l.b16 %v1577
      %v1610 = vunpack.c.l.b16 %v1578
      %v1611 = vunpack.c.l.b16 %v1579
      %v1612 = vunpack.c.l.b16 %v1580
      %v1613 = vpack.c.b16 %v1598, %v1597
      %v1614 = vpack.c.b16 %v1600, %v1599
      %v1615 = vpack.c.b16 %v1602, %v1601
      %v1616 = vpack.c.b16 %v1604, %v1603
      %v1617 = vpack.c.b16 %v1606, %v1605
      %v1618 = vpack.c.b16 %v1608, %v1607
      %v1619 = vpack.c.b16 %v1610, %v1609
      %v1620 = vpack.c.b16 %v1612, %v1611
      %1629 = vmatprep.subr.bf16.mxu0 0
      %1630 = vmatpush1.bf16.msra.mxu0 %v1613
      %1631 = vmatprep.subr.bf16.mxu0 0
      %1632 = vmatpush1.bf16.msra.mxu0 %v1614
      %1633 = vmatprep.subr.bf16.mxu0 0
      %1634 = vmatpush1.bf16.msra.mxu0 %v1615
      %1635 = vmatprep.subr.bf16.mxu0 0
      %1636 = vmatpush1.bf16.msra.mxu0 %v1616
      %1637 = vmatprep.subr.bf16.mxu0 0
      %1638 = vmatpush1.bf16.msra.mxu0 %v1617
      %1639 = vmatprep.subr.bf16.mxu0 0
      %1640 = vmatpush1.bf16.msra.mxu0 %v1618
      %1641 = vmatprep.subr.bf16.mxu0 0
      %1642 = vmatpush1.bf16.msra.mxu0 %v1619
      %1643 = vmatprep.subr.bf16.mxu0 0
      %1644 = vmatpush1.bf16.msra.mxu0 %v1620
      %1645 = vmatprep.subr.bf16.mxu0 0
      %1646 = vmatpush1.bf16.msra.mxu0 0
      %1647 = vmatprep.subr.bf16.mxu0 0
      %1648 = vmatpush1.bf16.msra.mxu0 0
      %1649 = vmatprep.subr.bf16.mxu0 0
      %1650 = vmatpush1.bf16.msra.mxu0 0
      %1651 = vmatprep.subr.bf16.mxu0 0
      %1652 = vmatpush1.bf16.msra.mxu0 0
      %1653 = vmatprep.subr.bf16.mxu0 0
      %1654 = vmatpush1.bf16.msra.mxu0 0
      %1655 = vmatprep.subr.bf16.mxu0 0
      %1656 = vmatpush1.bf16.msra.mxu0 0
      %1657 = vmatprep.subr.bf16.mxu0 0
      %1658 = vmatpush1.bf16.msra.mxu0 0
      %1659 = vmatprep.subr.bf16.mxu0 0
      %1660 = vmatpush1.bf16.msra.mxu0 0
      %1661 = vmatprep.mubr.bf16.mxu0 0
      %1662 = vmatmul.mubr.bf16.gmra.mrb[0].mxu0 %v283
      %v1663 = vpop.f32.mrb[0].mxu0
      %v1664 = vadd.f32 0.0, %v1663
      %v1665 = vpop.f32.mrb[0].mxu0
      %v1666 = vpop.f32.mrb[0].mxu0
      %v1667 = vadd.f32 0.0, %v1666
      %v1668 = vpop.f32.mrb[0].mxu0
      %1669 = vmatprep.mubr.bf16.mxu0 0
      %1670 = vmatmul.mubr.bf16.gmra.mrb[0].mxu0 %v284
      %v1671 = vpop.f32.mrb[0].mxu0
      %v1672 = vadd.f32 0.0, %v1671
      %v1673 = vpop.f32.mrb[0].mxu0
      %v1674 = vpop.f32.mrb[0].mxu0
      %v1675 = vadd.f32 0.0, %v1674
      %v1676 = vpop.f32.mrb[0].mxu0
      %1677 = vmatprep.mubr.bf16.mxu0 0
      %1678 = vmatmul.mubr.bf16.gmra.mrb[0].mxu0 %v285
      %v1679 = vpop.f32.mrb[0].mxu0
      %v1680 = vadd.f32 0.0, %v1679
      %v1681 = vpop.f32.mrb[0].mxu0
      %v1682 = vpop.f32.mrb[0].mxu0
      %v1683 = vadd.f32 0.0, %v1682
      %v1684 = vpop.f32.mrb[0].mxu0
      %1685 = vmatprep.mubr.bf16.mxu0 0
      %1686 = vmatmul.mubr.bf16.gmra.mrb[0].mxu0 %v286
      %v1687 = vpop.f32.mrb[0].mxu0
      %v1688 = vadd.f32 0.0, %v1687
      %v1689 = vpop.f32.mrb[0].mxu0
      %v1690 = vpop.f32.mrb[0].mxu0
      %v1691 = vadd.f32 0.0, %v1690
      %v1692 = vpop.f32.mrb[0].mxu0
      %1693 = vmatprep.mubr.bf16.mxu0 0
      %1694 = vmatmul.mubr.bf16.gmra.mrb[0].mxu0 %v287
      %v1695 = vpop.f32.mrb[0].mxu0
      %v1696 = vadd.f32 0.0, %v1695
      %v1697 = vpop.f32.mrb[0].mxu0
      %v1698 = vpop.f32.mrb[0].mxu0
      %v1699 = vadd.f32 0.0, %v1698
      %v1700 = vpop.f32.mrb[0].mxu0
      %1701 = vmatprep.mubr.bf16.mxu0 0
      %1702 = vmatmul.mubr.bf16.gmra.mrb[0].mxu0 %v288
      %v1703 = vpop.f32.mrb[0].mxu0
      %v1704 = vadd.f32 0.0, %v1703
      %v1705 = vpop.f32.mrb[0].mxu0
      %v1706 = vpop.f32.mrb[0].mxu0
      %v1707 = vadd.f32 0.0, %v1706
      %v1708 = vpop.f32.mrb[0].mxu0
      %1709 = vmatprep.mubr.bf16.mxu0 0
      %1710 = vmatmul.mubr.bf16.gmra.mrb[0].mxu0 %v289
      %v1711 = vpop.f32.mrb[0].mxu0
      %v1712 = vadd.f32 0.0, %v1711
      %v1713 = vpop.f32.mrb[0].mxu0
      %v1714 = vpop.f32.mrb[0].mxu0
      %v1715 = vadd.f32 0.0, %v1714
      %v1716 = vpop.f32.mrb[0].mxu0
      %1717 = vmatprep.mubr.bf16.mxu0 0
      %1718 = vmatmul.mubr.bf16.gmra.mrb[0].mxu0 %v290
      %v1719 = vpop.f32.mrb[0].mxu0
      %v1720 = vadd.f32 0.0, %v1719
      %v1721 = vpop.f32.mrb[0].mxu0
      %v1722 = vpop.f32.mrb[0].mxu0
      %v1723 = vadd.f32 0.0, %v1722
      %v1724 = vpop.f32.mrb[0].mxu0
      %1725 = vdwg.mxu0
      %v1726 = vpack.c.bf16 %v1667, %v1664
      %v1727 = vpack.c.bf16 %v1675, %v1672
      %v1728 = vpack.c.bf16 %v1683, %v1680
      %v1729 = vpack.c.bf16 %v1691, %v1688
      %v1730 = vpack.c.bf16 %v1699, %v1696
      %v1731 = vpack.c.bf16 %v1707, %v1704
      %v1732 = vpack.c.bf16 %v1715, %v1712
      %v1733 = vpack.c.bf16 %v1723, %v1720
      %s1734 = scalar_lea.vmem %s3, 64
      %v1735 = vld [vmem:[%s1734] sm:$0xf]
      %v1736 = vld [vmem:[%s1734 + $0x4] sm:$0xf]
      %v1737 = vld [vmem:[%s1734 + $0x8] sm:$0xf]
      %v1738 = vld [vmem:[%s1734 + $0xc] sm:$0xf]
      %v1739 = vld [vmem:[%s1734 + $0x10] sm:$0xf]
      %v1740 = vld [vmem:[%s1734 + $0x14] sm:$0xf]
      %v1741 = vld [vmem:[%s1734 + $0x18] sm:$0xf]
      %v1742 = vld [vmem:[%s1734 + $0x1c] sm:$0xf]
      %v1743 = vld [vmem:[%s1734 + $0x20] sm:$0xf]
      %v1744 = vld [vmem:[%s1734 + $0x24] sm:$0xf]
      %v1745 = vld [vmem:[%s1734 + $0x28] sm:$0xf]
      %v1746 = vld [vmem:[%s1734 + $0x2c] sm:$0xf]
      %v1747 = vld [vmem:[%s1734 + $0x30] sm:$0xf]
      %v1748 = vld [vmem:[%s1734 + $0x34] sm:$0xf]
      %v1749 = vld [vmem:[%s1734 + $0x38] sm:$0xf]
      %v1750 = vld [vmem:[%s1734 + $0x3c] sm:$0xf]
      %v1767 = vunpack.c.l.b16 %v1735
      %v1768 = vunpack.c.l.b16 %v1736
      %v1769 = vunpack.c.l.b16 %v1737
      %v1770 = vunpack.c.l.b16 %v1738
      %v1771 = vunpack.c.l.b16 %v1739
      %v1772 = vunpack.c.l.b16 %v1740
      %v1773 = vunpack.c.l.b16 %v1741
      %v1774 = vunpack.c.l.b16 %v1742
      %v1775 = vunpack.c.l.b16 %v1743
      %v1776 = vunpack.c.l.b16 %v1744
      %v1777 = vunpack.c.l.b16 %v1745
      %v1778 = vunpack.c.l.b16 %v1746
      %v1779 = vunpack.c.l.b16 %v1747
      %v1780 = vunpack.c.l.b16 %v1748
      %v1781 = vunpack.c.l.b16 %v1749
      %v1782 = vunpack.c.l.b16 %v1750
      %v1783 = vpack.c.b16 %v1768, %v1767
      %v1784 = vpack.c.b16 %v1770, %v1769
      %v1785 = vpack.c.b16 %v1772, %v1771
      %v1786 = vpack.c.b16 %v1774, %v1773
      %v1787 = vpack.c.b16 %v1776, %v1775
      %v1788 = vpack.c.b16 %v1778, %v1777
      %v1789 = vpack.c.b16 %v1780, %v1779
      %v1790 = vpack.c.b16 %v1782, %v1781
      %1799 = vmatprep.subr.bf16.mxu0 0
      %1800 = vmatpush1.bf16.msra.mxu0 %v1783
      %1801 = vmatprep.subr.bf16.mxu0 0
      %1802 = vmatpush1.bf16.msra.mxu0 %v1784
      %1803 = vmatprep.subr.bf16.mxu0 0
      %1804 = vmatpush1.bf16.msra.mxu0 %v1785
      %1805 = vmatprep.subr.bf16.mxu0 0
      %1806 = vmatpush1.bf16.msra.mxu0 %v1786
      %1807 = vmatprep.subr.bf16.mxu0 0
      %1808 = vmatpush1.bf16.msra.mxu0 %v1787
      %1809 = vmatprep.subr.bf16.mxu0 0
      %1810 = vmatpush1.bf16.msra.mxu0 %v1788
      %1811 = vmatprep.subr.bf16.mxu0 0
      %1812 = vmatpush1.bf16.msra.mxu0 %v1789
      %1813 = vmatprep.subr.bf16.mxu0 0
      %1814 = vmatpush1.bf16.msra.mxu0 %v1790
      %1815 = vmatprep.subr.bf16.mxu0 0
      %1816 = vmatpush1.bf16.msra.mxu0 0
      %1817 = vmatprep.subr.bf16.mxu0 0
      %1818 = vmatpush1.bf16.msra.mxu0 0
      %1819 = vmatprep.subr.bf16.mxu0 0
      %1820 = vmatpush1.bf16.msra.mxu0 0
      %1821 = vmatprep.subr.bf16.mxu0 0
      %1822 = vmatpush1.bf16.msra.mxu0 0
      %1823 = vmatprep.subr.bf16.mxu0 0
      %1824 = vmatpush1.bf16.msra.mxu0 0
      %1825 = vmatprep.subr.bf16.mxu0 0
      %1826 = vmatpush1.bf16.msra.mxu0 0
      %1827 = vmatprep.subr.bf16.mxu0 0
      %1828 = vmatpush1.bf16.msra.mxu0 0
      %1829 = vmatprep.subr.bf16.mxu0 0
      %1830 = vmatpush1.bf16.msra.mxu0 0
      %1831 = vmatprep.mubr.bf16.mxu0 0
      %1832 = vmatmul.mubr.bf16.gmra.mrb[0].mxu0 %v283
      %v1833 = vpop.f32.mrb[0].mxu0
      %v1834 = vadd.f32 0.0, %v1833
      %v1835 = vpop.f32.mrb[0].mxu0
      %v1836 = vpop.f32.mrb[0].mxu0
      %v1837 = vadd.f32 0.0, %v1836
      %v1838 = vpop.f32.mrb[0].mxu0
      %1839 = vmatprep.mubr.bf16.mxu0 0
      %1840 = vmatmul.mubr.bf16.gmra.mrb[0].mxu0 %v284
      %v1841 = vpop.f32.mrb[0].mxu0
      %v1842 = vadd.f32 0.0, %v1841
      %v1843 = vpop.f32.mrb[0].mxu0
      %v1844 = vpop.f32.mrb[0].mxu0
      %v1845 = vadd.f32 0.0, %v1844
      %v1846 = vpop.f32.mrb[0].mxu0
      %1847 = vmatprep.mubr.bf16.mxu0 0
      %1848 = vmatmul.mubr.bf16.gmra.mrb[0].mxu0 %v285
      %v1849 = vpop.f32.mrb[0].mxu0
      %v1850 = vadd.f32 0.0, %v1849
      %v1851 = vpop.f32.mrb[0].mxu0
      %v1852 = vpop.f32.mrb[0].mxu0
      %v1853 = vadd.f32 0.0, %v1852
      %v1854 = vpop.f32.mrb[0].mxu0
      %1855 = vmatprep.mubr.bf16.mxu0 0
      %1856 = vmatmul.mubr.bf16.gmra.mrb[0].mxu0 %v286
      %v1857 = vpop.f32.mrb[0].mxu0
      %v1858 = vadd.f32 0.0, %v1857
      %v1859 = vpop.f32.mrb[0].mxu0
      %v1860 = vpop.f32.mrb[0].mxu0
      %v1861 = vadd.f32 0.0, %v1860
      %v1862 = vpop.f32.mrb[0].mxu0
      %1863 = vmatprep.mubr.bf16.mxu0 0
      %1864 = vmatmul.mubr.bf16.gmra.mrb[0].mxu0 %v287
      %v1865 = vpop.f32.mrb[0].mxu0
      %v1866 = vadd.f32 0.0, %v1865
      %v1867 = vpop.f32.mrb[0].mxu0
      %v1868 = vpop.f32.mrb[0].mxu0
      %v1869 = vadd.f32 0.0, %v1868
      %v1870 = vpop.f32.mrb[0].mxu0
      %1871 = vmatprep.mubr.bf16.mxu0 0
      %1872 = vmatmul.mubr.bf16.gmra.mrb[0].mxu0 %v288
      %v1873 = vpop.f32.mrb[0].mxu0
      %v1874 = vadd.f32 0.0, %v1873
      %v1875 = vpop.f32.mrb[0].mxu0
      %v1876 = vpop.f32.mrb[0].mxu0
      %v1877 = vadd.f32 0.0, %v1876
      %v1878 = vpop.f32.mrb[0].mxu0
      %1879 = vmatprep.mubr.bf16.mxu0 0
      %1880 = vmatmul.mubr.bf16.gmra.mrb[0].mxu0 %v289
      %v1881 = vpop.f32.mrb[0].mxu0
      %v1882 = vadd.f32 0.0, %v1881
      %v1883 = vpop.f32.mrb[0].mxu0
      %v1884 = vpop.f32.mrb[0].mxu0
      %v1885 = vadd.f32 0.0, %v1884
      %v1886 = vpop.f32.mrb[0].mxu0
      %1887 = vmatprep.mubr.bf16.mxu0 0
      %1888 = vmatmul.mubr.bf16.gmra.mrb[0].mxu0 %v290
      %v1889 = vpop.f32.mrb[0].mxu0
      %v1890 = vadd.f32 0.0, %v1889
      %v1891 = vpop.f32.mrb[0].mxu0
      %v1892 = vpop.f32.mrb[0].mxu0
      %v1893 = vadd.f32 0.0, %v1892
      %v1894 = vpop.f32.mrb[0].mxu0
      %1895 = vdwg.mxu0
      %v1896 = vpack.c.bf16 %v1837, %v1834
      %v1897 = vpack.c.bf16 %v1845, %v1842
      %v1898 = vpack.c.bf16 %v1853, %v1850
      %v1899 = vpack.c.bf16 %v1861, %v1858
      %v1900 = vpack.c.bf16 %v1869, %v1866
      %v1901 = vpack.c.bf16 %v1877, %v1874
      %v1902 = vpack.c.bf16 %v1885, %v1882
      %v1903 = vpack.c.bf16 %v1893, %v1890
      %v1905 = vsel %vm814, %v1556, 0
      %v1908 = vsel %vm814, %v1557, 0
      %v1911 = vsel %vm814, %v1558, 0
      %v1914 = vsel %vm814, %v1559, 0
      %v1917 = vsel %vm814, %v1560, 0
      %v1920 = vsel %vm814, %v1561, 0
      %v1923 = vsel %vm814, %v1562, 0
      %v1926 = vsel %vm814, %v1563, 0
      %v1929 = vsel %vm814, %v1726, 0
      %v1932 = vsel %vm814, %v1727, 0
      %v1935 = vsel %vm814, %v1728, 0
      %v1938 = vsel %vm814, %v1729, 0
      %v1941 = vsel %vm814, %v1730, 0
      %v1944 = vsel %vm814, %v1731, 0
      %v1947 = vsel %vm814, %v1732, 0
      %v1950 = vsel %vm814, %v1733, 0
      %1952 = vmatprep.subr.bf16.mxu0 0
      %1953 = vmatpush1.bf16.xpose.msra.mxu0 %v1929
      %1954 = vmatprep.subr.bf16.mxu0 0
      %1955 = vmatpush1.bf16.xpose.msra.mxu0 %v1932
      %1956 = vmatprep.subr.bf16.mxu0 0
      %1957 = vmatpush1.bf16.xpose.msra.mxu0 %v1935
      %1958 = vmatprep.subr.bf16.mxu0 0
      %1959 = vmatpush1.bf16.xpose.msra.mxu0 %v1938
      %1960 = vmatprep.subr.bf16.mxu0 0
      %1961 = vmatpush1.bf16.xpose.msra.mxu0 %v1941
      %1962 = vmatprep.subr.bf16.mxu0 0
      %1963 = vmatpush1.bf16.xpose.msra.mxu0 %v1944
      %1964 = vmatprep.subr.bf16.mxu0 0
      %1965 = vmatpush1.bf16.xpose.msra.mxu0 %v1947
      %1966 = vmatprep.subr.bf16.mxu0 0
      %1967 = vmatpush1.bf16.xpose.msra.mxu0 %v1950
      %1968 = vmatprep.subr.bf16.mxu0 0
      %1969 = vmatpush1.bf16.xpose.msra.mxu0 0
      %1970 = vmatprep.subr.bf16.mxu0 0
      %1971 = vmatpush1.bf16.xpose.msra.mxu0 0
      %1972 = vmatprep.subr.bf16.mxu0 0
      %1973 = vmatpush1.bf16.xpose.msra.mxu0 0
      %1974 = vmatprep.subr.bf16.mxu0 0
      %1975 = vmatpush1.bf16.xpose.msra.mxu0 0
      %1976 = vmatprep.subr.bf16.mxu0 0
      %1977 = vmatpush1.bf16.xpose.msra.mxu0 0
      %1978 = vmatprep.subr.bf16.mxu0 0
      %1979 = vmatpush1.bf16.xpose.msra.mxu0 0
      %1980 = vmatprep.subr.bf16.mxu0 0
      %1981 = vmatpush1.bf16.xpose.msra.mxu0 0
      %1982 = vmatprep.subr.bf16.mxu0 0
      %1983 = vmatpush1.bf16.xpose.msra.mxu0 0
      %1984 = vmatprep.mubr.bf16.mxu0 0
      %1985 = vmatmul.mubr.bf16.gmra.mrb[0].mxu0 %v1905
      %v1986 = vpop.f32.mrb[0].mxu0
      %v1987 = vadd.f32 0.0, %v1986
      %v1988 = vpop.f32.mrb[0].mxu0
      %v1989 = vpop.f32.mrb[0].mxu0
      %v1990 = vadd.f32 0.0, %v1989
      %v1991 = vpop.f32.mrb[0].mxu0
      %1992 = vmatprep.mubr.bf16.mxu0 0
      %1993 = vmatmul.mubr.bf16.gmra.mrb[0].mxu0 %v1908
      %v1994 = vpop.f32.mrb[0].mxu0
      %v1995 = vadd.f32 0.0, %v1994
      %v1996 = vpop.f32.mrb[0].mxu0
      %v1997 = vpop.f32.mrb[0].mxu0
      %v1998 = vadd.f32 0.0, %v1997
      %v1999 = vpop.f32.mrb[0].mxu0
      %2000 = vmatprep.mubr.bf16.mxu0 0
      %2001 = vmatmul.mubr.bf16.gmra.mrb[0].mxu0 %v1911
      %v2002 = vpop.f32.mrb[0].mxu0
      %v2003 = vadd.f32 0.0, %v2002
      %v2004 = vpop.f32.mrb[0].mxu0
      %v2005 = vpop.f32.mrb[0].mxu0
      %v2006 = vadd.f32 0.0, %v2005
      %v2007 = vpop.f32.mrb[0].mxu0
      %2008 = vmatprep.mubr.bf16.mxu0 0
      %2009 = vmatmul.mubr.bf16.gmra.mrb[0].mxu0 %v1914
      %v2010 = vpop.f32.mrb[0].mxu0
      %v2011 = vadd.f32 0.0, %v2010
      %v2012 = vpop.f32.mrb[0].mxu0
      %v2013 = vpop.f32.mrb[0].mxu0
      %v2014 = vadd.f32 0.0, %v2013
      %v2015 = vpop.f32.mrb[0].mxu0
      %2016 = vmatprep.mubr.bf16.mxu0 0
      %2017 = vmatmul.mubr.bf16.gmra.mrb[0].mxu0 %v1917
      %v2018 = vpop.f32.mrb[0].mxu0
      %v2019 = vadd.f32 0.0, %v2018
      %v2020 = vpop.f32.mrb[0].mxu0
      %v2021 = vpop.f32.mrb[0].mxu0
      %v2022 = vadd.f32 0.0, %v2021
      %v2023 = vpop.f32.mrb[0].mxu0
      %2024 = vmatprep.mubr.bf16.mxu0 0
      %2025 = vmatmul.mubr.bf16.gmra.mrb[0].mxu0 %v1920
      %v2026 = vpop.f32.mrb[0].mxu0
      %v2027 = vadd.f32 0.0, %v2026
      %v2028 = vpop.f32.mrb[0].mxu0
      %v2029 = vpop.f32.mrb[0].mxu0
      %v2030 = vadd.f32 0.0, %v2029
      %v2031 = vpop.f32.mrb[0].mxu0
      %2032 = vmatprep.mubr.bf16.mxu0 0
      %2033 = vmatmul.mubr.bf16.gmra.mrb[0].mxu0 %v1923
      %v2034 = vpop.f32.mrb[0].mxu0
      %v2035 = vadd.f32 0.0, %v2034
      %v2036 = vpop.f32.mrb[0].mxu0
      %v2037 = vpop.f32.mrb[0].mxu0
      %v2038 = vadd.f32 0.0, %v2037
      %v2039 = vpop.f32.mrb[0].mxu0
      %2040 = vmatprep.mubr.bf16.mxu0 0
      %2041 = vmatmul.mubr.bf16.gmra.mrb[0].mxu0 %v1926
      %v2042 = vpop.f32.mrb[0].mxu0
      %v2043 = vadd.f32 0.0, %v2042
      %v2044 = vpop.f32.mrb[0].mxu0
      %v2045 = vpop.f32.mrb[0].mxu0
      %v2046 = vadd.f32 0.0, %v2045
      %v2047 = vpop.f32.mrb[0].mxu0
      %2048 = vdwg.mxu0
      %2049 = vmax.xlane.f32.xlu0 %v1987
      %v2050 = vpop.xlane.xlu0 %2049
      %2051 = vmax.xlane.f32.xlu0 %v1990
      %v2052 = vpop.xlane.xlu0 %2051
      %2053 = vmax.xlane.f32.xlu0 %v1995
      %v2054 = vpop.xlane.xlu0 %2053
      %2055 = vmax.xlane.f32.xlu0 %v1998
      %v2056 = vpop.xlane.xlu0 %2055
      %2057 = vmax.xlane.f32.xlu0 %v2003
      %v2058 = vpop.xlane.xlu0 %2057
      %2059 = vmax.xlane.f32.xlu0 %v2006
      %v2060 = vpop.xlane.xlu0 %2059
      %2061 = vmax.xlane.f32.xlu0 %v2011
      %v2062 = vpop.xlane.xlu0 %2061
      %2063 = vmax.xlane.f32.xlu0 %v2014
      %v2064 = vpop.xlane.xlu0 %2063
      %2065 = vmax.xlane.f32.xlu0 %v2019
      %v2066 = vpop.xlane.xlu0 %2065
      %2067 = vmax.xlane.f32.xlu0 %v2022
      %v2068 = vpop.xlane.xlu0 %2067
      %2069 = vmax.xlane.f32.xlu0 %v2027
      %v2070 = vpop.xlane.xlu0 %2069
      %2071 = vmax.xlane.f32.xlu0 %v2030
      %v2072 = vpop.xlane.xlu0 %2071
      %2073 = vmax.xlane.f32.xlu0 %v2035
      %v2074 = vpop.xlane.xlu0 %2073
      %2075 = vmax.xlane.f32.xlu0 %v2038
      %v2076 = vpop.xlane.xlu0 %2075
      %2077 = vmax.xlane.f32.xlu0 %v2043
      %v2078 = vpop.xlane.xlu0 %2077
      %2079 = vmax.xlane.f32.xlu0 %v2046
      %v2080 = vpop.xlane.xlu0 %2079
      %v2081 = vsub.f32 %v1987, %v2050
      %v2082 = vsub.f32 %v1990, %v2052
      %v2083 = vsub.f32 %v1995, %v2054
      %v2084 = vsub.f32 %v1998, %v2056
      %v2085 = vsub.f32 %v2003, %v2058
      %v2086 = vsub.f32 %v2006, %v2060
      %v2087 = vsub.f32 %v2011, %v2062
      %v2088 = vsub.f32 %v2014, %v2064
      %v2089 = vsub.f32 %v2019, %v2066
      %v2090 = vsub.f32 %v2022, %v2068
      %v2091 = vsub.f32 %v2027, %v2070
      %v2092 = vsub.f32 %v2030, %v2072
      %v2093 = vsub.f32 %v2035, %v2074
      %v2094 = vsub.f32 %v2038, %v2076
      %v2095 = vsub.f32 %v2043, %v2078
      %v2096 = vsub.f32 %v2046, %v2080
      %v2097 = vmul.f32 %v2081, 1.442695
      %v2098 = vpow.pop %v2097
      %v2099 = vmul.f32 %v2082, 1.442695
      %v2100 = vpow.pop %v2099
      %v2101 = vmul.f32 %v2083, 1.442695
      %v2102 = vpow.pop %v2101
      %v2103 = vmul.f32 %v2084, 1.442695
      %v2104 = vpow.pop %v2103
      %v2105 = vmul.f32 %v2085, 1.442695
      %v2106 = vpow.pop %v2105
      %v2107 = vmul.f32 %v2086, 1.442695
      %v2108 = vpow.pop %v2107
      %v2109 = vmul.f32 %v2087, 1.442695
      %v2110 = vpow.pop %v2109
      %v2111 = vmul.f32 %v2088, 1.442695
      %v2112 = vpow.pop %v2111
      %v2113 = vmul.f32 %v2089, 1.442695
      %v2114 = vpow.pop %v2113
      %v2115 = vmul.f32 %v2090, 1.442695
      %v2116 = vpow.pop %v2115
      %v2117 = vmul.f32 %v2091, 1.442695
      %v2118 = vpow.pop %v2117
      %v2119 = vmul.f32 %v2092, 1.442695
      %v2120 = vpow.pop %v2119
      %v2121 = vmul.f32 %v2093, 1.442695
      %v2122 = vpow.pop %v2121
      %v2123 = vmul.f32 %v2094, 1.442695
      %v2124 = vpow.pop %v2123
      %v2125 = vmul.f32 %v2095, 1.442695
      %v2126 = vpow.pop %v2125
      %v2127 = vmul.f32 %v2096, 1.442695
      %v2128 = vpow.pop %v2127
      %2129 = vadd.xlane.f32.xlu0 %v2098
      %v2130 = vpop.xlane.xlu0 %2129
      %2131 = vadd.xlane.f32.xlu0 %v2100
      %v2132 = vpop.xlane.xlu0 %2131
      %2133 = vadd.xlane.f32.xlu0 %v2102
      %v2134 = vpop.xlane.xlu0 %2133
      %2135 = vadd.xlane.f32.xlu0 %v2104
      %v2136 = vpop.xlane.xlu0 %2135
      %2137 = vadd.xlane.f32.xlu0 %v2106
      %v2138 = vpop.xlane.xlu0 %2137
      %2139 = vadd.xlane.f32.xlu0 %v2108
      %v2140 = vpop.xlane.xlu0 %2139
      %2141 = vadd.xlane.f32.xlu0 %v2110
      %v2142 = vpop.xlane.xlu0 %2141
      %2143 = vadd.xlane.f32.xlu0 %v2112
      %v2144 = vpop.xlane.xlu0 %2143
      %2145 = vadd.xlane.f32.xlu0 %v2114
      %v2146 = vpop.xlane.xlu0 %2145
      %2147 = vadd.xlane.f32.xlu0 %v2116
      %v2148 = vpop.xlane.xlu0 %2147
      %2149 = vadd.xlane.f32.xlu0 %v2118
      %v2150 = vpop.xlane.xlu0 %2149
      %2151 = vadd.xlane.f32.xlu0 %v2120
      %v2152 = vpop.xlane.xlu0 %2151
      %2153 = vadd.xlane.f32.xlu0 %v2122
      %v2154 = vpop.xlane.xlu0 %2153
      %2155 = vadd.xlane.f32.xlu0 %v2124
      %v2156 = vpop.xlane.xlu0 %2155
      %2157 = vadd.xlane.f32.xlu0 %v2126
      %v2158 = vpop.xlane.xlu0 %2157
      %2159 = vadd.xlane.f32.xlu0 %v2128
      %v2160 = vpop.xlane.xlu0 %2159
      %v2161 = vrcp.pop %v2130
      %v2162 = vrcp.pop %v2132
      %v2163 = vrcp.pop %v2134
      %v2164 = vrcp.pop %v2136
      %v2165 = vrcp.pop %v2138
      %v2166 = vrcp.pop %v2140
      %v2167 = vrcp.pop %v2142
      %v2168 = vrcp.pop %v2144
      %v2169 = vrcp.pop %v2146
      %v2170 = vrcp.pop %v2148
      %v2171 = vrcp.pop %v2150
      %v2172 = vrcp.pop %v2152
      %v2173 = vrcp.pop %v2154
      %v2174 = vrcp.pop %v2156
      %v2175 = vrcp.pop %v2158
      %v2176 = vrcp.pop %v2160
      %v2177 = vmul.f32 %v2098, %v2161
      %v2178 = vmul.f32 %v2100, %v2162
      %v2179 = vmul.f32 %v2102, %v2163
      %v2180 = vmul.f32 %v2104, %v2164
      %v2181 = vmul.f32 %v2106, %v2165
      %v2182 = vmul.f32 %v2108, %v2166
      %v2183 = vmul.f32 %v2110, %v2167
      %v2184 = vmul.f32 %v2112, %v2168
      %v2185 = vmul.f32 %v2114, %v2169
      %v2186 = vmul.f32 %v2116, %v2170
      %v2187 = vmul.f32 %v2118, %v2171
      %v2188 = vmul.f32 %v2120, %v2172
      %v2189 = vmul.f32 %v2122, %v2173
      %v2190 = vmul.f32 %v2124, %v2174
      %v2191 = vmul.f32 %v2126, %v2175
      %v2192 = vmul.f32 %v2128, %v2176
      %v2193 = vpack.c.bf16 %v2178, %v2177
      %v2194 = vpack.c.bf16 %v2180, %v2179
      %v2195 = vpack.c.bf16 %v2182, %v2181
      %v2196 = vpack.c.bf16 %v2184, %v2183
      %v2197 = vpack.c.bf16 %v2186, %v2185
      %v2198 = vpack.c.bf16 %v2188, %v2187
      %v2199 = vpack.c.bf16 %v2190, %v2189
      %v2200 = vpack.c.bf16 %v2192, %v2191
      %2201 = vmatprep.subr.bf16.mxu0 0
      %2202 = vmatpush1.bf16.msra.mxu0 %v1896
      %2203 = vmatprep.subr.bf16.mxu0 0
      %2204 = vmatpush1.bf16.msra.mxu0 %v1897
      %2205 = vmatprep.subr.bf16.mxu0 0
      %2206 = vmatpush1.bf16.msra.mxu0 %v1898
      %2207 = vmatprep.subr.bf16.mxu0 0
      %2208 = vmatpush1.bf16.msra.mxu0 %v1899
      %2209 = vmatprep.subr.bf16.mxu0 0
      %2210 = vmatpush1.bf16.msra.mxu0 %v1900
      %2211 = vmatprep.subr.bf16.mxu0 0
      %2212 = vmatpush1.bf16.msra.mxu0 %v1901
      %2213 = vmatprep.subr.bf16.mxu0 0
      %2214 = vmatpush1.bf16.msra.mxu0 %v1902
      %2215 = vmatprep.subr.bf16.mxu0 0
      %2216 = vmatpush1.bf16.msra.mxu0 %v1903
      %2217 = vmatprep.subr.bf16.mxu0 0
      %2218 = vmatpush1.bf16.msra.mxu0 0
      %2219 = vmatprep.subr.bf16.mxu0 0
      %2220 = vmatpush1.bf16.msra.mxu0 0
      %2221 = vmatprep.subr.bf16.mxu0 0
      %2222 = vmatpush1.bf16.msra.mxu0 0
      %2223 = vmatprep.subr.bf16.mxu0 0
      %2224 = vmatpush1.bf16.msra.mxu0 0
      %2225 = vmatprep.subr.bf16.mxu0 0
      %2226 = vmatpush1.bf16.msra.mxu0 0
      %2227 = vmatprep.subr.bf16.mxu0 0
      %2228 = vmatpush1.bf16.msra.mxu0 0
      %2229 = vmatprep.subr.bf16.mxu0 0
      %2230 = vmatpush1.bf16.msra.mxu0 0
      %2231 = vmatprep.subr.bf16.mxu0 0
      %2232 = vmatpush1.bf16.msra.mxu0 0
      %2233 = vmatprep.mubr.bf16.mxu0 0
      %2234 = vmatmul.mubr.bf16.gmra.mrb[0].mxu0 %v2193
      %v2235 = vpop.f32.mrb[0].mxu0
      %v2236 = vadd.f32 0.0, %v2235
      %v2237 = vpop.f32.mrb[0].mxu0
      %v2238 = vpop.f32.mrb[0].mxu0
      %v2239 = vadd.f32 0.0, %v2238
      %v2240 = vpop.f32.mrb[0].mxu0
      %2241 = vmatprep.mubr.bf16.mxu0 0
      %2242 = vmatmul.mubr.bf16.gmra.mrb[0].mxu0 %v2194
      %v2243 = vpop.f32.mrb[0].mxu0
      %v2244 = vadd.f32 0.0, %v2243
      %v2245 = vpop.f32.mrb[0].mxu0
      %v2246 = vpop.f32.mrb[0].mxu0
      %v2247 = vadd.f32 0.0, %v2246
      %v2248 = vpop.f32.mrb[0].mxu0
      %2249 = vmatprep.mubr.bf16.mxu0 0
      %2250 = vmatmul.mubr.bf16.gmra.mrb[0].mxu0 %v2195
      %v2251 = vpop.f32.mrb[0].mxu0
      %v2252 = vadd.f32 0.0, %v2251
      %v2253 = vpop.f32.mrb[0].mxu0
      %v2254 = vpop.f32.mrb[0].mxu0
      %v2255 = vadd.f32 0.0, %v2254
      %v2256 = vpop.f32.mrb[0].mxu0
      %2257 = vmatprep.mubr.bf16.mxu0 0
      %2258 = vmatmul.mubr.bf16.gmra.mrb[0].mxu0 %v2196
      %v2259 = vpop.f32.mrb[0].mxu0
      %v2260 = vadd.f32 0.0, %v2259
      %v2261 = vpop.f32.mrb[0].mxu0
      %v2262 = vpop.f32.mrb[0].mxu0
      %v2263 = vadd.f32 0.0, %v2262
      %v2264 = vpop.f32.mrb[0].mxu0
      %2265 = vmatprep.mubr.bf16.mxu0 0
      %2266 = vmatmul.mubr.bf16.gmra.mrb[0].mxu0 %v2197
      %v2267 = vpop.f32.mrb[0].mxu0
      %v2268 = vadd.f32 0.0, %v2267
      %v2269 = vpop.f32.mrb[0].mxu0
      %v2270 = vpop.f32.mrb[0].mxu0
      %v2271 = vadd.f32 0.0, %v2270
      %v2272 = vpop.f32.mrb[0].mxu0
      %2273 = vmatprep.mubr.bf16.mxu0 0
      %2274 = vmatmul.mubr.bf16.gmra.mrb[0].mxu0 %v2198
      %v2275 = vpop.f32.mrb[0].mxu0
      %v2276 = vadd.f32 0.0, %v2275
      %v2277 = vpop.f32.mrb[0].mxu0
      %v2278 = vpop.f32.mrb[0].mxu0
      %v2279 = vadd.f32 0.0, %v2278
      %v2280 = vpop.f32.mrb[0].mxu0
      %2281 = vmatprep.mubr.bf16.mxu0 0
      %2282 = vmatmul.mubr.bf16.gmra.mrb[0].mxu0 %v2199
      %v2283 = vpop.f32.mrb[0].mxu0
      %v2284 = vadd.f32 0.0, %v2283
      %v2285 = vpop.f32.mrb[0].mxu0
      %v2286 = vpop.f32.mrb[0].mxu0
      %v2287 = vadd.f32 0.0, %v2286
      %v2288 = vpop.f32.mrb[0].mxu0
      %2289 = vmatprep.mubr.bf16.mxu0 0
      %2290 = vmatmul.mubr.bf16.gmra.mrb[0].mxu0 %v2200
      %v2291 = vpop.f32.mrb[0].mxu0
      %v2292 = vadd.f32 0.0, %v2291
      %v2293 = vpop.f32.mrb[0].mxu0
      %v2294 = vpop.f32.mrb[0].mxu0
      %v2295 = vadd.f32 0.0, %v2294
      %v2296 = vpop.f32.mrb[0].mxu0
      %2297 = vdwg.mxu0
      %v2298 = vpack.c.bf16 %v2239, %v2236
      %v2299 = vpack.c.bf16 %v2247, %v2244
      %v2300 = vpack.c.bf16 %v2255, %v2252
      %v2301 = vpack.c.bf16 %v2263, %v2260
      %v2302 = vpack.c.bf16 %v2271, %v2268
      %v2303 = vpack.c.bf16 %v2279, %v2276
      %v2304 = vpack.c.bf16 %v2287, %v2284
      %v2305 = vpack.c.bf16 %v2295, %v2292
      %v2306 = vld [vmem:[#allocation2] sm:$0xff]
      %v2307 = vld [vmem:[#allocation2 + $0x8] sm:$0xff]
      %v2308 = vld [vmem:[#allocation2 + $0x10] sm:$0xff]
      %v2309 = vld [vmem:[#allocation2 + $0x18] sm:$0xff]
      %v2310 = vld [vmem:[#allocation2 + $0x20] sm:$0xff]
      %v2311 = vld [vmem:[#allocation2 + $0x28] sm:$0xff]
      %v2312 = vld [vmem:[#allocation2 + $0x30] sm:$0xff]
      %v2313 = vld [vmem:[#allocation2 + $0x38] sm:$0xff]
      %v2314 = vld [vmem:[#allocation2 + $0x40] sm:$0xff]
      %v2315 = vld [vmem:[#allocation2 + $0x48] sm:$0xff]
      %v2316 = vld [vmem:[#allocation2 + $0x50] sm:$0xff]
      %v2317 = vld [vmem:[#allocation2 + $0x58] sm:$0xff]
      %v2318 = vld [vmem:[#allocation2 + $0x60] sm:$0xff]
      %v2319 = vld [vmem:[#allocation2 + $0x68] sm:$0xff]
      %v2320 = vld [vmem:[#allocation2 + $0x70] sm:$0xff]
      %v2321 = vld [vmem:[#allocation2 + $0x78] sm:$0xff]
      %s2322 = scalar_lea.vmem %s4, 8
      %v2323 = vld [vmem:[%s2322] sm:$0xf]
      %v2324 = vld [vmem:[%s2322 + $0x4] sm:$0xf]
      %v2327 = vunpack.c.l.b16 %v2323
      %v2328 = vunpack.c.l.b16 %v2324
      %v2329 = vpack.c.b16 %v2328, %v2327
      %v2332 = vsel %vm814, %v2298, 0
      %v2335 = vsel %vm814, %v2299, 0
      %v2338 = vsel %vm814, %v2300, 0
      %v2341 = vsel %vm814, %v2301, 0
      %v2344 = vsel %vm814, %v2302, 0
      %v2347 = vsel %vm814, %v2303, 0
      %v2350 = vsel %vm814, %v2304, 0
      %v2353 = vsel %vm814, %v2305, 0
      %2355 = vmatprep.subr.bf16.mxu0 0
      %2356 = vmatpush1.bf16.msra.mxu0 %v2329
      %2357 = vmatprep.subr.bf16.mxu0 0
      %2358 = vmatpush1.bf16.msra.mxu0 0
      %2359 = vmatprep.subr.bf16.mxu0 0
      %2360 = vmatpush1.bf16.msra.mxu0 0
      %2361 = vmatprep.subr.bf16.mxu0 0
      %2362 = vmatpush1.bf16.msra.mxu0 0
      %2363 = vmatprep.subr.bf16.mxu0 0
      %2364 = vmatpush1.bf16.msra.mxu0 0
      %2365 = vmatprep.subr.bf16.mxu0 0
      %2366 = vmatpush1.bf16.msra.mxu0 0
      %2367 = vmatprep.subr.bf16.mxu0 0
      %2368 = vmatpush1.bf16.msra.mxu0 0
      %2369 = vmatprep.subr.bf16.mxu0 0
      %2370 = vmatpush1.bf16.msra.mxu0 0
      %2371 = vmatprep.subr.bf16.mxu0 0
      %2372 = vmatpush1.bf16.msra.mxu0 0
      %2373 = vmatprep.subr.bf16.mxu0 0
      %2374 = vmatpush1.bf16.msra.mxu0 0
      %2375 = vmatprep.subr.bf16.mxu0 0
      %2376 = vmatpush1.bf16.msra.mxu0 0
      %2377 = vmatprep.subr.bf16.mxu0 0
      %2378 = vmatpush1.bf16.msra.mxu0 0
      %2379 = vmatprep.subr.bf16.mxu0 0
      %2380 = vmatpush1.bf16.msra.mxu0 0
      %2381 = vmatprep.subr.bf16.mxu0 0
      %2382 = vmatpush1.bf16.msra.mxu0 0
      %2383 = vmatprep.subr.bf16.mxu0 0
      %2384 = vmatpush1.bf16.msra.mxu0 0
      %2385 = vmatprep.subr.bf16.mxu0 0
      %2386 = vmatpush1.bf16.msra.mxu0 0
      %2387 = vmatprep.mubr.bf16.mxu0 0
      %2388 = vmatmul.mubr.bf16.gmra.mrb[0].mxu0 %v2332
      %v2389 = vpop.f32.mrb[0].mxu0
      %v2390 = vadd.f32 0.0, %v2389
      %v2391 = vpop.f32.mrb[0].mxu0
      %v2392 = vpop.f32.mrb[0].mxu0
      %v2393 = vadd.f32 0.0, %v2392
      %v2394 = vpop.f32.mrb[0].mxu0
      %2395 = vmatprep.mubr.bf16.mxu0 0
      %2396 = vmatmul.mubr.bf16.gmra.mrb[0].mxu0 %v2335
      %v2397 = vpop.f32.mrb[0].mxu0
      %v2398 = vadd.f32 0.0, %v2397
      %v2399 = vpop.f32.mrb[0].mxu0
      %v2400 = vpop.f32.mrb[0].mxu0
      %v2401 = vadd.f32 0.0, %v2400
      %v2402 = vpop.f32.mrb[0].mxu0
      %2403 = vmatprep.mubr.bf16.mxu0 0
      %2404 = vmatmul.mubr.bf16.gmra.mrb[0].mxu0 %v2338
      %v2405 = vpop.f32.mrb[0].mxu0
      %v2406 = vadd.f32 0.0, %v2405
      %v2407 = vpop.f32.mrb[0].mxu0
      %v2408 = vpop.f32.mrb[0].mxu0
      %v2409 = vadd.f32 0.0, %v2408
      %v2410 = vpop.f32.mrb[0].mxu0
      %2411 = vmatprep.mubr.bf16.mxu0 0
      %2412 = vmatmul.mubr.bf16.gmra.mrb[0].mxu0 %v2341
      %v2413 = vpop.f32.mrb[0].mxu0
      %v2414 = vadd.f32 0.0, %v2413
      %v2415 = vpop.f32.mrb[0].mxu0
      %v2416 = vpop.f32.mrb[0].mxu0
      %v2417 = vadd.f32 0.0, %v2416
      %v2418 = vpop.f32.mrb[0].mxu0
      %2419 = vmatprep.mubr.bf16.mxu0 0
      %2420 = vmatmul.mubr.bf16.gmra.mrb[0].mxu0 %v2344
      %v2421 = vpop.f32.mrb[0].mxu0
      %v2422 = vadd.f32 0.0, %v2421
      %v2423 = vpop.f32.mrb[0].mxu0
      %v2424 = vpop.f32.mrb[0].mxu0
      %v2425 = vadd.f32 0.0, %v2424
      %v2426 = vpop.f32.mrb[0].mxu0
      %2427 = vmatprep.mubr.bf16.mxu0 0
      %2428 = vmatmul.mubr.bf16.gmra.mrb[0].mxu0 %v2347
      %v2429 = vpop.f32.mrb[0].mxu0
      %v2430 = vadd.f32 0.0, %v2429
      %v2431 = vpop.f32.mrb[0].mxu0
      %v2432 = vpop.f32.mrb[0].mxu0
      %v2433 = vadd.f32 0.0, %v2432
      %v2434 = vpop.f32.mrb[0].mxu0
      %2435 = vmatprep.mubr.bf16.mxu0 0
      %2436 = vmatmul.mubr.bf16.gmra.mrb[0].mxu0 %v2350
      %v2437 = vpop.f32.mrb[0].mxu0
      %v2438 = vadd.f32 0.0, %v2437
      %v2439 = vpop.f32.mrb[0].mxu0
      %v2440 = vpop.f32.mrb[0].mxu0
      %v2441 = vadd.f32 0.0, %v2440
      %v2442 = vpop.f32.mrb[0].mxu0
      %2443 = vmatprep.mubr.bf16.mxu0 0
      %2444 = vmatmul.mubr.bf16.gmra.mrb[0].mxu0 %v2353
      %v2445 = vpop.f32.mrb[0].mxu0
      %v2446 = vadd.f32 0.0, %v2445
      %v2447 = vpop.f32.mrb[0].mxu0
      %v2448 = vpop.f32.mrb[0].mxu0
      %v2449 = vadd.f32 0.0, %v2448
      %v2450 = vpop.f32.mrb[0].mxu0
      %2451 = vdwg.mxu0
      %v2452 = vadd.f32 %v2306, %v2390
      %v2453 = vadd.f32 %v2307, %v2393
      %v2454 = vadd.f32 %v2308, %v2398
      %v2455 = vadd.f32 %v2309, %v2401
      %v2456 = vadd.f32 %v2310, %v2406
      %v2457 = vadd.f32 %v2311, %v2409
      %v2458 = vadd.f32 %v2312, %v2414
      %v2459 = vadd.f32 %v2313, %v2417
      %v2460 = vadd.f32 %v2314, %v2422
      %v2461 = vadd.f32 %v2315, %v2425
      %v2462 = vadd.f32 %v2316, %v2430
      %v2463 = vadd.f32 %v2317, %v2433
      %v2464 = vadd.f32 %v2318, %v2438
      %v2465 = vadd.f32 %v2319, %v2441
      %v2466 = vadd.f32 %v2320, %v2446
      %v2467 = vadd.f32 %v2321, %v2449
      %2468 = vst [vmem:[#allocation2] sm:$0xff] %v2452
      %2469 = vst [vmem:[#allocation2 + $0x8] sm:$0xff] %v2453
      %2470 = vst [vmem:[#allocation2 + $0x10] sm:$0xff] %v2454
      %2471 = vst [vmem:[#allocation2 + $0x18] sm:$0xff] %v2455
      %2472 = vst [vmem:[#allocation2 + $0x20] sm:$0xff] %v2456
      %2473 = vst [vmem:[#allocation2 + $0x28] sm:$0xff] %v2457
      %2474 = vst [vmem:[#allocation2 + $0x30] sm:$0xff] %v2458
      %2475 = vst [vmem:[#allocation2 + $0x38] sm:$0xff] %v2459
      %2476 = vst [vmem:[#allocation2 + $0x40] sm:$0xff] %v2460
      %2477 = vst [vmem:[#allocation2 + $0x48] sm:$0xff] %v2461
      %2478 = vst [vmem:[#allocation2 + $0x50] sm:$0xff] %v2462
      %2479 = vst [vmem:[#allocation2 + $0x58] sm:$0xff] %v2463
      %2480 = vst [vmem:[#allocation2 + $0x60] sm:$0xff] %v2464
      %2481 = vst [vmem:[#allocation2 + $0x68] sm:$0xff] %v2465
      %2482 = vst [vmem:[#allocation2 + $0x70] sm:$0xff] %v2466
      %2483 = vst [vmem:[#allocation2 + $0x78] sm:$0xff] %v2467
      %s2484 = scalar_lea.vmem %s1, 128
      %v2485 = vld [vmem:[%s2484] sm:$0xf]
      %v2486 = vld [vmem:[%s2484 + $0x4] sm:$0xf]
      %v2487 = vld [vmem:[%s2484 + $0x8] sm:$0xf]
      %v2488 = vld [vmem:[%s2484 + $0xc] sm:$0xf]
      %v2489 = vld [vmem:[%s2484 + $0x10] sm:$0xf]
      %v2490 = vld [vmem:[%s2484 + $0x14] sm:$0xf]
      %v2491 = vld [vmem:[%s2484 + $0x18] sm:$0xf]
      %v2492 = vld [vmem:[%s2484 + $0x1c] sm:$0xf]
      %v2493 = vld [vmem:[%s2484 + $0x20] sm:$0xf]
      %v2494 = vld [vmem:[%s2484 + $0x24] sm:$0xf]
      %v2495 = vld [vmem:[%s2484 + $0x28] sm:$0xf]
      %v2496 = vld [vmem:[%s2484 + $0x2c] sm:$0xf]
      %v2497 = vld [vmem:[%s2484 + $0x30] sm:$0xf]
      %v2498 = vld [vmem:[%s2484 + $0x34] sm:$0xf]
      %v2499 = vld [vmem:[%s2484 + $0x38] sm:$0xf]
      %v2500 = vld [vmem:[%s2484 + $0x3c] sm:$0xf]
      %v2517 = vunpack.c.l.b16 %v2485
      %v2518 = vunpack.c.l.b16 %v2486
      %v2519 = vunpack.c.l.b16 %v2487
      %v2520 = vunpack.c.l.b16 %v2488
      %v2521 = vunpack.c.l.b16 %v2489
      %v2522 = vunpack.c.l.b16 %v2490
      %v2523 = vunpack.c.l.b16 %v2491
      %v2524 = vunpack.c.l.b16 %v2492
      %v2525 = vunpack.c.l.b16 %v2493
      %v2526 = vunpack.c.l.b16 %v2494
      %v2527 = vunpack.c.l.b16 %v2495
      %v2528 = vunpack.c.l.b16 %v2496
      %v2529 = vunpack.c.l.b16 %v2497
      %v2530 = vunpack.c.l.b16 %v2498
      %v2531 = vunpack.c.l.b16 %v2499
      %v2532 = vunpack.c.l.b16 %v2500
      %v2533 = vpack.c.b16 %v2518, %v2517
      %v2534 = vpack.c.b16 %v2520, %v2519
      %v2535 = vpack.c.b16 %v2522, %v2521
      %v2536 = vpack.c.b16 %v2524, %v2523
      %v2537 = vpack.c.b16 %v2526, %v2525
      %v2538 = vpack.c.b16 %v2528, %v2527
      %v2539 = vpack.c.b16 %v2530, %v2529
      %v2540 = vpack.c.b16 %v2532, %v2531
      %2549 = vmatprep.subr.bf16.mxu0 0
      %2550 = vmatpush1.bf16.msra.mxu0 %v2533
      %2551 = vmatprep.subr.bf16.mxu0 0
      %2552 = vmatpush1.bf16.msra.mxu0 %v2534
      %2553 = vmatprep.subr.bf16.mxu0 0
      %2554 = vmatpush1.bf16.msra.mxu0 %v2535
      %2555 = vmatprep.subr.bf16.mxu0 0
      %2556 = vmatpush1.bf16.msra.mxu0 %v2536
      %2557 = vmatprep.subr.bf16.mxu0 0
      %2558 = vmatpush1.bf16.msra.mxu0 %v2537
      %2559 = vmatprep.subr.bf16.mxu0 0
      %2560 = vmatpush1.bf16.msra.mxu0 %v2538
      %2561 = vmatprep.subr.bf16.mxu0 0
      %2562 = vmatpush1.bf16.msra.mxu0 %v2539
      %2563 = vmatprep.subr.bf16.mxu0 0
      %2564 = vmatpush1.bf16.msra.mxu0 %v2540
      %2565 = vmatprep.subr.bf16.mxu0 0
      %2566 = vmatpush1.bf16.msra.mxu0 0
      %2567 = vmatprep.subr.bf16.mxu0 0
      %2568 = vmatpush1.bf16.msra.mxu0 0
      %2569 = vmatprep.subr.bf16.mxu0 0
      %2570 = vmatpush1.bf16.msra.mxu0 0
      %2571 = vmatprep.subr.bf16.mxu0 0
      %2572 = vmatpush1.bf16.msra.mxu0 0
      %2573 = vmatprep.subr.bf16.mxu0 0
      %2574 = vmatpush1.bf16.msra.mxu0 0
      %2575 = vmatprep.subr.bf16.mxu0 0
      %2576 = vmatpush1.bf16.msra.mxu0 0
      %2577 = vmatprep.subr.bf16.mxu0 0
      %2578 = vmatpush1.bf16.msra.mxu0 0
      %2579 = vmatprep.subr.bf16.mxu0 0
      %2580 = vmatpush1.bf16.msra.mxu0 0
      %2581 = vmatprep.mubr.bf16.mxu0 0
      %2582 = vmatmul.mubr.bf16.gmra.mrb[0].mxu0 %v283
      %v2583 = vpop.f32.mrb[0].mxu0
      %v2584 = vadd.f32 0.0, %v2583
      %v2585 = vpop.f32.mrb[0].mxu0
      %v2586 = vpop.f32.mrb[0].mxu0
      %v2587 = vadd.f32 0.0, %v2586
      %v2588 = vpop.f32.mrb[0].mxu0
      %2589 = vmatprep.mubr.bf16.mxu0 0
      %2590 = vmatmul.mubr.bf16.gmra.mrb[0].mxu0 %v284
      %v2591 = vpop.f32.mrb[0].mxu0
      %v2592 = vadd.f32 0.0, %v2591
      %v2593 = vpop.f32.mrb[0].mxu0
      %v2594 = vpop.f32.mrb[0].mxu0
      %v2595 = vadd.f32 0.0, %v2594
      %v2596 = vpop.f32.mrb[0].mxu0
      %2597 = vmatprep.mubr.bf16.mxu0 0
      %2598 = vmatmul.mubr.bf16.gmra.mrb[0].mxu0 %v285
      %v2599 = vpop.f32.mrb[0].mxu0
      %v2600 = vadd.f32 0.0, %v2599
      %v2601 = vpop.f32.mrb[0].mxu0
      %v2602 = vpop.f32.mrb[0].mxu0
      %v2603 = vadd.f32 0.0, %v2602
      %v2604 = vpop.f32.mrb[0].mxu0
      %2605 = vmatprep.mubr.bf16.mxu0 0
      %2606 = vmatmul.mubr.bf16.gmra.mrb[0].mxu0 %v286
      %v2607 = vpop.f32.mrb[0].mxu0
      %v2608 = vadd.f32 0.0, %v2607
      %v2609 = vpop.f32.mrb[0].mxu0
      %v2610 = vpop.f32.mrb[0].mxu0
      %v2611 = vadd.f32 0.0, %v2610
      %v2612 = vpop.f32.mrb[0].mxu0
      %2613 = vmatprep.mubr.bf16.mxu0 0
      %2614 = vmatmul.mubr.bf16.gmra.mrb[0].mxu0 %v287
      %v2615 = vpop.f32.mrb[0].mxu0
      %v2616 = vadd.f32 0.0, %v2615
      %v2617 = vpop.f32.mrb[0].mxu0
      %v2618 = vpop.f32.mrb[0].mxu0
      %v2619 = vadd.f32 0.0, %v2618
      %v2620 = vpop.f32.mrb[0].mxu0
      %2621 = vmatprep.mubr.bf16.mxu0 0
      %2622 = vmatmul.mubr.bf16.gmra.mrb[0].mxu0 %v288
      %v2623 = vpop.f32.mrb[0].mxu0
      %v2624 = vadd.f32 0.0, %v2623
      %v2625 = vpop.f32.mrb[0].mxu0
      %v2626 = vpop.f32.mrb[0].mxu0
      %v2627 = vadd.f32 0.0, %v2626
      %v2628 = vpop.f32.mrb[0].mxu0
      %2629 = vmatprep.mubr.bf16.mxu0 0
      %2630 = vmatmul.mubr.bf16.gmra.mrb[0].mxu0 %v289
      %v2631 = vpop.f32.mrb[0].mxu0
      %v2632 = vadd.f32 0.0, %v2631
      %v2633 = vpop.f32.mrb[0].mxu0
      %v2634 = vpop.f32.mrb[0].mxu0
      %v2635 = vadd.f32 0.0, %v2634
      %v2636 = vpop.f32.mrb[0].mxu0
      %2637 = vmatprep.mubr.bf16.mxu0 0
      %2638 = vmatmul.mubr.bf16.gmra.mrb[0].mxu0 %v290
      %v2639 = vpop.f32.mrb[0].mxu0
      %v2640 = vadd.f32 0.0, %v2639
      %v2641 = vpop.f32.mrb[0].mxu0
      %v2642 = vpop.f32.mrb[0].mxu0
      %v2643 = vadd.f32 0.0, %v2642
      %v2644 = vpop.f32.mrb[0].mxu0
      %2645 = vdwg.mxu0
      %v2646 = vpack.c.bf16 %v2587, %v2584
      %v2647 = vpack.c.bf16 %v2595, %v2592
      %v2648 = vpack.c.bf16 %v2603, %v2600
      %v2649 = vpack.c.bf16 %v2611, %v2608
      %v2650 = vpack.c.bf16 %v2619, %v2616
      %v2651 = vpack.c.bf16 %v2627, %v2624
      %v2652 = vpack.c.bf16 %v2635, %v2632
      %v2653 = vpack.c.bf16 %v2643, %v2640
      %s2654 = scalar_lea.vmem %s2, 128
      %v2655 = vld [vmem:[%s2654] sm:$0xf]
      %v2656 = vld [vmem:[%s2654 + $0x4] sm:$0xf]
      %v2657 = vld [vmem:[%s2654 + $0x8] sm:$0xf]
      %v2658 = vld [vmem:[%s2654 + $0xc] sm:$0xf]
      %v2659 = vld [vmem:[%s2654 + $0x10] sm:$0xf]
      %v2660 = vld [vmem:[%s2654 + $0x14] sm:$0xf]
      %v2661 = vld [vmem:[%s2654 + $0x18] sm:$0xf]
      %v2662 = vld [vmem:[%s2654 + $0x1c] sm:$0xf]
      %v2663 = vld [vmem:[%s2654 + $0x20] sm:$0xf]
      %v2664 = vld [vmem:[%s2654 + $0x24] sm:$0xf]
      %v2665 = vld [vmem:[%s2654 + $0x28] sm:$0xf]
      %v2666 = vld [vmem:[%s2654 + $0x2c] sm:$0xf]
      %v2667 = vld [vmem:[%s2654 + $0x30] sm:$0xf]
      %v2668 = vld [vmem:[%s2654 + $0x34] sm:$0xf]
      %v2669 = vld [vmem:[%s2654 + $0x38] sm:$0xf]
      %v2670 = vld [vmem:[%s2654 + $0x3c] sm:$0xf]
      %v2687 = vunpack.c.l.b16 %v2655
      %v2688 = vunpack.c.l.b16 %v2656
      %v2689 = vunpack.c.l.b16 %v2657
      %v2690 = vunpack.c.l.b16 %v2658
      %v2691 = vunpack.c.l.b16 %v2659
      %v2692 = vunpack.c.l.b16 %v2660
      %v2693 = vunpack.c.l.b16 %v2661
      %v2694 = vunpack.c.l.b16 %v2662
      %v2695 = vunpack.c.l.b16 %v2663
      %v2696 = vunpack.c.l.b16 %v2664
      %v2697 = vunpack.c.l.b16 %v2665
      %v2698 = vunpack.c.l.b16 %v2666
      %v2699 = vunpack.c.l.b16 %v2667
      %v2700 = vunpack.c.l.b16 %v2668
      %v2701 = vunpack.c.l.b16 %v2669
      %v2702 = vunpack.c.l.b16 %v2670
      %v2703 = vpack.c.b16 %v2688, %v2687
      %v2704 = vpack.c.b16 %v2690, %v2689
      %v2705 = vpack.c.b16 %v2692, %v2691
      %v2706 = vpack.c.b16 %v2694, %v2693
      %v2707 = vpack.c.b16 %v2696, %v2695
      %v2708 = vpack.c.b16 %v2698, %v2697
      %v2709 = vpack.c.b16 %v2700, %v2699
      %v2710 = vpack.c.b16 %v2702, %v2701
      %2719 = vmatprep.subr.bf16.mxu0 0
      %2720 = vmatpush1.bf16.msra.mxu0 %v2703
      %2721 = vmatprep.subr.bf16.mxu0 0
      %2722 = vmatpush1.bf16.msra.mxu0 %v2704
      %2723 = vmatprep.subr.bf16.mxu0 0
      %2724 = vmatpush1.bf16.msra.mxu0 %v2705
      %2725 = vmatprep.subr.bf16.mxu0 0
      %2726 = vmatpush1.bf16.msra.mxu0 %v2706
      %2727 = vmatprep.subr.bf16.mxu0 0
      %2728 = vmatpush1.bf16.msra.mxu0 %v2707
      %2729 = vmatprep.subr.bf16.mxu0 0
      %2730 = vmatpush1.bf16.msra.mxu0 %v2708
      %2731 = vmatprep.subr.bf16.mxu0 0
      %2732 = vmatpush1.bf16.msra.mxu0 %v2709
      %2733 = vmatprep.subr.bf16.mxu0 0
      %2734 = vmatpush1.bf16.msra.mxu0 %v2710
      %2735 = vmatprep.subr.bf16.mxu0 0
      %2736 = vmatpush1.bf16.msra.mxu0 0
      %2737 = vmatprep.subr.bf16.mxu0 0
      %2738 = vmatpush1.bf16.msra.mxu0 0
      %2739 = vmatprep.subr.bf16.mxu0 0
      %2740 = vmatpush1.bf16.msra.mxu0 0
      %2741 = vmatprep.subr.bf16.mxu0 0
      %2742 = vmatpush1.bf16.msra.mxu0 0
      %2743 = vmatprep.subr.bf16.mxu0 0
      %2744 = vmatpush1.bf16.msra.mxu0 0
      %2745 = vmatprep.subr.bf16.mxu0 0
      %2746 = vmatpush1.bf16.msra.mxu0 0
      %2747 = vmatprep.subr.bf16.mxu0 0
      %2748 = vmatpush1.bf16.msra.mxu0 0
      %2749 = vmatprep.subr.bf16.mxu0 0
      %2750 = vmatpush1.bf16.msra.mxu0 0
      %2751 = vmatprep.mubr.bf16.mxu0 0
      %2752 = vmatmul.mubr.bf16.gmra.mrb[0].mxu0 %v283
      %v2753 = vpop.f32.mrb[0].mxu0
      %v2754 = vadd.f32 0.0, %v2753
      %v2755 = vpop.f32.mrb[0].mxu0
      %v2756 = vpop.f32.mrb[0].mxu0
      %v2757 = vadd.f32 0.0, %v2756
      %v2758 = vpop.f32.mrb[0].mxu0
      %2759 = vmatprep.mubr.bf16.mxu0 0
      %2760 = vmatmul.mubr.bf16.gmra.mrb[0].mxu0 %v284
      %v2761 = vpop.f32.mrb[0].mxu0
      %v2762 = vadd.f32 0.0, %v2761
      %v2763 = vpop.f32.mrb[0].mxu0
      %v2764 = vpop.f32.mrb[0].mxu0
      %v2765 = vadd.f32 0.0, %v2764
      %v2766 = vpop.f32.mrb[0].mxu0
      %2767 = vmatprep.mubr.bf16.mxu0 0
      %2768 = vmatmul.mubr.bf16.gmra.mrb[0].mxu0 %v285
      %v2769 = vpop.f32.mrb[0].mxu0
      %v2770 = vadd.f32 0.0, %v2769
      %v2771 = vpop.f32.mrb[0].mxu0
      %v2772 = vpop.f32.mrb[0].mxu0
      %v2773 = vadd.f32 0.0, %v2772
      %v2774 = vpop.f32.mrb[0].mxu0
      %2775 = vmatprep.mubr.bf16.mxu0 0
      %2776 = vmatmul.mubr.bf16.gmra.mrb[0].mxu0 %v286
      %v2777 = vpop.f32.mrb[0].mxu0
      %v2778 = vadd.f32 0.0, %v2777
      %v2779 = vpop.f32.mrb[0].mxu0
      %v2780 = vpop.f32.mrb[0].mxu0
      %v2781 = vadd.f32 0.0, %v2780
      %v2782 = vpop.f32.mrb[0].mxu0
      %2783 = vmatprep.mubr.bf16.mxu0 0
      %2784 = vmatmul.mubr.bf16.gmra.mrb[0].mxu0 %v287
      %v2785 = vpop.f32.mrb[0].mxu0
      %v2786 = vadd.f32 0.0, %v2785
      %v2787 = vpop.f32.mrb[0].mxu0
      %v2788 = vpop.f32.mrb[0].mxu0
      %v2789 = vadd.f32 0.0, %v2788
      %v2790 = vpop.f32.mrb[0].mxu0
      %2791 = vmatprep.mubr.bf16.mxu0 0
      %2792 = vmatmul.mubr.bf16.gmra.mrb[0].mxu0 %v288
      %v2793 = vpop.f32.mrb[0].mxu0
      %v2794 = vadd.f32 0.0, %v2793
      %v2795 = vpop.f32.mrb[0].mxu0
      %v2796 = vpop.f32.mrb[0].mxu0
      %v2797 = vadd.f32 0.0, %v2796
      %v2798 = vpop.f32.mrb[0].mxu0
      %2799 = vmatprep.mubr.bf16.mxu0 0
      %2800 = vmatmul.mubr.bf16.gmra.mrb[0].mxu0 %v289
      %v2801 = vpop.f32.mrb[0].mxu0
      %v2802 = vadd.f32 0.0, %v2801
      %v2803 = vpop.f32.mrb[0].mxu0
      %v2804 = vpop.f32.mrb[0].mxu0
      %v2805 = vadd.f32 0.0, %v2804
      %v2806 = vpop.f32.mrb[0].mxu0
      %2807 = vmatprep.mubr.bf16.mxu0 0
      %2808 = vmatmul.mubr.bf16.gmra.mrb[0].mxu0 %v290
      %v2809 = vpop.f32.mrb[0].mxu0
      %v2810 = vadd.f32 0.0, %v2809
      %v2811 = vpop.f32.mrb[0].mxu0
      %v2812 = vpop.f32.mrb[0].mxu0
      %v2813 = vadd.f32 0.0, %v2812
      %v2814 = vpop.f32.mrb[0].mxu0
      %2815 = vdwg.mxu0
      %v2816 = vpack.c.bf16 %v2757, %v2754
      %v2817 = vpack.c.bf16 %v2765, %v2762
      %v2818 = vpack.c.bf16 %v2773, %v2770
      %v2819 = vpack.c.bf16 %v2781, %v2778
      %v2820 = vpack.c.bf16 %v2789, %v2786
      %v2821 = vpack.c.bf16 %v2797, %v2794
      %v2822 = vpack.c.bf16 %v2805, %v2802
      %v2823 = vpack.c.bf16 %v2813, %v2810
      %s2824 = scalar_lea.vmem %s3, 128
      %v2825 = vld [vmem:[%s2824] sm:$0xf]
      %v2826 = vld [vmem:[%s2824 + $0x4] sm:$0xf]
      %v2827 = vld [vmem:[%s2824 + $0x8] sm:$0xf]
      %v2828 = vld [vmem:[%s2824 + $0xc] sm:$0xf]
      %v2829 = vld [vmem:[%s2824 + $0x10] sm:$0xf]
      %v2830 = vld [vmem:[%s2824 + $0x14] sm:$0xf]
      %v2831 = vld [vmem:[%s2824 + $0x18] sm:$0xf]
      %v2832 = vld [vmem:[%s2824 + $0x1c] sm:$0xf]
      %v2833 = vld [vmem:[%s2824 + $0x20] sm:$0xf]
      %v2834 = vld [vmem:[%s2824 + $0x24] sm:$0xf]
      %v2835 = vld [vmem:[%s2824 + $0x28] sm:$0xf]
      %v2836 = vld [vmem:[%s2824 + $0x2c] sm:$0xf]
      %v2837 = vld [vmem:[%s2824 + $0x30] sm:$0xf]
      %v2838 = vld [vmem:[%s2824 + $0x34] sm:$0xf]
      %v2839 = vld [vmem:[%s2824 + $0x38] sm:$0xf]
      %v2840 = vld [vmem:[%s2824 + $0x3c] sm:$0xf]
      %v2857 = vunpack.c.l.b16 %v2825
      %v2858 = vunpack.c.l.b16 %v2826
      %v2859 = vunpack.c.l.b16 %v2827
      %v2860 = vunpack.c.l.b16 %v2828
      %v2861 = vunpack.c.l.b16 %v2829
      %v2862 = vunpack.c.l.b16 %v2830
      %v2863 = vunpack.c.l.b16 %v2831
      %v2864 = vunpack.c.l.b16 %v2832
      %v2865 = vunpack.c.l.b16 %v2833
      %v2866 = vunpack.c.l.b16 %v2834
      %v2867 = vunpack.c.l.b16 %v2835
      %v2868 = vunpack.c.l.b16 %v2836
      %v2869 = vunpack.c.l.b16 %v2837
      %v2870 = vunpack.c.l.b16 %v2838
      %v2871 = vunpack.c.l.b16 %v2839
      %v2872 = vunpack.c.l.b16 %v2840
      %v2873 = vpack.c.b16 %v2858, %v2857
      %v2874 = vpack.c.b16 %v2860, %v2859
      %v2875 = vpack.c.b16 %v2862, %v2861
      %v2876 = vpack.c.b16 %v2864, %v2863
      %v2877 = vpack.c.b16 %v2866, %v2865
      %v2878 = vpack.c.b16 %v2868, %v2867
      %v2879 = vpack.c.b16 %v2870, %v2869
      %v2880 = vpack.c.b16 %v2872, %v2871
      %2889 = vmatprep.subr.bf16.mxu0 0
      %2890 = vmatpush1.bf16.msra.mxu0 %v2873
      %2891 = vmatprep.subr.bf16.mxu0 0
      %2892 = vmatpush1.bf16.msra.mxu0 %v2874
      %2893 = vmatprep.subr.bf16.mxu0 0
      %2894 = vmatpush1.bf16.msra.mxu0 %v2875
      %2895 = vmatprep.subr.bf16.mxu0 0
      %2896 = vmatpush1.bf16.msra.mxu0 %v2876
      %2897 = vmatprep.subr.bf16.mxu0 0
      %2898 = vmatpush1.bf16.msra.mxu0 %v2877
      %2899 = vmatprep.subr.bf16.mxu0 0
      %2900 = vmatpush1.bf16.msra.mxu0 %v2878
      %2901 = vmatprep.subr.bf16.mxu0 0
      %2902 = vmatpush1.bf16.msra.mxu0 %v2879
      %2903 = vmatprep.subr.bf16.mxu0 0
      %2904 = vmatpush1.bf16.msra.mxu0 %v2880
      %2905 = vmatprep.subr.bf16.mxu0 0
      %2906 = vmatpush1.bf16.msra.mxu0 0
      %2907 = vmatprep.subr.bf16.mxu0 0
      %2908 = vmatpush1.bf16.msra.mxu0 0
      %2909 = vmatprep.subr.bf16.mxu0 0
      %2910 = vmatpush1.bf16.msra.mxu0 0
      %2911 = vmatprep.subr.bf16.mxu0 0
      %2912 = vmatpush1.bf16.msra.mxu0 0
      %2913 = vmatprep.subr.bf16.mxu0 0
      %2914 = vmatpush1.bf16.msra.mxu0 0
      %2915 = vmatprep.subr.bf16.mxu0 0
      %2916 = vmatpush1.bf16.msra.mxu0 0
      %2917 = vmatprep.subr.bf16.mxu0 0
      %2918 = vmatpush1.bf16.msra.mxu0 0
      %2919 = vmatprep.subr.bf16.mxu0 0
      %2920 = vmatpush1.bf16.msra.mxu0 0
      %2921 = vmatprep.mubr.bf16.mxu0 0
      %2922 = vmatmul.mubr.bf16.gmra.mrb[0].mxu0 %v283
      %v2923 = vpop.f32.mrb[0].mxu0
      %v2924 = vadd.f32 0.0, %v2923
      %v2925 = vpop.f32.mrb[0].mxu0
      %v2926 = vpop.f32.mrb[0].mxu0
      %v2927 = vadd.f32 0.0, %v2926
      %v2928 = vpop.f32.mrb[0].mxu0
      %2929 = vmatprep.mubr.bf16.mxu0 0
      %2930 = vmatmul.mubr.bf16.gmra.mrb[0].mxu0 %v284
      %v2931 = vpop.f32.mrb[0].mxu0
      %v2932 = vadd.f32 0.0, %v2931
      %v2933 = vpop.f32.mrb[0].mxu0
      %v2934 = vpop.f32.mrb[0].mxu0
      %v2935 = vadd.f32 0.0, %v2934
      %v2936 = vpop.f32.mrb[0].mxu0
      %2937 = vmatprep.mubr.bf16.mxu0 0
      %2938 = vmatmul.mubr.bf16.gmra.mrb[0].mxu0 %v285
      %v2939 = vpop.f32.mrb[0].mxu0
      %v2940 = vadd.f32 0.0, %v2939
      %v2941 = vpop.f32.mrb[0].mxu0
      %v2942 = vpop.f32.mrb[0].mxu0
      %v2943 = vadd.f32 0.0, %v2942
      %v2944 = vpop.f32.mrb[0].mxu0
      %2945 = vmatprep.mubr.bf16.mxu0 0
      %2946 = vmatmul.mubr.bf16.gmra.mrb[0].mxu0 %v286
      %v2947 = vpop.f32.mrb[0].mxu0
      %v2948 = vadd.f32 0.0, %v2947
      %v2949 = vpop.f32.mrb[0].mxu0
      %v2950 = vpop.f32.mrb[0].mxu0
      %v2951 = vadd.f32 0.0, %v2950
      %v2952 = vpop.f32.mrb[0].mxu0
      %2953 = vmatprep.mubr.bf16.mxu0 0
      %2954 = vmatmul.mubr.bf16.gmra.mrb[0].mxu0 %v287
      %v2955 = vpop.f32.mrb[0].mxu0
      %v2956 = vadd.f32 0.0, %v2955
      %v2957 = vpop.f32.mrb[0].mxu0
      %v2958 = vpop.f32.mrb[0].mxu0
      %v2959 = vadd.f32 0.0, %v2958
      %v2960 = vpop.f32.mrb[0].mxu0
      %2961 = vmatprep.mubr.bf16.mxu0 0
      %2962 = vmatmul.mubr.bf16.gmra.mrb[0].mxu0 %v288
      %v2963 = vpop.f32.mrb[0].mxu0
      %v2964 = vadd.f32 0.0, %v2963
      %v2965 = vpop.f32.mrb[0].mxu0
      %v2966 = vpop.f32.mrb[0].mxu0
      %v2967 = vadd.f32 0.0, %v2966
      %v2968 = vpop.f32.mrb[0].mxu0
      %2969 = vmatprep.mubr.bf16.mxu0 0
      %2970 = vmatmul.mubr.bf16.gmra.mrb[0].mxu0 %v289
      %v2971 = vpop.f32.mrb[0].mxu0
      %v2972 = vadd.f32 0.0, %v2971
      %v2973 = vpop.f32.mrb[0].mxu0
      %v2974 = vpop.f32.mrb[0].mxu0
      %v2975 = vadd.f32 0.0, %v2974
      %v2976 = vpop.f32.mrb[0].mxu0
      %2977 = vmatprep.mubr.bf16.mxu0 0
      %2978 = vmatmul.mubr.bf16.gmra.mrb[0].mxu0 %v290
      %v2979 = vpop.f32.mrb[0].mxu0
      %v2980 = vadd.f32 0.0, %v2979
      %v2981 = vpop.f32.mrb[0].mxu0
      %v2982 = vpop.f32.mrb[0].mxu0
      %v2983 = vadd.f32 0.0, %v2982
      %v2984 = vpop.f32.mrb[0].mxu0
      %2985 = vdwg.mxu0
      %v2986 = vpack.c.bf16 %v2927, %v2924
      %v2987 = vpack.c.bf16 %v2935, %v2932
      %v2988 = vpack.c.bf16 %v2943, %v2940
      %v2989 = vpack.c.bf16 %v2951, %v2948
      %v2990 = vpack.c.bf16 %v2959, %v2956
      %v2991 = vpack.c.bf16 %v2967, %v2964
      %v2992 = vpack.c.bf16 %v2975, %v2972
      %v2993 = vpack.c.bf16 %v2983, %v2980
      %v2995 = vsel %vm814, %v2646, 0
      %v2998 = vsel %vm814, %v2647, 0
      %v3001 = vsel %vm814, %v2648, 0
      %v3004 = vsel %vm814, %v2649, 0
      %v3007 = vsel %vm814, %v2650, 0
      %v3010 = vsel %vm814, %v2651, 0
      %v3013 = vsel %vm814, %v2652, 0
      %v3016 = vsel %vm814, %v2653, 0
      %v3019 = vsel %vm814, %v2816, 0
      %v3022 = vsel %vm814, %v2817, 0
      %v3025 = vsel %vm814, %v2818, 0
      %v3028 = vsel %vm814, %v2819, 0
      %v3031 = vsel %vm814, %v2820, 0
      %v3034 = vsel %vm814, %v2821, 0
      %v3037 = vsel %vm814, %v2822, 0
      %v3040 = vsel %vm814, %v2823, 0
      %3042 = vmatprep.subr.bf16.mxu0 0
      %3043 = vmatpush1.bf16.xpose.msra.mxu0 %v3019
      %3044 = vmatprep.subr.bf16.mxu0 0
      %3045 = vmatpush1.bf16.xpose.msra.mxu0 %v3022
      %3046 = vmatprep.subr.bf16.mxu0 0
      %3047 = vmatpush1.bf16.xpose.msra.mxu0 %v3025
      %3048 = vmatprep.subr.bf16.mxu0 0
      %3049 = vmatpush1.bf16.xpose.msra.mxu0 %v3028
      %3050 = vmatprep.subr.bf16.mxu0 0
      %3051 = vmatpush1.bf16.xpose.msra.mxu0 %v3031
      %3052 = vmatprep.subr.bf16.mxu0 0
      %3053 = vmatpush1.bf16.xpose.msra.mxu0 %v3034
      %3054 = vmatprep.subr.bf16.mxu0 0
      %3055 = vmatpush1.bf16.xpose.msra.mxu0 %v3037
      %3056 = vmatprep.subr.bf16.mxu0 0
      %3057 = vmatpush1.bf16.xpose.msra.mxu0 %v3040
      %3058 = vmatprep.subr.bf16.mxu0 0
      %3059 = vmatpush1.bf16.xpose.msra.mxu0 0
      %3060 = vmatprep.subr.bf16.mxu0 0
      %3061 = vmatpush1.bf16.xpose.msra.mxu0 0
      %3062 = vmatprep.subr.bf16.mxu0 0
      %3063 = vmatpush1.bf16.xpose.msra.mxu0 0
      %3064 = vmatprep.subr.bf16.mxu0 0
      %3065 = vmatpush1.bf16.xpose.msra.mxu0 0
      %3066 = vmatprep.subr.bf16.mxu0 0
      %3067 = vmatpush1.bf16.xpose.msra.mxu0 0
      %3068 = vmatprep.subr.bf16.mxu0 0
      %3069 = vmatpush1.bf16.xpose.msra.mxu0 0
      %3070 = vmatprep.subr.bf16.mxu0 0
      %3071 = vmatpush1.bf16.xpose.msra.mxu0 0
      %3072 = vmatprep.subr.bf16.mxu0 0
      %3073 = vmatpush1.bf16.xpose.msra.mxu0 0
      %3074 = vmatprep.mubr.bf16.mxu0 0
      %3075 = vmatmul.mubr.bf16.gmra.mrb[0].mxu0 %v2995
      %v3076 = vpop.f32.mrb[0].mxu0
      %v3077 = vadd.f32 0.0, %v3076
      %v3078 = vpop.f32.mrb[0].mxu0
      %v3079 = vpop.f32.mrb[0].mxu0
      %v3080 = vadd.f32 0.0, %v3079
      %v3081 = vpop.f32.mrb[0].mxu0
      %3082 = vmatprep.mubr.bf16.mxu0 0
      %3083 = vmatmul.mubr.bf16.gmra.mrb[0].mxu0 %v2998
      %v3084 = vpop.f32.mrb[0].mxu0
      %v3085 = vadd.f32 0.0, %v3084
      %v3086 = vpop.f32.mrb[0].mxu0
      %v3087 = vpop.f32.mrb[0].mxu0
      %v3088 = vadd.f32 0.0, %v3087
      %v3089 = vpop.f32.mrb[0].mxu0
      %3090 = vmatprep.mubr.bf16.mxu0 0
      %3091 = vmatmul.mubr.bf16.gmra.mrb[0].mxu0 %v3001
      %v3092 = vpop.f32.mrb[0].mxu0
      %v3093 = vadd.f32 0.0, %v3092
      %v3094 = vpop.f32.mrb[0].mxu0
      %v3095 = vpop.f32.mrb[0].mxu0
      %v3096 = vadd.f32 0.0, %v3095
      %v3097 = vpop.f32.mrb[0].mxu0
      %3098 = vmatprep.mubr.bf16.mxu0 0
      %3099 = vmatmul.mubr.bf16.gmra.mrb[0].mxu0 %v3004
      %v3100 = vpop.f32.mrb[0].mxu0
      %v3101 = vadd.f32 0.0, %v3100
      %v3102 = vpop.f32.mrb[0].mxu0
      %v3103 = vpop.f32.mrb[0].mxu0
      %v3104 = vadd.f32 0.0, %v3103
      %v3105 = vpop.f32.mrb[0].mxu0
      %3106 = vmatprep.mubr.bf16.mxu0 0
      %3107 = vmatmul.mubr.bf16.gmra.mrb[0].mxu0 %v3007
      %v3108 = vpop.f32.mrb[0].mxu0
      %v3109 = vadd.f32 0.0, %v3108
      %v3110 = vpop.f32.mrb[0].mxu0
      %v3111 = vpop.f32.mrb[0].mxu0
      %v3112 = vadd.f32 0.0, %v3111
      %v3113 = vpop.f32.mrb[0].mxu0
      %3114 = vmatprep.mubr.bf16.mxu0 0
      %3115 = vmatmul.mubr.bf16.gmra.mrb[0].mxu0 %v3010
      %v3116 = vpop.f32.mrb[0].mxu0
      %v3117 = vadd.f32 0.0, %v3116
      %v3118 = vpop.f32.mrb[0].mxu0
      %v3119 = vpop.f32.mrb[0].mxu0
      %v3120 = vadd.f32 0.0, %v3119
      %v3121 = vpop.f32.mrb[0].mxu0
      %3122 = vmatprep.mubr.bf16.mxu0 0
      %3123 = vmatmul.mubr.bf16.gmra.mrb[0].mxu0 %v3013
      %v3124 = vpop.f32.mrb[0].mxu0
      %v3125 = vadd.f32 0.0, %v3124
      %v3126 = vpop.f32.mrb[0].mxu0
      %v3127 = vpop.f32.mrb[0].mxu0
      %v3128 = vadd.f32 0.0, %v3127
      %v3129 = vpop.f32.mrb[0].mxu0
      %3130 = vmatprep.mubr.bf16.mxu0 0
      %3131 = vmatmul.mubr.bf16.gmra.mrb[0].mxu0 %v3016
      %v3132 = vpop.f32.mrb[0].mxu0
      %v3133 = vadd.f32 0.0, %v3132
      %v3134 = vpop.f32.mrb[0].mxu0
      %v3135 = vpop.f32.mrb[0].mxu0
      %v3136 = vadd.f32 0.0, %v3135
      %v3137 = vpop.f32.mrb[0].mxu0
      %3138 = vdwg.mxu0
      %3139 = vmax.xlane.f32.xlu0 %v3077
      %v3140 = vpop.xlane.xlu0 %3139
      %3141 = vmax.xlane.f32.xlu0 %v3080
      %v3142 = vpop.xlane.xlu0 %3141
      %3143 = vmax.xlane.f32.xlu0 %v3085
      %v3144 = vpop.xlane.xlu0 %3143
      %3145 = vmax.xlane.f32.xlu0 %v3088
      %v3146 = vpop.xlane.xlu0 %3145
      %3147 = vmax.xlane.f32.xlu0 %v3093
      %v3148 = vpop.xlane.xlu0 %3147
      %3149 = vmax.xlane.f32.xlu0 %v3096
      %v3150 = vpop.xlane.xlu0 %3149
      %3151 = vmax.xlane.f32.xlu0 %v3101
      %v3152 = vpop.xlane.xlu0 %3151
      %3153 = vmax.xlane.f32.xlu0 %v3104
      %v3154 = vpop.xlane.xlu0 %3153
      %3155 = vmax.xlane.f32.xlu0 %v3109
      %v3156 = vpop.xlane.xlu0 %3155
      %3157 = vmax.xlane.f32.xlu0 %v3112
      %v3158 = vpop.xlane.xlu0 %3157
      %3159 = vmax.xlane.f32.xlu0 %v3117
      %v3160 = vpop.xlane.xlu0 %3159
      %3161 = vmax.xlane.f32.xlu0 %v3120
      %v3162 = vpop.xlane.xlu0 %3161
      %3163 = vmax.xlane.f32.xlu0 %v3125
      %v3164 = vpop.xlane.xlu0 %3163
      %3165 = vmax.xlane.f32.xlu0 %v3128
      %v3166 = vpop.xlane.xlu0 %3165
      %3167 = vmax.xlane.f32.xlu0 %v3133
      %v3168 = vpop.xlane.xlu0 %3167
      %3169 = vmax.xlane.f32.xlu0 %v3136
      %v3170 = vpop.xlane.xlu0 %3169
      %v3171 = vsub.f32 %v3077, %v3140
      %v3172 = vsub.f32 %v3080, %v3142
      %v3173 = vsub.f32 %v3085, %v3144
      %v3174 = vsub.f32 %v3088, %v3146
      %v3175 = vsub.f32 %v3093, %v3148
      %v3176 = vsub.f32 %v3096, %v3150
      %v3177 = vsub.f32 %v3101, %v3152
      %v3178 = vsub.f32 %v3104, %v3154
      %v3179 = vsub.f32 %v3109, %v3156
      %v3180 = vsub.f32 %v3112, %v3158
      %v3181 = vsub.f32 %v3117, %v3160
      %v3182 = vsub.f32 %v3120, %v3162
      %v3183 = vsub.f32 %v3125, %v3164
      %v3184 = vsub.f32 %v3128, %v3166
      %v3185 = vsub.f32 %v3133, %v3168
      %v3186 = vsub.f32 %v3136, %v3170
      %v3187 = vmul.f32 %v3171, 1.442695
      %v3188 = vpow.pop %v3187
      %v3189 = vmul.f32 %v3172, 1.442695
      %v3190 = vpow.pop %v3189
      %v3191 = vmul.f32 %v3173, 1.442695
      %v3192 = vpow.pop %v3191
      %v3193 = vmul.f32 %v3174, 1.442695
      %v3194 = vpow.pop %v3193
      %v3195 = vmul.f32 %v3175, 1.442695
      %v3196 = vpow.pop %v3195
      %v3197 = vmul.f32 %v3176, 1.442695
      %v3198 = vpow.pop %v3197
      %v3199 = vmul.f32 %v3177, 1.442695
      %v3200 = vpow.pop %v3199
      %v3201 = vmul.f32 %v3178, 1.442695
      %v3202 = vpow.pop %v3201
      %v3203 = vmul.f32 %v3179, 1.442695
      %v3204 = vpow.pop %v3203
      %v3205 = vmul.f32 %v3180, 1.442695
      %v3206 = vpow.pop %v3205
      %v3207 = vmul.f32 %v3181, 1.442695
      %v3208 = vpow.pop %v3207
      %v3209 = vmul.f32 %v3182, 1.442695
      %v3210 = vpow.pop %v3209
      %v3211 = vmul.f32 %v3183, 1.442695
      %v3212 = vpow.pop %v3211
      %v3213 = vmul.f32 %v3184, 1.442695
      %v3214 = vpow.pop %v3213
      %v3215 = vmul.f32 %v3185, 1.442695
      %v3216 = vpow.pop %v3215
      %v3217 = vmul.f32 %v3186, 1.442695
      %v3218 = vpow.pop %v3217
      %3219 = vadd.xlane.f32.xlu0 %v3188
      %v3220 = vpop.xlane.xlu0 %3219
      %3221 = vadd.xlane.f32.xlu0 %v3190
      %v3222 = vpop.xlane.xlu0 %3221
      %3223 = vadd.xlane.f32.xlu0 %v3192
      %v3224 = vpop.xlane.xlu0 %3223
      %3225 = vadd.xlane.f32.xlu0 %v3194
      %v3226 = vpop.xlane.xlu0 %3225
      %3227 = vadd.xlane.f32.xlu0 %v3196
      %v3228 = vpop.xlane.xlu0 %3227
      %3229 = vadd.xlane.f32.xlu0 %v3198
      %v3230 = vpop.xlane.xlu0 %3229
      %3231 = vadd.xlane.f32.xlu0 %v3200
      %v3232 = vpop.xlane.xlu0 %3231
      %3233 = vadd.xlane.f32.xlu0 %v3202
      %v3234 = vpop.xlane.xlu0 %3233
      %3235 = vadd.xlane.f32.xlu0 %v3204
      %v3236 = vpop.xlane.xlu0 %3235
      %3237 = vadd.xlane.f32.xlu0 %v3206
      %v3238 = vpop.xlane.xlu0 %3237
      %3239 = vadd.xlane.f32.xlu0 %v3208
      %v3240 = vpop.xlane.xlu0 %3239
      %3241 = vadd.xlane.f32.xlu0 %v3210
      %v3242 = vpop.xlane.xlu0 %3241
      %3243 = vadd.xlane.f32.xlu0 %v3212
      %v3244 = vpop.xlane.xlu0 %3243
      %3245 = vadd.xlane.f32.xlu0 %v3214
      %v3246 = vpop.xlane.xlu0 %3245
      %3247 = vadd.xlane.f32.xlu0 %v3216
      %v3248 = vpop.xlane.xlu0 %3247
      %3249 = vadd.xlane.f32.xlu0 %v3218
      %v3250 = vpop.xlane.xlu0 %3249
      %v3251 = vrcp.pop %v3220
      %v3252 = vrcp.pop %v3222
      %v3253 = vrcp.pop %v3224
      %v3254 = vrcp.pop %v3226
      %v3255 = vrcp.pop %v3228
      %v3256 = vrcp.pop %v3230
      %v3257 = vrcp.pop %v3232
      %v3258 = vrcp.pop %v3234
      %v3259 = vrcp.pop %v3236
      %v3260 = vrcp.pop %v3238
      %v3261 = vrcp.pop %v3240
      %v3262 = vrcp.pop %v3242
      %v3263 = vrcp.pop %v3244
      %v3264 = vrcp.pop %v3246
      %v3265 = vrcp.pop %v3248
      %v3266 = vrcp.pop %v3250
      %v3267 = vmul.f32 %v3188, %v3251
      %v3268 = vmul.f32 %v3190, %v3252
      %v3269 = vmul.f32 %v3192, %v3253
      %v3270 = vmul.f32 %v3194, %v3254
      %v3271 = vmul.f32 %v3196, %v3255
      %v3272 = vmul.f32 %v3198, %v3256
      %v3273 = vmul.f32 %v3200, %v3257
      %v3274 = vmul.f32 %v3202, %v3258
      %v3275 = vmul.f32 %v3204, %v3259
      %v3276 = vmul.f32 %v3206, %v3260
      %v3277 = vmul.f32 %v3208, %v3261
      %v3278 = vmul.f32 %v3210, %v3262
      %v3279 = vmul.f32 %v3212, %v3263
      %v3280 = vmul.f32 %v3214, %v3264
      %v3281 = vmul.f32 %v3216, %v3265
      %v3282 = vmul.f32 %v3218, %v3266
      %v3283 = vpack.c.bf16 %v3268, %v3267
      %v3284 = vpack.c.bf16 %v3270, %v3269
      %v3285 = vpack.c.bf16 %v3272, %v3271
      %v3286 = vpack.c.bf16 %v3274, %v3273
      %v3287 = vpack.c.bf16 %v3276, %v3275
      %v3288 = vpack.c.bf16 %v3278, %v3277
      %v3289 = vpack.c.bf16 %v3280, %v3279
      %v3290 = vpack.c.bf16 %v3282, %v3281
      %3291 = vmatprep.subr.bf16.mxu0 0
      %3292 = vmatpush1.bf16.msra.mxu0 %v2986
      %3293 = vmatprep.subr.bf16.mxu0 0
      %3294 = vmatpush1.bf16.msra.mxu0 %v2987
      %3295 = vmatprep.subr.bf16.mxu0 0
      %3296 = vmatpush1.bf16.msra.mxu0 %v2988
      %3297 = vmatprep.subr.bf16.mxu0 0
      %3298 = vmatpush1.bf16.msra.mxu0 %v2989
      %3299 = vmatprep.subr.bf16.mxu0 0
      %3300 = vmatpush1.bf16.msra.mxu0 %v2990
      %3301 = vmatprep.subr.bf16.mxu0 0
      %3302 = vmatpush1.bf16.msra.mxu0 %v2991
      %3303 = vmatprep.subr.bf16.mxu0 0
      %3304 = vmatpush1.bf16.msra.mxu0 %v2992
      %3305 = vmatprep.subr.bf16.mxu0 0
      %3306 = vmatpush1.bf16.msra.mxu0 %v2993
      %3307 = vmatprep.subr.bf16.mxu0 0
      %3308 = vmatpush1.bf16.msra.mxu0 0
      %3309 = vmatprep.subr.bf16.mxu0 0
      %3310 = vmatpush1.bf16.msra.mxu0 0
      %3311 = vmatprep.subr.bf16.mxu0 0
      %3312 = vmatpush1.bf16.msra.mxu0 0
      %3313 = vmatprep.subr.bf16.mxu0 0
      %3314 = vmatpush1.bf16.msra.mxu0 0
      %3315 = vmatprep.subr.bf16.mxu0 0
      %3316 = vmatpush1.bf16.msra.mxu0 0
      %3317 = vmatprep.subr.bf16.mxu0 0
      %3318 = vmatpush1.bf16.msra.mxu0 0
      %3319 = vmatprep.subr.bf16.mxu0 0
      %3320 = vmatpush1.bf16.msra.mxu0 0
      %3321 = vmatprep.subr.bf16.mxu0 0
      %3322 = vmatpush1.bf16.msra.mxu0 0
      %3323 = vmatprep.mubr.bf16.mxu0 0
      %3324 = vmatmul.mubr.bf16.gmra.mrb[0].mxu0 %v3283
      %v3325 = vpop.f32.mrb[0].mxu0
      %v3326 = vadd.f32 0.0, %v3325
      %v3327 = vpop.f32.mrb[0].mxu0
      %v3328 = vpop.f32.mrb[0].mxu0
      %v3329 = vadd.f32 0.0, %v3328
      %v3330 = vpop.f32.mrb[0].mxu0
      %3331 = vmatprep.mubr.bf16.mxu0 0
      %3332 = vmatmul.mubr.bf16.gmra.mrb[0].mxu0 %v3284
      %v3333 = vpop.f32.mrb[0].mxu0
      %v3334 = vadd.f32 0.0, %v3333
      %v3335 = vpop.f32.mrb[0].mxu0
      %v3336 = vpop.f32.mrb[0].mxu0
      %v3337 = vadd.f32 0.0, %v3336
      %v3338 = vpop.f32.mrb[0].mxu0
      %3339 = vmatprep.mubr.bf16.mxu0 0
      %3340 = vmatmul.mubr.bf16.gmra.mrb[0].mxu0 %v3285
      %v3341 = vpop.f32.mrb[0].mxu0
      %v3342 = vadd.f32 0.0, %v3341
      %v3343 = vpop.f32.mrb[0].mxu0
      %v3344 = vpop.f32.mrb[0].mxu0
      %v3345 = vadd.f32 0.0, %v3344
      %v3346 = vpop.f32.mrb[0].mxu0
      %3347 = vmatprep.mubr.bf16.mxu0 0
      %3348 = vmatmul.mubr.bf16.gmra.mrb[0].mxu0 %v3286
      %v3349 = vpop.f32.mrb[0].mxu0
      %v3350 = vadd.f32 0.0, %v3349
      %v3351 = vpop.f32.mrb[0].mxu0
      %v3352 = vpop.f32.mrb[0].mxu0
      %v3353 = vadd.f32 0.0, %v3352
      %v3354 = vpop.f32.mrb[0].mxu0
      %3355 = vmatprep.mubr.bf16.mxu0 0
      %3356 = vmatmul.mubr.bf16.gmra.mrb[0].mxu0 %v3287
      %v3357 = vpop.f32.mrb[0].mxu0
      %v3358 = vadd.f32 0.0, %v3357
      %v3359 = vpop.f32.mrb[0].mxu0
      %v3360 = vpop.f32.mrb[0].mxu0
      %v3361 = vadd.f32 0.0, %v3360
      %v3362 = vpop.f32.mrb[0].mxu0
      %3363 = vmatprep.mubr.bf16.mxu0 0
      %3364 = vmatmul.mubr.bf16.gmra.mrb[0].mxu0 %v3288
      %v3365 = vpop.f32.mrb[0].mxu0
      %v3366 = vadd.f32 0.0, %v3365
      %v3367 = vpop.f32.mrb[0].mxu0
      %v3368 = vpop.f32.mrb[0].mxu0
      %v3369 = vadd.f32 0.0, %v3368
      %v3370 = vpop.f32.mrb[0].mxu0
      %3371 = vmatprep.mubr.bf16.mxu0 0
      %3372 = vmatmul.mubr.bf16.gmra.mrb[0].mxu0 %v3289
      %v3373 = vpop.f32.mrb[0].mxu0
      %v3374 = vadd.f32 0.0, %v3373
      %v3375 = vpop.f32.mrb[0].mxu0
      %v3376 = vpop.f32.mrb[0].mxu0
      %v3377 = vadd.f32 0.0, %v3376
      %v3378 = vpop.f32.mrb[0].mxu0
      %3379 = vmatprep.mubr.bf16.mxu0 0
      %3380 = vmatmul.mubr.bf16.gmra.mrb[0].mxu0 %v3290
      %v3381 = vpop.f32.mrb[0].mxu0
      %v3382 = vadd.f32 0.0, %v3381
      %v3383 = vpop.f32.mrb[0].mxu0
      %v3384 = vpop.f32.mrb[0].mxu0
      %v3385 = vadd.f32 0.0, %v3384
      %v3386 = vpop.f32.mrb[0].mxu0
      %3387 = vdwg.mxu0
      %v3388 = vpack.c.bf16 %v3329, %v3326
      %v3389 = vpack.c.bf16 %v3337, %v3334
      %v3390 = vpack.c.bf16 %v3345, %v3342
      %v3391 = vpack.c.bf16 %v3353, %v3350
      %v3392 = vpack.c.bf16 %v3361, %v3358
      %v3393 = vpack.c.bf16 %v3369, %v3366
      %v3394 = vpack.c.bf16 %v3377, %v3374
      %v3395 = vpack.c.bf16 %v3385, %v3382
      %v3396 = vld [vmem:[#allocation2] sm:$0xff]
      %v3397 = vld [vmem:[#allocation2 + $0x8] sm:$0xff]
      %v3398 = vld [vmem:[#allocation2 + $0x10] sm:$0xff]
      %v3399 = vld [vmem:[#allocation2 + $0x18] sm:$0xff]
      %v3400 = vld [vmem:[#allocation2 + $0x20] sm:$0xff]
      %v3401 = vld [vmem:[#allocation2 + $0x28] sm:$0xff]
      %v3402 = vld [vmem:[#allocation2 + $0x30] sm:$0xff]
      %v3403 = vld [vmem:[#allocation2 + $0x38] sm:$0xff]
      %v3404 = vld [vmem:[#allocation2 + $0x40] sm:$0xff]
      %v3405 = vld [vmem:[#allocation2 + $0x48] sm:$0xff]
      %v3406 = vld [vmem:[#allocation2 + $0x50] sm:$0xff]
      %v3407 = vld [vmem:[#allocation2 + $0x58] sm:$0xff]
      %v3408 = vld [vmem:[#allocation2 + $0x60] sm:$0xff]
      %v3409 = vld [vmem:[#allocation2 + $0x68] sm:$0xff]
      %v3410 = vld [vmem:[#allocation2 + $0x70] sm:$0xff]
      %v3411 = vld [vmem:[#allocation2 + $0x78] sm:$0xff]
      %s3412 = scalar_lea.vmem %s4, 16
      %v3413 = vld [vmem:[%s3412] sm:$0xf]
      %v3414 = vld [vmem:[%s3412 + $0x4] sm:$0xf]
      %v3417 = vunpack.c.l.b16 %v3413
      %v3418 = vunpack.c.l.b16 %v3414
      %v3419 = vpack.c.b16 %v3418, %v3417
      %v3422 = vsel %vm814, %v3388, 0
      %v3425 = vsel %vm814, %v3389, 0
      %v3428 = vsel %vm814, %v3390, 0
      %v3431 = vsel %vm814, %v3391, 0
      %v3434 = vsel %vm814, %v3392, 0
      %v3437 = vsel %vm814, %v3393, 0
      %v3440 = vsel %vm814, %v3394, 0
      %v3443 = vsel %vm814, %v3395, 0
      %3445 = vmatprep.subr.bf16.mxu0 0
      %3446 = vmatpush1.bf16.msra.mxu0 %v3419
      %3447 = vmatprep.subr.bf16.mxu0 0
      %3448 = vmatpush1.bf16.msra.mxu0 0
      %3449 = vmatprep.subr.bf16.mxu0 0
      %3450 = vmatpush1.bf16.msra.mxu0 0
      %3451 = vmatprep.subr.bf16.mxu0 0
      %3452 = vmatpush1.bf16.msra.mxu0 0
      %3453 = vmatprep.subr.bf16.mxu0 0
      %3454 = vmatpush1.bf16.msra.mxu0 0
      %3455 = vmatprep.subr.bf16.mxu0 0
      %3456 = vmatpush1.bf16.msra.mxu0 0
      %3457 = vmatprep.subr.bf16.mxu0 0
      %3458 = vmatpush1.bf16.msra.mxu0 0
      %3459 = vmatprep.subr.bf16.mxu0 0
      %3460 = vmatpush1.bf16.msra.mxu0 0
      %3461 = vmatprep.subr.bf16.mxu0 0
      %3462 = vmatpush1.bf16.msra.mxu0 0
      %3463 = vmatprep.subr.bf16.mxu0 0
      %3464 = vmatpush1.bf16.msra.mxu0 0
      %3465 = vmatprep.subr.bf16.mxu0 0
      %3466 = vmatpush1.bf16.msra.mxu0 0
      %3467 = vmatprep.subr.bf16.mxu0 0
      %3468 = vmatpush1.bf16.msra.mxu0 0
      %3469 = vmatprep.subr.bf16.mxu0 0
      %3470 = vmatpush1.bf16.msra.mxu0 0
      %3471 = vmatprep.subr.bf16.mxu0 0
      %3472 = vmatpush1.bf16.msra.mxu0 0
      %3473 = vmatprep.subr.bf16.mxu0 0
      %3474 = vmatpush1.bf16.msra.mxu0 0
      %3475 = vmatprep.subr.bf16.mxu0 0
      %3476 = vmatpush1.bf16.msra.mxu0 0
      %3477 = vmatprep.mubr.bf16.mxu0 0
      %3478 = vmatmul.mubr.bf16.gmra.mrb[0].mxu0 %v3422
      %v3479 = vpop.f32.mrb[0].mxu0
      %v3480 = vadd.f32 0.0, %v3479
      %v3481 = vpop.f32.mrb[0].mxu0
      %v3482 = vpop.f32.mrb[0].mxu0
      %v3483 = vadd.f32 0.0, %v3482
      %v3484 = vpop.f32.mrb[0].mxu0
      %3485 = vmatprep.mubr.bf16.mxu0 0
      %3486 = vmatmul.mubr.bf16.gmra.mrb[0].mxu0 %v3425
      %v3487 = vpop.f32.mrb[0].mxu0
      %v3488 = vadd.f32 0.0, %v3487
      %v3489 = vpop.f32.mrb[0].mxu0
      %v3490 = vpop.f32.mrb[0].mxu0
      %v3491 = vadd.f32 0.0, %v3490
      %v3492 = vpop.f32.mrb[0].mxu0
      %3493 = vmatprep.mubr.bf16.mxu0 0
      %3494 = vmatmul.mubr.bf16.gmra.mrb[0].mxu0 %v3428
      %v3495 = vpop.f32.mrb[0].mxu0
      %v3496 = vadd.f32 0.0, %v3495
      %v3497 = vpop.f32.mrb[0].mxu0
      %v3498 = vpop.f32.mrb[0].mxu0
      %v3499 = vadd.f32 0.0, %v3498
      %v3500 = vpop.f32.mrb[0].mxu0
      %3501 = vmatprep.mubr.bf16.mxu0 0
      %3502 = vmatmul.mubr.bf16.gmra.mrb[0].mxu0 %v3431
      %v3503 = vpop.f32.mrb[0].mxu0
      %v3504 = vadd.f32 0.0, %v3503
      %v3505 = vpop.f32.mrb[0].mxu0
      %v3506 = vpop.f32.mrb[0].mxu0
      %v3507 = vadd.f32 0.0, %v3506
      %v3508 = vpop.f32.mrb[0].mxu0
      %3509 = vmatprep.mubr.bf16.mxu0 0
      %3510 = vmatmul.mubr.bf16.gmra.mrb[0].mxu0 %v3434
      %v3511 = vpop.f32.mrb[0].mxu0
      %v3512 = vadd.f32 0.0, %v3511
      %v3513 = vpop.f32.mrb[0].mxu0
      %v3514 = vpop.f32.mrb[0].mxu0
      %v3515 = vadd.f32 0.0, %v3514
      %v3516 = vpop.f32.mrb[0].mxu0
      %3517 = vmatprep.mubr.bf16.mxu0 0
      %3518 = vmatmul.mubr.bf16.gmra.mrb[0].mxu0 %v3437
      %v3519 = vpop.f32.mrb[0].mxu0
      %v3520 = vadd.f32 0.0, %v3519
      %v3521 = vpop.f32.mrb[0].mxu0
      %v3522 = vpop.f32.mrb[0].mxu0
      %v3523 = vadd.f32 0.0, %v3522
      %v3524 = vpop.f32.mrb[0].mxu0
      %3525 = vmatprep.mubr.bf16.mxu0 0
      %3526 = vmatmul.mubr.bf16.gmra.mrb[0].mxu0 %v3440
      %v3527 = vpop.f32.mrb[0].mxu0
      %v3528 = vadd.f32 0.0, %v3527
      %v3529 = vpop.f32.mrb[0].mxu0
      %v3530 = vpop.f32.mrb[0].mxu0
      %v3531 = vadd.f32 0.0, %v3530
      %v3532 = vpop.f32.mrb[0].mxu0
      %3533 = vmatprep.mubr.bf16.mxu0 0
      %3534 = vmatmul.mubr.bf16.gmra.mrb[0].mxu0 %v3443
      %v3535 = vpop.f32.mrb[0].mxu0
      %v3536 = vadd.f32 0.0, %v3535
      %v3537 = vpop.f32.mrb[0].mxu0
      %v3538 = vpop.f32.mrb[0].mxu0
      %v3539 = vadd.f32 0.0, %v3538
      %v3540 = vpop.f32.mrb[0].mxu0
      %3541 = vdwg.mxu0
      %v3542 = vadd.f32 %v3396, %v3480
      %v3543 = vadd.f32 %v3397, %v3483
      %v3544 = vadd.f32 %v3398, %v3488
      %v3545 = vadd.f32 %v3399, %v3491
      %v3546 = vadd.f32 %v3400, %v3496
      %v3547 = vadd.f32 %v3401, %v3499
      %v3548 = vadd.f32 %v3402, %v3504
      %v3549 = vadd.f32 %v3403, %v3507
      %v3550 = vadd.f32 %v3404, %v3512
      %v3551 = vadd.f32 %v3405, %v3515
      %v3552 = vadd.f32 %v3406, %v3520
      %v3553 = vadd.f32 %v3407, %v3523
      %v3554 = vadd.f32 %v3408, %v3528
      %v3555 = vadd.f32 %v3409, %v3531
      %v3556 = vadd.f32 %v3410, %v3536
      %v3557 = vadd.f32 %v3411, %v3539
      %3558 = vst [vmem:[#allocation2] sm:$0xff] %v3542
      %3559 = vst [vmem:[#allocation2 + $0x8] sm:$0xff] %v3543
      %3560 = vst [vmem:[#allocation2 + $0x10] sm:$0xff] %v3544
      %3561 = vst [vmem:[#allocation2 + $0x18] sm:$0xff] %v3545
      %3562 = vst [vmem:[#allocation2 + $0x20] sm:$0xff] %v3546
      %3563 = vst [vmem:[#allocation2 + $0x28] sm:$0xff] %v3547
      %3564 = vst [vmem:[#allocation2 + $0x30] sm:$0xff] %v3548
      %3565 = vst [vmem:[#allocation2 + $0x38] sm:$0xff] %v3549
      %3566 = vst [vmem:[#allocation2 + $0x40] sm:$0xff] %v3550
      %3567 = vst [vmem:[#allocation2 + $0x48] sm:$0xff] %v3551
      %3568 = vst [vmem:[#allocation2 + $0x50] sm:$0xff] %v3552
      %3569 = vst [vmem:[#allocation2 + $0x58] sm:$0xff] %v3553
      %3570 = vst [vmem:[#allocation2 + $0x60] sm:$0xff] %v3554
      %3571 = vst [vmem:[#allocation2 + $0x68] sm:$0xff] %v3555
      %3572 = vst [vmem:[#allocation2 + $0x70] sm:$0xff] %v3556
      %3573 = vst [vmem:[#allocation2 + $0x78] sm:$0xff] %v3557
      %s3574 = scalar_lea.vmem %s1, 192
      %v3575 = vld [vmem:[%s3574] sm:$0xf]
      %v3576 = vld [vmem:[%s3574 + $0x4] sm:$0xf]
      %v3577 = vld [vmem:[%s3574 + $0x8] sm:$0xf]
      %v3578 = vld [vmem:[%s3574 + $0xc] sm:$0xf]
      %v3579 = vld [vmem:[%s3574 + $0x10] sm:$0xf]
      %v3580 = vld [vmem:[%s3574 + $0x14] sm:$0xf]
      %v3581 = vld [vmem:[%s3574 + $0x18] sm:$0xf]
      %v3582 = vld [vmem:[%s3574 + $0x1c] sm:$0xf]
      %v3583 = vld [vmem:[%s3574 + $0x20] sm:$0xf]
      %v3584 = vld [vmem:[%s3574 + $0x24] sm:$0xf]
      %v3585 = vld [vmem:[%s3574 + $0x28] sm:$0xf]
      %v3586 = vld [vmem:[%s3574 + $0x2c] sm:$0xf]
      %v3587 = vld [vmem:[%s3574 + $0x30] sm:$0xf]
      %v3588 = vld [vmem:[%s3574 + $0x34] sm:$0xf]
      %v3589 = vld [vmem:[%s3574 + $0x38] sm:$0xf]
      %v3590 = vld [vmem:[%s3574 + $0x3c] sm:$0xf]
      %v3607 = vunpack.c.l.b16 %v3575
      %v3608 = vunpack.c.l.b16 %v3576
      %v3609 = vunpack.c.l.b16 %v3577
      %v3610 = vunpack.c.l.b16 %v3578
      %v3611 = vunpack.c.l.b16 %v3579
      %v3612 = vunpack.c.l.b16 %v3580
      %v3613 = vunpack.c.l.b16 %v3581
      %v3614 = vunpack.c.l.b16 %v3582
      %v3615 = vunpack.c.l.b16 %v3583
      %v3616 = vunpack.c.l.b16 %v3584
      %v3617 = vunpack.c.l.b16 %v3585
      %v3618 = vunpack.c.l.b16 %v3586
      %v3619 = vunpack.c.l.b16 %v3587
      %v3620 = vunpack.c.l.b16 %v3588
      %v3621 = vunpack.c.l.b16 %v3589
      %v3622 = vunpack.c.l.b16 %v3590
      %v3623 = vpack.c.b16 %v3608, %v3607
      %v3624 = vpack.c.b16 %v3610, %v3609
      %v3625 = vpack.c.b16 %v3612, %v3611
      %v3626 = vpack.c.b16 %v3614, %v3613
      %v3627 = vpack.c.b16 %v3616, %v3615
      %v3628 = vpack.c.b16 %v3618, %v3617
      %v3629 = vpack.c.b16 %v3620, %v3619
      %v3630 = vpack.c.b16 %v3622, %v3621
      %3639 = vmatprep.subr.bf16.mxu0 0
      %3640 = vmatpush1.bf16.msra.mxu0 %v3623
      %3641 = vmatprep.subr.bf16.mxu0 0
      %3642 = vmatpush1.bf16.msra.mxu0 %v3624
      %3643 = vmatprep.subr.bf16.mxu0 0
      %3644 = vmatpush1.bf16.msra.mxu0 %v3625
      %3645 = vmatprep.subr.bf16.mxu0 0
      %3646 = vmatpush1.bf16.msra.mxu0 %v3626
      %3647 = vmatprep.subr.bf16.mxu0 0
      %3648 = vmatpush1.bf16.msra.mxu0 %v3627
      %3649 = vmatprep.subr.bf16.mxu0 0
      %3650 = vmatpush1.bf16.msra.mxu0 %v3628
      %3651 = vmatprep.subr.bf16.mxu0 0
      %3652 = vmatpush1.bf16.msra.mxu0 %v3629
      %3653 = vmatprep.subr.bf16.mxu0 0
      %3654 = vmatpush1.bf16.msra.mxu0 %v3630
      %3655 = vmatprep.subr.bf16.mxu0 0
      %3656 = vmatpush1.bf16.msra.mxu0 0
      %3657 = vmatprep.subr.bf16.mxu0 0
      %3658 = vmatpush1.bf16.msra.mxu0 0
      %3659 = vmatprep.subr.bf16.mxu0 0
      %3660 = vmatpush1.bf16.msra.mxu0 0
      %3661 = vmatprep.subr.bf16.mxu0 0
      %3662 = vmatpush1.bf16.msra.mxu0 0
      %3663 = vmatprep.subr.bf16.mxu0 0
      %3664 = vmatpush1.bf16.msra.mxu0 0
      %3665 = vmatprep.subr.bf16.mxu0 0
      %3666 = vmatpush1.bf16.msra.mxu0 0
      %3667 = vmatprep.subr.bf16.mxu0 0
      %3668 = vmatpush1.bf16.msra.mxu0 0
      %3669 = vmatprep.subr.bf16.mxu0 0
      %3670 = vmatpush1.bf16.msra.mxu0 0
      %3671 = vmatprep.mubr.bf16.mxu0 0
      %3672 = vmatmul.mubr.bf16.gmra.mrb[0].mxu0 %v283
      %v3673 = vpop.f32.mrb[0].mxu0
      %v3674 = vadd.f32 0.0, %v3673
      %v3675 = vpop.f32.mrb[0].mxu0
      %v3676 = vpop.f32.mrb[0].mxu0
      %v3677 = vadd.f32 0.0, %v3676
      %v3678 = vpop.f32.mrb[0].mxu0
      %3679 = vmatprep.mubr.bf16.mxu0 0
      %3680 = vmatmul.mubr.bf16.gmra.mrb[0].mxu0 %v284
      %v3681 = vpop.f32.mrb[0].mxu0
      %v3682 = vadd.f32 0.0, %v3681
      %v3683 = vpop.f32.mrb[0].mxu0
      %v3684 = vpop.f32.mrb[0].mxu0
      %v3685 = vadd.f32 0.0, %v3684
      %v3686 = vpop.f32.mrb[0].mxu0
      %3687 = vmatprep.mubr.bf16.mxu0 0
      %3688 = vmatmul.mubr.bf16.gmra.mrb[0].mxu0 %v285
      %v3689 = vpop.f32.mrb[0].mxu0
      %v3690 = vadd.f32 0.0, %v3689
      %v3691 = vpop.f32.mrb[0].mxu0
      %v3692 = vpop.f32.mrb[0].mxu0
      %v3693 = vadd.f32 0.0, %v3692
      %v3694 = vpop.f32.mrb[0].mxu0
      %3695 = vmatprep.mubr.bf16.mxu0 0
      %3696 = vmatmul.mubr.bf16.gmra.mrb[0].mxu0 %v286
      %v3697 = vpop.f32.mrb[0].mxu0
      %v3698 = vadd.f32 0.0, %v3697
      %v3699 = vpop.f32.mrb[0].mxu0
      %v3700 = vpop.f32.mrb[0].mxu0
      %v3701 = vadd.f32 0.0, %v3700
      %v3702 = vpop.f32.mrb[0].mxu0
      %3703 = vmatprep.mubr.bf16.mxu0 0
      %3704 = vmatmul.mubr.bf16.gmra.mrb[0].mxu0 %v287
      %v3705 = vpop.f32.mrb[0].mxu0
      %v3706 = vadd.f32 0.0, %v3705
      %v3707 = vpop.f32.mrb[0].mxu0
      %v3708 = vpop.f32.mrb[0].mxu0
      %v3709 = vadd.f32 0.0, %v3708
      %v3710 = vpop.f32.mrb[0].mxu0
      %3711 = vmatprep.mubr.bf16.mxu0 0
      %3712 = vmatmul.mubr.bf16.gmra.mrb[0].mxu0 %v288
      %v3713 = vpop.f32.mrb[0].mxu0
      %v3714 = vadd.f32 0.0, %v3713
      %v3715 = vpop.f32.mrb[0].mxu0
      %v3716 = vpop.f32.mrb[0].mxu0
      %v3717 = vadd.f32 0.0, %v3716
      %v3718 = vpop.f32.mrb[0].mxu0
      %3719 = vmatprep.mubr.bf16.mxu0 0
      %3720 = vmatmul.mubr.bf16.gmra.mrb[0].mxu0 %v289
      %v3721 = vpop.f32.mrb[0].mxu0
      %v3722 = vadd.f32 0.0, %v3721
      %v3723 = vpop.f32.mrb[0].mxu0
      %v3724 = vpop.f32.mrb[0].mxu0
      %v3725 = vadd.f32 0.0, %v3724
      %v3726 = vpop.f32.mrb[0].mxu0
      %3727 = vmatprep.mubr.bf16.mxu0 0
      %3728 = vmatmul.mubr.bf16.gmra.mrb[0].mxu0 %v290
      %v3729 = vpop.f32.mrb[0].mxu0
      %v3730 = vadd.f32 0.0, %v3729
      %v3731 = vpop.f32.mrb[0].mxu0
      %v3732 = vpop.f32.mrb[0].mxu0
      %v3733 = vadd.f32 0.0, %v3732
      %v3734 = vpop.f32.mrb[0].mxu0
      %3735 = vdwg.mxu0
      %v3736 = vpack.c.bf16 %v3677, %v3674
      %v3737 = vpack.c.bf16 %v3685, %v3682
      %v3738 = vpack.c.bf16 %v3693, %v3690
      %v3739 = vpack.c.bf16 %v3701, %v3698
      %v3740 = vpack.c.bf16 %v3709, %v3706
      %v3741 = vpack.c.bf16 %v3717, %v3714
      %v3742 = vpack.c.bf16 %v3725, %v3722
      %v3743 = vpack.c.bf16 %v3733, %v3730
      %s3744 = scalar_lea.vmem %s2, 192
      %v3745 = vld [vmem:[%s3744] sm:$0xf]
      %v3746 = vld [vmem:[%s3744 + $0x4] sm:$0xf]
      %v3747 = vld [vmem:[%s3744 + $0x8] sm:$0xf]
      %v3748 = vld [vmem:[%s3744 + $0xc] sm:$0xf]
      %v3749 = vld [vmem:[%s3744 + $0x10] sm:$0xf]
      %v3750 = vld [vmem:[%s3744 + $0x14] sm:$0xf]
      %v3751 = vld [vmem:[%s3744 + $0x18] sm:$0xf]
      %v3752 = vld [vmem:[%s3744 + $0x1c] sm:$0xf]
      %v3753 = vld [vmem:[%s3744 + $0x20] sm:$0xf]
      %v3754 = vld [vmem:[%s3744 + $0x24] sm:$0xf]
      %v3755 = vld [vmem:[%s3744 + $0x28] sm:$0xf]
      %v3756 = vld [vmem:[%s3744 + $0x2c] sm:$0xf]
      %v3757 = vld [vmem:[%s3744 + $0x30] sm:$0xf]
      %v3758 = vld [vmem:[%s3744 + $0x34] sm:$0xf]
      %v3759 = vld [vmem:[%s3744 + $0x38] sm:$0xf]
      %v3760 = vld [vmem:[%s3744 + $0x3c] sm:$0xf]
      %v3777 = vunpack.c.l.b16 %v3745
      %v3778 = vunpack.c.l.b16 %v3746
      %v3779 = vunpack.c.l.b16 %v3747
      %v3780 = vunpack.c.l.b16 %v3748
      %v3781 = vunpack.c.l.b16 %v3749
      %v3782 = vunpack.c.l.b16 %v3750
      %v3783 = vunpack.c.l.b16 %v3751
      %v3784 = vunpack.c.l.b16 %v3752
      %v3785 = vunpack.c.l.b16 %v3753
      %v3786 = vunpack.c.l.b16 %v3754
      %v3787 = vunpack.c.l.b16 %v3755
      %v3788 = vunpack.c.l.b16 %v3756
      %v3789 = vunpack.c.l.b16 %v3757
      %v3790 = vunpack.c.l.b16 %v3758
      %v3791 = vunpack.c.l.b16 %v3759
      %v3792 = vunpack.c.l.b16 %v3760
      %v3793 = vpack.c.b16 %v3778, %v3777
      %v3794 = vpack.c.b16 %v3780, %v3779
      %v3795 = vpack.c.b16 %v3782, %v3781
      %v3796 = vpack.c.b16 %v3784, %v3783
      %v3797 = vpack.c.b16 %v3786, %v3785
      %v3798 = vpack.c.b16 %v3788, %v3787
      %v3799 = vpack.c.b16 %v3790, %v3789
      %v3800 = vpack.c.b16 %v3792, %v3791
      %3809 = vmatprep.subr.bf16.mxu0 0
      %3810 = vmatpush1.bf16.msra.mxu0 %v3793
      %3811 = vmatprep.subr.bf16.mxu0 0
      %3812 = vmatpush1.bf16.msra.mxu0 %v3794
      %3813 = vmatprep.subr.bf16.mxu0 0
      %3814 = vmatpush1.bf16.msra.mxu0 %v3795
      %3815 = vmatprep.subr.bf16.mxu0 0
      %3816 = vmatpush1.bf16.msra.mxu0 %v3796
      %3817 = vmatprep.subr.bf16.mxu0 0
      %3818 = vmatpush1.bf16.msra.mxu0 %v3797
      %3819 = vmatprep.subr.bf16.mxu0 0
      %3820 = vmatpush1.bf16.msra.mxu0 %v3798
      %3821 = vmatprep.subr.bf16.mxu0 0
      %3822 = vmatpush1.bf16.msra.mxu0 %v3799
      %3823 = vmatprep.subr.bf16.mxu0 0
      %3824 = vmatpush1.bf16.msra.mxu0 %v3800
      %3825 = vmatprep.subr.bf16.mxu0 0
      %3826 = vmatpush1.bf16.msra.mxu0 0
      %3827 = vmatprep.subr.bf16.mxu0 0
      %3828 = vmatpush1.bf16.msra.mxu0 0
      %3829 = vmatprep.subr.bf16.mxu0 0
      %3830 = vmatpush1.bf16.msra.mxu0 0
      %3831 = vmatprep.subr.bf16.mxu0 0
      %3832 = vmatpush1.bf16.msra.mxu0 0
      %3833 = vmatprep.subr.bf16.mxu0 0
      %3834 = vmatpush1.bf16.msra.mxu0 0
      %3835 = vmatprep.subr.bf16.mxu0 0
      %3836 = vmatpush1.bf16.msra.mxu0 0
      %3837 = vmatprep.subr.bf16.mxu0 0
      %3838 = vmatpush1.bf16.msra.mxu0 0
      %3839 = vmatprep.subr.bf16.mxu0 0
      %3840 = vmatpush1.bf16.msra.mxu0 0
      %3841 = vmatprep.mubr.bf16.mxu0 0
      %3842 = vmatmul.mubr.bf16.gmra.mrb[0].mxu0 %v283
      %v3843 = vpop.f32.mrb[0].mxu0
      %v3844 = vadd.f32 0.0, %v3843
      %v3845 = vpop.f32.mrb[0].mxu0
      %v3846 = vpop.f32.mrb[0].mxu0
      %v3847 = vadd.f32 0.0, %v3846
      %v3848 = vpop.f32.mrb[0].mxu0
      %3849 = vmatprep.mubr.bf16.mxu0 0
      %3850 = vmatmul.mubr.bf16.gmra.mrb[0].mxu0 %v284
      %v3851 = vpop.f32.mrb[0].mxu0
      %v3852 = vadd.f32 0.0, %v3851
      %v3853 = vpop.f32.mrb[0].mxu0
      %v3854 = vpop.f32.mrb[0].mxu0
      %v3855 = vadd.f32 0.0, %v3854
      %v3856 = vpop.f32.mrb[0].mxu0
      %3857 = vmatprep.mubr.bf16.mxu0 0
      %3858 = vmatmul.mubr.bf16.gmra.mrb[0].mxu0 %v285
      %v3859 = vpop.f32.mrb[0].mxu0
      %v3860 = vadd.f32 0.0, %v3859
      %v3861 = vpop.f32.mrb[0].mxu0
      %v3862 = vpop.f32.mrb[0].mxu0
      %v3863 = vadd.f32 0.0, %v3862
      %v3864 = vpop.f32.mrb[0].mxu0
      %3865 = vmatprep.mubr.bf16.mxu0 0
      %3866 = vmatmul.mubr.bf16.gmra.mrb[0].mxu0 %v286
      %v3867 = vpop.f32.mrb[0].mxu0
      %v3868 = vadd.f32 0.0, %v3867
      %v3869 = vpop.f32.mrb[0].mxu0
      %v3870 = vpop.f32.mrb[0].mxu0
      %v3871 = vadd.f32 0.0, %v3870
      %v3872 = vpop.f32.mrb[0].mxu0
      %3873 = vmatprep.mubr.bf16.mxu0 0
      %3874 = vmatmul.mubr.bf16.gmra.mrb[0].mxu0 %v287
      %v3875 = vpop.f32.mrb[0].mxu0
      %v3876 = vadd.f32 0.0, %v3875
      %v3877 = vpop.f32.mrb[0].mxu0
      %v3878 = vpop.f32.mrb[0].mxu0
      %v3879 = vadd.f32 0.0, %v3878
      %v3880 = vpop.f32.mrb[0].mxu0
      %3881 = vmatprep.mubr.bf16.mxu0 0
      %3882 = vmatmul.mubr.bf16.gmra.mrb[0].mxu0 %v288
      %v3883 = vpop.f32.mrb[0].mxu0
      %v3884 = vadd.f32 0.0, %v3883
      %v3885 = vpop.f32.mrb[0].mxu0
      %v3886 = vpop.f32.mrb[0].mxu0
      %v3887 = vadd.f32 0.0, %v3886
      %v3888 = vpop.f32.mrb[0].mxu0
      %3889 = vmatprep.mubr.bf16.mxu0 0
      %3890 = vmatmul.mubr.bf16.gmra.mrb[0].mxu0 %v289
      %v3891 = vpop.f32.mrb[0].mxu0
      %v3892 = vadd.f32 0.0, %v3891
      %v3893 = vpop.f32.mrb[0].mxu0
      %v3894 = vpop.f32.mrb[0].mxu0
      %v3895 = vadd.f32 0.0, %v3894
      %v3896 = vpop.f32.mrb[0].mxu0
      %3897 = vmatprep.mubr.bf16.mxu0 0
      %3898 = vmatmul.mubr.bf16.gmra.mrb[0].mxu0 %v290
      %v3899 = vpop.f32.mrb[0].mxu0
      %v3900 = vadd.f32 0.0, %v3899
      %v3901 = vpop.f32.mrb[0].mxu0
      %v3902 = vpop.f32.mrb[0].mxu0
      %v3903 = vadd.f32 0.0, %v3902
      %v3904 = vpop.f32.mrb[0].mxu0
      %3905 = vdwg.mxu0
      %v3906 = vpack.c.bf16 %v3847, %v3844
      %v3907 = vpack.c.bf16 %v3855, %v3852
      %v3908 = vpack.c.bf16 %v3863, %v3860
      %v3909 = vpack.c.bf16 %v3871, %v3868
      %v3910 = vpack.c.bf16 %v3879, %v3876
      %v3911 = vpack.c.bf16 %v3887, %v3884
      %v3912 = vpack.c.bf16 %v3895, %v3892
      %v3913 = vpack.c.bf16 %v3903, %v3900
      %s3914 = scalar_lea.vmem %s3, 192
      %v3915 = vld [vmem:[%s3914] sm:$0xf]
      %v3916 = vld [vmem:[%s3914 + $0x4] sm:$0xf]
      %v3917 = vld [vmem:[%s3914 + $0x8] sm:$0xf]
      %v3918 = vld [vmem:[%s3914 + $0xc] sm:$0xf]
      %v3919 = vld [vmem:[%s3914 + $0x10] sm:$0xf]
      %v3920 = vld [vmem:[%s3914 + $0x14] sm:$0xf]
      %v3921 = vld [vmem:[%s3914 + $0x18] sm:$0xf]
      %v3922 = vld [vmem:[%s3914 + $0x1c] sm:$0xf]
      %v3923 = vld [vmem:[%s3914 + $0x20] sm:$0xf]
      %v3924 = vld [vmem:[%s3914 + $0x24] sm:$0xf]
      %v3925 = vld [vmem:[%s3914 + $0x28] sm:$0xf]
      %v3926 = vld [vmem:[%s3914 + $0x2c] sm:$0xf]
      %v3927 = vld [vmem:[%s3914 + $0x30] sm:$0xf]
      %v3928 = vld [vmem:[%s3914 + $0x34] sm:$0xf]
      %v3929 = vld [vmem:[%s3914 + $0x38] sm:$0xf]
      %v3930 = vld [vmem:[%s3914 + $0x3c] sm:$0xf]
      %v3947 = vunpack.c.l.b16 %v3915
      %v3948 = vunpack.c.l.b16 %v3916
      %v3949 = vunpack.c.l.b16 %v3917
      %v3950 = vunpack.c.l.b16 %v3918
      %v3951 = vunpack.c.l.b16 %v3919
      %v3952 = vunpack.c.l.b16 %v3920
      %v3953 = vunpack.c.l.b16 %v3921
      %v3954 = vunpack.c.l.b16 %v3922
      %v3955 = vunpack.c.l.b16 %v3923
      %v3956 = vunpack.c.l.b16 %v3924
      %v3957 = vunpack.c.l.b16 %v3925
      %v3958 = vunpack.c.l.b16 %v3926
      %v3959 = vunpack.c.l.b16 %v3927
      %v3960 = vunpack.c.l.b16 %v3928
      %v3961 = vunpack.c.l.b16 %v3929
      %v3962 = vunpack.c.l.b16 %v3930
      %v3963 = vpack.c.b16 %v3948, %v3947
      %v3964 = vpack.c.b16 %v3950, %v3949
      %v3965 = vpack.c.b16 %v3952, %v3951
      %v3966 = vpack.c.b16 %v3954, %v3953
      %v3967 = vpack.c.b16 %v3956, %v3955
      %v3968 = vpack.c.b16 %v3958, %v3957
      %v3969 = vpack.c.b16 %v3960, %v3959
      %v3970 = vpack.c.b16 %v3962, %v3961
      %3979 = vmatprep.subr.bf16.mxu0 0
      %3980 = vmatpush1.bf16.msra.mxu0 %v3963
      %3981 = vmatprep.subr.bf16.mxu0 0
      %3982 = vmatpush1.bf16.msra.mxu0 %v3964
      %3983 = vmatprep.subr.bf16.mxu0 0
      %3984 = vmatpush1.bf16.msra.mxu0 %v3965
      %3985 = vmatprep.subr.bf16.mxu0 0
      %3986 = vmatpush1.bf16.msra.mxu0 %v3966
      %3987 = vmatprep.subr.bf16.mxu0 0
      %3988 = vmatpush1.bf16.msra.mxu0 %v3967
      %3989 = vmatprep.subr.bf16.mxu0 0
      %3990 = vmatpush1.bf16.msra.mxu0 %v3968
      %3991 = vmatprep.subr.bf16.mxu0 0
      %3992 = vmatpush1.bf16.msra.mxu0 %v3969
      %3993 = vmatprep.subr.bf16.mxu0 0
      %3994 = vmatpush1.bf16.msra.mxu0 %v3970
      %3995 = vmatprep.subr.bf16.mxu0 0
      %3996 = vmatpush1.bf16.msra.mxu0 0
      %3997 = vmatprep.subr.bf16.mxu0 0
      %3998 = vmatpush1.bf16.msra.mxu0 0
      %3999 = vmatprep.subr.bf16.mxu0 0
      %4000 = vmatpush1.bf16.msra.mxu0 0
      %4001 = vmatprep.subr.bf16.mxu0 0
      %4002 = vmatpush1.bf16.msra.mxu0 0
      %4003 = vmatprep.subr.bf16.mxu0 0
      %4004 = vmatpush1.bf16.msra.mxu0 0
      %4005 = vmatprep.subr.bf16.mxu0 0
      %4006 = vmatpush1.bf16.msra.mxu0 0
      %4007 = vmatprep.subr.bf16.mxu0 0
      %4008 = vmatpush1.bf16.msra.mxu0 0
      %4009 = vmatprep.subr.bf16.mxu0 0
      %4010 = vmatpush1.bf16.msra.mxu0 0
      %4011 = vmatprep.mubr.bf16.mxu0 0
      %4012 = vmatmul.mubr.bf16.gmra.mrb[0].mxu0 %v283
      %v4013 = vpop.f32.mrb[0].mxu0
      %v4014 = vadd.f32 0.0, %v4013
      %v4015 = vpop.f32.mrb[0].mxu0
      %v4016 = vpop.f32.mrb[0].mxu0
      %v4017 = vadd.f32 0.0, %v4016
      %v4018 = vpop.f32.mrb[0].mxu0
      %4019 = vmatprep.mubr.bf16.mxu0 0
      %4020 = vmatmul.mubr.bf16.gmra.mrb[0].mxu0 %v284
      %v4021 = vpop.f32.mrb[0].mxu0
      %v4022 = vadd.f32 0.0, %v4021
      %v4023 = vpop.f32.mrb[0].mxu0
      %v4024 = vpop.f32.mrb[0].mxu0
      %v4025 = vadd.f32 0.0, %v4024
      %v4026 = vpop.f32.mrb[0].mxu0
      %4027 = vmatprep.mubr.bf16.mxu0 0
      %4028 = vmatmul.mubr.bf16.gmra.mrb[0].mxu0 %v285
      %v4029 = vpop.f32.mrb[0].mxu0
      %v4030 = vadd.f32 0.0, %v4029
      %v4031 = vpop.f32.mrb[0].mxu0
      %v4032 = vpop.f32.mrb[0].mxu0
      %v4033 = vadd.f32 0.0, %v4032
      %v4034 = vpop.f32.mrb[0].mxu0
      %4035 = vmatprep.mubr.bf16.mxu0 0
      %4036 = vmatmul.mubr.bf16.gmra.mrb[0].mxu0 %v286
      %v4037 = vpop.f32.mrb[0].mxu0
      %v4038 = vadd.f32 0.0, %v4037
      %v4039 = vpop.f32.mrb[0].mxu0
      %v4040 = vpop.f32.mrb[0].mxu0
      %v4041 = vadd.f32 0.0, %v4040
      %v4042 = vpop.f32.mrb[0].mxu0
      %4043 = vmatprep.mubr.bf16.mxu0 0
      %4044 = vmatmul.mubr.bf16.gmra.mrb[0].mxu0 %v287
      %v4045 = vpop.f32.mrb[0].mxu0
      %v4046 = vadd.f32 0.0, %v4045
      %v4047 = vpop.f32.mrb[0].mxu0
      %v4048 = vpop.f32.mrb[0].mxu0
      %v4049 = vadd.f32 0.0, %v4048
      %v4050 = vpop.f32.mrb[0].mxu0
      %4051 = vmatprep.mubr.bf16.mxu0 0
      %4052 = vmatmul.mubr.bf16.gmra.mrb[0].mxu0 %v288
      %v4053 = vpop.f32.mrb[0].mxu0
      %v4054 = vadd.f32 0.0, %v4053
      %v4055 = vpop.f32.mrb[0].mxu0
      %v4056 = vpop.f32.mrb[0].mxu0
      %v4057 = vadd.f32 0.0, %v4056
      %v4058 = vpop.f32.mrb[0].mxu0
      %4059 = vmatprep.mubr.bf16.mxu0 0
      %4060 = vmatmul.mubr.bf16.gmra.mrb[0].mxu0 %v289
      %v4061 = vpop.f32.mrb[0].mxu0
      %v4062 = vadd.f32 0.0, %v4061
      %v4063 = vpop.f32.mrb[0].mxu0
      %v4064 = vpop.f32.mrb[0].mxu0
      %v4065 = vadd.f32 0.0, %v4064
      %v4066 = vpop.f32.mrb[0].mxu0
      %4067 = vmatprep.mubr.bf16.mxu0 0
      %4068 = vmatmul.mubr.bf16.gmra.mrb[0].mxu0 %v290
      %v4069 = vpop.f32.mrb[0].mxu0
      %v4070 = vadd.f32 0.0, %v4069
      %v4071 = vpop.f32.mrb[0].mxu0
      %v4072 = vpop.f32.mrb[0].mxu0
      %v4073 = vadd.f32 0.0, %v4072
      %v4074 = vpop.f32.mrb[0].mxu0
      %4075 = vdwg.mxu0
      %v4076 = vpack.c.bf16 %v4017, %v4014
      %v4077 = vpack.c.bf16 %v4025, %v4022
      %v4078 = vpack.c.bf16 %v4033, %v4030
      %v4079 = vpack.c.bf16 %v4041, %v4038
      %v4080 = vpack.c.bf16 %v4049, %v4046
      %v4081 = vpack.c.bf16 %v4057, %v4054
      %v4082 = vpack.c.bf16 %v4065, %v4062
      %v4083 = vpack.c.bf16 %v4073, %v4070
      %v4085 = vsel %vm814, %v3736, 0
      %v4088 = vsel %vm814, %v3737, 0
      %v4091 = vsel %vm814, %v3738, 0
      %v4094 = vsel %vm814, %v3739, 0
      %v4097 = vsel %vm814, %v3740, 0
      %v4100 = vsel %vm814, %v3741, 0
      %v4103 = vsel %vm814, %v3742, 0
      %v4106 = vsel %vm814, %v3743, 0
      %v4109 = vsel %vm814, %v3906, 0
      %v4112 = vsel %vm814, %v3907, 0
      %v4115 = vsel %vm814, %v3908, 0
      %v4118 = vsel %vm814, %v3909, 0
      %v4121 = vsel %vm814, %v3910, 0
      %v4124 = vsel %vm814, %v3911, 0
      %v4127 = vsel %vm814, %v3912, 0
      %v4130 = vsel %vm814, %v3913, 0
      %4132 = vmatprep.subr.bf16.mxu0 0
      %4133 = vmatpush1.bf16.xpose.msra.mxu0 %v4109
      %4134 = vmatprep.subr.bf16.mxu0 0
      %4135 = vmatpush1.bf16.xpose.msra.mxu0 %v4112
      %4136 = vmatprep.subr.bf16.mxu0 0
      %4137 = vmatpush1.bf16.xpose.msra.mxu0 %v4115
      %4138 = vmatprep.subr.bf16.mxu0 0
      %4139 = vmatpush1.bf16.xpose.msra.mxu0 %v4118
      %4140 = vmatprep.subr.bf16.mxu0 0
      %4141 = vmatpush1.bf16.xpose.msra.mxu0 %v4121
      %4142 = vmatprep.subr.bf16.mxu0 0
      %4143 = vmatpush1.bf16.xpose.msra.mxu0 %v4124
      %4144 = vmatprep.subr.bf16.mxu0 0
      %4145 = vmatpush1.bf16.xpose.msra.mxu0 %v4127
      %4146 = vmatprep.subr.bf16.mxu0 0
      %4147 = vmatpush1.bf16.xpose.msra.mxu0 %v4130
      %4148 = vmatprep.subr.bf16.mxu0 0
      %4149 = vmatpush1.bf16.xpose.msra.mxu0 0
      %4150 = vmatprep.subr.bf16.mxu0 0
      %4151 = vmatpush1.bf16.xpose.msra.mxu0 0
      %4152 = vmatprep.subr.bf16.mxu0 0
      %4153 = vmatpush1.bf16.xpose.msra.mxu0 0
      %4154 = vmatprep.subr.bf16.mxu0 0
      %4155 = vmatpush1.bf16.xpose.msra.mxu0 0
      %4156 = vmatprep.subr.bf16.mxu0 0
      %4157 = vmatpush1.bf16.xpose.msra.mxu0 0
      %4158 = vmatprep.subr.bf16.mxu0 0
      %4159 = vmatpush1.bf16.xpose.msra.mxu0 0
      %4160 = vmatprep.subr.bf16.mxu0 0
      %4161 = vmatpush1.bf16.xpose.msra.mxu0 0
      %4162 = vmatprep.subr.bf16.mxu0 0
      %4163 = vmatpush1.bf16.xpose.msra.mxu0 0
      %4164 = vmatprep.mubr.bf16.mxu0 0
      %4165 = vmatmul.mubr.bf16.gmra.mrb[0].mxu0 %v4085
      %v4166 = vpop.f32.mrb[0].mxu0
      %v4167 = vadd.f32 0.0, %v4166
      %v4168 = vpop.f32.mrb[0].mxu0
      %v4169 = vpop.f32.mrb[0].mxu0
      %v4170 = vadd.f32 0.0, %v4169
      %v4171 = vpop.f32.mrb[0].mxu0
      %4172 = vmatprep.mubr.bf16.mxu0 0
      %4173 = vmatmul.mubr.bf16.gmra.mrb[0].mxu0 %v4088
      %v4174 = vpop.f32.mrb[0].mxu0
      %v4175 = vadd.f32 0.0, %v4174
      %v4176 = vpop.f32.mrb[0].mxu0
      %v4177 = vpop.f32.mrb[0].mxu0
      %v4178 = vadd.f32 0.0, %v4177
      %v4179 = vpop.f32.mrb[0].mxu0
      %4180 = vmatprep.mubr.bf16.mxu0 0
      %4181 = vmatmul.mubr.bf16.gmra.mrb[0].mxu0 %v4091
      %v4182 = vpop.f32.mrb[0].mxu0
      %v4183 = vadd.f32 0.0, %v4182
      %v4184 = vpop.f32.mrb[0].mxu0
      %v4185 = vpop.f32.mrb[0].mxu0
      %v4186 = vadd.f32 0.0, %v4185
      %v4187 = vpop.f32.mrb[0].mxu0
      %4188 = vmatprep.mubr.bf16.mxu0 0
      %4189 = vmatmul.mubr.bf16.gmra.mrb[0].mxu0 %v4094
      %v4190 = vpop.f32.mrb[0].mxu0
      %v4191 = vadd.f32 0.0, %v4190
      %v4192 = vpop.f32.mrb[0].mxu0
      %v4193 = vpop.f32.mrb[0].mxu0
      %v4194 = vadd.f32 0.0, %v4193
      %v4195 = vpop.f32.mrb[0].mxu0
      %4196 = vmatprep.mubr.bf16.mxu0 0
      %4197 = vmatmul.mubr.bf16.gmra.mrb[0].mxu0 %v4097
      %v4198 = vpop.f32.mrb[0].mxu0
      %v4199 = vadd.f32 0.0, %v4198
      %v4200 = vpop.f32.mrb[0].mxu0
      %v4201 = vpop.f32.mrb[0].mxu0
      %v4202 = vadd.f32 0.0, %v4201
      %v4203 = vpop.f32.mrb[0].mxu0
      %4204 = vmatprep.mubr.bf16.mxu0 0
      %4205 = vmatmul.mubr.bf16.gmra.mrb[0].mxu0 %v4100
      %v4206 = vpop.f32.mrb[0].mxu0
      %v4207 = vadd.f32 0.0, %v4206
      %v4208 = vpop.f32.mrb[0].mxu0
      %v4209 = vpop.f32.mrb[0].mxu0
      %v4210 = vadd.f32 0.0, %v4209
      %v4211 = vpop.f32.mrb[0].mxu0
      %4212 = vmatprep.mubr.bf16.mxu0 0
      %4213 = vmatmul.mubr.bf16.gmra.mrb[0].mxu0 %v4103
      %v4214 = vpop.f32.mrb[0].mxu0
      %v4215 = vadd.f32 0.0, %v4214
      %v4216 = vpop.f32.mrb[0].mxu0
      %v4217 = vpop.f32.mrb[0].mxu0
      %v4218 = vadd.f32 0.0, %v4217
      %v4219 = vpop.f32.mrb[0].mxu0
      %4220 = vmatprep.mubr.bf16.mxu0 0
      %4221 = vmatmul.mubr.bf16.gmra.mrb[0].mxu0 %v4106
      %v4222 = vpop.f32.mrb[0].mxu0
      %v4223 = vadd.f32 0.0, %v4222
      %v4224 = vpop.f32.mrb[0].mxu0
      %v4225 = vpop.f32.mrb[0].mxu0
      %v4226 = vadd.f32 0.0, %v4225
      %v4227 = vpop.f32.mrb[0].mxu0
      %4228 = vdwg.mxu0
      %4229 = vmax.xlane.f32.xlu0 %v4167
      %v4230 = vpop.xlane.xlu0 %4229
      %4231 = vmax.xlane.f32.xlu0 %v4170
      %v4232 = vpop.xlane.xlu0 %4231
      %4233 = vmax.xlane.f32.xlu0 %v4175
      %v4234 = vpop.xlane.xlu0 %4233
      %4235 = vmax.xlane.f32.xlu0 %v4178
      %v4236 = vpop.xlane.xlu0 %4235
      %4237 = vmax.xlane.f32.xlu0 %v4183
      %v4238 = vpop.xlane.xlu0 %4237
      %4239 = vmax.xlane.f32.xlu0 %v4186
      %v4240 = vpop.xlane.xlu0 %4239
      %4241 = vmax.xlane.f32.xlu0 %v4191
      %v4242 = vpop.xlane.xlu0 %4241
      %4243 = vmax.xlane.f32.xlu0 %v4194
      %v4244 = vpop.xlane.xlu0 %4243
      %4245 = vmax.xlane.f32.xlu0 %v4199
      %v4246 = vpop.xlane.xlu0 %4245
      %4247 = vmax.xlane.f32.xlu0 %v4202
      %v4248 = vpop.xlane.xlu0 %4247
      %4249 = vmax.xlane.f32.xlu0 %v4207
      %v4250 = vpop.xlane.xlu0 %4249
      %4251 = vmax.xlane.f32.xlu0 %v4210
      %v4252 = vpop.xlane.xlu0 %4251
      %4253 = vmax.xlane.f32.xlu0 %v4215
      %v4254 = vpop.xlane.xlu0 %4253
      %4255 = vmax.xlane.f32.xlu0 %v4218
      %v4256 = vpop.xlane.xlu0 %4255
      %4257 = vmax.xlane.f32.xlu0 %v4223
      %v4258 = vpop.xlane.xlu0 %4257
      %4259 = vmax.xlane.f32.xlu0 %v4226
      %v4260 = vpop.xlane.xlu0 %4259
      %v4261 = vsub.f32 %v4167, %v4230
      %v4262 = vsub.f32 %v4170, %v4232
      %v4263 = vsub.f32 %v4175, %v4234
      %v4264 = vsub.f32 %v4178, %v4236
      %v4265 = vsub.f32 %v4183, %v4238
      %v4266 = vsub.f32 %v4186, %v4240
      %v4267 = vsub.f32 %v4191, %v4242
      %v4268 = vsub.f32 %v4194, %v4244
      %v4269 = vsub.f32 %v4199, %v4246
      %v4270 = vsub.f32 %v4202, %v4248
      %v4271 = vsub.f32 %v4207, %v4250
      %v4272 = vsub.f32 %v4210, %v4252
      %v4273 = vsub.f32 %v4215, %v4254
      %v4274 = vsub.f32 %v4218, %v4256
      %v4275 = vsub.f32 %v4223, %v4258
      %v4276 = vsub.f32 %v4226, %v4260
      %v4277 = vmul.f32 %v4261, 1.442695
      %v4278 = vpow.pop %v4277
      %v4279 = vmul.f32 %v4262, 1.442695
      %v4280 = vpow.pop %v4279
      %v4281 = vmul.f32 %v4263, 1.442695
      %v4282 = vpow.pop %v4281
      %v4283 = vmul.f32 %v4264, 1.442695
      %v4284 = vpow.pop %v4283
      %v4285 = vmul.f32 %v4265, 1.442695
      %v4286 = vpow.pop %v4285
      %v4287 = vmul.f32 %v4266, 1.442695
      %v4288 = vpow.pop %v4287
      %v4289 = vmul.f32 %v4267, 1.442695
      %v4290 = vpow.pop %v4289
      %v4291 = vmul.f32 %v4268, 1.442695
      %v4292 = vpow.pop %v4291
      %v4293 = vmul.f32 %v4269, 1.442695
      %v4294 = vpow.pop %v4293
      %v4295 = vmul.f32 %v4270, 1.442695
      %v4296 = vpow.pop %v4295
      %v4297 = vmul.f32 %v4271, 1.442695
      %v4298 = vpow.pop %v4297
      %v4299 = vmul.f32 %v4272, 1.442695
      %v4300 = vpow.pop %v4299
      %v4301 = vmul.f32 %v4273, 1.442695
      %v4302 = vpow.pop %v4301
      %v4303 = vmul.f32 %v4274, 1.442695
      %v4304 = vpow.pop %v4303
      %v4305 = vmul.f32 %v4275, 1.442695
      %v4306 = vpow.pop %v4305
      %v4307 = vmul.f32 %v4276, 1.442695
      %v4308 = vpow.pop %v4307
      %4309 = vadd.xlane.f32.xlu0 %v4278
      %v4310 = vpop.xlane.xlu0 %4309
      %4311 = vadd.xlane.f32.xlu0 %v4280
      %v4312 = vpop.xlane.xlu0 %4311
      %4313 = vadd.xlane.f32.xlu0 %v4282
      %v4314 = vpop.xlane.xlu0 %4313
      %4315 = vadd.xlane.f32.xlu0 %v4284
      %v4316 = vpop.xlane.xlu0 %4315
      %4317 = vadd.xlane.f32.xlu0 %v4286
      %v4318 = vpop.xlane.xlu0 %4317
      %4319 = vadd.xlane.f32.xlu0 %v4288
      %v4320 = vpop.xlane.xlu0 %4319
      %4321 = vadd.xlane.f32.xlu0 %v4290
      %v4322 = vpop.xlane.xlu0 %4321
      %4323 = vadd.xlane.f32.xlu0 %v4292
      %v4324 = vpop.xlane.xlu0 %4323
      %4325 = vadd.xlane.f32.xlu0 %v4294
      %v4326 = vpop.xlane.xlu0 %4325
      %4327 = vadd.xlane.f32.xlu0 %v4296
      %v4328 = vpop.xlane.xlu0 %4327
      %4329 = vadd.xlane.f32.xlu0 %v4298
      %v4330 = vpop.xlane.xlu0 %4329
      %4331 = vadd.xlane.f32.xlu0 %v4300
      %v4332 = vpop.xlane.xlu0 %4331
      %4333 = vadd.xlane.f32.xlu0 %v4302
      %v4334 = vpop.xlane.xlu0 %4333
      %4335 = vadd.xlane.f32.xlu0 %v4304
      %v4336 = vpop.xlane.xlu0 %4335
      %4337 = vadd.xlane.f32.xlu0 %v4306
      %v4338 = vpop.xlane.xlu0 %4337
      %4339 = vadd.xlane.f32.xlu0 %v4308
      %v4340 = vpop.xlane.xlu0 %4339
      %v4341 = vrcp.pop %v4310
      %v4342 = vrcp.pop %v4312
      %v4343 = vrcp.pop %v4314
      %v4344 = vrcp.pop %v4316
      %v4345 = vrcp.pop %v4318
      %v4346 = vrcp.pop %v4320
      %v4347 = vrcp.pop %v4322
      %v4348 = vrcp.pop %v4324
      %v4349 = vrcp.pop %v4326
      %v4350 = vrcp.pop %v4328
      %v4351 = vrcp.pop %v4330
      %v4352 = vrcp.pop %v4332
      %v4353 = vrcp.pop %v4334
      %v4354 = vrcp.pop %v4336
      %v4355 = vrcp.pop %v4338
      %v4356 = vrcp.pop %v4340
      %v4357 = vmul.f32 %v4278, %v4341
      %v4358 = vmul.f32 %v4280, %v4342
      %v4359 = vmul.f32 %v4282, %v4343
      %v4360 = vmul.f32 %v4284, %v4344
      %v4361 = vmul.f32 %v4286, %v4345
      %v4362 = vmul.f32 %v4288, %v4346
      %v4363 = vmul.f32 %v4290, %v4347
      %v4364 = vmul.f32 %v4292, %v4348
      %v4365 = vmul.f32 %v4294, %v4349
      %v4366 = vmul.f32 %v4296, %v4350
      %v4367 = vmul.f32 %v4298, %v4351
      %v4368 = vmul.f32 %v4300, %v4352
      %v4369 = vmul.f32 %v4302, %v4353
      %v4370 = vmul.f32 %v4304, %v4354
      %v4371 = vmul.f32 %v4306, %v4355
      %v4372 = vmul.f32 %v4308, %v4356
      %v4373 = vpack.c.bf16 %v4358, %v4357
      %v4374 = vpack.c.bf16 %v4360, %v4359
      %v4375 = vpack.c.bf16 %v4362, %v4361
      %v4376 = vpack.c.bf16 %v4364, %v4363
      %v4377 = vpack.c.bf16 %v4366, %v4365
      %v4378 = vpack.c.bf16 %v4368, %v4367
      %v4379 = vpack.c.bf16 %v4370, %v4369
      %v4380 = vpack.c.bf16 %v4372, %v4371
      %4381 = vmatprep.subr.bf16.mxu0 0
      %4382 = vmatpush1.bf16.msra.mxu0 %v4076
      %4383 = vmatprep.subr.bf16.mxu0 0
      %4384 = vmatpush1.bf16.msra.mxu0 %v4077
      %4385 = vmatprep.subr.bf16.mxu0 0
      %4386 = vmatpush1.bf16.msra.mxu0 %v4078
      %4387 = vmatprep.subr.bf16.mxu0 0
      %4388 = vmatpush1.bf16.msra.mxu0 %v4079
      %4389 = vmatprep.subr.bf16.mxu0 0
      %4390 = vmatpush1.bf16.msra.mxu0 %v4080
      %4391 = vmatprep.subr.bf16.mxu0 0
      %4392 = vmatpush1.bf16.msra.mxu0 %v4081
      %4393 = vmatprep.subr.bf16.mxu0 0
      %4394 = vmatpush1.bf16.msra.mxu0 %v4082
      %4395 = vmatprep.subr.bf16.mxu0 0
      %4396 = vmatpush1.bf16.msra.mxu0 %v4083
      %4397 = vmatprep.subr.bf16.mxu0 0
      %4398 = vmatpush1.bf16.msra.mxu0 0
      %4399 = vmatprep.subr.bf16.mxu0 0
      %4400 = vmatpush1.bf16.msra.mxu0 0
      %4401 = vmatprep.subr.bf16.mxu0 0
      %4402 = vmatpush1.bf16.msra.mxu0 0
      %4403 = vmatprep.subr.bf16.mxu0 0
      %4404 = vmatpush1.bf16.msra.mxu0 0
      %4405 = vmatprep.subr.bf16.mxu0 0
      %4406 = vmatpush1.bf16.msra.mxu0 0
      %4407 = vmatprep.subr.bf16.mxu0 0
      %4408 = vmatpush1.bf16.msra.mxu0 0
      %4409 = vmatprep.subr.bf16.mxu0 0
      %4410 = vmatpush1.bf16.msra.mxu0 0
      %4411 = vmatprep.subr.bf16.mxu0 0
      %4412 = vmatpush1.bf16.msra.mxu0 0
      %4413 = vmatprep.mubr.bf16.mxu0 0
      %4414 = vmatmul.mubr.bf16.gmra.mrb[0].mxu0 %v4373
      %v4415 = vpop.f32.mrb[0].mxu0
      %v4416 = vadd.f32 0.0, %v4415
      %v4417 = vpop.f32.mrb[0].mxu0
      %v4418 = vpop.f32.mrb[0].mxu0
      %v4419 = vadd.f32 0.0, %v4418
      %v4420 = vpop.f32.mrb[0].mxu0
      %4421 = vmatprep.mubr.bf16.mxu0 0
      %4422 = vmatmul.mubr.bf16.gmra.mrb[0].mxu0 %v4374
      %v4423 = vpop.f32.mrb[0].mxu0
      %v4424 = vadd.f32 0.0, %v4423
      %v4425 = vpop.f32.mrb[0].mxu0
      %v4426 = vpop.f32.mrb[0].mxu0
      %v4427 = vadd.f32 0.0, %v4426
      %v4428 = vpop.f32.mrb[0].mxu0
      %4429 = vmatprep.mubr.bf16.mxu0 0
      %4430 = vmatmul.mubr.bf16.gmra.mrb[0].mxu0 %v4375
      %v4431 = vpop.f32.mrb[0].mxu0
      %v4432 = vadd.f32 0.0, %v4431
      %v4433 = vpop.f32.mrb[0].mxu0
      %v4434 = vpop.f32.mrb[0].mxu0
      %v4435 = vadd.f32 0.0, %v4434
      %v4436 = vpop.f32.mrb[0].mxu0
      %4437 = vmatprep.mubr.bf16.mxu0 0
      %4438 = vmatmul.mubr.bf16.gmra.mrb[0].mxu0 %v4376
      %v4439 = vpop.f32.mrb[0].mxu0
      %v4440 = vadd.f32 0.0, %v4439
      %v4441 = vpop.f32.mrb[0].mxu0
      %v4442 = vpop.f32.mrb[0].mxu0
      %v4443 = vadd.f32 0.0, %v4442
      %v4444 = vpop.f32.mrb[0].mxu0
      %4445 = vmatprep.mubr.bf16.mxu0 0
      %4446 = vmatmul.mubr.bf16.gmra.mrb[0].mxu0 %v4377
      %v4447 = vpop.f32.mrb[0].mxu0
      %v4448 = vadd.f32 0.0, %v4447
      %v4449 = vpop.f32.mrb[0].mxu0
      %v4450 = vpop.f32.mrb[0].mxu0
      %v4451 = vadd.f32 0.0, %v4450
      %v4452 = vpop.f32.mrb[0].mxu0
      %4453 = vmatprep.mubr.bf16.mxu0 0
      %4454 = vmatmul.mubr.bf16.gmra.mrb[0].mxu0 %v4378
      %v4455 = vpop.f32.mrb[0].mxu0
      %v4456 = vadd.f32 0.0, %v4455
      %v4457 = vpop.f32.mrb[0].mxu0
      %v4458 = vpop.f32.mrb[0].mxu0
      %v4459 = vadd.f32 0.0, %v4458
      %v4460 = vpop.f32.mrb[0].mxu0
      %4461 = vmatprep.mubr.bf16.mxu0 0
      %4462 = vmatmul.mubr.bf16.gmra.mrb[0].mxu0 %v4379
      %v4463 = vpop.f32.mrb[0].mxu0
      %v4464 = vadd.f32 0.0, %v4463
      %v4465 = vpop.f32.mrb[0].mxu0
      %v4466 = vpop.f32.mrb[0].mxu0
      %v4467 = vadd.f32 0.0, %v4466
      %v4468 = vpop.f32.mrb[0].mxu0
      %4469 = vmatprep.mubr.bf16.mxu0 0
      %4470 = vmatmul.mubr.bf16.gmra.mrb[0].mxu0 %v4380
      %v4471 = vpop.f32.mrb[0].mxu0
      %v4472 = vadd.f32 0.0, %v4471
      %v4473 = vpop.f32.mrb[0].mxu0
      %v4474 = vpop.f32.mrb[0].mxu0
      %v4475 = vadd.f32 0.0, %v4474
      %v4476 = vpop.f32.mrb[0].mxu0
      %4477 = vdwg.mxu0
      %v4478 = vpack.c.bf16 %v4419, %v4416
      %v4479 = vpack.c.bf16 %v4427, %v4424
      %v4480 = vpack.c.bf16 %v4435, %v4432
      %v4481 = vpack.c.bf16 %v4443, %v4440
      %v4482 = vpack.c.bf16 %v4451, %v4448
      %v4483 = vpack.c.bf16 %v4459, %v4456
      %v4484 = vpack.c.bf16 %v4467, %v4464
      %v4485 = vpack.c.bf16 %v4475, %v4472
      %v4486 = vld [vmem:[#allocation2] sm:$0xff]
      %v4487 = vld [vmem:[#allocation2 + $0x8] sm:$0xff]
      %v4488 = vld [vmem:[#allocation2 + $0x10] sm:$0xff]
      %v4489 = vld [vmem:[#allocation2 + $0x18] sm:$0xff]
      %v4490 = vld [vmem:[#allocation2 + $0x20] sm:$0xff]
      %v4491 = vld [vmem:[#allocation2 + $0x28] sm:$0xff]
      %v4492 = vld [vmem:[#allocation2 + $0x30] sm:$0xff]
      %v4493 = vld [vmem:[#allocation2 + $0x38] sm:$0xff]
      %v4494 = vld [vmem:[#allocation2 + $0x40] sm:$0xff]
      %v4495 = vld [vmem:[#allocation2 + $0x48] sm:$0xff]
      %v4496 = vld [vmem:[#allocation2 + $0x50] sm:$0xff]
      %v4497 = vld [vmem:[#allocation2 + $0x58] sm:$0xff]
      %v4498 = vld [vmem:[#allocation2 + $0x60] sm:$0xff]
      %v4499 = vld [vmem:[#allocation2 + $0x68] sm:$0xff]
      %v4500 = vld [vmem:[#allocation2 + $0x70] sm:$0xff]
      %v4501 = vld [vmem:[#allocation2 + $0x78] sm:$0xff]
      %s4502 = scalar_lea.vmem %s4, 24
      %v4503 = vld [vmem:[%s4502] sm:$0xf]
      %v4504 = vld [vmem:[%s4502 + $0x4] sm:$0xf]
      %v4507 = vunpack.c.l.b16 %v4503
      %v4508 = vunpack.c.l.b16 %v4504
      %v4509 = vpack.c.b16 %v4508, %v4507
      %v4512 = vsel %vm814, %v4478, 0
      %v4515 = vsel %vm814, %v4479, 0
      %v4518 = vsel %vm814, %v4480, 0
      %v4521 = vsel %vm814, %v4481, 0
      %v4524 = vsel %vm814, %v4482, 0
      %v4527 = vsel %vm814, %v4483, 0
      %v4530 = vsel %vm814, %v4484, 0
      %v4533 = vsel %vm814, %v4485, 0
      %4535 = vmatprep.subr.bf16.mxu0 0
      %4536 = vmatpush1.bf16.msra.mxu0 %v4509
      %4537 = vmatprep.subr.bf16.mxu0 0
      %4538 = vmatpush1.bf16.msra.mxu0 0
      %4539 = vmatprep.subr.bf16.mxu0 0
      %4540 = vmatpush1.bf16.msra.mxu0 0
      %4541 = vmatprep.subr.bf16.mxu0 0
      %4542 = vmatpush1.bf16.msra.mxu0 0
      %4543 = vmatprep.subr.bf16.mxu0 0
      %4544 = vmatpush1.bf16.msra.mxu0 0
      %4545 = vmatprep.subr.bf16.mxu0 0
      %4546 = vmatpush1.bf16.msra.mxu0 0
      %4547 = vmatprep.subr.bf16.mxu0 0
      %4548 = vmatpush1.bf16.msra.mxu0 0
      %4549 = vmatprep.subr.bf16.mxu0 0
      %4550 = vmatpush1.bf16.msra.mxu0 0
      %4551 = vmatprep.subr.bf16.mxu0 0
      %4552 = vmatpush1.bf16.msra.mxu0 0
      %4553 = vmatprep.subr.bf16.mxu0 0
      %4554 = vmatpush1.bf16.msra.mxu0 0
      %4555 = vmatprep.subr.bf16.mxu0 0
      %4556 = vmatpush1.bf16.msra.mxu0 0
      %4557 = vmatprep.subr.bf16.mxu0 0
      %4558 = vmatpush1.bf16.msra.mxu0 0
      %4559 = vmatprep.subr.bf16.mxu0 0
      %4560 = vmatpush1.bf16.msra.mxu0 0
      %4561 = vmatprep.subr.bf16.mxu0 0
      %4562 = vmatpush1.bf16.msra.mxu0 0
      %4563 = vmatprep.subr.bf16.mxu0 0
      %4564 = vmatpush1.bf16.msra.mxu0 0
      %4565 = vmatprep.subr.bf16.mxu0 0
      %4566 = vmatpush1.bf16.msra.mxu0 0
      %4567 = vmatprep.mubr.bf16.mxu0 0
      %4568 = vmatmul.mubr.bf16.gmra.mrb[0].mxu0 %v4512
      %v4569 = vpop.f32.mrb[0].mxu0
      %v4570 = vadd.f32 0.0, %v4569
      %v4571 = vpop.f32.mrb[0].mxu0
      %v4572 = vpop.f32.mrb[0].mxu0
      %v4573 = vadd.f32 0.0, %v4572
      %v4574 = vpop.f32.mrb[0].mxu0
      %4575 = vmatprep.mubr.bf16.mxu0 0
      %4576 = vmatmul.mubr.bf16.gmra.mrb[0].mxu0 %v4515
      %v4577 = vpop.f32.mrb[0].mxu0
      %v4578 = vadd.f32 0.0, %v4577
      %v4579 = vpop.f32.mrb[0].mxu0
      %v4580 = vpop.f32.mrb[0].mxu0
      %v4581 = vadd.f32 0.0, %v4580
      %v4582 = vpop.f32.mrb[0].mxu0
      %4583 = vmatprep.mubr.bf16.mxu0 0
      %4584 = vmatmul.mubr.bf16.gmra.mrb[0].mxu0 %v4518
      %v4585 = vpop.f32.mrb[0].mxu0
      %v4586 = vadd.f32 0.0, %v4585
      %v4587 = vpop.f32.mrb[0].mxu0
      %v4588 = vpop.f32.mrb[0].mxu0
      %v4589 = vadd.f32 0.0, %v4588
      %v4590 = vpop.f32.mrb[0].mxu0
      %4591 = vmatprep.mubr.bf16.mxu0 0
      %4592 = vmatmul.mubr.bf16.gmra.mrb[0].mxu0 %v4521
      %v4593 = vpop.f32.mrb[0].mxu0
      %v4594 = vadd.f32 0.0, %v4593
      %v4595 = vpop.f32.mrb[0].mxu0
      %v4596 = vpop.f32.mrb[0].mxu0
      %v4597 = vadd.f32 0.0, %v4596
      %v4598 = vpop.f32.mrb[0].mxu0
      %4599 = vmatprep.mubr.bf16.mxu0 0
      %4600 = vmatmul.mubr.bf16.gmra.mrb[0].mxu0 %v4524
      %v4601 = vpop.f32.mrb[0].mxu0
      %v4602 = vadd.f32 0.0, %v4601
      %v4603 = vpop.f32.mrb[0].mxu0
      %v4604 = vpop.f32.mrb[0].mxu0
      %v4605 = vadd.f32 0.0, %v4604
      %v4606 = vpop.f32.mrb[0].mxu0
      %4607 = vmatprep.mubr.bf16.mxu0 0
      %4608 = vmatmul.mubr.bf16.gmra.mrb[0].mxu0 %v4527
      %v4609 = vpop.f32.mrb[0].mxu0
      %v4610 = vadd.f32 0.0, %v4609
      %v4611 = vpop.f32.mrb[0].mxu0
      %v4612 = vpop.f32.mrb[0].mxu0
      %v4613 = vadd.f32 0.0, %v4612
      %v4614 = vpop.f32.mrb[0].mxu0
      %4615 = vmatprep.mubr.bf16.mxu0 0
      %4616 = vmatmul.mubr.bf16.gmra.mrb[0].mxu0 %v4530
      %v4617 = vpop.f32.mrb[0].mxu0
      %v4618 = vadd.f32 0.0, %v4617
      %v4619 = vpop.f32.mrb[0].mxu0
      %v4620 = vpop.f32.mrb[0].mxu0
      %v4621 = vadd.f32 0.0, %v4620
      %v4622 = vpop.f32.mrb[0].mxu0
      %4623 = vmatprep.mubr.bf16.mxu0 0
      %4624 = vmatmul.mubr.bf16.gmra.mrb[0].mxu0 %v4533
      %v4625 = vpop.f32.mrb[0].mxu0
      %v4626 = vadd.f32 0.0, %v4625
      %v4627 = vpop.f32.mrb[0].mxu0
      %v4628 = vpop.f32.mrb[0].mxu0
      %v4629 = vadd.f32 0.0, %v4628
      %v4630 = vpop.f32.mrb[0].mxu0
      %4631 = vdwg.mxu0
      %v4632 = vadd.f32 %v4486, %v4570
      %v4633 = vadd.f32 %v4487, %v4573
      %v4634 = vadd.f32 %v4488, %v4578
      %v4635 = vadd.f32 %v4489, %v4581
      %v4636 = vadd.f32 %v4490, %v4586
      %v4637 = vadd.f32 %v4491, %v4589
      %v4638 = vadd.f32 %v4492, %v4594
      %v4639 = vadd.f32 %v4493, %v4597
      %v4640 = vadd.f32 %v4494, %v4602
      %v4641 = vadd.f32 %v4495, %v4605
      %v4642 = vadd.f32 %v4496, %v4610
      %v4643 = vadd.f32 %v4497, %v4613
      %v4644 = vadd.f32 %v4498, %v4618
      %v4645 = vadd.f32 %v4499, %v4621
      %v4646 = vadd.f32 %v4500, %v4626
      %v4647 = vadd.f32 %v4501, %v4629
      %4648 = vst [vmem:[#allocation2] sm:$0xff] %v4632
      %4649 = vst [vmem:[#allocation2 + $0x8] sm:$0xff] %v4633
      %4650 = vst [vmem:[#allocation2 + $0x10] sm:$0xff] %v4634
      %4651 = vst [vmem:[#allocation2 + $0x18] sm:$0xff] %v4635
      %4652 = vst [vmem:[#allocation2 + $0x20] sm:$0xff] %v4636
      %4653 = vst [vmem:[#allocation2 + $0x28] sm:$0xff] %v4637
      %4654 = vst [vmem:[#allocation2 + $0x30] sm:$0xff] %v4638
      %4655 = vst [vmem:[#allocation2 + $0x38] sm:$0xff] %v4639
      %4656 = vst [vmem:[#allocation2 + $0x40] sm:$0xff] %v4640
      %4657 = vst [vmem:[#allocation2 + $0x48] sm:$0xff] %v4641
      %4658 = vst [vmem:[#allocation2 + $0x50] sm:$0xff] %v4642
      %4659 = vst [vmem:[#allocation2 + $0x58] sm:$0xff] %v4643
      %4660 = vst [vmem:[#allocation2 + $0x60] sm:$0xff] %v4644
      %4661 = vst [vmem:[#allocation2 + $0x68] sm:$0xff] %v4645
      %4662 = vst [vmem:[#allocation2 + $0x70] sm:$0xff] %v4646
      %4663 = vst [vmem:[#allocation2 + $0x78] sm:$0xff] %v4647
      %s4664 = scalar_lea.vmem %s1, 256
      %v4665 = vld [vmem:[%s4664] sm:$0xf]
      %v4666 = vld [vmem:[%s4664 + $0x4] sm:$0xf]
      %v4667 = vld [vmem:[%s4664 + $0x8] sm:$0xf]
      %v4668 = vld [vmem:[%s4664 + $0xc] sm:$0xf]
      %v4669 = vld [vmem:[%s4664 + $0x10] sm:$0xf]
      %v4670 = vld [vmem:[%s4664 + $0x14] sm:$0xf]
      %v4671 = vld [vmem:[%s4664 + $0x18] sm:$0xf]
      %v4672 = vld [vmem:[%s4664 + $0x1c] sm:$0xf]
      %v4673 = vld [vmem:[%s4664 + $0x20] sm:$0xf]
      %v4674 = vld [vmem:[%s4664 + $0x24] sm:$0xf]
      %v4675 = vld [vmem:[%s4664 + $0x28] sm:$0xf]
      %v4676 = vld [vmem:[%s4664 + $0x2c] sm:$0xf]
      %v4677 = vld [vmem:[%s4664 + $0x30] sm:$0xf]
      %v4678 = vld [vmem:[%s4664 + $0x34] sm:$0xf]
      %v4679 = vld [vmem:[%s4664 + $0x38] sm:$0xf]
      %v4680 = vld [vmem:[%s4664 + $0x3c] sm:$0xf]
      %v4697 = vunpack.c.l.b16 %v4665
      %v4698 = vunpack.c.l.b16 %v4666
      %v4699 = vunpack.c.l.b16 %v4667
      %v4700 = vunpack.c.l.b16 %v4668
      %v4701 = vunpack.c.l.b16 %v4669
      %v4702 = vunpack.c.l.b16 %v4670
      %v4703 = vunpack.c.l.b16 %v4671
      %v4704 = vunpack.c.l.b16 %v4672
      %v4705 = vunpack.c.l.b16 %v4673
      %v4706 = vunpack.c.l.b16 %v4674
      %v4707 = vunpack.c.l.b16 %v4675
      %v4708 = vunpack.c.l.b16 %v4676
      %v4709 = vunpack.c.l.b16 %v4677
      %v4710 = vunpack.c.l.b16 %v4678
      %v4711 = vunpack.c.l.b16 %v4679
      %v4712 = vunpack.c.l.b16 %v4680
      %v4713 = vpack.c.b16 %v4698, %v4697
      %v4714 = vpack.c.b16 %v4700, %v4699
      %v4715 = vpack.c.b16 %v4702, %v4701
      %v4716 = vpack.c.b16 %v4704, %v4703
      %v4717 = vpack.c.b16 %v4706, %v4705
      %v4718 = vpack.c.b16 %v4708, %v4707
      %v4719 = vpack.c.b16 %v4710, %v4709
      %v4720 = vpack.c.b16 %v4712, %v4711
      %4729 = vmatprep.subr.bf16.mxu0 0
      %4730 = vmatpush1.bf16.msra.mxu0 %v4713
      %4731 = vmatprep.subr.bf16.mxu0 0
      %4732 = vmatpush1.bf16.msra.mxu0 %v4714
      %4733 = vmatprep.subr.bf16.mxu0 0
      %4734 = vmatpush1.bf16.msra.mxu0 %v4715
      %4735 = vmatprep.subr.bf16.mxu0 0
      %4736 = vmatpush1.bf16.msra.mxu0 %v4716
      %4737 = vmatprep.subr.bf16.mxu0 0
      %4738 = vmatpush1.bf16.msra.mxu0 %v4717
      %4739 = vmatprep.subr.bf16.mxu0 0
      %4740 = vmatpush1.bf16.msra.mxu0 %v4718
      %4741 = vmatprep.subr.bf16.mxu0 0
      %4742 = vmatpush1.bf16.msra.mxu0 %v4719
      %4743 = vmatprep.subr.bf16.mxu0 0
      %4744 = vmatpush1.bf16.msra.mxu0 %v4720
      %4745 = vmatprep.subr.bf16.mxu0 0
      %4746 = vmatpush1.bf16.msra.mxu0 0
      %4747 = vmatprep.subr.bf16.mxu0 0
      %4748 = vmatpush1.bf16.msra.mxu0 0
      %4749 = vmatprep.subr.bf16.mxu0 0
      %4750 = vmatpush1.bf16.msra.mxu0 0
      %4751 = vmatprep.subr.bf16.mxu0 0
      %4752 = vmatpush1.bf16.msra.mxu0 0
      %4753 = vmatprep.subr.bf16.mxu0 0
      %4754 = vmatpush1.bf16.msra.mxu0 0
      %4755 = vmatprep.subr.bf16.mxu0 0
      %4756 = vmatpush1.bf16.msra.mxu0 0
      %4757 = vmatprep.subr.bf16.mxu0 0
      %4758 = vmatpush1.bf16.msra.mxu0 0
      %4759 = vmatprep.subr.bf16.mxu0 0
      %4760 = vmatpush1.bf16.msra.mxu0 0
      %4761 = vmatprep.mubr.bf16.mxu0 0
      %4762 = vmatmul.mubr.bf16.gmra.mrb[0].mxu0 %v283
      %v4763 = vpop.f32.mrb[0].mxu0
      %v4764 = vadd.f32 0.0, %v4763
      %v4765 = vpop.f32.mrb[0].mxu0
      %v4766 = vpop.f32.mrb[0].mxu0
      %v4767 = vadd.f32 0.0, %v4766
      %v4768 = vpop.f32.mrb[0].mxu0
      %4769 = vmatprep.mubr.bf16.mxu0 0
      %4770 = vmatmul.mubr.bf16.gmra.mrb[0].mxu0 %v284
      %v4771 = vpop.f32.mrb[0].mxu0
      %v4772 = vadd.f32 0.0, %v4771
      %v4773 = vpop.f32.mrb[0].mxu0
      %v4774 = vpop.f32.mrb[0].mxu0
      %v4775 = vadd.f32 0.0, %v4774
      %v4776 = vpop.f32.mrb[0].mxu0
      %4777 = vmatprep.mubr.bf16.mxu0 0
      %4778 = vmatmul.mubr.bf16.gmra.mrb[0].mxu0 %v285
      %v4779 = vpop.f32.mrb[0].mxu0
      %v4780 = vadd.f32 0.0, %v4779
      %v4781 = vpop.f32.mrb[0].mxu0
      %v4782 = vpop.f32.mrb[0].mxu0
      %v4783 = vadd.f32 0.0, %v4782
      %v4784 = vpop.f32.mrb[0].mxu0
      %4785 = vmatprep.mubr.bf16.mxu0 0
      %4786 = vmatmul.mubr.bf16.gmra.mrb[0].mxu0 %v286
      %v4787 = vpop.f32.mrb[0].mxu0
      %v4788 = vadd.f32 0.0, %v4787
      %v4789 = vpop.f32.mrb[0].mxu0
      %v4790 = vpop.f32.mrb[0].mxu0
      %v4791 = vadd.f32 0.0, %v4790
      %v4792 = vpop.f32.mrb[0].mxu0
      %4793 = vmatprep.mubr.bf16.mxu0 0
      %4794 = vmatmul.mubr.bf16.gmra.mrb[0].mxu0 %v287
      %v4795 = vpop.f32.mrb[0].mxu0
      %v4796 = vadd.f32 0.0, %v4795
      %v4797 = vpop.f32.mrb[0].mxu0
      %v4798 = vpop.f32.mrb[0].mxu0
      %v4799 = vadd.f32 0.0, %v4798
      %v4800 = vpop.f32.mrb[0].mxu0
      %4801 = vmatprep.mubr.bf16.mxu0 0
      %4802 = vmatmul.mubr.bf16.gmra.mrb[0].mxu0 %v288
      %v4803 = vpop.f32.mrb[0].mxu0
      %v4804 = vadd.f32 0.0, %v4803
      %v4805 = vpop.f32.mrb[0].mxu0
      %v4806 = vpop.f32.mrb[0].mxu0
      %v4807 = vadd.f32 0.0, %v4806
      %v4808 = vpop.f32.mrb[0].mxu0
      %4809 = vmatprep.mubr.bf16.mxu0 0
      %4810 = vmatmul.mubr.bf16.gmra.mrb[0].mxu0 %v289
      %v4811 = vpop.f32.mrb[0].mxu0
      %v4812 = vadd.f32 0.0, %v4811
      %v4813 = vpop.f32.mrb[0].mxu0
      %v4814 = vpop.f32.mrb[0].mxu0
      %v4815 = vadd.f32 0.0, %v4814
      %v4816 = vpop.f32.mrb[0].mxu0
      %4817 = vmatprep.mubr.bf16.mxu0 0
      %4818 = vmatmul.mubr.bf16.gmra.mrb[0].mxu0 %v290
      %v4819 = vpop.f32.mrb[0].mxu0
      %v4820 = vadd.f32 0.0, %v4819
      %v4821 = vpop.f32.mrb[0].mxu0
      %v4822 = vpop.f32.mrb[0].mxu0
      %v4823 = vadd.f32 0.0, %v4822
      %v4824 = vpop.f32.mrb[0].mxu0
      %4825 = vdwg.mxu0
      %v4826 = vpack.c.bf16 %v4767, %v4764
      %v4827 = vpack.c.bf16 %v4775, %v4772
      %v4828 = vpack.c.bf16 %v4783, %v4780
      %v4829 = vpack.c.bf16 %v4791, %v4788
      %v4830 = vpack.c.bf16 %v4799, %v4796
      %v4831 = vpack.c.bf16 %v4807, %v4804
      %v4832 = vpack.c.bf16 %v4815, %v4812
      %v4833 = vpack.c.bf16 %v4823, %v4820
      %s4834 = scalar_lea.vmem %s2, 256
      %v4835 = vld [vmem:[%s4834] sm:$0xf]
      %v4836 = vld [vmem:[%s4834 + $0x4] sm:$0xf]
      %v4837 = vld [vmem:[%s4834 + $0x8] sm:$0xf]
      %v4838 = vld [vmem:[%s4834 + $0xc] sm:$0xf]
      %v4839 = vld [vmem:[%s4834 + $0x10] sm:$0xf]
      %v4840 = vld [vmem:[%s4834 + $0x14] sm:$0xf]
      %v4841 = vld [vmem:[%s4834 + $0x18] sm:$0xf]
      %v4842 = vld [vmem:[%s4834 + $0x1c] sm:$0xf]
      %v4843 = vld [vmem:[%s4834 + $0x20] sm:$0xf]
      %v4844 = vld [vmem:[%s4834 + $0x24] sm:$0xf]
      %v4845 = vld [vmem:[%s4834 + $0x28] sm:$0xf]
      %v4846 = vld [vmem:[%s4834 + $0x2c] sm:$0xf]
      %v4847 = vld [vmem:[%s4834 + $0x30] sm:$0xf]
      %v4848 = vld [vmem:[%s4834 + $0x34] sm:$0xf]
      %v4849 = vld [vmem:[%s4834 + $0x38] sm:$0xf]
      %v4850 = vld [vmem:[%s4834 + $0x3c] sm:$0xf]
      %v4867 = vunpack.c.l.b16 %v4835
      %v4868 = vunpack.c.l.b16 %v4836
      %v4869 = vunpack.c.l.b16 %v4837
      %v4870 = vunpack.c.l.b16 %v4838
      %v4871 = vunpack.c.l.b16 %v4839
      %v4872 = vunpack.c.l.b16 %v4840
      %v4873 = vunpack.c.l.b16 %v4841
      %v4874 = vunpack.c.l.b16 %v4842
      %v4875 = vunpack.c.l.b16 %v4843
      %v4876 = vunpack.c.l.b16 %v4844
      %v4877 = vunpack.c.l.b16 %v4845
      %v4878 = vunpack.c.l.b16 %v4846
      %v4879 = vunpack.c.l.b16 %v4847
      %v4880 = vunpack.c.l.b16 %v4848
      %v4881 = vunpack.c.l.b16 %v4849
      %v4882 = vunpack.c.l.b16 %v4850
      %v4883 = vpack.c.b16 %v4868, %v4867
      %v4884 = vpack.c.b16 %v4870, %v4869
      %v4885 = vpack.c.b16 %v4872, %v4871
      %v4886 = vpack.c.b16 %v4874, %v4873
      %v4887 = vpack.c.b16 %v4876, %v4875
      %v4888 = vpack.c.b16 %v4878, %v4877
      %v4889 = vpack.c.b16 %v4880, %v4879
      %v4890 = vpack.c.b16 %v4882, %v4881
      %4899 = vmatprep.subr.bf16.mxu0 0
      %4900 = vmatpush1.bf16.msra.mxu0 %v4883
      %4901 = vmatprep.subr.bf16.mxu0 0
      %4902 = vmatpush1.bf16.msra.mxu0 %v4884
      %4903 = vmatprep.subr.bf16.mxu0 0
      %4904 = vmatpush1.bf16.msra.mxu0 %v4885
      %4905 = vmatprep.subr.bf16.mxu0 0
      %4906 = vmatpush1.bf16.msra.mxu0 %v4886
      %4907 = vmatprep.subr.bf16.mxu0 0
      %4908 = vmatpush1.bf16.msra.mxu0 %v4887
      %4909 = vmatprep.subr.bf16.mxu0 0
      %4910 = vmatpush1.bf16.msra.mxu0 %v4888
      %4911 = vmatprep.subr.bf16.mxu0 0
      %4912 = vmatpush1.bf16.msra.mxu0 %v4889
      %4913 = vmatprep.subr.bf16.mxu0 0
      %4914 = vmatpush1.bf16.msra.mxu0 %v4890
      %4915 = vmatprep.subr.bf16.mxu0 0
      %4916 = vmatpush1.bf16.msra.mxu0 0
      %4917 = vmatprep.subr.bf16.mxu0 0
      %4918 = vmatpush1.bf16.msra.mxu0 0
      %4919 = vmatprep.subr.bf16.mxu0 0
      %4920 = vmatpush1.bf16.msra.mxu0 0
      %4921 = vmatprep.subr.bf16.mxu0 0
      %4922 = vmatpush1.bf16.msra.mxu0 0
      %4923 = vmatprep.subr.bf16.mxu0 0
      %4924 = vmatpush1.bf16.msra.mxu0 0
      %4925 = vmatprep.subr.bf16.mxu0 0
      %4926 = vmatpush1.bf16.msra.mxu0 0
      %4927 = vmatprep.subr.bf16.mxu0 0
      %4928 = vmatpush1.bf16.msra.mxu0 0
      %4929 = vmatprep.subr.bf16.mxu0 0
      %4930 = vmatpush1.bf16.msra.mxu0 0
      %4931 = vmatprep.mubr.bf16.mxu0 0
      %4932 = vmatmul.mubr.bf16.gmra.mrb[0].mxu0 %v283
      %v4933 = vpop.f32.mrb[0].mxu0
      %v4934 = vadd.f32 0.0, %v4933
      %v4935 = vpop.f32.mrb[0].mxu0
      %v4936 = vpop.f32.mrb[0].mxu0
      %v4937 = vadd.f32 0.0, %v4936
      %v4938 = vpop.f32.mrb[0].mxu0
      %4939 = vmatprep.mubr.bf16.mxu0 0
      %4940 = vmatmul.mubr.bf16.gmra.mrb[0].mxu0 %v284
      %v4941 = vpop.f32.mrb[0].mxu0
      %v4942 = vadd.f32 0.0, %v4941
      %v4943 = vpop.f32.mrb[0].mxu0
      %v4944 = vpop.f32.mrb[0].mxu0
      %v4945 = vadd.f32 0.0, %v4944
      %v4946 = vpop.f32.mrb[0].mxu0
      %4947 = vmatprep.mubr.bf16.mxu0 0
      %4948 = vmatmul.mubr.bf16.gmra.mrb[0].mxu0 %v285
      %v4949 = vpop.f32.mrb[0].mxu0
      %v4950 = vadd.f32 0.0, %v4949
      %v4951 = vpop.f32.mrb[0].mxu0
      %v4952 = vpop.f32.mrb[0].mxu0
      %v4953 = vadd.f32 0.0, %v4952
      %v4954 = vpop.f32.mrb[0].mxu0
      %4955 = vmatprep.mubr.bf16.mxu0 0
      %4956 = vmatmul.mubr.bf16.gmra.mrb[0].mxu0 %v286
      %v4957 = vpop.f32.mrb[0].mxu0
      %v4958 = vadd.f32 0.0, %v4957
      %v4959 = vpop.f32.mrb[0].mxu0
      %v4960 = vpop.f32.mrb[0].mxu0
      %v4961 = vadd.f32 0.0, %v4960
      %v4962 = vpop.f32.mrb[0].mxu0
      %4963 = vmatprep.mubr.bf16.mxu0 0
      %4964 = vmatmul.mubr.bf16.gmra.mrb[0].mxu0 %v287
      %v4965 = vpop.f32.mrb[0].mxu0
      %v4966 = vadd.f32 0.0, %v4965
      %v4967 = vpop.f32.mrb[0].mxu0
      %v4968 = vpop.f32.mrb[0].mxu0
      %v4969 = vadd.f32 0.0, %v4968
      %v4970 = vpop.f32.mrb[0].mxu0
      %4971 = vmatprep.mubr.bf16.mxu0 0
      %4972 = vmatmul.mubr.bf16.gmra.mrb[0].mxu0 %v288
      %v4973 = vpop.f32.mrb[0].mxu0
      %v4974 = vadd.f32 0.0, %v4973
      %v4975 = vpop.f32.mrb[0].mxu0
      %v4976 = vpop.f32.mrb[0].mxu0
      %v4977 = vadd.f32 0.0, %v4976
      %v4978 = vpop.f32.mrb[0].mxu0
      %4979 = vmatprep.mubr.bf16.mxu0 0
      %4980 = vmatmul.mubr.bf16.gmra.mrb[0].mxu0 %v289
      %v4981 = vpop.f32.mrb[0].mxu0
      %v4982 = vadd.f32 0.0, %v4981
      %v4983 = vpop.f32.mrb[0].mxu0
      %v4984 = vpop.f32.mrb[0].mxu0
      %v4985 = vadd.f32 0.0, %v4984
      %v4986 = vpop.f32.mrb[0].mxu0
      %4987 = vmatprep.mubr.bf16.mxu0 0
      %4988 = vmatmul.mubr.bf16.gmra.mrb[0].mxu0 %v290
      %v4989 = vpop.f32.mrb[0].mxu0
      %v4990 = vadd.f32 0.0, %v4989
      %v4991 = vpop.f32.mrb[0].mxu0
      %v4992 = vpop.f32.mrb[0].mxu0
      %v4993 = vadd.f32 0.0, %v4992
      %v4994 = vpop.f32.mrb[0].mxu0
      %4995 = vdwg.mxu0
      %v4996 = vpack.c.bf16 %v4937, %v4934
      %v4997 = vpack.c.bf16 %v4945, %v4942
      %v4998 = vpack.c.bf16 %v4953, %v4950
      %v4999 = vpack.c.bf16 %v4961, %v4958
      %v5000 = vpack.c.bf16 %v4969, %v4966
      %v5001 = vpack.c.bf16 %v4977, %v4974
      %v5002 = vpack.c.bf16 %v4985, %v4982
      %v5003 = vpack.c.bf16 %v4993, %v4990
      %s5004 = scalar_lea.vmem %s3, 256
      %v5005 = vld [vmem:[%s5004] sm:$0xf]
      %v5006 = vld [vmem:[%s5004 + $0x4] sm:$0xf]
      %v5007 = vld [vmem:[%s5004 + $0x8] sm:$0xf]
      %v5008 = vld [vmem:[%s5004 + $0xc] sm:$0xf]
      %v5009 = vld [vmem:[%s5004 + $0x10] sm:$0xf]
      %v5010 = vld [vmem:[%s5004 + $0x14] sm:$0xf]
      %v5011 = vld [vmem:[%s5004 + $0x18] sm:$0xf]
      %v5012 = vld [vmem:[%s5004 + $0x1c] sm:$0xf]
      %v5013 = vld [vmem:[%s5004 + $0x20] sm:$0xf]
      %v5014 = vld [vmem:[%s5004 + $0x24] sm:$0xf]
      %v5015 = vld [vmem:[%s5004 + $0x28] sm:$0xf]
      %v5016 = vld [vmem:[%s5004 + $0x2c] sm:$0xf]
      %v5017 = vld [vmem:[%s5004 + $0x30] sm:$0xf]
      %v5018 = vld [vmem:[%s5004 + $0x34] sm:$0xf]
      %v5019 = vld [vmem:[%s5004 + $0x38] sm:$0xf]
      %v5020 = vld [vmem:[%s5004 + $0x3c] sm:$0xf]
      %v5037 = vunpack.c.l.b16 %v5005
      %v5038 = vunpack.c.l.b16 %v5006
      %v5039 = vunpack.c.l.b16 %v5007
      %v5040 = vunpack.c.l.b16 %v5008
      %v5041 = vunpack.c.l.b16 %v5009
      %v5042 = vunpack.c.l.b16 %v5010
      %v5043 = vunpack.c.l.b16 %v5011
      %v5044 = vunpack.c.l.b16 %v5012
      %v5045 = vunpack.c.l.b16 %v5013
      %v5046 = vunpack.c.l.b16 %v5014
      %v5047 = vunpack.c.l.b16 %v5015
      %v5048 = vunpack.c.l.b16 %v5016
      %v5049 = vunpack.c.l.b16 %v5017
      %v5050 = vunpack.c.l.b16 %v5018
      %v5051 = vunpack.c.l.b16 %v5019
      %v5052 = vunpack.c.l.b16 %v5020
      %v5053 = vpack.c.b16 %v5038, %v5037
      %v5054 = vpack.c.b16 %v5040, %v5039
      %v5055 = vpack.c.b16 %v5042, %v5041
      %v5056 = vpack.c.b16 %v5044, %v5043
      %v5057 = vpack.c.b16 %v5046, %v5045
      %v5058 = vpack.c.b16 %v5048, %v5047
      %v5059 = vpack.c.b16 %v5050, %v5049
      %v5060 = vpack.c.b16 %v5052, %v5051
      %5069 = vmatprep.subr.bf16.mxu0 0
      %5070 = vmatpush1.bf16.msra.mxu0 %v5053
      %5071 = vmatprep.subr.bf16.mxu0 0
      %5072 = vmatpush1.bf16.msra.mxu0 %v5054
      %5073 = vmatprep.subr.bf16.mxu0 0
      %5074 = vmatpush1.bf16.msra.mxu0 %v5055
      %5075 = vmatprep.subr.bf16.mxu0 0
      %5076 = vmatpush1.bf16.msra.mxu0 %v5056
      %5077 = vmatprep.subr.bf16.mxu0 0
      %5078 = vmatpush1.bf16.msra.mxu0 %v5057
      %5079 = vmatprep.subr.bf16.mxu0 0
      %5080 = vmatpush1.bf16.msra.mxu0 %v5058
      %5081 = vmatprep.subr.bf16.mxu0 0
      %5082 = vmatpush1.bf16.msra.mxu0 %v5059
      %5083 = vmatprep.subr.bf16.mxu0 0
      %5084 = vmatpush1.bf16.msra.mxu0 %v5060
      %5085 = vmatprep.subr.bf16.mxu0 0
      %5086 = vmatpush1.bf16.msra.mxu0 0
      %5087 = vmatprep.subr.bf16.mxu0 0
      %5088 = vmatpush1.bf16.msra.mxu0 0
      %5089 = vmatprep.subr.bf16.mxu0 0
      %5090 = vmatpush1.bf16.msra.mxu0 0
      %5091 = vmatprep.subr.bf16.mxu0 0
      %5092 = vmatpush1.bf16.msra.mxu0 0
      %5093 = vmatprep.subr.bf16.mxu0 0
      %5094 = vmatpush1.bf16.msra.mxu0 0
      %5095 = vmatprep.subr.bf16.mxu0 0
      %5096 = vmatpush1.bf16.msra.mxu0 0
      %5097 = vmatprep.subr.bf16.mxu0 0
      %5098 = vmatpush1.bf16.msra.mxu0 0
      %5099 = vmatprep.subr.bf16.mxu0 0
      %5100 = vmatpush1.bf16.msra.mxu0 0
      %5101 = vmatprep.mubr.bf16.mxu0 0
      %5102 = vmatmul.mubr.bf16.gmra.mrb[0].mxu0 %v283
      %v5103 = vpop.f32.mrb[0].mxu0
      %v5104 = vadd.f32 0.0, %v5103
      %v5105 = vpop.f32.mrb[0].mxu0
      %v5106 = vpop.f32.mrb[0].mxu0
      %v5107 = vadd.f32 0.0, %v5106
      %v5108 = vpop.f32.mrb[0].mxu0
      %5109 = vmatprep.mubr.bf16.mxu0 0
      %5110 = vmatmul.mubr.bf16.gmra.mrb[0].mxu0 %v284
      %v5111 = vpop.f32.mrb[0].mxu0
      %v5112 = vadd.f32 0.0, %v5111
      %v5113 = vpop.f32.mrb[0].mxu0
      %v5114 = vpop.f32.mrb[0].mxu0
      %v5115 = vadd.f32 0.0, %v5114
      %v5116 = vpop.f32.mrb[0].mxu0
      %5117 = vmatprep.mubr.bf16.mxu0 0
      %5118 = vmatmul.mubr.bf16.gmra.mrb[0].mxu0 %v285
      %v5119 = vpop.f32.mrb[0].mxu0
      %v5120 = vadd.f32 0.0, %v5119
      %v5121 = vpop.f32.mrb[0].mxu0
      %v5122 = vpop.f32.mrb[0].mxu0
      %v5123 = vadd.f32 0.0, %v5122
      %v5124 = vpop.f32.mrb[0].mxu0
      %5125 = vmatprep.mubr.bf16.mxu0 0
      %5126 = vmatmul.mubr.bf16.gmra.mrb[0].mxu0 %v286
      %v5127 = vpop.f32.mrb[0].mxu0
      %v5128 = vadd.f32 0.0, %v5127
      %v5129 = vpop.f32.mrb[0].mxu0
      %v5130 = vpop.f32.mrb[0].mxu0
      %v5131 = vadd.f32 0.0, %v5130
      %v5132 = vpop.f32.mrb[0].mxu0
      %5133 = vmatprep.mubr.bf16.mxu0 0
      %5134 = vmatmul.mubr.bf16.gmra.mrb[0].mxu0 %v287
      %v5135 = vpop.f32.mrb[0].mxu0
      %v5136 = vadd.f32 0.0, %v5135
      %v5137 = vpop.f32.mrb[0].mxu0
      %v5138 = vpop.f32.mrb[0].mxu0
      %v5139 = vadd.f32 0.0, %v5138
      %v5140 = vpop.f32.mrb[0].mxu0
      %5141 = vmatprep.mubr.bf16.mxu0 0
      %5142 = vmatmul.mubr.bf16.gmra.mrb[0].mxu0 %v288
      %v5143 = vpop.f32.mrb[0].mxu0
      %v5144 = vadd.f32 0.0, %v5143
      %v5145 = vpop.f32.mrb[0].mxu0
      %v5146 = vpop.f32.mrb[0].mxu0
      %v5147 = vadd.f32 0.0, %v5146
      %v5148 = vpop.f32.mrb[0].mxu0
      %5149 = vmatprep.mubr.bf16.mxu0 0
      %5150 = vmatmul.mubr.bf16.gmra.mrb[0].mxu0 %v289
      %v5151 = vpop.f32.mrb[0].mxu0
      %v5152 = vadd.f32 0.0, %v5151
      %v5153 = vpop.f32.mrb[0].mxu0
      %v5154 = vpop.f32.mrb[0].mxu0
      %v5155 = vadd.f32 0.0, %v5154
      %v5156 = vpop.f32.mrb[0].mxu0
      %5157 = vmatprep.mubr.bf16.mxu0 0
      %5158 = vmatmul.mubr.bf16.gmra.mrb[0].mxu0 %v290
      %v5159 = vpop.f32.mrb[0].mxu0
      %v5160 = vadd.f32 0.0, %v5159
      %v5161 = vpop.f32.mrb[0].mxu0
      %v5162 = vpop.f32.mrb[0].mxu0
      %v5163 = vadd.f32 0.0, %v5162
      %v5164 = vpop.f32.mrb[0].mxu0
      %5165 = vdwg.mxu0
      %v5166 = vpack.c.bf16 %v5107, %v5104
      %v5167 = vpack.c.bf16 %v5115, %v5112
      %v5168 = vpack.c.bf16 %v5123, %v5120
      %v5169 = vpack.c.bf16 %v5131, %v5128
      %v5170 = vpack.c.bf16 %v5139, %v5136
      %v5171 = vpack.c.bf16 %v5147, %v5144
      %v5172 = vpack.c.bf16 %v5155, %v5152
      %v5173 = vpack.c.bf16 %v5163, %v5160
      %v5175 = vsel %vm814, %v4826, 0
      %v5178 = vsel %vm814, %v4827, 0
      %v5181 = vsel %vm814, %v4828, 0
      %v5184 = vsel %vm814, %v4829, 0
      %v5187 = vsel %vm814, %v4830, 0
      %v5190 = vsel %vm814, %v4831, 0
      %v5193 = vsel %vm814, %v4832, 0
      %v5196 = vsel %vm814, %v4833, 0
      %v5199 = vsel %vm814, %v4996, 0
      %v5202 = vsel %vm814, %v4997, 0
      %v5205 = vsel %vm814, %v4998, 0
      %v5208 = vsel %vm814, %v4999, 0
      %v5211 = vsel %vm814, %v5000, 0
      %v5214 = vsel %vm814, %v5001, 0
      %v5217 = vsel %vm814, %v5002, 0
      %v5220 = vsel %vm814, %v5003, 0
      %5222 = vmatprep.subr.bf16.mxu0 0
      %5223 = vmatpush1.bf16.xpose.msra.mxu0 %v5199
      %5224 = vmatprep.subr.bf16.mxu0 0
      %5225 = vmatpush1.bf16.xpose.msra.mxu0 %v5202
      %5226 = vmatprep.subr.bf16.mxu0 0
      %5227 = vmatpush1.bf16.xpose.msra.mxu0 %v5205
      %5228 = vmatprep.subr.bf16.mxu0 0
      %5229 = vmatpush1.bf16.xpose.msra.mxu0 %v5208
      %5230 = vmatprep.subr.bf16.mxu0 0
      %5231 = vmatpush1.bf16.xpose.msra.mxu0 %v5211
      %5232 = vmatprep.subr.bf16.mxu0 0
      %5233 = vmatpush1.bf16.xpose.msra.mxu0 %v5214
      %5234 = vmatprep.subr.bf16.mxu0 0
      %5235 = vmatpush1.bf16.xpose.msra.mxu0 %v5217
      %5236 = vmatprep.subr.bf16.mxu0 0
      %5237 = vmatpush1.bf16.xpose.msra.mxu0 %v5220
      %5238 = vmatprep.subr.bf16.mxu0 0
      %5239 = vmatpush1.bf16.xpose.msra.mxu0 0
      %5240 = vmatprep.subr.bf16.mxu0 0
      %5241 = vmatpush1.bf16.xpose.msra.mxu0 0
      %5242 = vmatprep.subr.bf16.mxu0 0
      %5243 = vmatpush1.bf16.xpose.msra.mxu0 0
      %5244 = vmatprep.subr.bf16.mxu0 0
      %5245 = vmatpush1.bf16.xpose.msra.mxu0 0
      %5246 = vmatprep.subr.bf16.mxu0 0
      %5247 = vmatpush1.bf16.xpose.msra.mxu0 0
      %5248 = vmatprep.subr.bf16.mxu0 0
      %5249 = vmatpush1.bf16.xpose.msra.mxu0 0
      %5250 = vmatprep.subr.bf16.mxu0 0
      %5251 = vmatpush1.bf16.xpose.msra.mxu0 0
      %5252 = vmatprep.subr.bf16.mxu0 0
      %5253 = vmatpush1.bf16.xpose.msra.mxu0 0
      %5254 = vmatprep.mubr.bf16.mxu0 0
      %5255 = vmatmul.mubr.bf16.gmra.mrb[0].mxu0 %v5175
      %v5256 = vpop.f32.mrb[0].mxu0
      %v5257 = vadd.f32 0.0, %v5256
      %v5258 = vpop.f32.mrb[0].mxu0
      %v5259 = vpop.f32.mrb[0].mxu0
      %v5260 = vadd.f32 0.0, %v5259
      %v5261 = vpop.f32.mrb[0].mxu0
      %5262 = vmatprep.mubr.bf16.mxu0 0
      %5263 = vmatmul.mubr.bf16.gmra.mrb[0].mxu0 %v5178
      %v5264 = vpop.f32.mrb[0].mxu0
      %v5265 = vadd.f32 0.0, %v5264
      %v5266 = vpop.f32.mrb[0].mxu0
      %v5267 = vpop.f32.mrb[0].mxu0
      %v5268 = vadd.f32 0.0, %v5267
      %v5269 = vpop.f32.mrb[0].mxu0
      %5270 = vmatprep.mubr.bf16.mxu0 0
      %5271 = vmatmul.mubr.bf16.gmra.mrb[0].mxu0 %v5181
      %v5272 = vpop.f32.mrb[0].mxu0
      %v5273 = vadd.f32 0.0, %v5272
      %v5274 = vpop.f32.mrb[0].mxu0
      %v5275 = vpop.f32.mrb[0].mxu0
      %v5276 = vadd.f32 0.0, %v5275
      %v5277 = vpop.f32.mrb[0].mxu0
      %5278 = vmatprep.mubr.bf16.mxu0 0
      %5279 = vmatmul.mubr.bf16.gmra.mrb[0].mxu0 %v5184
      %v5280 = vpop.f32.mrb[0].mxu0
      %v5281 = vadd.f32 0.0, %v5280
      %v5282 = vpop.f32.mrb[0].mxu0
      %v5283 = vpop.f32.mrb[0].mxu0
      %v5284 = vadd.f32 0.0, %v5283
      %v5285 = vpop.f32.mrb[0].mxu0
      %5286 = vmatprep.mubr.bf16.mxu0 0
      %5287 = vmatmul.mubr.bf16.gmra.mrb[0].mxu0 %v5187
      %v5288 = vpop.f32.mrb[0].mxu0
      %v5289 = vadd.f32 0.0, %v5288
      %v5290 = vpop.f32.mrb[0].mxu0
      %v5291 = vpop.f32.mrb[0].mxu0
      %v5292 = vadd.f32 0.0, %v5291
      %v5293 = vpop.f32.mrb[0].mxu0
      %5294 = vmatprep.mubr.bf16.mxu0 0
      %5295 = vmatmul.mubr.bf16.gmra.mrb[0].mxu0 %v5190
      %v5296 = vpop.f32.mrb[0].mxu0
      %v5297 = vadd.f32 0.0, %v5296
      %v5298 = vpop.f32.mrb[0].mxu0
      %v5299 = vpop.f32.mrb[0].mxu0
      %v5300 = vadd.f32 0.0, %v5299
      %v5301 = vpop.f32.mrb[0].mxu0
      %5302 = vmatprep.mubr.bf16.mxu0 0
      %5303 = vmatmul.mubr.bf16.gmra.mrb[0].mxu0 %v5193
      %v5304 = vpop.f32.mrb[0].mxu0
      %v5305 = vadd.f32 0.0, %v5304
      %v5306 = vpop.f32.mrb[0].mxu0
      %v5307 = vpop.f32.mrb[0].mxu0
      %v5308 = vadd.f32 0.0, %v5307
      %v5309 = vpop.f32.mrb[0].mxu0
      %5310 = vmatprep.mubr.bf16.mxu0 0
      %5311 = vmatmul.mubr.bf16.gmra.mrb[0].mxu0 %v5196
      %v5312 = vpop.f32.mrb[0].mxu0
      %v5313 = vadd.f32 0.0, %v5312
      %v5314 = vpop.f32.mrb[0].mxu0
      %v5315 = vpop.f32.mrb[0].mxu0
      %v5316 = vadd.f32 0.0, %v5315
      %v5317 = vpop.f32.mrb[0].mxu0
      %5318 = vdwg.mxu0
      %5319 = vmax.xlane.f32.xlu0 %v5257
      %v5320 = vpop.xlane.xlu0 %5319
      %5321 = vmax.xlane.f32.xlu0 %v5260
      %v5322 = vpop.xlane.xlu0 %5321
      %5323 = vmax.xlane.f32.xlu0 %v5265
      %v5324 = vpop.xlane.xlu0 %5323
      %5325 = vmax.xlane.f32.xlu0 %v5268
      %v5326 = vpop.xlane.xlu0 %5325
      %5327 = vmax.xlane.f32.xlu0 %v5273
      %v5328 = vpop.xlane.xlu0 %5327
      %5329 = vmax.xlane.f32.xlu0 %v5276
      %v5330 = vpop.xlane.xlu0 %5329
      %5331 = vmax.xlane.f32.xlu0 %v5281
      %v5332 = vpop.xlane.xlu0 %5331
      %5333 = vmax.xlane.f32.xlu0 %v5284
      %v5334 = vpop.xlane.xlu0 %5333
      %5335 = vmax.xlane.f32.xlu0 %v5289
      %v5336 = vpop.xlane.xlu0 %5335
      %5337 = vmax.xlane.f32.xlu0 %v5292
      %v5338 = vpop.xlane.xlu0 %5337
      %5339 = vmax.xlane.f32.xlu0 %v5297
      %v5340 = vpop.xlane.xlu0 %5339
      %5341 = vmax.xlane.f32.xlu0 %v5300
      %v5342 = vpop.xlane.xlu0 %5341
      %5343 = vmax.xlane.f32.xlu0 %v5305
      %v5344 = vpop.xlane.xlu0 %5343
      %5345 = vmax.xlane.f32.xlu0 %v5308
      %v5346 = vpop.xlane.xlu0 %5345
      %5347 = vmax.xlane.f32.xlu0 %v5313
      %v5348 = vpop.xlane.xlu0 %5347
      %5349 = vmax.xlane.f32.xlu0 %v5316
      %v5350 = vpop.xlane.xlu0 %5349
      %v5351 = vsub.f32 %v5257, %v5320
      %v5352 = vsub.f32 %v5260, %v5322
      %v5353 = vsub.f32 %v5265, %v5324
      %v5354 = vsub.f32 %v5268, %v5326
      %v5355 = vsub.f32 %v5273, %v5328
      %v5356 = vsub.f32 %v5276, %v5330
      %v5357 = vsub.f32 %v5281, %v5332
      %v5358 = vsub.f32 %v5284, %v5334
      %v5359 = vsub.f32 %v5289, %v5336
      %v5360 = vsub.f32 %v5292, %v5338
      %v5361 = vsub.f32 %v5297, %v5340
      %v5362 = vsub.f32 %v5300, %v5342
      %v5363 = vsub.f32 %v5305, %v5344
      %v5364 = vsub.f32 %v5308, %v5346
      %v5365 = vsub.f32 %v5313, %v5348
      %v5366 = vsub.f32 %v5316, %v5350
      %v5367 = vmul.f32 %v5351, 1.442695
      %v5368 = vpow.pop %v5367
      %v5369 = vmul.f32 %v5352, 1.442695
      %v5370 = vpow.pop %v5369
      %v5371 = vmul.f32 %v5353, 1.442695
      %v5372 = vpow.pop %v5371
      %v5373 = vmul.f32 %v5354, 1.442695
      %v5374 = vpow.pop %v5373
      %v5375 = vmul.f32 %v5355, 1.442695
      %v5376 = vpow.pop %v5375
      %v5377 = vmul.f32 %v5356, 1.442695
      %v5378 = vpow.pop %v5377
      %v5379 = vmul.f32 %v5357, 1.442695
      %v5380 = vpow.pop %v5379
      %v5381 = vmul.f32 %v5358, 1.442695
      %v5382 = vpow.pop %v5381
      %v5383 = vmul.f32 %v5359, 1.442695
      %v5384 = vpow.pop %v5383
      %v5385 = vmul.f32 %v5360, 1.442695
      %v5386 = vpow.pop %v5385
      %v5387 = vmul.f32 %v5361, 1.442695
      %v5388 = vpow.pop %v5387
      %v5389 = vmul.f32 %v5362, 1.442695
      %v5390 = vpow.pop %v5389
      %v5391 = vmul.f32 %v5363, 1.442695
      %v5392 = vpow.pop %v5391
      %v5393 = vmul.f32 %v5364, 1.442695
      %v5394 = vpow.pop %v5393
      %v5395 = vmul.f32 %v5365, 1.442695
      %v5396 = vpow.pop %v5395
      %v5397 = vmul.f32 %v5366, 1.442695
      %v5398 = vpow.pop %v5397
      %5399 = vadd.xlane.f32.xlu0 %v5368
      %v5400 = vpop.xlane.xlu0 %5399
      %5401 = vadd.xlane.f32.xlu0 %v5370
      %v5402 = vpop.xlane.xlu0 %5401
      %5403 = vadd.xlane.f32.xlu0 %v5372
      %v5404 = vpop.xlane.xlu0 %5403
      %5405 = vadd.xlane.f32.xlu0 %v5374
      %v5406 = vpop.xlane.xlu0 %5405
      %5407 = vadd.xlane.f32.xlu0 %v5376
      %v5408 = vpop.xlane.xlu0 %5407
      %5409 = vadd.xlane.f32.xlu0 %v5378
      %v5410 = vpop.xlane.xlu0 %5409
      %5411 = vadd.xlane.f32.xlu0 %v5380
      %v5412 = vpop.xlane.xlu0 %5411
      %5413 = vadd.xlane.f32.xlu0 %v5382
      %v5414 = vpop.xlane.xlu0 %5413
      %5415 = vadd.xlane.f32.xlu0 %v5384
      %v5416 = vpop.xlane.xlu0 %5415
      %5417 = vadd.xlane.f32.xlu0 %v5386
      %v5418 = vpop.xlane.xlu0 %5417
      %5419 = vadd.xlane.f32.xlu0 %v5388
      %v5420 = vpop.xlane.xlu0 %5419
      %5421 = vadd.xlane.f32.xlu0 %v5390
      %v5422 = vpop.xlane.xlu0 %5421
      %5423 = vadd.xlane.f32.xlu0 %v5392
      %v5424 = vpop.xlane.xlu0 %5423
      %5425 = vadd.xlane.f32.xlu0 %v5394
      %v5426 = vpop.xlane.xlu0 %5425
      %5427 = vadd.xlane.f32.xlu0 %v5396
      %v5428 = vpop.xlane.xlu0 %5427
      %5429 = vadd.xlane.f32.xlu0 %v5398
      %v5430 = vpop.xlane.xlu0 %5429
      %v5431 = vrcp.pop %v5400
      %v5432 = vrcp.pop %v5402
      %v5433 = vrcp.pop %v5404
      %v5434 = vrcp.pop %v5406
      %v5435 = vrcp.pop %v5408
      %v5436 = vrcp.pop %v5410
      %v5437 = vrcp.pop %v5412
      %v5438 = vrcp.pop %v5414
      %v5439 = vrcp.pop %v5416
      %v5440 = vrcp.pop %v5418
      %v5441 = vrcp.pop %v5420
      %v5442 = vrcp.pop %v5422
      %v5443 = vrcp.pop %v5424
      %v5444 = vrcp.pop %v5426
      %v5445 = vrcp.pop %v5428
      %v5446 = vrcp.pop %v5430
      %v5447 = vmul.f32 %v5368, %v5431
      %v5448 = vmul.f32 %v5370, %v5432
      %v5449 = vmul.f32 %v5372, %v5433
      %v5450 = vmul.f32 %v5374, %v5434
      %v5451 = vmul.f32 %v5376, %v5435
      %v5452 = vmul.f32 %v5378, %v5436
      %v5453 = vmul.f32 %v5380, %v5437
      %v5454 = vmul.f32 %v5382, %v5438
      %v5455 = vmul.f32 %v5384, %v5439
      %v5456 = vmul.f32 %v5386, %v5440
      %v5457 = vmul.f32 %v5388, %v5441
      %v5458 = vmul.f32 %v5390, %v5442
      %v5459 = vmul.f32 %v5392, %v5443
      %v5460 = vmul.f32 %v5394, %v5444
      %v5461 = vmul.f32 %v5396, %v5445
      %v5462 = vmul.f32 %v5398, %v5446
      %v5463 = vpack.c.bf16 %v5448, %v5447
      %v5464 = vpack.c.bf16 %v5450, %v5449
      %v5465 = vpack.c.bf16 %v5452, %v5451
      %v5466 = vpack.c.bf16 %v5454, %v5453
      %v5467 = vpack.c.bf16 %v5456, %v5455
      %v5468 = vpack.c.bf16 %v5458, %v5457
      %v5469 = vpack.c.bf16 %v5460, %v5459
      %v5470 = vpack.c.bf16 %v5462, %v5461
      %5471 = vmatprep.subr.bf16.mxu0 0
      %5472 = vmatpush1.bf16.msra.mxu0 %v5166
      %5473 = vmatprep.subr.bf16.mxu0 0
      %5474 = vmatpush1.bf16.msra.mxu0 %v5167
      %5475 = vmatprep.subr.bf16.mxu0 0
      %5476 = vmatpush1.bf16.msra.mxu0 %v5168
      %5477 = vmatprep.subr.bf16.mxu0 0
      %5478 = vmatpush1.bf16.msra.mxu0 %v5169
      %5479 = vmatprep.subr.bf16.mxu0 0
      %5480 = vmatpush1.bf16.msra.mxu0 %v5170
      %5481 = vmatprep.subr.bf16.mxu0 0
      %5482 = vmatpush1.bf16.msra.mxu0 %v5171
      %5483 = vmatprep.subr.bf16.mxu0 0
      %5484 = vmatpush1.bf16.msra.mxu0 %v5172
      %5485 = vmatprep.subr.bf16.mxu0 0
      %5486 = vmatpush1.bf16.msra.mxu0 %v5173
      %5487 = vmatprep.subr.bf16.mxu0 0
      %5488 = vmatpush1.bf16.msra.mxu0 0
      %5489 = vmatprep.subr.bf16.mxu0 0
      %5490 = vmatpush1.bf16.msra.mxu0 0
      %5491 = vmatprep.subr.bf16.mxu0 0
      %5492 = vmatpush1.bf16.msra.mxu0 0
      %5493 = vmatprep.subr.bf16.mxu0 0
      %5494 = vmatpush1.bf16.msra.mxu0 0
      %5495 = vmatprep.subr.bf16.mxu0 0
      %5496 = vmatpush1.bf16.msra.mxu0 0
      %5497 = vmatprep.subr.bf16.mxu0 0
      %5498 = vmatpush1.bf16.msra.mxu0 0
      %5499 = vmatprep.subr.bf16.mxu0 0
      %5500 = vmatpush1.bf16.msra.mxu0 0
      %5501 = vmatprep.subr.bf16.mxu0 0
      %5502 = vmatpush1.bf16.msra.mxu0 0
      %5503 = vmatprep.mubr.bf16.mxu0 0
      %5504 = vmatmul.mubr.bf16.gmra.mrb[0].mxu0 %v5463
      %v5505 = vpop.f32.mrb[0].mxu0
      %v5506 = vadd.f32 0.0, %v5505
      %v5507 = vpop.f32.mrb[0].mxu0
      %v5508 = vpop.f32.mrb[0].mxu0
      %v5509 = vadd.f32 0.0, %v5508
      %v5510 = vpop.f32.mrb[0].mxu0
      %5511 = vmatprep.mubr.bf16.mxu0 0
      %5512 = vmatmul.mubr.bf16.gmra.mrb[0].mxu0 %v5464
      %v5513 = vpop.f32.mrb[0].mxu0
      %v5514 = vadd.f32 0.0, %v5513
      %v5515 = vpop.f32.mrb[0].mxu0
      %v5516 = vpop.f32.mrb[0].mxu0
      %v5517 = vadd.f32 0.0, %v5516
      %v5518 = vpop.f32.mrb[0].mxu0
      %5519 = vmatprep.mubr.bf16.mxu0 0
      %5520 = vmatmul.mubr.bf16.gmra.mrb[0].mxu0 %v5465
      %v5521 = vpop.f32.mrb[0].mxu0
      %v5522 = vadd.f32 0.0, %v5521
      %v5523 = vpop.f32.mrb[0].mxu0
      %v5524 = vpop.f32.mrb[0].mxu0
      %v5525 = vadd.f32 0.0, %v5524
      %v5526 = vpop.f32.mrb[0].mxu0
      %5527 = vmatprep.mubr.bf16.mxu0 0
      %5528 = vmatmul.mubr.bf16.gmra.mrb[0].mxu0 %v5466
      %v5529 = vpop.f32.mrb[0].mxu0
      %v5530 = vadd.f32 0.0, %v5529
      %v5531 = vpop.f32.mrb[0].mxu0
      %v5532 = vpop.f32.mrb[0].mxu0
      %v5533 = vadd.f32 0.0, %v5532
      %v5534 = vpop.f32.mrb[0].mxu0
      %5535 = vmatprep.mubr.bf16.mxu0 0
      %5536 = vmatmul.mubr.bf16.gmra.mrb[0].mxu0 %v5467
      %v5537 = vpop.f32.mrb[0].mxu0
      %v5538 = vadd.f32 0.0, %v5537
      %v5539 = vpop.f32.mrb[0].mxu0
      %v5540 = vpop.f32.mrb[0].mxu0
      %v5541 = vadd.f32 0.0, %v5540
      %v5542 = vpop.f32.mrb[0].mxu0
      %5543 = vmatprep.mubr.bf16.mxu0 0
      %5544 = vmatmul.mubr.bf16.gmra.mrb[0].mxu0 %v5468
      %v5545 = vpop.f32.mrb[0].mxu0
      %v5546 = vadd.f32 0.0, %v5545
      %v5547 = vpop.f32.mrb[0].mxu0
      %v5548 = vpop.f32.mrb[0].mxu0
      %v5549 = vadd.f32 0.0, %v5548
      %v5550 = vpop.f32.mrb[0].mxu0
      %5551 = vmatprep.mubr.bf16.mxu0 0
      %5552 = vmatmul.mubr.bf16.gmra.mrb[0].mxu0 %v5469
      %v5553 = vpop.f32.mrb[0].mxu0
      %v5554 = vadd.f32 0.0, %v5553
      %v5555 = vpop.f32.mrb[0].mxu0
      %v5556 = vpop.f32.mrb[0].mxu0
      %v5557 = vadd.f32 0.0, %v5556
      %v5558 = vpop.f32.mrb[0].mxu0
      %5559 = vmatprep.mubr.bf16.mxu0 0
      %5560 = vmatmul.mubr.bf16.gmra.mrb[0].mxu0 %v5470
      %v5561 = vpop.f32.mrb[0].mxu0
      %v5562 = vadd.f32 0.0, %v5561
      %v5563 = vpop.f32.mrb[0].mxu0
      %v5564 = vpop.f32.mrb[0].mxu0
      %v5565 = vadd.f32 0.0, %v5564
      %v5566 = vpop.f32.mrb[0].mxu0
      %5567 = vdwg.mxu0
      %v5568 = vpack.c.bf16 %v5509, %v5506
      %v5569 = vpack.c.bf16 %v5517, %v5514
      %v5570 = vpack.c.bf16 %v5525, %v5522
      %v5571 = vpack.c.bf16 %v5533, %v5530
      %v5572 = vpack.c.bf16 %v5541, %v5538
      %v5573 = vpack.c.bf16 %v5549, %v5546
      %v5574 = vpack.c.bf16 %v5557, %v5554
      %v5575 = vpack.c.bf16 %v5565, %v5562
      %v5576 = vld [vmem:[#allocation2] sm:$0xff]
      %v5577 = vld [vmem:[#allocation2 + $0x8] sm:$0xff]
      %v5578 = vld [vmem:[#allocation2 + $0x10] sm:$0xff]
      %v5579 = vld [vmem:[#allocation2 + $0x18] sm:$0xff]
      %v5580 = vld [vmem:[#allocation2 + $0x20] sm:$0xff]
      %v5581 = vld [vmem:[#allocation2 + $0x28] sm:$0xff]
      %v5582 = vld [vmem:[#allocation2 + $0x30] sm:$0xff]
      %v5583 = vld [vmem:[#allocation2 + $0x38] sm:$0xff]
      %v5584 = vld [vmem:[#allocation2 + $0x40] sm:$0xff]
      %v5585 = vld [vmem:[#allocation2 + $0x48] sm:$0xff]
      %v5586 = vld [vmem:[#allocation2 + $0x50] sm:$0xff]
      %v5587 = vld [vmem:[#allocation2 + $0x58] sm:$0xff]
      %v5588 = vld [vmem:[#allocation2 + $0x60] sm:$0xff]
      %v5589 = vld [vmem:[#allocation2 + $0x68] sm:$0xff]
      %v5590 = vld [vmem:[#allocation2 + $0x70] sm:$0xff]
      %v5591 = vld [vmem:[#allocation2 + $0x78] sm:$0xff]
      %s5592 = scalar_lea.vmem %s4, 32
      %v5593 = vld [vmem:[%s5592] sm:$0xf]
      %v5594 = vld [vmem:[%s5592 + $0x4] sm:$0xf]
      %v5597 = vunpack.c.l.b16 %v5593
      %v5598 = vunpack.c.l.b16 %v5594
      %v5599 = vpack.c.b16 %v5598, %v5597
      %v5602 = vsel %vm814, %v5568, 0
      %v5605 = vsel %vm814, %v5569, 0
      %v5608 = vsel %vm814, %v5570, 0
      %v5611 = vsel %vm814, %v5571, 0
      %v5614 = vsel %vm814, %v5572, 0
      %v5617 = vsel %vm814, %v5573, 0
      %v5620 = vsel %vm814, %v5574, 0
      %v5623 = vsel %vm814, %v5575, 0
      %5625 = vmatprep.subr.bf16.mxu0 0
      %5626 = vmatpush1.bf16.msra.mxu0 %v5599
      %5627 = vmatprep.subr.bf16.mxu0 0
      %5628 = vmatpush1.bf16.msra.mxu0 0
      %5629 = vmatprep.subr.bf16.mxu0 0
      %5630 = vmatpush1.bf16.msra.mxu0 0
      %5631 = vmatprep.subr.bf16.mxu0 0
      %5632 = vmatpush1.bf16.msra.mxu0 0
      %5633 = vmatprep.subr.bf16.mxu0 0
      %5634 = vmatpush1.bf16.msra.mxu0 0
      %5635 = vmatprep.subr.bf16.mxu0 0
      %5636 = vmatpush1.bf16.msra.mxu0 0
      %5637 = vmatprep.subr.bf16.mxu0 0
      %5638 = vmatpush1.bf16.msra.mxu0 0
      %5639 = vmatprep.subr.bf16.mxu0 0
      %5640 = vmatpush1.bf16.msra.mxu0 0
      %5641 = vmatprep.subr.bf16.mxu0 0
      %5642 = vmatpush1.bf16.msra.mxu0 0
      %5643 = vmatprep.subr.bf16.mxu0 0
      %5644 = vmatpush1.bf16.msra.mxu0 0
      %5645 = vmatprep.subr.bf16.mxu0 0
      %5646 = vmatpush1.bf16.msra.mxu0 0
      %5647 = vmatprep.subr.bf16.mxu0 0
      %5648 = vmatpush1.bf16.msra.mxu0 0
      %5649 = vmatprep.subr.bf16.mxu0 0
      %5650 = vmatpush1.bf16.msra.mxu0 0
      %5651 = vmatprep.subr.bf16.mxu0 0
      %5652 = vmatpush1.bf16.msra.mxu0 0
      %5653 = vmatprep.subr.bf16.mxu0 0
      %5654 = vmatpush1.bf16.msra.mxu0 0
      %5655 = vmatprep.subr.bf16.mxu0 0
      %5656 = vmatpush1.bf16.msra.mxu0 0
      %5657 = vmatprep.mubr.bf16.mxu0 0
      %5658 = vmatmul.mubr.bf16.gmra.mrb[0].mxu0 %v5602
      %v5659 = vpop.f32.mrb[0].mxu0
      %v5660 = vadd.f32 0.0, %v5659
      %v5661 = vpop.f32.mrb[0].mxu0
      %v5662 = vpop.f32.mrb[0].mxu0
      %v5663 = vadd.f32 0.0, %v5662
      %v5664 = vpop.f32.mrb[0].mxu0
      %5665 = vmatprep.mubr.bf16.mxu0 0
      %5666 = vmatmul.mubr.bf16.gmra.mrb[0].mxu0 %v5605
      %v5667 = vpop.f32.mrb[0].mxu0
      %v5668 = vadd.f32 0.0, %v5667
      %v5669 = vpop.f32.mrb[0].mxu0
      %v5670 = vpop.f32.mrb[0].mxu0
      %v5671 = vadd.f32 0.0, %v5670
      %v5672 = vpop.f32.mrb[0].mxu0
      %5673 = vmatprep.mubr.bf16.mxu0 0
      %5674 = vmatmul.mubr.bf16.gmra.mrb[0].mxu0 %v5608
      %v5675 = vpop.f32.mrb[0].mxu0
      %v5676 = vadd.f32 0.0, %v5675
      %v5677 = vpop.f32.mrb[0].mxu0
      %v5678 = vpop.f32.mrb[0].mxu0
      %v5679 = vadd.f32 0.0, %v5678
      %v5680 = vpop.f32.mrb[0].mxu0
      %5681 = vmatprep.mubr.bf16.mxu0 0
      %5682 = vmatmul.mubr.bf16.gmra.mrb[0].mxu0 %v5611
      %v5683 = vpop.f32.mrb[0].mxu0
      %v5684 = vadd.f32 0.0, %v5683
      %v5685 = vpop.f32.mrb[0].mxu0
      %v5686 = vpop.f32.mrb[0].mxu0
      %v5687 = vadd.f32 0.0, %v5686
      %v5688 = vpop.f32.mrb[0].mxu0
      %5689 = vmatprep.mubr.bf16.mxu0 0
      %5690 = vmatmul.mubr.bf16.gmra.mrb[0].mxu0 %v5614
      %v5691 = vpop.f32.mrb[0].mxu0
      %v5692 = vadd.f32 0.0, %v5691
      %v5693 = vpop.f32.mrb[0].mxu0
      %v5694 = vpop.f32.mrb[0].mxu0
      %v5695 = vadd.f32 0.0, %v5694
      %v5696 = vpop.f32.mrb[0].mxu0
      %5697 = vmatprep.mubr.bf16.mxu0 0
      %5698 = vmatmul.mubr.bf16.gmra.mrb[0].mxu0 %v5617
      %v5699 = vpop.f32.mrb[0].mxu0
      %v5700 = vadd.f32 0.0, %v5699
      %v5701 = vpop.f32.mrb[0].mxu0
      %v5702 = vpop.f32.mrb[0].mxu0
      %v5703 = vadd.f32 0.0, %v5702
      %v5704 = vpop.f32.mrb[0].mxu0
      %5705 = vmatprep.mubr.bf16.mxu0 0
      %5706 = vmatmul.mubr.bf16.gmra.mrb[0].mxu0 %v5620
      %v5707 = vpop.f32.mrb[0].mxu0
      %v5708 = vadd.f32 0.0, %v5707
      %v5709 = vpop.f32.mrb[0].mxu0
      %v5710 = vpop.f32.mrb[0].mxu0
      %v5711 = vadd.f32 0.0, %v5710
      %v5712 = vpop.f32.mrb[0].mxu0
      %5713 = vmatprep.mubr.bf16.mxu0 0
      %5714 = vmatmul.mubr.bf16.gmra.mrb[0].mxu0 %v5623
      %v5715 = vpop.f32.mrb[0].mxu0
      %v5716 = vadd.f32 0.0, %v5715
      %v5717 = vpop.f32.mrb[0].mxu0
      %v5718 = vpop.f32.mrb[0].mxu0
      %v5719 = vadd.f32 0.0, %v5718
      %v5720 = vpop.f32.mrb[0].mxu0
      %5721 = vdwg.mxu0
      %v5722 = vadd.f32 %v5576, %v5660
      %v5723 = vadd.f32 %v5577, %v5663
      %v5724 = vadd.f32 %v5578, %v5668
      %v5725 = vadd.f32 %v5579, %v5671
      %v5726 = vadd.f32 %v5580, %v5676
      %v5727 = vadd.f32 %v5581, %v5679
      %v5728 = vadd.f32 %v5582, %v5684
      %v5729 = vadd.f32 %v5583, %v5687
      %v5730 = vadd.f32 %v5584, %v5692
      %v5731 = vadd.f32 %v5585, %v5695
      %v5732 = vadd.f32 %v5586, %v5700
      %v5733 = vadd.f32 %v5587, %v5703
      %v5734 = vadd.f32 %v5588, %v5708
      %v5735 = vadd.f32 %v5589, %v5711
      %v5736 = vadd.f32 %v5590, %v5716
      %v5737 = vadd.f32 %v5591, %v5719
      %5738 = vst [vmem:[#allocation2] sm:$0xff] %v5722
      %5739 = vst [vmem:[#allocation2 + $0x8] sm:$0xff] %v5723
      %5740 = vst [vmem:[#allocation2 + $0x10] sm:$0xff] %v5724
      %5741 = vst [vmem:[#allocation2 + $0x18] sm:$0xff] %v5725
      %5742 = vst [vmem:[#allocation2 + $0x20] sm:$0xff] %v5726
      %5743 = vst [vmem:[#allocation2 + $0x28] sm:$0xff] %v5727
      %5744 = vst [vmem:[#allocation2 + $0x30] sm:$0xff] %v5728
      %5745 = vst [vmem:[#allocation2 + $0x38] sm:$0xff] %v5729
      %5746 = vst [vmem:[#allocation2 + $0x40] sm:$0xff] %v5730
      %5747 = vst [vmem:[#allocation2 + $0x48] sm:$0xff] %v5731
      %5748 = vst [vmem:[#allocation2 + $0x50] sm:$0xff] %v5732
      %5749 = vst [vmem:[#allocation2 + $0x58] sm:$0xff] %v5733
      %5750 = vst [vmem:[#allocation2 + $0x60] sm:$0xff] %v5734
      %5751 = vst [vmem:[#allocation2 + $0x68] sm:$0xff] %v5735
      %5752 = vst [vmem:[#allocation2 + $0x70] sm:$0xff] %v5736
      %5753 = vst [vmem:[#allocation2 + $0x78] sm:$0xff] %v5737
      %s5754 = scalar_lea.vmem %s1, 320
      %v5755 = vld [vmem:[%s5754] sm:$0xf]
      %v5756 = vld [vmem:[%s5754 + $0x4] sm:$0xf]
      %v5757 = vld [vmem:[%s5754 + $0x8] sm:$0xf]
      %v5758 = vld [vmem:[%s5754 + $0xc] sm:$0xf]
      %v5759 = vld [vmem:[%s5754 + $0x10] sm:$0xf]
      %v5760 = vld [vmem:[%s5754 + $0x14] sm:$0xf]
      %v5761 = vld [vmem:[%s5754 + $0x18] sm:$0xf]
      %v5762 = vld [vmem:[%s5754 + $0x1c] sm:$0xf]
      %v5763 = vld [vmem:[%s5754 + $0x20] sm:$0xf]
      %v5764 = vld [vmem:[%s5754 + $0x24] sm:$0xf]
      %v5765 = vld [vmem:[%s5754 + $0x28] sm:$0xf]
      %v5766 = vld [vmem:[%s5754 + $0x2c] sm:$0xf]
      %v5767 = vld [vmem:[%s5754 + $0x30] sm:$0xf]
      %v5768 = vld [vmem:[%s5754 + $0x34] sm:$0xf]
      %v5769 = vld [vmem:[%s5754 + $0x38] sm:$0xf]
      %v5770 = vld [vmem:[%s5754 + $0x3c] sm:$0xf]
      %v5787 = vunpack.c.l.b16 %v5755
      %v5788 = vunpack.c.l.b16 %v5756
      %v5789 = vunpack.c.l.b16 %v5757
      %v5790 = vunpack.c.l.b16 %v5758
      %v5791 = vunpack.c.l.b16 %v5759
      %v5792 = vunpack.c.l.b16 %v5760
      %v5793 = vunpack.c.l.b16 %v5761
      %v5794 = vunpack.c.l.b16 %v5762
      %v5795 = vunpack.c.l.b16 %v5763
      %v5796 = vunpack.c.l.b16 %v5764
      %v5797 = vunpack.c.l.b16 %v5765
      %v5798 = vunpack.c.l.b16 %v5766
      %v5799 = vunpack.c.l.b16 %v5767
      %v5800 = vunpack.c.l.b16 %v5768
      %v5801 = vunpack.c.l.b16 %v5769
      %v5802 = vunpack.c.l.b16 %v5770
      %v5803 = vpack.c.b16 %v5788, %v5787
      %v5804 = vpack.c.b16 %v5790, %v5789
      %v5805 = vpack.c.b16 %v5792, %v5791
      %v5806 = vpack.c.b16 %v5794, %v5793
      %v5807 = vpack.c.b16 %v5796, %v5795
      %v5808 = vpack.c.b16 %v5798, %v5797
      %v5809 = vpack.c.b16 %v5800, %v5799
      %v5810 = vpack.c.b16 %v5802, %v5801
      %5819 = vmatprep.subr.bf16.mxu0 0
      %5820 = vmatpush1.bf16.msra.mxu0 %v5803
      %5821 = vmatprep.subr.bf16.mxu0 0
      %5822 = vmatpush1.bf16.msra.mxu0 %v5804
      %5823 = vmatprep.subr.bf16.mxu0 0
      %5824 = vmatpush1.bf16.msra.mxu0 %v5805
      %5825 = vmatprep.subr.bf16.mxu0 0
      %5826 = vmatpush1.bf16.msra.mxu0 %v5806
      %5827 = vmatprep.subr.bf16.mxu0 0
      %5828 = vmatpush1.bf16.msra.mxu0 %v5807
      %5829 = vmatprep.subr.bf16.mxu0 0
      %5830 = vmatpush1.bf16.msra.mxu0 %v5808
      %5831 = vmatprep.subr.bf16.mxu0 0
      %5832 = vmatpush1.bf16.msra.mxu0 %v5809
      %5833 = vmatprep.subr.bf16.mxu0 0
      %5834 = vmatpush1.bf16.msra.mxu0 %v5810
      %5835 = vmatprep.subr.bf16.mxu0 0
      %5836 = vmatpush1.bf16.msra.mxu0 0
      %5837 = vmatprep.subr.bf16.mxu0 0
      %5838 = vmatpush1.bf16.msra.mxu0 0
      %5839 = vmatprep.subr.bf16.mxu0 0
      %5840 = vmatpush1.bf16.msra.mxu0 0
      %5841 = vmatprep.subr.bf16.mxu0 0
      %5842 = vmatpush1.bf16.msra.mxu0 0
      %5843 = vmatprep.subr.bf16.mxu0 0
      %5844 = vmatpush1.bf16.msra.mxu0 0
      %5845 = vmatprep.subr.bf16.mxu0 0
      %5846 = vmatpush1.bf16.msra.mxu0 0
      %5847 = vmatprep.subr.bf16.mxu0 0
      %5848 = vmatpush1.bf16.msra.mxu0 0
      %5849 = vmatprep.subr.bf16.mxu0 0
      %5850 = vmatpush1.bf16.msra.mxu0 0
      %5851 = vmatprep.mubr.bf16.mxu0 0
      %5852 = vmatmul.mubr.bf16.gmra.mrb[0].mxu0 %v283
      %v5853 = vpop.f32.mrb[0].mxu0
      %v5854 = vadd.f32 0.0, %v5853
      %v5855 = vpop.f32.mrb[0].mxu0
      %v5856 = vpop.f32.mrb[0].mxu0
      %v5857 = vadd.f32 0.0, %v5856
      %v5858 = vpop.f32.mrb[0].mxu0
      %5859 = vmatprep.mubr.bf16.mxu0 0
      %5860 = vmatmul.mubr.bf16.gmra.mrb[0].mxu0 %v284
      %v5861 = vpop.f32.mrb[0].mxu0
      %v5862 = vadd.f32 0.0, %v5861
      %v5863 = vpop.f32.mrb[0].mxu0
      %v5864 = vpop.f32.mrb[0].mxu0
      %v5865 = vadd.f32 0.0, %v5864
      %v5866 = vpop.f32.mrb[0].mxu0
      %5867 = vmatprep.mubr.bf16.mxu0 0
      %5868 = vmatmul.mubr.bf16.gmra.mrb[0].mxu0 %v285
      %v5869 = vpop.f32.mrb[0].mxu0
      %v5870 = vadd.f32 0.0, %v5869
      %v5871 = vpop.f32.mrb[0].mxu0
      %v5872 = vpop.f32.mrb[0].mxu0
      %v5873 = vadd.f32 0.0, %v5872
      %v5874 = vpop.f32.mrb[0].mxu0
      %5875 = vmatprep.mubr.bf16.mxu0 0
      %5876 = vmatmul.mubr.bf16.gmra.mrb[0].mxu0 %v286
      %v5877 = vpop.f32.mrb[0].mxu0
      %v5878 = vadd.f32 0.0, %v5877
      %v5879 = vpop.f32.mrb[0].mxu0
      %v5880 = vpop.f32.mrb[0].mxu0
      %v5881 = vadd.f32 0.0, %v5880
      %v5882 = vpop.f32.mrb[0].mxu0
      %5883 = vmatprep.mubr.bf16.mxu0 0
      %5884 = vmatmul.mubr.bf16.gmra.mrb[0].mxu0 %v287
      %v5885 = vpop.f32.mrb[0].mxu0
      %v5886 = vadd.f32 0.0, %v5885
      %v5887 = vpop.f32.mrb[0].mxu0
      %v5888 = vpop.f32.mrb[0].mxu0
      %v5889 = vadd.f32 0.0, %v5888
      %v5890 = vpop.f32.mrb[0].mxu0
      %5891 = vmatprep.mubr.bf16.mxu0 0
      %5892 = vmatmul.mubr.bf16.gmra.mrb[0].mxu0 %v288
      %v5893 = vpop.f32.mrb[0].mxu0
      %v5894 = vadd.f32 0.0, %v5893
      %v5895 = vpop.f32.mrb[0].mxu0
      %v5896 = vpop.f32.mrb[0].mxu0
      %v5897 = vadd.f32 0.0, %v5896
      %v5898 = vpop.f32.mrb[0].mxu0
      %5899 = vmatprep.mubr.bf16.mxu0 0
      %5900 = vmatmul.mubr.bf16.gmra.mrb[0].mxu0 %v289
      %v5901 = vpop.f32.mrb[0].mxu0
      %v5902 = vadd.f32 0.0, %v5901
      %v5903 = vpop.f32.mrb[0].mxu0
      %v5904 = vpop.f32.mrb[0].mxu0
      %v5905 = vadd.f32 0.0, %v5904
      %v5906 = vpop.f32.mrb[0].mxu0
      %5907 = vmatprep.mubr.bf16.mxu0 0
      %5908 = vmatmul.mubr.bf16.gmra.mrb[0].mxu0 %v290
      %v5909 = vpop.f32.mrb[0].mxu0
      %v5910 = vadd.f32 0.0, %v5909
      %v5911 = vpop.f32.mrb[0].mxu0
      %v5912 = vpop.f32.mrb[0].mxu0
      %v5913 = vadd.f32 0.0, %v5912
      %v5914 = vpop.f32.mrb[0].mxu0
      %5915 = vdwg.mxu0
      %v5916 = vpack.c.bf16 %v5857, %v5854
      %v5917 = vpack.c.bf16 %v5865, %v5862
      %v5918 = vpack.c.bf16 %v5873, %v5870
      %v5919 = vpack.c.bf16 %v5881, %v5878
      %v5920 = vpack.c.bf16 %v5889, %v5886
      %v5921 = vpack.c.bf16 %v5897, %v5894
      %v5922 = vpack.c.bf16 %v5905, %v5902
      %v5923 = vpack.c.bf16 %v5913, %v5910
      %s5924 = scalar_lea.vmem %s2, 320
      %v5925 = vld [vmem:[%s5924] sm:$0xf]
      %v5926 = vld [vmem:[%s5924 + $0x4] sm:$0xf]
      %v5927 = vld [vmem:[%s5924 + $0x8] sm:$0xf]
      %v5928 = vld [vmem:[%s5924 + $0xc] sm:$0xf]
      %v5929 = vld [vmem:[%s5924 + $0x10] sm:$0xf]
      %v5930 = vld [vmem:[%s5924 + $0x14] sm:$0xf]
      %v5931 = vld [vmem:[%s5924 + $0x18] sm:$0xf]
      %v5932 = vld [vmem:[%s5924 + $0x1c] sm:$0xf]
      %v5933 = vld [vmem:[%s5924 + $0x20] sm:$0xf]
      %v5934 = vld [vmem:[%s5924 + $0x24] sm:$0xf]
      %v5935 = vld [vmem:[%s5924 + $0x28] sm:$0xf]
      %v5936 = vld [vmem:[%s5924 + $0x2c] sm:$0xf]
      %v5937 = vld [vmem:[%s5924 + $0x30] sm:$0xf]
      %v5938 = vld [vmem:[%s5924 + $0x34] sm:$0xf]
      %v5939 = vld [vmem:[%s5924 + $0x38] sm:$0xf]
      %v5940 = vld [vmem:[%s5924 + $0x3c] sm:$0xf]
      %v5957 = vunpack.c.l.b16 %v5925
      %v5958 = vunpack.c.l.b16 %v5926
      %v5959 = vunpack.c.l.b16 %v5927
      %v5960 = vunpack.c.l.b16 %v5928
      %v5961 = vunpack.c.l.b16 %v5929
      %v5962 = vunpack.c.l.b16 %v5930
      %v5963 = vunpack.c.l.b16 %v5931
      %v5964 = vunpack.c.l.b16 %v5932
      %v5965 = vunpack.c.l.b16 %v5933
      %v5966 = vunpack.c.l.b16 %v5934
      %v5967 = vunpack.c.l.b16 %v5935
      %v5968 = vunpack.c.l.b16 %v5936
      %v5969 = vunpack.c.l.b16 %v5937
      %v5970 = vunpack.c.l.b16 %v5938
      %v5971 = vunpack.c.l.b16 %v5939
      %v5972 = vunpack.c.l.b16 %v5940
      %v5973 = vpack.c.b16 %v5958, %v5957
      %v5974 = vpack.c.b16 %v5960, %v5959
      %v5975 = vpack.c.b16 %v5962, %v5961
      %v5976 = vpack.c.b16 %v5964, %v5963
      %v5977 = vpack.c.b16 %v5966, %v5965
      %v5978 = vpack.c.b16 %v5968, %v5967
      %v5979 = vpack.c.b16 %v5970, %v5969
      %v5980 = vpack.c.b16 %v5972, %v5971
      %5989 = vmatprep.subr.bf16.mxu0 0
      %5990 = vmatpush1.bf16.msra.mxu0 %v5973
      %5991 = vmatprep.subr.bf16.mxu0 0
      %5992 = vmatpush1.bf16.msra.mxu0 %v5974
      %5993 = vmatprep.subr.bf16.mxu0 0
      %5994 = vmatpush1.bf16.msra.mxu0 %v5975
      %5995 = vmatprep.subr.bf16.mxu0 0
      %5996 = vmatpush1.bf16.msra.mxu0 %v5976
      %5997 = vmatprep.subr.bf16.mxu0 0
      %5998 = vmatpush1.bf16.msra.mxu0 %v5977
      %5999 = vmatprep.subr.bf16.mxu0 0
      %6000 = vmatpush1.bf16.msra.mxu0 %v5978
      %6001 = vmatprep.subr.bf16.mxu0 0
      %6002 = vmatpush1.bf16.msra.mxu0 %v5979
      %6003 = vmatprep.subr.bf16.mxu0 0
      %6004 = vmatpush1.bf16.msra.mxu0 %v5980
      %6005 = vmatprep.subr.bf16.mxu0 0
      %6006 = vmatpush1.bf16.msra.mxu0 0
      %6007 = vmatprep.subr.bf16.mxu0 0
      %6008 = vmatpush1.bf16.msra.mxu0 0
      %6009 = vmatprep.subr.bf16.mxu0 0
      %6010 = vmatpush1.bf16.msra.mxu0 0
      %6011 = vmatprep.subr.bf16.mxu0 0
      %6012 = vmatpush1.bf16.msra.mxu0 0
      %6013 = vmatprep.subr.bf16.mxu0 0
      %6014 = vmatpush1.bf16.msra.mxu0 0
      %6015 = vmatprep.subr.bf16.mxu0 0
      %6016 = vmatpush1.bf16.msra.mxu0 0
      %6017 = vmatprep.subr.bf16.mxu0 0
      %6018 = vmatpush1.bf16.msra.mxu0 0
      %6019 = vmatprep.subr.bf16.mxu0 0
      %6020 = vmatpush1.bf16.msra.mxu0 0
      %6021 = vmatprep.mubr.bf16.mxu0 0
      %6022 = vmatmul.mubr.bf16.gmra.mrb[0].mxu0 %v283
      %v6023 = vpop.f32.mrb[0].mxu0
      %v6024 = vadd.f32 0.0, %v6023
      %v6025 = vpop.f32.mrb[0].mxu0
      %v6026 = vpop.f32.mrb[0].mxu0
      %v6027 = vadd.f32 0.0, %v6026
      %v6028 = vpop.f32.mrb[0].mxu0
      %6029 = vmatprep.mubr.bf16.mxu0 0
      %6030 = vmatmul.mubr.bf16.gmra.mrb[0].mxu0 %v284
      %v6031 = vpop.f32.mrb[0].mxu0
      %v6032 = vadd.f32 0.0, %v6031
      %v6033 = vpop.f32.mrb[0].mxu0
      %v6034 = vpop.f32.mrb[0].mxu0
      %v6035 = vadd.f32 0.0, %v6034
      %v6036 = vpop.f32.mrb[0].mxu0
      %6037 = vmatprep.mubr.bf16.mxu0 0
      %6038 = vmatmul.mubr.bf16.gmra.mrb[0].mxu0 %v285
      %v6039 = vpop.f32.mrb[0].mxu0
      %v6040 = vadd.f32 0.0, %v6039
      %v6041 = vpop.f32.mrb[0].mxu0
      %v6042 = vpop.f32.mrb[0].mxu0
      %v6043 = vadd.f32 0.0, %v6042
      %v6044 = vpop.f32.mrb[0].mxu0
      %6045 = vmatprep.mubr.bf16.mxu0 0
      %6046 = vmatmul.mubr.bf16.gmra.mrb[0].mxu0 %v286
      %v6047 = vpop.f32.mrb[0].mxu0
      %v6048 = vadd.f32 0.0, %v6047
      %v6049 = vpop.f32.mrb[0].mxu0
      %v6050 = vpop.f32.mrb[0].mxu0
      %v6051 = vadd.f32 0.0, %v6050
      %v6052 = vpop.f32.mrb[0].mxu0
      %6053 = vmatprep.mubr.bf16.mxu0 0
      %6054 = vmatmul.mubr.bf16.gmra.mrb[0].mxu0 %v287
      %v6055 = vpop.f32.mrb[0].mxu0
      %v6056 = vadd.f32 0.0, %v6055
      %v6057 = vpop.f32.mrb[0].mxu0
      %v6058 = vpop.f32.mrb[0].mxu0
      %v6059 = vadd.f32 0.0, %v6058
      %v6060 = vpop.f32.mrb[0].mxu0
      %6061 = vmatprep.mubr.bf16.mxu0 0
      %6062 = vmatmul.mubr.bf16.gmra.mrb[0].mxu0 %v288
      %v6063 = vpop.f32.mrb[0].mxu0
      %v6064 = vadd.f32 0.0, %v6063
      %v6065 = vpop.f32.mrb[0].mxu0
      %v6066 = vpop.f32.mrb[0].mxu0
      %v6067 = vadd.f32 0.0, %v6066
      %v6068 = vpop.f32.mrb[0].mxu0
      %6069 = vmatprep.mubr.bf16.mxu0 0
      %6070 = vmatmul.mubr.bf16.gmra.mrb[0].mxu0 %v289
      %v6071 = vpop.f32.mrb[0].mxu0
      %v6072 = vadd.f32 0.0, %v6071
      %v6073 = vpop.f32.mrb[0].mxu0
      %v6074 = vpop.f32.mrb[0].mxu0
      %v6075 = vadd.f32 0.0, %v6074
      %v6076 = vpop.f32.mrb[0].mxu0
      %6077 = vmatprep.mubr.bf16.mxu0 0
      %6078 = vmatmul.mubr.bf16.gmra.mrb[0].mxu0 %v290
      %v6079 = vpop.f32.mrb[0].mxu0
      %v6080 = vadd.f32 0.0, %v6079
      %v6081 = vpop.f32.mrb[0].mxu0
      %v6082 = vpop.f32.mrb[0].mxu0
      %v6083 = vadd.f32 0.0, %v6082
      %v6084 = vpop.f32.mrb[0].mxu0
      %6085 = vdwg.mxu0
      %v6086 = vpack.c.bf16 %v6027, %v6024
      %v6087 = vpack.c.bf16 %v6035, %v6032
      %v6088 = vpack.c.bf16 %v6043, %v6040
      %v6089 = vpack.c.bf16 %v6051, %v6048
      %v6090 = vpack.c.bf16 %v6059, %v6056
      %v6091 = vpack.c.bf16 %v6067, %v6064
      %v6092 = vpack.c.bf16 %v6075, %v6072
      %v6093 = vpack.c.bf16 %v6083, %v6080
      %s6094 = scalar_lea.vmem %s3, 320
      %v6095 = vld [vmem:[%s6094] sm:$0xf]
      %v6096 = vld [vmem:[%s6094 + $0x4] sm:$0xf]
      %v6097 = vld [vmem:[%s6094 + $0x8] sm:$0xf]
      %v6098 = vld [vmem:[%s6094 + $0xc] sm:$0xf]
      %v6099 = vld [vmem:[%s6094 + $0x10] sm:$0xf]
      %v6100 = vld [vmem:[%s6094 + $0x14] sm:$0xf]
      %v6101 = vld [vmem:[%s6094 + $0x18] sm:$0xf]
      %v6102 = vld [vmem:[%s6094 + $0x1c] sm:$0xf]
      %v6103 = vld [vmem:[%s6094 + $0x20] sm:$0xf]
      %v6104 = vld [vmem:[%s6094 + $0x24] sm:$0xf]
      %v6105 = vld [vmem:[%s6094 + $0x28] sm:$0xf]
      %v6106 = vld [vmem:[%s6094 + $0x2c] sm:$0xf]
      %v6107 = vld [vmem:[%s6094 + $0x30] sm:$0xf]
      %v6108 = vld [vmem:[%s6094 + $0x34] sm:$0xf]
      %v6109 = vld [vmem:[%s6094 + $0x38] sm:$0xf]
      %v6110 = vld [vmem:[%s6094 + $0x3c] sm:$0xf]
      %v6127 = vunpack.c.l.b16 %v6095
      %v6128 = vunpack.c.l.b16 %v6096
      %v6129 = vunpack.c.l.b16 %v6097
      %v6130 = vunpack.c.l.b16 %v6098
      %v6131 = vunpack.c.l.b16 %v6099
      %v6132 = vunpack.c.l.b16 %v6100
      %v6133 = vunpack.c.l.b16 %v6101
      %v6134 = vunpack.c.l.b16 %v6102
      %v6135 = vunpack.c.l.b16 %v6103
      %v6136 = vunpack.c.l.b16 %v6104
      %v6137 = vunpack.c.l.b16 %v6105
      %v6138 = vunpack.c.l.b16 %v6106
      %v6139 = vunpack.c.l.b16 %v6107
      %v6140 = vunpack.c.l.b16 %v6108
      %v6141 = vunpack.c.l.b16 %v6109
      %v6142 = vunpack.c.l.b16 %v6110
      %v6143 = vpack.c.b16 %v6128, %v6127
      %v6144 = vpack.c.b16 %v6130, %v6129
      %v6145 = vpack.c.b16 %v6132, %v6131
      %v6146 = vpack.c.b16 %v6134, %v6133
      %v6147 = vpack.c.b16 %v6136, %v6135
      %v6148 = vpack.c.b16 %v6138, %v6137
      %v6149 = vpack.c.b16 %v6140, %v6139
      %v6150 = vpack.c.b16 %v6142, %v6141
      %6159 = vmatprep.subr.bf16.mxu0 0
      %6160 = vmatpush1.bf16.msra.mxu0 %v6143
      %6161 = vmatprep.subr.bf16.mxu0 0
      %6162 = vmatpush1.bf16.msra.mxu0 %v6144
      %6163 = vmatprep.subr.bf16.mxu0 0
      %6164 = vmatpush1.bf16.msra.mxu0 %v6145
      %6165 = vmatprep.subr.bf16.mxu0 0
      %6166 = vmatpush1.bf16.msra.mxu0 %v6146
      %6167 = vmatprep.subr.bf16.mxu0 0
      %6168 = vmatpush1.bf16.msra.mxu0 %v6147
      %6169 = vmatprep.subr.bf16.mxu0 0
      %6170 = vmatpush1.bf16.msra.mxu0 %v6148
      %6171 = vmatprep.subr.bf16.mxu0 0
      %6172 = vmatpush1.bf16.msra.mxu0 %v6149
      %6173 = vmatprep.subr.bf16.mxu0 0
      %6174 = vmatpush1.bf16.msra.mxu0 %v6150
      %6175 = vmatprep.subr.bf16.mxu0 0
      %6176 = vmatpush1.bf16.msra.mxu0 0
      %6177 = vmatprep.subr.bf16.mxu0 0
      %6178 = vmatpush1.bf16.msra.mxu0 0
      %6179 = vmatprep.subr.bf16.mxu0 0
      %6180 = vmatpush1.bf16.msra.mxu0 0
      %6181 = vmatprep.subr.bf16.mxu0 0
      %6182 = vmatpush1.bf16.msra.mxu0 0
      %6183 = vmatprep.subr.bf16.mxu0 0
      %6184 = vmatpush1.bf16.msra.mxu0 0
      %6185 = vmatprep.subr.bf16.mxu0 0
      %6186 = vmatpush1.bf16.msra.mxu0 0
      %6187 = vmatprep.subr.bf16.mxu0 0
      %6188 = vmatpush1.bf16.msra.mxu0 0
      %6189 = vmatprep.subr.bf16.mxu0 0
      %6190 = vmatpush1.bf16.msra.mxu0 0
      %6191 = vmatprep.mubr.bf16.mxu0 0
      %6192 = vmatmul.mubr.bf16.gmra.mrb[0].mxu0 %v283
      %v6193 = vpop.f32.mrb[0].mxu0
      %v6194 = vadd.f32 0.0, %v6193
      %v6195 = vpop.f32.mrb[0].mxu0
      %v6196 = vpop.f32.mrb[0].mxu0
      %v6197 = vadd.f32 0.0, %v6196
      %v6198 = vpop.f32.mrb[0].mxu0
      %6199 = vmatprep.mubr.bf16.mxu0 0
      %6200 = vmatmul.mubr.bf16.gmra.mrb[0].mxu0 %v284
      %v6201 = vpop.f32.mrb[0].mxu0
      %v6202 = vadd.f32 0.0, %v6201
      %v6203 = vpop.f32.mrb[0].mxu0
      %v6204 = vpop.f32.mrb[0].mxu0
      %v6205 = vadd.f32 0.0, %v6204
      %v6206 = vpop.f32.mrb[0].mxu0
      %6207 = vmatprep.mubr.bf16.mxu0 0
      %6208 = vmatmul.mubr.bf16.gmra.mrb[0].mxu0 %v285
      %v6209 = vpop.f32.mrb[0].mxu0
      %v6210 = vadd.f32 0.0, %v6209
      %v6211 = vpop.f32.mrb[0].mxu0
      %v6212 = vpop.f32.mrb[0].mxu0
      %v6213 = vadd.f32 0.0, %v6212
      %v6214 = vpop.f32.mrb[0].mxu0
      %6215 = vmatprep.mubr.bf16.mxu0 0
      %6216 = vmatmul.mubr.bf16.gmra.mrb[0].mxu0 %v286
      %v6217 = vpop.f32.mrb[0].mxu0
      %v6218 = vadd.f32 0.0, %v6217
      %v6219 = vpop.f32.mrb[0].mxu0
      %v6220 = vpop.f32.mrb[0].mxu0
      %v6221 = vadd.f32 0.0, %v6220
      %v6222 = vpop.f32.mrb[0].mxu0
      %6223 = vmatprep.mubr.bf16.mxu0 0
      %6224 = vmatmul.mubr.bf16.gmra.mrb[0].mxu0 %v287
      %v6225 = vpop.f32.mrb[0].mxu0
      %v6226 = vadd.f32 0.0, %v6225
      %v6227 = vpop.f32.mrb[0].mxu0
      %v6228 = vpop.f32.mrb[0].mxu0
      %v6229 = vadd.f32 0.0, %v6228
      %v6230 = vpop.f32.mrb[0].mxu0
      %6231 = vmatprep.mubr.bf16.mxu0 0
      %6232 = vmatmul.mubr.bf16.gmra.mrb[0].mxu0 %v288
      %v6233 = vpop.f32.mrb[0].mxu0
      %v6234 = vadd.f32 0.0, %v6233
      %v6235 = vpop.f32.mrb[0].mxu0
      %v6236 = vpop.f32.mrb[0].mxu0
      %v6237 = vadd.f32 0.0, %v6236
      %v6238 = vpop.f32.mrb[0].mxu0
      %6239 = vmatprep.mubr.bf16.mxu0 0
      %6240 = vmatmul.mubr.bf16.gmra.mrb[0].mxu0 %v289
      %v6241 = vpop.f32.mrb[0].mxu0
      %v6242 = vadd.f32 0.0, %v6241
      %v6243 = vpop.f32.mrb[0].mxu0
      %v6244 = vpop.f32.mrb[0].mxu0
      %v6245 = vadd.f32 0.0, %v6244
      %v6246 = vpop.f32.mrb[0].mxu0
      %6247 = vmatprep.mubr.bf16.mxu0 0
      %6248 = vmatmul.mubr.bf16.gmra.mrb[0].mxu0 %v290
      %v6249 = vpop.f32.mrb[0].mxu0
      %v6250 = vadd.f32 0.0, %v6249
      %v6251 = vpop.f32.mrb[0].mxu0
      %v6252 = vpop.f32.mrb[0].mxu0
      %v6253 = vadd.f32 0.0, %v6252
      %v6254 = vpop.f32.mrb[0].mxu0
      %6255 = vdwg.mxu0
      %v6256 = vpack.c.bf16 %v6197, %v6194
      %v6257 = vpack.c.bf16 %v6205, %v6202
      %v6258 = vpack.c.bf16 %v6213, %v6210
      %v6259 = vpack.c.bf16 %v6221, %v6218
      %v6260 = vpack.c.bf16 %v6229, %v6226
      %v6261 = vpack.c.bf16 %v6237, %v6234
      %v6262 = vpack.c.bf16 %v6245, %v6242
      %v6263 = vpack.c.bf16 %v6253, %v6250
      %v6265 = vsel %vm814, %v5916, 0
      %v6268 = vsel %vm814, %v5917, 0
      %v6271 = vsel %vm814, %v5918, 0
      %v6274 = vsel %vm814, %v5919, 0
      %v6277 = vsel %vm814, %v5920, 0
      %v6280 = vsel %vm814, %v5921, 0
      %v6283 = vsel %vm814, %v5922, 0
      %v6286 = vsel %vm814, %v5923, 0
      %v6289 = vsel %vm814, %v6086, 0
      %v6292 = vsel %vm814, %v6087, 0
      %v6295 = vsel %vm814, %v6088, 0
      %v6298 = vsel %vm814, %v6089, 0
      %v6301 = vsel %vm814, %v6090, 0
      %v6304 = vsel %vm814, %v6091, 0
      %v6307 = vsel %vm814, %v6092, 0
      %v6310 = vsel %vm814, %v6093, 0
      %6312 = vmatprep.subr.bf16.mxu0 0
      %6313 = vmatpush1.bf16.xpose.msra.mxu0 %v6289
      %6314 = vmatprep.subr.bf16.mxu0 0
      %6315 = vmatpush1.bf16.xpose.msra.mxu0 %v6292
      %6316 = vmatprep.subr.bf16.mxu0 0
      %6317 = vmatpush1.bf16.xpose.msra.mxu0 %v6295
      %6318 = vmatprep.subr.bf16.mxu0 0
      %6319 = vmatpush1.bf16.xpose.msra.mxu0 %v6298
      %6320 = vmatprep.subr.bf16.mxu0 0
      %6321 = vmatpush1.bf16.xpose.msra.mxu0 %v6301
      %6322 = vmatprep.subr.bf16.mxu0 0
      %6323 = vmatpush1.bf16.xpose.msra.mxu0 %v6304
      %6324 = vmatprep.subr.bf16.mxu0 0
      %6325 = vmatpush1.bf16.xpose.msra.mxu0 %v6307
      %6326 = vmatprep.subr.bf16.mxu0 0
      %6327 = vmatpush1.bf16.xpose.msra.mxu0 %v6310
      %6328 = vmatprep.subr.bf16.mxu0 0
      %6329 = vmatpush1.bf16.xpose.msra.mxu0 0
      %6330 = vmatprep.subr.bf16.mxu0 0
      %6331 = vmatpush1.bf16.xpose.msra.mxu0 0
      %6332 = vmatprep.subr.bf16.mxu0 0
      %6333 = vmatpush1.bf16.xpose.msra.mxu0 0
      %6334 = vmatprep.subr.bf16.mxu0 0
      %6335 = vmatpush1.bf16.xpose.msra.mxu0 0
      %6336 = vmatprep.subr.bf16.mxu0 0
      %6337 = vmatpush1.bf16.xpose.msra.mxu0 0
      %6338 = vmatprep.subr.bf16.mxu0 0
      %6339 = vmatpush1.bf16.xpose.msra.mxu0 0
      %6340 = vmatprep.subr.bf16.mxu0 0
      %6341 = vmatpush1.bf16.xpose.msra.mxu0 0
      %6342 = vmatprep.subr.bf16.mxu0 0
      %6343 = vmatpush1.bf16.xpose.msra.mxu0 0
      %6344 = vmatprep.mubr.bf16.mxu0 0
      %6345 = vmatmul.mubr.bf16.gmra.mrb[0].mxu0 %v6265
      %v6346 = vpop.f32.mrb[0].mxu0
      %v6347 = vadd.f32 0.0, %v6346
      %v6348 = vpop.f32.mrb[0].mxu0
      %v6349 = vpop.f32.mrb[0].mxu0
      %v6350 = vadd.f32 0.0, %v6349
      %v6351 = vpop.f32.mrb[0].mxu0
      %6352 = vmatprep.mubr.bf16.mxu0 0
      %6353 = vmatmul.mubr.bf16.gmra.mrb[0].mxu0 %v6268
      %v6354 = vpop.f32.mrb[0].mxu0
      %v6355 = vadd.f32 0.0, %v6354
      %v6356 = vpop.f32.mrb[0].mxu0
      %v6357 = vpop.f32.mrb[0].mxu0
      %v6358 = vadd.f32 0.0, %v6357
      %v6359 = vpop.f32.mrb[0].mxu0
      %6360 = vmatprep.mubr.bf16.mxu0 0
      %6361 = vmatmul.mubr.bf16.gmra.mrb[0].mxu0 %v6271
      %v6362 = vpop.f32.mrb[0].mxu0
      %v6363 = vadd.f32 0.0, %v6362
      %v6364 = vpop.f32.mrb[0].mxu0
      %v6365 = vpop.f32.mrb[0].mxu0
      %v6366 = vadd.f32 0.0, %v6365
      %v6367 = vpop.f32.mrb[0].mxu0
      %6368 = vmatprep.mubr.bf16.mxu0 0
      %6369 = vmatmul.mubr.bf16.gmra.mrb[0].mxu0 %v6274
      %v6370 = vpop.f32.mrb[0].mxu0
      %v6371 = vadd.f32 0.0, %v6370
      %v6372 = vpop.f32.mrb[0].mxu0
      %v6373 = vpop.f32.mrb[0].mxu0
      %v6374 = vadd.f32 0.0, %v6373
      %v6375 = vpop.f32.mrb[0].mxu0
      %6376 = vmatprep.mubr.bf16.mxu0 0
      %6377 = vmatmul.mubr.bf16.gmra.mrb[0].mxu0 %v6277
      %v6378 = vpop.f32.mrb[0].mxu0
      %v6379 = vadd.f32 0.0, %v6378
      %v6380 = vpop.f32.mrb[0].mxu0
      %v6381 = vpop.f32.mrb[0].mxu0
      %v6382 = vadd.f32 0.0, %v6381
      %v6383 = vpop.f32.mrb[0].mxu0
      %6384 = vmatprep.mubr.bf16.mxu0 0
      %6385 = vmatmul.mubr.bf16.gmra.mrb[0].mxu0 %v6280
      %v6386 = vpop.f32.mrb[0].mxu0
      %v6387 = vadd.f32 0.0, %v6386
      %v6388 = vpop.f32.mrb[0].mxu0
      %v6389 = vpop.f32.mrb[0].mxu0
      %v6390 = vadd.f32 0.0, %v6389
      %v6391 = vpop.f32.mrb[0].mxu0
      %6392 = vmatprep.mubr.bf16.mxu0 0
      %6393 = vmatmul.mubr.bf16.gmra.mrb[0].mxu0 %v6283
      %v6394 = vpop.f32.mrb[0].mxu0
      %v6395 = vadd.f32 0.0, %v6394
      %v6396 = vpop.f32.mrb[0].mxu0
      %v6397 = vpop.f32.mrb[0].mxu0
      %v6398 = vadd.f32 0.0, %v6397
      %v6399 = vpop.f32.mrb[0].mxu0
      %6400 = vmatprep.mubr.bf16.mxu0 0
      %6401 = vmatmul.mubr.bf16.gmra.mrb[0].mxu0 %v6286
      %v6402 = vpop.f32.mrb[0].mxu0
      %v6403 = vadd.f32 0.0, %v6402
      %v6404 = vpop.f32.mrb[0].mxu0
      %v6405 = vpop.f32.mrb[0].mxu0
      %v6406 = vadd.f32 0.0, %v6405
      %v6407 = vpop.f32.mrb[0].mxu0
      %6408 = vdwg.mxu0
      %6409 = vmax.xlane.f32.xlu0 %v6347
      %v6410 = vpop.xlane.xlu0 %6409
      %6411 = vmax.xlane.f32.xlu0 %v6350
      %v6412 = vpop.xlane.xlu0 %6411
      %6413 = vmax.xlane.f32.xlu0 %v6355
      %v6414 = vpop.xlane.xlu0 %6413
      %6415 = vmax.xlane.f32.xlu0 %v6358
      %v6416 = vpop.xlane.xlu0 %6415
      %6417 = vmax.xlane.f32.xlu0 %v6363
      %v6418 = vpop.xlane.xlu0 %6417
      %6419 = vmax.xlane.f32.xlu0 %v6366
      %v6420 = vpop.xlane.xlu0 %6419
      %6421 = vmax.xlane.f32.xlu0 %v6371
      %v6422 = vpop.xlane.xlu0 %6421
      %6423 = vmax.xlane.f32.xlu0 %v6374
      %v6424 = vpop.xlane.xlu0 %6423
      %6425 = vmax.xlane.f32.xlu0 %v6379
      %v6426 = vpop.xlane.xlu0 %6425
      %6427 = vmax.xlane.f32.xlu0 %v6382
      %v6428 = vpop.xlane.xlu0 %6427
      %6429 = vmax.xlane.f32.xlu0 %v6387
      %v6430 = vpop.xlane.xlu0 %6429
      %6431 = vmax.xlane.f32.xlu0 %v6390
      %v6432 = vpop.xlane.xlu0 %6431
      %6433 = vmax.xlane.f32.xlu0 %v6395
      %v6434 = vpop.xlane.xlu0 %6433
      %6435 = vmax.xlane.f32.xlu0 %v6398
      %v6436 = vpop.xlane.xlu0 %6435
      %6437 = vmax.xlane.f32.xlu0 %v6403
      %v6438 = vpop.xlane.xlu0 %6437
      %6439 = vmax.xlane.f32.xlu0 %v6406
      %v6440 = vpop.xlane.xlu0 %6439
      %v6441 = vsub.f32 %v6347, %v6410
      %v6442 = vsub.f32 %v6350, %v6412
      %v6443 = vsub.f32 %v6355, %v6414
      %v6444 = vsub.f32 %v6358, %v6416
      %v6445 = vsub.f32 %v6363, %v6418
      %v6446 = vsub.f32 %v6366, %v6420
      %v6447 = vsub.f32 %v6371, %v6422
      %v6448 = vsub.f32 %v6374, %v6424
      %v6449 = vsub.f32 %v6379, %v6426
      %v6450 = vsub.f32 %v6382, %v6428
      %v6451 = vsub.f32 %v6387, %v6430
      %v6452 = vsub.f32 %v6390, %v6432
      %v6453 = vsub.f32 %v6395, %v6434
      %v6454 = vsub.f32 %v6398, %v6436
      %v6455 = vsub.f32 %v6403, %v6438
      %v6456 = vsub.f32 %v6406, %v6440
      %v6457 = vmul.f32 %v6441, 1.442695
      %v6458 = vpow.pop %v6457
      %v6459 = vmul.f32 %v6442, 1.442695
      %v6460 = vpow.pop %v6459
      %v6461 = vmul.f32 %v6443, 1.442695
      %v6462 = vpow.pop %v6461
      %v6463 = vmul.f32 %v6444, 1.442695
      %v6464 = vpow.pop %v6463
      %v6465 = vmul.f32 %v6445, 1.442695
      %v6466 = vpow.pop %v6465
      %v6467 = vmul.f32 %v6446, 1.442695
      %v6468 = vpow.pop %v6467
      %v6469 = vmul.f32 %v6447, 1.442695
      %v6470 = vpow.pop %v6469
      %v6471 = vmul.f32 %v6448, 1.442695
      %v6472 = vpow.pop %v6471
      %v6473 = vmul.f32 %v6449, 1.442695
      %v6474 = vpow.pop %v6473
      %v6475 = vmul.f32 %v6450, 1.442695
      %v6476 = vpow.pop %v6475
      %v6477 = vmul.f32 %v6451, 1.442695
      %v6478 = vpow.pop %v6477
      %v6479 = vmul.f32 %v6452, 1.442695
      %v6480 = vpow.pop %v6479
      %v6481 = vmul.f32 %v6453, 1.442695
      %v6482 = vpow.pop %v6481
      %v6483 = vmul.f32 %v6454, 1.442695
      %v6484 = vpow.pop %v6483
      %v6485 = vmul.f32 %v6455, 1.442695
      %v6486 = vpow.pop %v6485
      %v6487 = vmul.f32 %v6456, 1.442695
      %v6488 = vpow.pop %v6487
      %6489 = vadd.xlane.f32.xlu0 %v6458
      %v6490 = vpop.xlane.xlu0 %6489
      %6491 = vadd.xlane.f32.xlu0 %v6460
      %v6492 = vpop.xlane.xlu0 %6491
      %6493 = vadd.xlane.f32.xlu0 %v6462
      %v6494 = vpop.xlane.xlu0 %6493
      %6495 = vadd.xlane.f32.xlu0 %v6464
      %v6496 = vpop.xlane.xlu0 %6495
      %6497 = vadd.xlane.f32.xlu0 %v6466
      %v6498 = vpop.xlane.xlu0 %6497
      %6499 = vadd.xlane.f32.xlu0 %v6468
      %v6500 = vpop.xlane.xlu0 %6499
      %6501 = vadd.xlane.f32.xlu0 %v6470
      %v6502 = vpop.xlane.xlu0 %6501
      %6503 = vadd.xlane.f32.xlu0 %v6472
      %v6504 = vpop.xlane.xlu0 %6503
      %6505 = vadd.xlane.f32.xlu0 %v6474
      %v6506 = vpop.xlane.xlu0 %6505
      %6507 = vadd.xlane.f32.xlu0 %v6476
      %v6508 = vpop.xlane.xlu0 %6507
      %6509 = vadd.xlane.f32.xlu0 %v6478
      %v6510 = vpop.xlane.xlu0 %6509
      %6511 = vadd.xlane.f32.xlu0 %v6480
      %v6512 = vpop.xlane.xlu0 %6511
      %6513 = vadd.xlane.f32.xlu0 %v6482
      %v6514 = vpop.xlane.xlu0 %6513
      %6515 = vadd.xlane.f32.xlu0 %v6484
      %v6516 = vpop.xlane.xlu0 %6515
      %6517 = vadd.xlane.f32.xlu0 %v6486
      %v6518 = vpop.xlane.xlu0 %6517
      %6519 = vadd.xlane.f32.xlu0 %v6488
      %v6520 = vpop.xlane.xlu0 %6519
      %v6521 = vrcp.pop %v6490
      %v6522 = vrcp.pop %v6492
      %v6523 = vrcp.pop %v6494
      %v6524 = vrcp.pop %v6496
      %v6525 = vrcp.pop %v6498
      %v6526 = vrcp.pop %v6500
      %v6527 = vrcp.pop %v6502
      %v6528 = vrcp.pop %v6504
      %v6529 = vrcp.pop %v6506
      %v6530 = vrcp.pop %v6508
      %v6531 = vrcp.pop %v6510
      %v6532 = vrcp.pop %v6512
      %v6533 = vrcp.pop %v6514
      %v6534 = vrcp.pop %v6516
      %v6535 = vrcp.pop %v6518
      %v6536 = vrcp.pop %v6520
      %v6537 = vmul.f32 %v6458, %v6521
      %v6538 = vmul.f32 %v6460, %v6522
      %v6539 = vmul.f32 %v6462, %v6523
      %v6540 = vmul.f32 %v6464, %v6524
      %v6541 = vmul.f32 %v6466, %v6525
      %v6542 = vmul.f32 %v6468, %v6526
      %v6543 = vmul.f32 %v6470, %v6527
      %v6544 = vmul.f32 %v6472, %v6528
      %v6545 = vmul.f32 %v6474, %v6529
      %v6546 = vmul.f32 %v6476, %v6530
      %v6547 = vmul.f32 %v6478, %v6531
      %v6548 = vmul.f32 %v6480, %v6532
      %v6549 = vmul.f32 %v6482, %v6533
      %v6550 = vmul.f32 %v6484, %v6534
      %v6551 = vmul.f32 %v6486, %v6535
      %v6552 = vmul.f32 %v6488, %v6536
      %v6553 = vpack.c.bf16 %v6538, %v6537
      %v6554 = vpack.c.bf16 %v6540, %v6539
      %v6555 = vpack.c.bf16 %v6542, %v6541
      %v6556 = vpack.c.bf16 %v6544, %v6543
      %v6557 = vpack.c.bf16 %v6546, %v6545
      %v6558 = vpack.c.bf16 %v6548, %v6547
      %v6559 = vpack.c.bf16 %v6550, %v6549
      %v6560 = vpack.c.bf16 %v6552, %v6551
      %6561 = vmatprep.subr.bf16.mxu0 0
      %6562 = vmatpush1.bf16.msra.mxu0 %v6256
      %6563 = vmatprep.subr.bf16.mxu0 0
      %6564 = vmatpush1.bf16.msra.mxu0 %v6257
      %6565 = vmatprep.subr.bf16.mxu0 0
      %6566 = vmatpush1.bf16.msra.mxu0 %v6258
      %6567 = vmatprep.subr.bf16.mxu0 0
      %6568 = vmatpush1.bf16.msra.mxu0 %v6259
      %6569 = vmatprep.subr.bf16.mxu0 0
      %6570 = vmatpush1.bf16.msra.mxu0 %v6260
      %6571 = vmatprep.subr.bf16.mxu0 0
      %6572 = vmatpush1.bf16.msra.mxu0 %v6261
      %6573 = vmatprep.subr.bf16.mxu0 0
      %6574 = vmatpush1.bf16.msra.mxu0 %v6262
      %6575 = vmatprep.subr.bf16.mxu0 0
      %6576 = vmatpush1.bf16.msra.mxu0 %v6263
      %6577 = vmatprep.subr.bf16.mxu0 0
      %6578 = vmatpush1.bf16.msra.mxu0 0
      %6579 = vmatprep.subr.bf16.mxu0 0
      %6580 = vmatpush1.bf16.msra.mxu0 0
      %6581 = vmatprep.subr.bf16.mxu0 0
      %6582 = vmatpush1.bf16.msra.mxu0 0
      %6583 = vmatprep.subr.bf16.mxu0 0
      %6584 = vmatpush1.bf16.msra.mxu0 0
      %6585 = vmatprep.subr.bf16.mxu0 0
      %6586 = vmatpush1.bf16.msra.mxu0 0
      %6587 = vmatprep.subr.bf16.mxu0 0
      %6588 = vmatpush1.bf16.msra.mxu0 0
      %6589 = vmatprep.subr.bf16.mxu0 0
      %6590 = vmatpush1.bf16.msra.mxu0 0
      %6591 = vmatprep.subr.bf16.mxu0 0
      %6592 = vmatpush1.bf16.msra.mxu0 0
      %6593 = vmatprep.mubr.bf16.mxu0 0
      %6594 = vmatmul.mubr.bf16.gmra.mrb[0].mxu0 %v6553
      %v6595 = vpop.f32.mrb[0].mxu0
      %v6596 = vadd.f32 0.0, %v6595
      %v6597 = vpop.f32.mrb[0].mxu0
      %v6598 = vpop.f32.mrb[0].mxu0
      %v6599 = vadd.f32 0.0, %v6598
      %v6600 = vpop.f32.mrb[0].mxu0
      %6601 = vmatprep.mubr.bf16.mxu0 0
      %6602 = vmatmul.mubr.bf16.gmra.mrb[0].mxu0 %v6554
      %v6603 = vpop.f32.mrb[0].mxu0
      %v6604 = vadd.f32 0.0, %v6603
      %v6605 = vpop.f32.mrb[0].mxu0
      %v6606 = vpop.f32.mrb[0].mxu0
      %v6607 = vadd.f32 0.0, %v6606
      %v6608 = vpop.f32.mrb[0].mxu0
      %6609 = vmatprep.mubr.bf16.mxu0 0
      %6610 = vmatmul.mubr.bf16.gmra.mrb[0].mxu0 %v6555
      %v6611 = vpop.f32.mrb[0].mxu0
      %v6612 = vadd.f32 0.0, %v6611
      %v6613 = vpop.f32.mrb[0].mxu0
      %v6614 = vpop.f32.mrb[0].mxu0
      %v6615 = vadd.f32 0.0, %v6614
      %v6616 = vpop.f32.mrb[0].mxu0
      %6617 = vmatprep.mubr.bf16.mxu0 0
      %6618 = vmatmul.mubr.bf16.gmra.mrb[0].mxu0 %v6556
      %v6619 = vpop.f32.mrb[0].mxu0
      %v6620 = vadd.f32 0.0, %v6619
      %v6621 = vpop.f32.mrb[0].mxu0
      %v6622 = vpop.f32.mrb[0].mxu0
      %v6623 = vadd.f32 0.0, %v6622
      %v6624 = vpop.f32.mrb[0].mxu0
      %6625 = vmatprep.mubr.bf16.mxu0 0
      %6626 = vmatmul.mubr.bf16.gmra.mrb[0].mxu0 %v6557
      %v6627 = vpop.f32.mrb[0].mxu0
      %v6628 = vadd.f32 0.0, %v6627
      %v6629 = vpop.f32.mrb[0].mxu0
      %v6630 = vpop.f32.mrb[0].mxu0
      %v6631 = vadd.f32 0.0, %v6630
      %v6632 = vpop.f32.mrb[0].mxu0
      %6633 = vmatprep.mubr.bf16.mxu0 0
      %6634 = vmatmul.mubr.bf16.gmra.mrb[0].mxu0 %v6558
      %v6635 = vpop.f32.mrb[0].mxu0
      %v6636 = vadd.f32 0.0, %v6635
      %v6637 = vpop.f32.mrb[0].mxu0
      %v6638 = vpop.f32.mrb[0].mxu0
      %v6639 = vadd.f32 0.0, %v6638
      %v6640 = vpop.f32.mrb[0].mxu0
      %6641 = vmatprep.mubr.bf16.mxu0 0
      %6642 = vmatmul.mubr.bf16.gmra.mrb[0].mxu0 %v6559
      %v6643 = vpop.f32.mrb[0].mxu0
      %v6644 = vadd.f32 0.0, %v6643
      %v6645 = vpop.f32.mrb[0].mxu0
      %v6646 = vpop.f32.mrb[0].mxu0
      %v6647 = vadd.f32 0.0, %v6646
      %v6648 = vpop.f32.mrb[0].mxu0
      %6649 = vmatprep.mubr.bf16.mxu0 0
      %6650 = vmatmul.mubr.bf16.gmra.mrb[0].mxu0 %v6560
      %v6651 = vpop.f32.mrb[0].mxu0
      %v6652 = vadd.f32 0.0, %v6651
      %v6653 = vpop.f32.mrb[0].mxu0
      %v6654 = vpop.f32.mrb[0].mxu0
      %v6655 = vadd.f32 0.0, %v6654
      %v6656 = vpop.f32.mrb[0].mxu0
      %6657 = vdwg.mxu0
      %v6658 = vpack.c.bf16 %v6599, %v6596
      %v6659 = vpack.c.bf16 %v6607, %v6604
      %v6660 = vpack.c.bf16 %v6615, %v6612
      %v6661 = vpack.c.bf16 %v6623, %v6620
      %v6662 = vpack.c.bf16 %v6631, %v6628
      %v6663 = vpack.c.bf16 %v6639, %v6636
      %v6664 = vpack.c.bf16 %v6647, %v6644
      %v6665 = vpack.c.bf16 %v6655, %v6652
      %v6666 = vld [vmem:[#allocation2] sm:$0xff]
      %v6667 = vld [vmem:[#allocation2 + $0x8] sm:$0xff]
      %v6668 = vld [vmem:[#allocation2 + $0x10] sm:$0xff]
      %v6669 = vld [vmem:[#allocation2 + $0x18] sm:$0xff]
      %v6670 = vld [vmem:[#allocation2 + $0x20] sm:$0xff]
      %v6671 = vld [vmem:[#allocation2 + $0x28] sm:$0xff]
      %v6672 = vld [vmem:[#allocation2 + $0x30] sm:$0xff]
      %v6673 = vld [vmem:[#allocation2 + $0x38] sm:$0xff]
      %v6674 = vld [vmem:[#allocation2 + $0x40] sm:$0xff]
      %v6675 = vld [vmem:[#allocation2 + $0x48] sm:$0xff]
      %v6676 = vld [vmem:[#allocation2 + $0x50] sm:$0xff]
      %v6677 = vld [vmem:[#allocation2 + $0x58] sm:$0xff]
      %v6678 = vld [vmem:[#allocation2 + $0x60] sm:$0xff]
      %v6679 = vld [vmem:[#allocation2 + $0x68] sm:$0xff]
      %v6680 = vld [vmem:[#allocation2 + $0x70] sm:$0xff]
      %v6681 = vld [vmem:[#allocation2 + $0x78] sm:$0xff]
      %s6682 = scalar_lea.vmem %s4, 40
      %v6683 = vld [vmem:[%s6682] sm:$0xf]
      %v6684 = vld [vmem:[%s6682 + $0x4] sm:$0xf]
      %v6687 = vunpack.c.l.b16 %v6683
      %v6688 = vunpack.c.l.b16 %v6684
      %v6689 = vpack.c.b16 %v6688, %v6687
      %v6692 = vsel %vm814, %v6658, 0
      %v6695 = vsel %vm814, %v6659, 0
      %v6698 = vsel %vm814, %v6660, 0
      %v6701 = vsel %vm814, %v6661, 0
      %v6704 = vsel %vm814, %v6662, 0
      %v6707 = vsel %vm814, %v6663, 0
      %v6710 = vsel %vm814, %v6664, 0
      %v6713 = vsel %vm814, %v6665, 0
      %6715 = vmatprep.subr.bf16.mxu0 0
      %6716 = vmatpush1.bf16.msra.mxu0 %v6689
      %6717 = vmatprep.subr.bf16.mxu0 0
      %6718 = vmatpush1.bf16.msra.mxu0 0
      %6719 = vmatprep.subr.bf16.mxu0 0
      %6720 = vmatpush1.bf16.msra.mxu0 0
      %6721 = vmatprep.subr.bf16.mxu0 0
      %6722 = vmatpush1.bf16.msra.mxu0 0
      %6723 = vmatprep.subr.bf16.mxu0 0
      %6724 = vmatpush1.bf16.msra.mxu0 0
      %6725 = vmatprep.subr.bf16.mxu0 0
      %6726 = vmatpush1.bf16.msra.mxu0 0
      %6727 = vmatprep.subr.bf16.mxu0 0
      %6728 = vmatpush1.bf16.msra.mxu0 0
      %6729 = vmatprep.subr.bf16.mxu0 0
      %6730 = vmatpush1.bf16.msra.mxu0 0
      %6731 = vmatprep.subr.bf16.mxu0 0
      %6732 = vmatpush1.bf16.msra.mxu0 0
      %6733 = vmatprep.subr.bf16.mxu0 0
      %6734 = vmatpush1.bf16.msra.mxu0 0
      %6735 = vmatprep.subr.bf16.mxu0 0
      %6736 = vmatpush1.bf16.msra.mxu0 0
      %6737 = vmatprep.subr.bf16.mxu0 0
      %6738 = vmatpush1.bf16.msra.mxu0 0
      %6739 = vmatprep.subr.bf16.mxu0 0
      %6740 = vmatpush1.bf16.msra.mxu0 0
      %6741 = vmatprep.subr.bf16.mxu0 0
      %6742 = vmatpush1.bf16.msra.mxu0 0
      %6743 = vmatprep.subr.bf16.mxu0 0
      %6744 = vmatpush1.bf16.msra.mxu0 0
      %6745 = vmatprep.subr.bf16.mxu0 0
      %6746 = vmatpush1.bf16.msra.mxu0 0
      %6747 = vmatprep.mubr.bf16.mxu0 0
      %6748 = vmatmul.mubr.bf16.gmra.mrb[0].mxu0 %v6692
      %v6749 = vpop.f32.mrb[0].mxu0
      %v6750 = vadd.f32 0.0, %v6749
      %v6751 = vpop.f32.mrb[0].mxu0
      %v6752 = vpop.f32.mrb[0].mxu0
      %v6753 = vadd.f32 0.0, %v6752
      %v6754 = vpop.f32.mrb[0].mxu0
      %6755 = vmatprep.mubr.bf16.mxu0 0
      %6756 = vmatmul.mubr.bf16.gmra.mrb[0].mxu0 %v6695
      %v6757 = vpop.f32.mrb[0].mxu0
      %v6758 = vadd.f32 0.0, %v6757
      %v6759 = vpop.f32.mrb[0].mxu0
      %v6760 = vpop.f32.mrb[0].mxu0
      %v6761 = vadd.f32 0.0, %v6760
      %v6762 = vpop.f32.mrb[0].mxu0
      %6763 = vmatprep.mubr.bf16.mxu0 0
      %6764 = vmatmul.mubr.bf16.gmra.mrb[0].mxu0 %v6698
      %v6765 = vpop.f32.mrb[0].mxu0
      %v6766 = vadd.f32 0.0, %v6765
      %v6767 = vpop.f32.mrb[0].mxu0
      %v6768 = vpop.f32.mrb[0].mxu0
      %v6769 = vadd.f32 0.0, %v6768
      %v6770 = vpop.f32.mrb[0].mxu0
      %6771 = vmatprep.mubr.bf16.mxu0 0
      %6772 = vmatmul.mubr.bf16.gmra.mrb[0].mxu0 %v6701
      %v6773 = vpop.f32.mrb[0].mxu0
      %v6774 = vadd.f32 0.0, %v6773
      %v6775 = vpop.f32.mrb[0].mxu0
      %v6776 = vpop.f32.mrb[0].mxu0
      %v6777 = vadd.f32 0.0, %v6776
      %v6778 = vpop.f32.mrb[0].mxu0
      %6779 = vmatprep.mubr.bf16.mxu0 0
      %6780 = vmatmul.mubr.bf16.gmra.mrb[0].mxu0 %v6704
      %v6781 = vpop.f32.mrb[0].mxu0
      %v6782 = vadd.f32 0.0, %v6781
      %v6783 = vpop.f32.mrb[0].mxu0
      %v6784 = vpop.f32.mrb[0].mxu0
      %v6785 = vadd.f32 0.0, %v6784
      %v6786 = vpop.f32.mrb[0].mxu0
      %6787 = vmatprep.mubr.bf16.mxu0 0
      %6788 = vmatmul.mubr.bf16.gmra.mrb[0].mxu0 %v6707
      %v6789 = vpop.f32.mrb[0].mxu0
      %v6790 = vadd.f32 0.0, %v6789
      %v6791 = vpop.f32.mrb[0].mxu0
      %v6792 = vpop.f32.mrb[0].mxu0
      %v6793 = vadd.f32 0.0, %v6792
      %v6794 = vpop.f32.mrb[0].mxu0
      %6795 = vmatprep.mubr.bf16.mxu0 0
      %6796 = vmatmul.mubr.bf16.gmra.mrb[0].mxu0 %v6710
      %v6797 = vpop.f32.mrb[0].mxu0
      %v6798 = vadd.f32 0.0, %v6797
      %v6799 = vpop.f32.mrb[0].mxu0
      %v6800 = vpop.f32.mrb[0].mxu0
      %v6801 = vadd.f32 0.0, %v6800
      %v6802 = vpop.f32.mrb[0].mxu0
      %6803 = vmatprep.mubr.bf16.mxu0 0
      %6804 = vmatmul.mubr.bf16.gmra.mrb[0].mxu0 %v6713
      %v6805 = vpop.f32.mrb[0].mxu0
      %v6806 = vadd.f32 0.0, %v6805
      %v6807 = vpop.f32.mrb[0].mxu0
      %v6808 = vpop.f32.mrb[0].mxu0
      %v6809 = vadd.f32 0.0, %v6808
      %v6810 = vpop.f32.mrb[0].mxu0
      %6811 = vdwg.mxu0
      %v6812 = vadd.f32 %v6666, %v6750
      %v6813 = vadd.f32 %v6667, %v6753
      %v6814 = vadd.f32 %v6668, %v6758
      %v6815 = vadd.f32 %v6669, %v6761
      %v6816 = vadd.f32 %v6670, %v6766
      %v6817 = vadd.f32 %v6671, %v6769
      %v6818 = vadd.f32 %v6672, %v6774
      %v6819 = vadd.f32 %v6673, %v6777
      %v6820 = vadd.f32 %v6674, %v6782
      %v6821 = vadd.f32 %v6675, %v6785
      %v6822 = vadd.f32 %v6676, %v6790
      %v6823 = vadd.f32 %v6677, %v6793
      %v6824 = vadd.f32 %v6678, %v6798
      %v6825 = vadd.f32 %v6679, %v6801
      %v6826 = vadd.f32 %v6680, %v6806
      %v6827 = vadd.f32 %v6681, %v6809
      %6828 = vst [vmem:[#allocation2] sm:$0xff] %v6812
      %6829 = vst [vmem:[#allocation2 + $0x8] sm:$0xff] %v6813
      %6830 = vst [vmem:[#allocation2 + $0x10] sm:$0xff] %v6814
      %6831 = vst [vmem:[#allocation2 + $0x18] sm:$0xff] %v6815
      %6832 = vst [vmem:[#allocation2 + $0x20] sm:$0xff] %v6816
      %6833 = vst [vmem:[#allocation2 + $0x28] sm:$0xff] %v6817
      %6834 = vst [vmem:[#allocation2 + $0x30] sm:$0xff] %v6818
      %6835 = vst [vmem:[#allocation2 + $0x38] sm:$0xff] %v6819
      %6836 = vst [vmem:[#allocation2 + $0x40] sm:$0xff] %v6820
      %6837 = vst [vmem:[#allocation2 + $0x48] sm:$0xff] %v6821
      %6838 = vst [vmem:[#allocation2 + $0x50] sm:$0xff] %v6822
      %6839 = vst [vmem:[#allocation2 + $0x58] sm:$0xff] %v6823
      %6840 = vst [vmem:[#allocation2 + $0x60] sm:$0xff] %v6824
      %6841 = vst [vmem:[#allocation2 + $0x68] sm:$0xff] %v6825
      %6842 = vst [vmem:[#allocation2 + $0x70] sm:$0xff] %v6826
      %6843 = vst [vmem:[#allocation2 + $0x78] sm:$0xff] %v6827
      %s6844 = scalar_lea.vmem %s1, 384
      %v6845 = vld [vmem:[%s6844] sm:$0xf]
      %v6846 = vld [vmem:[%s6844 + $0x4] sm:$0xf]
      %v6847 = vld [vmem:[%s6844 + $0x8] sm:$0xf]
      %v6848 = vld [vmem:[%s6844 + $0xc] sm:$0xf]
      %v6849 = vld [vmem:[%s6844 + $0x10] sm:$0xf]
      %v6850 = vld [vmem:[%s6844 + $0x14] sm:$0xf]
      %v6851 = vld [vmem:[%s6844 + $0x18] sm:$0xf]
      %v6852 = vld [vmem:[%s6844 + $0x1c] sm:$0xf]
      %v6853 = vld [vmem:[%s6844 + $0x20] sm:$0xf]
      %v6854 = vld [vmem:[%s6844 + $0x24] sm:$0xf]
      %v6855 = vld [vmem:[%s6844 + $0x28] sm:$0xf]
      %v6856 = vld [vmem:[%s6844 + $0x2c] sm:$0xf]
      %v6857 = vld [vmem:[%s6844 + $0x30] sm:$0xf]
      %v6858 = vld [vmem:[%s6844 + $0x34] sm:$0xf]
      %v6859 = vld [vmem:[%s6844 + $0x38] sm:$0xf]
      %v6860 = vld [vmem:[%s6844 + $0x3c] sm:$0xf]
      %v6877 = vunpack.c.l.b16 %v6845
      %v6878 = vunpack.c.l.b16 %v6846
      %v6879 = vunpack.c.l.b16 %v6847
      %v6880 = vunpack.c.l.b16 %v6848
      %v6881 = vunpack.c.l.b16 %v6849
      %v6882 = vunpack.c.l.b16 %v6850
      %v6883 = vunpack.c.l.b16 %v6851
      %v6884 = vunpack.c.l.b16 %v6852
      %v6885 = vunpack.c.l.b16 %v6853
      %v6886 = vunpack.c.l.b16 %v6854
      %v6887 = vunpack.c.l.b16 %v6855
      %v6888 = vunpack.c.l.b16 %v6856
      %v6889 = vunpack.c.l.b16 %v6857
      %v6890 = vunpack.c.l.b16 %v6858
      %v6891 = vunpack.c.l.b16 %v6859
      %v6892 = vunpack.c.l.b16 %v6860
      %v6893 = vpack.c.b16 %v6878, %v6877
      %v6894 = vpack.c.b16 %v6880, %v6879
      %v6895 = vpack.c.b16 %v6882, %v6881
      %v6896 = vpack.c.b16 %v6884, %v6883
      %v6897 = vpack.c.b16 %v6886, %v6885
      %v6898 = vpack.c.b16 %v6888, %v6887
      %v6899 = vpack.c.b16 %v6890, %v6889
      %v6900 = vpack.c.b16 %v6892, %v6891
      %6909 = vmatprep.subr.bf16.mxu0 0
      %6910 = vmatpush1.bf16.msra.mxu0 %v6893
      %6911 = vmatprep.subr.bf16.mxu0 0
      %6912 = vmatpush1.bf16.msra.mxu0 %v6894
      %6913 = vmatprep.subr.bf16.mxu0 0
      %6914 = vmatpush1.bf16.msra.mxu0 %v6895
      %6915 = vmatprep.subr.bf16.mxu0 0
      %6916 = vmatpush1.bf16.msra.mxu0 %v6896
      %6917 = vmatprep.subr.bf16.mxu0 0
      %6918 = vmatpush1.bf16.msra.mxu0 %v6897
      %6919 = vmatprep.subr.bf16.mxu0 0
      %6920 = vmatpush1.bf16.msra.mxu0 %v6898
      %6921 = vmatprep.subr.bf16.mxu0 0
      %6922 = vmatpush1.bf16.msra.mxu0 %v6899
      %6923 = vmatprep.subr.bf16.mxu0 0
      %6924 = vmatpush1.bf16.msra.mxu0 %v6900
      %6925 = vmatprep.subr.bf16.mxu0 0
      %6926 = vmatpush1.bf16.msra.mxu0 0
      %6927 = vmatprep.subr.bf16.mxu0 0
      %6928 = vmatpush1.bf16.msra.mxu0 0
      %6929 = vmatprep.subr.bf16.mxu0 0
      %6930 = vmatpush1.bf16.msra.mxu0 0
      %6931 = vmatprep.subr.bf16.mxu0 0
      %6932 = vmatpush1.bf16.msra.mxu0 0
      %6933 = vmatprep.subr.bf16.mxu0 0
      %6934 = vmatpush1.bf16.msra.mxu0 0
      %6935 = vmatprep.subr.bf16.mxu0 0
      %6936 = vmatpush1.bf16.msra.mxu0 0
      %6937 = vmatprep.subr.bf16.mxu0 0
      %6938 = vmatpush1.bf16.msra.mxu0 0
      %6939 = vmatprep.subr.bf16.mxu0 0
      %6940 = vmatpush1.bf16.msra.mxu0 0
      %6941 = vmatprep.mubr.bf16.mxu0 0
      %6942 = vmatmul.mubr.bf16.gmra.mrb[0].mxu0 %v283
      %v6943 = vpop.f32.mrb[0].mxu0
      %v6944 = vadd.f32 0.0, %v6943
      %v6945 = vpop.f32.mrb[0].mxu0
      %v6946 = vpop.f32.mrb[0].mxu0
      %v6947 = vadd.f32 0.0, %v6946
      %v6948 = vpop.f32.mrb[0].mxu0
      %6949 = vmatprep.mubr.bf16.mxu0 0
      %6950 = vmatmul.mubr.bf16.gmra.mrb[0].mxu0 %v284
      %v6951 = vpop.f32.mrb[0].mxu0
      %v6952 = vadd.f32 0.0, %v6951
      %v6953 = vpop.f32.mrb[0].mxu0
      %v6954 = vpop.f32.mrb[0].mxu0
      %v6955 = vadd.f32 0.0, %v6954
      %v6956 = vpop.f32.mrb[0].mxu0
      %6957 = vmatprep.mubr.bf16.mxu0 0
      %6958 = vmatmul.mubr.bf16.gmra.mrb[0].mxu0 %v285
      %v6959 = vpop.f32.mrb[0].mxu0
      %v6960 = vadd.f32 0.0, %v6959
      %v6961 = vpop.f32.mrb[0].mxu0
      %v6962 = vpop.f32.mrb[0].mxu0
      %v6963 = vadd.f32 0.0, %v6962
      %v6964 = vpop.f32.mrb[0].mxu0
      %6965 = vmatprep.mubr.bf16.mxu0 0
      %6966 = vmatmul.mubr.bf16.gmra.mrb[0].mxu0 %v286
      %v6967 = vpop.f32.mrb[0].mxu0
      %v6968 = vadd.f32 0.0, %v6967
      %v6969 = vpop.f32.mrb[0].mxu0
      %v6970 = vpop.f32.mrb[0].mxu0
      %v6971 = vadd.f32 0.0, %v6970
      %v6972 = vpop.f32.mrb[0].mxu0
      %6973 = vmatprep.mubr.bf16.mxu0 0
      %6974 = vmatmul.mubr.bf16.gmra.mrb[0].mxu0 %v287
      %v6975 = vpop.f32.mrb[0].mxu0
      %v6976 = vadd.f32 0.0, %v6975
      %v6977 = vpop.f32.mrb[0].mxu0
      %v6978 = vpop.f32.mrb[0].mxu0
      %v6979 = vadd.f32 0.0, %v6978
      %v6980 = vpop.f32.mrb[0].mxu0
      %6981 = vmatprep.mubr.bf16.mxu0 0
      %6982 = vmatmul.mubr.bf16.gmra.mrb[0].mxu0 %v288
      %v6983 = vpop.f32.mrb[0].mxu0
      %v6984 = vadd.f32 0.0, %v6983
      %v6985 = vpop.f32.mrb[0].mxu0
      %v6986 = vpop.f32.mrb[0].mxu0
      %v6987 = vadd.f32 0.0, %v6986
      %v6988 = vpop.f32.mrb[0].mxu0
      %6989 = vmatprep.mubr.bf16.mxu0 0
      %6990 = vmatmul.mubr.bf16.gmra.mrb[0].mxu0 %v289
      %v6991 = vpop.f32.mrb[0].mxu0
      %v6992 = vadd.f32 0.0, %v6991
      %v6993 = vpop.f32.mrb[0].mxu0
      %v6994 = vpop.f32.mrb[0].mxu0
      %v6995 = vadd.f32 0.0, %v6994
      %v6996 = vpop.f32.mrb[0].mxu0
      %6997 = vmatprep.mubr.bf16.mxu0 0
      %6998 = vmatmul.mubr.bf16.gmra.mrb[0].mxu0 %v290
      %v6999 = vpop.f32.mrb[0].mxu0
      %v7000 = vadd.f32 0.0, %v6999
      %v7001 = vpop.f32.mrb[0].mxu0
      %v7002 = vpop.f32.mrb[0].mxu0
      %v7003 = vadd.f32 0.0, %v7002
      %v7004 = vpop.f32.mrb[0].mxu0
      %7005 = vdwg.mxu0
      %v7006 = vpack.c.bf16 %v6947, %v6944
      %v7007 = vpack.c.bf16 %v6955, %v6952
      %v7008 = vpack.c.bf16 %v6963, %v6960
      %v7009 = vpack.c.bf16 %v6971, %v6968
      %v7010 = vpack.c.bf16 %v6979, %v6976
      %v7011 = vpack.c.bf16 %v6987, %v6984
      %v7012 = vpack.c.bf16 %v6995, %v6992
      %v7013 = vpack.c.bf16 %v7003, %v7000
      %s7014 = scalar_lea.vmem %s2, 384
      %v7015 = vld [vmem:[%s7014] sm:$0xf]
      %v7016 = vld [vmem:[%s7014 + $0x4] sm:$0xf]
      %v7017 = vld [vmem:[%s7014 + $0x8] sm:$0xf]
      %v7018 = vld [vmem:[%s7014 + $0xc] sm:$0xf]
      %v7019 = vld [vmem:[%s7014 + $0x10] sm:$0xf]
      %v7020 = vld [vmem:[%s7014 + $0x14] sm:$0xf]
      %v7021 = vld [vmem:[%s7014 + $0x18] sm:$0xf]
      %v7022 = vld [vmem:[%s7014 + $0x1c] sm:$0xf]
      %v7023 = vld [vmem:[%s7014 + $0x20] sm:$0xf]
      %v7024 = vld [vmem:[%s7014 + $0x24] sm:$0xf]
      %v7025 = vld [vmem:[%s7014 + $0x28] sm:$0xf]
      %v7026 = vld [vmem:[%s7014 + $0x2c] sm:$0xf]
      %v7027 = vld [vmem:[%s7014 + $0x30] sm:$0xf]
      %v7028 = vld [vmem:[%s7014 + $0x34] sm:$0xf]
      %v7029 = vld [vmem:[%s7014 + $0x38] sm:$0xf]
      %v7030 = vld [vmem:[%s7014 + $0x3c] sm:$0xf]
      %v7047 = vunpack.c.l.b16 %v7015
      %v7048 = vunpack.c.l.b16 %v7016
      %v7049 = vunpack.c.l.b16 %v7017
      %v7050 = vunpack.c.l.b16 %v7018
      %v7051 = vunpack.c.l.b16 %v7019
      %v7052 = vunpack.c.l.b16 %v7020
      %v7053 = vunpack.c.l.b16 %v7021
      %v7054 = vunpack.c.l.b16 %v7022
      %v7055 = vunpack.c.l.b16 %v7023
      %v7056 = vunpack.c.l.b16 %v7024
      %v7057 = vunpack.c.l.b16 %v7025
      %v7058 = vunpack.c.l.b16 %v7026
      %v7059 = vunpack.c.l.b16 %v7027
      %v7060 = vunpack.c.l.b16 %v7028
      %v7061 = vunpack.c.l.b16 %v7029
      %v7062 = vunpack.c.l.b16 %v7030
      %v7063 = vpack.c.b16 %v7048, %v7047
      %v7064 = vpack.c.b16 %v7050, %v7049
      %v7065 = vpack.c.b16 %v7052, %v7051
      %v7066 = vpack.c.b16 %v7054, %v7053
      %v7067 = vpack.c.b16 %v7056, %v7055
      %v7068 = vpack.c.b16 %v7058, %v7057
      %v7069 = vpack.c.b16 %v7060, %v7059
      %v7070 = vpack.c.b16 %v7062, %v7061
      %7079 = vmatprep.subr.bf16.mxu0 0
      %7080 = vmatpush1.bf16.msra.mxu0 %v7063
      %7081 = vmatprep.subr.bf16.mxu0 0
      %7082 = vmatpush1.bf16.msra.mxu0 %v7064
      %7083 = vmatprep.subr.bf16.mxu0 0
      %7084 = vmatpush1.bf16.msra.mxu0 %v7065
      %7085 = vmatprep.subr.bf16.mxu0 0
      %7086 = vmatpush1.bf16.msra.mxu0 %v7066
      %7087 = vmatprep.subr.bf16.mxu0 0
      %7088 = vmatpush1.bf16.msra.mxu0 %v7067
      %7089 = vmatprep.subr.bf16.mxu0 0
      %7090 = vmatpush1.bf16.msra.mxu0 %v7068
      %7091 = vmatprep.subr.bf16.mxu0 0
      %7092 = vmatpush1.bf16.msra.mxu0 %v7069
      %7093 = vmatprep.subr.bf16.mxu0 0
      %7094 = vmatpush1.bf16.msra.mxu0 %v7070
      %7095 = vmatprep.subr.bf16.mxu0 0
      %7096 = vmatpush1.bf16.msra.mxu0 0
      %7097 = vmatprep.subr.bf16.mxu0 0
      %7098 = vmatpush1.bf16.msra.mxu0 0
      %7099 = vmatprep.subr.bf16.mxu0 0
      %7100 = vmatpush1.bf16.msra.mxu0 0
      %7101 = vmatprep.subr.bf16.mxu0 0
      %7102 = vmatpush1.bf16.msra.mxu0 0
      %7103 = vmatprep.subr.bf16.mxu0 0
      %7104 = vmatpush1.bf16.msra.mxu0 0
      %7105 = vmatprep.subr.bf16.mxu0 0
      %7106 = vmatpush1.bf16.msra.mxu0 0
      %7107 = vmatprep.subr.bf16.mxu0 0
      %7108 = vmatpush1.bf16.msra.mxu0 0
      %7109 = vmatprep.subr.bf16.mxu0 0
      %7110 = vmatpush1.bf16.msra.mxu0 0
      %7111 = vmatprep.mubr.bf16.mxu0 0
      %7112 = vmatmul.mubr.bf16.gmra.mrb[0].mxu0 %v283
      %v7113 = vpop.f32.mrb[0].mxu0
      %v7114 = vadd.f32 0.0, %v7113
      %v7115 = vpop.f32.mrb[0].mxu0
      %v7116 = vpop.f32.mrb[0].mxu0
      %v7117 = vadd.f32 0.0, %v7116
      %v7118 = vpop.f32.mrb[0].mxu0
      %7119 = vmatprep.mubr.bf16.mxu0 0
      %7120 = vmatmul.mubr.bf16.gmra.mrb[0].mxu0 %v284
      %v7121 = vpop.f32.mrb[0].mxu0
      %v7122 = vadd.f32 0.0, %v7121
      %v7123 = vpop.f32.mrb[0].mxu0
      %v7124 = vpop.f32.mrb[0].mxu0
      %v7125 = vadd.f32 0.0, %v7124
      %v7126 = vpop.f32.mrb[0].mxu0
      %7127 = vmatprep.mubr.bf16.mxu0 0
      %7128 = vmatmul.mubr.bf16.gmra.mrb[0].mxu0 %v285
      %v7129 = vpop.f32.mrb[0].mxu0
      %v7130 = vadd.f32 0.0, %v7129
      %v7131 = vpop.f32.mrb[0].mxu0
      %v7132 = vpop.f32.mrb[0].mxu0
      %v7133 = vadd.f32 0.0, %v7132
      %v7134 = vpop.f32.mrb[0].mxu0
      %7135 = vmatprep.mubr.bf16.mxu0 0
      %7136 = vmatmul.mubr.bf16.gmra.mrb[0].mxu0 %v286
      %v7137 = vpop.f32.mrb[0].mxu0
      %v7138 = vadd.f32 0.0, %v7137
      %v7139 = vpop.f32.mrb[0].mxu0
      %v7140 = vpop.f32.mrb[0].mxu0
      %v7141 = vadd.f32 0.0, %v7140
      %v7142 = vpop.f32.mrb[0].mxu0
      %7143 = vmatprep.mubr.bf16.mxu0 0
      %7144 = vmatmul.mubr.bf16.gmra.mrb[0].mxu0 %v287
      %v7145 = vpop.f32.mrb[0].mxu0
      %v7146 = vadd.f32 0.0, %v7145
      %v7147 = vpop.f32.mrb[0].mxu0
      %v7148 = vpop.f32.mrb[0].mxu0
      %v7149 = vadd.f32 0.0, %v7148
      %v7150 = vpop.f32.mrb[0].mxu0
      %7151 = vmatprep.mubr.bf16.mxu0 0
      %7152 = vmatmul.mubr.bf16.gmra.mrb[0].mxu0 %v288
      %v7153 = vpop.f32.mrb[0].mxu0
      %v7154 = vadd.f32 0.0, %v7153
      %v7155 = vpop.f32.mrb[0].mxu0
      %v7156 = vpop.f32.mrb[0].mxu0
      %v7157 = vadd.f32 0.0, %v7156
      %v7158 = vpop.f32.mrb[0].mxu0
      %7159 = vmatprep.mubr.bf16.mxu0 0
      %7160 = vmatmul.mubr.bf16.gmra.mrb[0].mxu0 %v289
      %v7161 = vpop.f32.mrb[0].mxu0
      %v7162 = vadd.f32 0.0, %v7161
      %v7163 = vpop.f32.mrb[0].mxu0
      %v7164 = vpop.f32.mrb[0].mxu0
      %v7165 = vadd.f32 0.0, %v7164
      %v7166 = vpop.f32.mrb[0].mxu0
      %7167 = vmatprep.mubr.bf16.mxu0 0
      %7168 = vmatmul.mubr.bf16.gmra.mrb[0].mxu0 %v290
      %v7169 = vpop.f32.mrb[0].mxu0
      %v7170 = vadd.f32 0.0, %v7169
      %v7171 = vpop.f32.mrb[0].mxu0
      %v7172 = vpop.f32.mrb[0].mxu0
      %v7173 = vadd.f32 0.0, %v7172
      %v7174 = vpop.f32.mrb[0].mxu0
      %7175 = vdwg.mxu0
      %v7176 = vpack.c.bf16 %v7117, %v7114
      %v7177 = vpack.c.bf16 %v7125, %v7122
      %v7178 = vpack.c.bf16 %v7133, %v7130
      %v7179 = vpack.c.bf16 %v7141, %v7138
      %v7180 = vpack.c.bf16 %v7149, %v7146
      %v7181 = vpack.c.bf16 %v7157, %v7154
      %v7182 = vpack.c.bf16 %v7165, %v7162
      %v7183 = vpack.c.bf16 %v7173, %v7170
      %s7184 = scalar_lea.vmem %s3, 384
      %v7185 = vld [vmem:[%s7184] sm:$0xf]
      %v7186 = vld [vmem:[%s7184 + $0x4] sm:$0xf]
      %v7187 = vld [vmem:[%s7184 + $0x8] sm:$0xf]
      %v7188 = vld [vmem:[%s7184 + $0xc] sm:$0xf]
      %v7189 = vld [vmem:[%s7184 + $0x10] sm:$0xf]
      %v7190 = vld [vmem:[%s7184 + $0x14] sm:$0xf]
      %v7191 = vld [vmem:[%s7184 + $0x18] sm:$0xf]
      %v7192 = vld [vmem:[%s7184 + $0x1c] sm:$0xf]
      %v7193 = vld [vmem:[%s7184 + $0x20] sm:$0xf]
      %v7194 = vld [vmem:[%s7184 + $0x24] sm:$0xf]
      %v7195 = vld [vmem:[%s7184 + $0x28] sm:$0xf]
      %v7196 = vld [vmem:[%s7184 + $0x2c] sm:$0xf]
      %v7197 = vld [vmem:[%s7184 + $0x30] sm:$0xf]
      %v7198 = vld [vmem:[%s7184 + $0x34] sm:$0xf]
      %v7199 = vld [vmem:[%s7184 + $0x38] sm:$0xf]
      %v7200 = vld [vmem:[%s7184 + $0x3c] sm:$0xf]
      %v7217 = vunpack.c.l.b16 %v7185
      %v7218 = vunpack.c.l.b16 %v7186
      %v7219 = vunpack.c.l.b16 %v7187
      %v7220 = vunpack.c.l.b16 %v7188
      %v7221 = vunpack.c.l.b16 %v7189
      %v7222 = vunpack.c.l.b16 %v7190
      %v7223 = vunpack.c.l.b16 %v7191
      %v7224 = vunpack.c.l.b16 %v7192
      %v7225 = vunpack.c.l.b16 %v7193
      %v7226 = vunpack.c.l.b16 %v7194
      %v7227 = vunpack.c.l.b16 %v7195
      %v7228 = vunpack.c.l.b16 %v7196
      %v7229 = vunpack.c.l.b16 %v7197
      %v7230 = vunpack.c.l.b16 %v7198
      %v7231 = vunpack.c.l.b16 %v7199
      %v7232 = vunpack.c.l.b16 %v7200
      %v7233 = vpack.c.b16 %v7218, %v7217
      %v7234 = vpack.c.b16 %v7220, %v7219
      %v7235 = vpack.c.b16 %v7222, %v7221
      %v7236 = vpack.c.b16 %v7224, %v7223
      %v7237 = vpack.c.b16 %v7226, %v7225
      %v7238 = vpack.c.b16 %v7228, %v7227
      %v7239 = vpack.c.b16 %v7230, %v7229
      %v7240 = vpack.c.b16 %v7232, %v7231
      %7249 = vmatprep.subr.bf16.mxu0 0
      %7250 = vmatpush1.bf16.msra.mxu0 %v7233
      %7251 = vmatprep.subr.bf16.mxu0 0
      %7252 = vmatpush1.bf16.msra.mxu0 %v7234
      %7253 = vmatprep.subr.bf16.mxu0 0
      %7254 = vmatpush1.bf16.msra.mxu0 %v7235
      %7255 = vmatprep.subr.bf16.mxu0 0
      %7256 = vmatpush1.bf16.msra.mxu0 %v7236
      %7257 = vmatprep.subr.bf16.mxu0 0
      %7258 = vmatpush1.bf16.msra.mxu0 %v7237
      %7259 = vmatprep.subr.bf16.mxu0 0
      %7260 = vmatpush1.bf16.msra.mxu0 %v7238
      %7261 = vmatprep.subr.bf16.mxu0 0
      %7262 = vmatpush1.bf16.msra.mxu0 %v7239
      %7263 = vmatprep.subr.bf16.mxu0 0
      %7264 = vmatpush1.bf16.msra.mxu0 %v7240
      %7265 = vmatprep.subr.bf16.mxu0 0
      %7266 = vmatpush1.bf16.msra.mxu0 0
      %7267 = vmatprep.subr.bf16.mxu0 0
      %7268 = vmatpush1.bf16.msra.mxu0 0
      %7269 = vmatprep.subr.bf16.mxu0 0
      %7270 = vmatpush1.bf16.msra.mxu0 0
      %7271 = vmatprep.subr.bf16.mxu0 0
      %7272 = vmatpush1.bf16.msra.mxu0 0
      %7273 = vmatprep.subr.bf16.mxu0 0
      %7274 = vmatpush1.bf16.msra.mxu0 0
      %7275 = vmatprep.subr.bf16.mxu0 0
      %7276 = vmatpush1.bf16.msra.mxu0 0
      %7277 = vmatprep.subr.bf16.mxu0 0
      %7278 = vmatpush1.bf16.msra.mxu0 0
      %7279 = vmatprep.subr.bf16.mxu0 0
      %7280 = vmatpush1.bf16.msra.mxu0 0
      %7281 = vmatprep.mubr.bf16.mxu0 0
      %7282 = vmatmul.mubr.bf16.gmra.mrb[0].mxu0 %v283
      %v7283 = vpop.f32.mrb[0].mxu0
      %v7284 = vadd.f32 0.0, %v7283
      %v7285 = vpop.f32.mrb[0].mxu0
      %v7286 = vpop.f32.mrb[0].mxu0
      %v7287 = vadd.f32 0.0, %v7286
      %v7288 = vpop.f32.mrb[0].mxu0
      %7289 = vmatprep.mubr.bf16.mxu0 0
      %7290 = vmatmul.mubr.bf16.gmra.mrb[0].mxu0 %v284
      %v7291 = vpop.f32.mrb[0].mxu0
      %v7292 = vadd.f32 0.0, %v7291
      %v7293 = vpop.f32.mrb[0].mxu0
      %v7294 = vpop.f32.mrb[0].mxu0
      %v7295 = vadd.f32 0.0, %v7294
      %v7296 = vpop.f32.mrb[0].mxu0
      %7297 = vmatprep.mubr.bf16.mxu0 0
      %7298 = vmatmul.mubr.bf16.gmra.mrb[0].mxu0 %v285
      %v7299 = vpop.f32.mrb[0].mxu0
      %v7300 = vadd.f32 0.0, %v7299
      %v7301 = vpop.f32.mrb[0].mxu0
      %v7302 = vpop.f32.mrb[0].mxu0
      %v7303 = vadd.f32 0.0, %v7302
      %v7304 = vpop.f32.mrb[0].mxu0
      %7305 = vmatprep.mubr.bf16.mxu0 0
      %7306 = vmatmul.mubr.bf16.gmra.mrb[0].mxu0 %v286
      %v7307 = vpop.f32.mrb[0].mxu0
      %v7308 = vadd.f32 0.0, %v7307
      %v7309 = vpop.f32.mrb[0].mxu0
      %v7310 = vpop.f32.mrb[0].mxu0
      %v7311 = vadd.f32 0.0, %v7310
      %v7312 = vpop.f32.mrb[0].mxu0
      %7313 = vmatprep.mubr.bf16.mxu0 0
      %7314 = vmatmul.mubr.bf16.gmra.mrb[0].mxu0 %v287
      %v7315 = vpop.f32.mrb[0].mxu0
      %v7316 = vadd.f32 0.0, %v7315
      %v7317 = vpop.f32.mrb[0].mxu0
      %v7318 = vpop.f32.mrb[0].mxu0
      %v7319 = vadd.f32 0.0, %v7318
      %v7320 = vpop.f32.mrb[0].mxu0
      %7321 = vmatprep.mubr.bf16.mxu0 0
      %7322 = vmatmul.mubr.bf16.gmra.mrb[0].mxu0 %v288
      %v7323 = vpop.f32.mrb[0].mxu0
      %v7324 = vadd.f32 0.0, %v7323
      %v7325 = vpop.f32.mrb[0].mxu0
      %v7326 = vpop.f32.mrb[0].mxu0
      %v7327 = vadd.f32 0.0, %v7326
      %v7328 = vpop.f32.mrb[0].mxu0
      %7329 = vmatprep.mubr.bf16.mxu0 0
      %7330 = vmatmul.mubr.bf16.gmra.mrb[0].mxu0 %v289
      %v7331 = vpop.f32.mrb[0].mxu0
      %v7332 = vadd.f32 0.0, %v7331
      %v7333 = vpop.f32.mrb[0].mxu0
      %v7334 = vpop.f32.mrb[0].mxu0
      %v7335 = vadd.f32 0.0, %v7334
      %v7336 = vpop.f32.mrb[0].mxu0
      %7337 = vmatprep.mubr.bf16.mxu0 0
      %7338 = vmatmul.mubr.bf16.gmra.mrb[0].mxu0 %v290
      %v7339 = vpop.f32.mrb[0].mxu0
      %v7340 = vadd.f32 0.0, %v7339
      %v7341 = vpop.f32.mrb[0].mxu0
      %v7342 = vpop.f32.mrb[0].mxu0
      %v7343 = vadd.f32 0.0, %v7342
      %v7344 = vpop.f32.mrb[0].mxu0
      %7345 = vdwg.mxu0
      %v7346 = vpack.c.bf16 %v7287, %v7284
      %v7347 = vpack.c.bf16 %v7295, %v7292
      %v7348 = vpack.c.bf16 %v7303, %v7300
      %v7349 = vpack.c.bf16 %v7311, %v7308
      %v7350 = vpack.c.bf16 %v7319, %v7316
      %v7351 = vpack.c.bf16 %v7327, %v7324
      %v7352 = vpack.c.bf16 %v7335, %v7332
      %v7353 = vpack.c.bf16 %v7343, %v7340
      %v7355 = vsel %vm814, %v7006, 0
      %v7358 = vsel %vm814, %v7007, 0
      %v7361 = vsel %vm814, %v7008, 0
      %v7364 = vsel %vm814, %v7009, 0
      %v7367 = vsel %vm814, %v7010, 0
      %v7370 = vsel %vm814, %v7011, 0
      %v7373 = vsel %vm814, %v7012, 0
      %v7376 = vsel %vm814, %v7013, 0
      %v7379 = vsel %vm814, %v7176, 0
      %v7382 = vsel %vm814, %v7177, 0
      %v7385 = vsel %vm814, %v7178, 0
      %v7388 = vsel %vm814, %v7179, 0
      %v7391 = vsel %vm814, %v7180, 0
      %v7394 = vsel %vm814, %v7181, 0
      %v7397 = vsel %vm814, %v7182, 0
      %v7400 = vsel %vm814, %v7183, 0
      %7402 = vmatprep.subr.bf16.mxu0 0
      %7403 = vmatpush1.bf16.xpose.msra.mxu0 %v7379
      %7404 = vmatprep.subr.bf16.mxu0 0
      %7405 = vmatpush1.bf16.xpose.msra.mxu0 %v7382
      %7406 = vmatprep.subr.bf16.mxu0 0
      %7407 = vmatpush1.bf16.xpose.msra.mxu0 %v7385
      %7408 = vmatprep.subr.bf16.mxu0 0
      %7409 = vmatpush1.bf16.xpose.msra.mxu0 %v7388
      %7410 = vmatprep.subr.bf16.mxu0 0
      %7411 = vmatpush1.bf16.xpose.msra.mxu0 %v7391
      %7412 = vmatprep.subr.bf16.mxu0 0
      %7413 = vmatpush1.bf16.xpose.msra.mxu0 %v7394
      %7414 = vmatprep.subr.bf16.mxu0 0
      %7415 = vmatpush1.bf16.xpose.msra.mxu0 %v7397
      %7416 = vmatprep.subr.bf16.mxu0 0
      %7417 = vmatpush1.bf16.xpose.msra.mxu0 %v7400
      %7418 = vmatprep.subr.bf16.mxu0 0
      %7419 = vmatpush1.bf16.xpose.msra.mxu0 0
      %7420 = vmatprep.subr.bf16.mxu0 0
      %7421 = vmatpush1.bf16.xpose.msra.mxu0 0
      %7422 = vmatprep.subr.bf16.mxu0 0
      %7423 = vmatpush1.bf16.xpose.msra.mxu0 0
      %7424 = vmatprep.subr.bf16.mxu0 0
      %7425 = vmatpush1.bf16.xpose.msra.mxu0 0
      %7426 = vmatprep.subr.bf16.mxu0 0
      %7427 = vmatpush1.bf16.xpose.msra.mxu0 0
      %7428 = vmatprep.subr.bf16.mxu0 0
      %7429 = vmatpush1.bf16.xpose.msra.mxu0 0
      %7430 = vmatprep.subr.bf16.mxu0 0
      %7431 = vmatpush1.bf16.xpose.msra.mxu0 0
      %7432 = vmatprep.subr.bf16.mxu0 0
      %7433 = vmatpush1.bf16.xpose.msra.mxu0 0
      %7434 = vmatprep.mubr.bf16.mxu0 0
      %7435 = vmatmul.mubr.bf16.gmra.mrb[0].mxu0 %v7355
      %v7436 = vpop.f32.mrb[0].mxu0
      %v7437 = vadd.f32 0.0, %v7436
      %v7438 = vpop.f32.mrb[0].mxu0
      %v7439 = vpop.f32.mrb[0].mxu0
      %v7440 = vadd.f32 0.0, %v7439
      %v7441 = vpop.f32.mrb[0].mxu0
      %7442 = vmatprep.mubr.bf16.mxu0 0
      %7443 = vmatmul.mubr.bf16.gmra.mrb[0].mxu0 %v7358
      %v7444 = vpop.f32.mrb[0].mxu0
      %v7445 = vadd.f32 0.0, %v7444
      %v7446 = vpop.f32.mrb[0].mxu0
      %v7447 = vpop.f32.mrb[0].mxu0
      %v7448 = vadd.f32 0.0, %v7447
      %v7449 = vpop.f32.mrb[0].mxu0
      %7450 = vmatprep.mubr.bf16.mxu0 0
      %7451 = vmatmul.mubr.bf16.gmra.mrb[0].mxu0 %v7361
      %v7452 = vpop.f32.mrb[0].mxu0
      %v7453 = vadd.f32 0.0, %v7452
      %v7454 = vpop.f32.mrb[0].mxu0
      %v7455 = vpop.f32.mrb[0].mxu0
      %v7456 = vadd.f32 0.0, %v7455
      %v7457 = vpop.f32.mrb[0].mxu0
      %7458 = vmatprep.mubr.bf16.mxu0 0
      %7459 = vmatmul.mubr.bf16.gmra.mrb[0].mxu0 %v7364
      %v7460 = vpop.f32.mrb[0].mxu0
      %v7461 = vadd.f32 0.0, %v7460
      %v7462 = vpop.f32.mrb[0].mxu0
      %v7463 = vpop.f32.mrb[0].mxu0
      %v7464 = vadd.f32 0.0, %v7463
      %v7465 = vpop.f32.mrb[0].mxu0
      %7466 = vmatprep.mubr.bf16.mxu0 0
      %7467 = vmatmul.mubr.bf16.gmra.mrb[0].mxu0 %v7367
      %v7468 = vpop.f32.mrb[0].mxu0
      %v7469 = vadd.f32 0.0, %v7468
      %v7470 = vpop.f32.mrb[0].mxu0
      %v7471 = vpop.f32.mrb[0].mxu0
      %v7472 = vadd.f32 0.0, %v7471
      %v7473 = vpop.f32.mrb[0].mxu0
      %7474 = vmatprep.mubr.bf16.mxu0 0
      %7475 = vmatmul.mubr.bf16.gmra.mrb[0].mxu0 %v7370
      %v7476 = vpop.f32.mrb[0].mxu0
      %v7477 = vadd.f32 0.0, %v7476
      %v7478 = vpop.f32.mrb[0].mxu0
      %v7479 = vpop.f32.mrb[0].mxu0
      %v7480 = vadd.f32 0.0, %v7479
      %v7481 = vpop.f32.mrb[0].mxu0
      %7482 = vmatprep.mubr.bf16.mxu0 0
      %7483 = vmatmul.mubr.bf16.gmra.mrb[0].mxu0 %v7373
      %v7484 = vpop.f32.mrb[0].mxu0
      %v7485 = vadd.f32 0.0, %v7484
      %v7486 = vpop.f32.mrb[0].mxu0
      %v7487 = vpop.f32.mrb[0].mxu0
      %v7488 = vadd.f32 0.0, %v7487
      %v7489 = vpop.f32.mrb[0].mxu0
      %7490 = vmatprep.mubr.bf16.mxu0 0
      %7491 = vmatmul.mubr.bf16.gmra.mrb[0].mxu0 %v7376
      %v7492 = vpop.f32.mrb[0].mxu0
      %v7493 = vadd.f32 0.0, %v7492
      %v7494 = vpop.f32.mrb[0].mxu0
      %v7495 = vpop.f32.mrb[0].mxu0
      %v7496 = vadd.f32 0.0, %v7495
      %v7497 = vpop.f32.mrb[0].mxu0
      %7498 = vdwg.mxu0
      %7499 = vmax.xlane.f32.xlu0 %v7437
      %v7500 = vpop.xlane.xlu0 %7499
      %7501 = vmax.xlane.f32.xlu0 %v7440
      %v7502 = vpop.xlane.xlu0 %7501
      %7503 = vmax.xlane.f32.xlu0 %v7445
      %v7504 = vpop.xlane.xlu0 %7503
      %7505 = vmax.xlane.f32.xlu0 %v7448
      %v7506 = vpop.xlane.xlu0 %7505
      %7507 = vmax.xlane.f32.xlu0 %v7453
      %v7508 = vpop.xlane.xlu0 %7507
      %7509 = vmax.xlane.f32.xlu0 %v7456
      %v7510 = vpop.xlane.xlu0 %7509
      %7511 = vmax.xlane.f32.xlu0 %v7461
      %v7512 = vpop.xlane.xlu0 %7511
      %7513 = vmax.xlane.f32.xlu0 %v7464
      %v7514 = vpop.xlane.xlu0 %7513
      %7515 = vmax.xlane.f32.xlu0 %v7469
      %v7516 = vpop.xlane.xlu0 %7515
      %7517 = vmax.xlane.f32.xlu0 %v7472
      %v7518 = vpop.xlane.xlu0 %7517
      %7519 = vmax.xlane.f32.xlu0 %v7477
      %v7520 = vpop.xlane.xlu0 %7519
      %7521 = vmax.xlane.f32.xlu0 %v7480
      %v7522 = vpop.xlane.xlu0 %7521
      %7523 = vmax.xlane.f32.xlu0 %v7485
      %v7524 = vpop.xlane.xlu0 %7523
      %7525 = vmax.xlane.f32.xlu0 %v7488
      %v7526 = vpop.xlane.xlu0 %7525
      %7527 = vmax.xlane.f32.xlu0 %v7493
      %v7528 = vpop.xlane.xlu0 %7527
      %7529 = vmax.xlane.f32.xlu0 %v7496
      %v7530 = vpop.xlane.xlu0 %7529
      %v7531 = vsub.f32 %v7437, %v7500
      %v7532 = vsub.f32 %v7440, %v7502
      %v7533 = vsub.f32 %v7445, %v7504
      %v7534 = vsub.f32 %v7448, %v7506
      %v7535 = vsub.f32 %v7453, %v7508
      %v7536 = vsub.f32 %v7456, %v7510
      %v7537 = vsub.f32 %v7461, %v7512
      %v7538 = vsub.f32 %v7464, %v7514
      %v7539 = vsub.f32 %v7469, %v7516
      %v7540 = vsub.f32 %v7472, %v7518
      %v7541 = vsub.f32 %v7477, %v7520
      %v7542 = vsub.f32 %v7480, %v7522
      %v7543 = vsub.f32 %v7485, %v7524
      %v7544 = vsub.f32 %v7488, %v7526
      %v7545 = vsub.f32 %v7493, %v7528
      %v7546 = vsub.f32 %v7496, %v7530
      %v7547 = vmul.f32 %v7531, 1.442695
      %v7548 = vpow.pop %v7547
      %v7549 = vmul.f32 %v7532, 1.442695
      %v7550 = vpow.pop %v7549
      %v7551 = vmul.f32 %v7533, 1.442695
      %v7552 = vpow.pop %v7551
      %v7553 = vmul.f32 %v7534, 1.442695
      %v7554 = vpow.pop %v7553
      %v7555 = vmul.f32 %v7535, 1.442695
      %v7556 = vpow.pop %v7555
      %v7557 = vmul.f32 %v7536, 1.442695
      %v7558 = vpow.pop %v7557
      %v7559 = vmul.f32 %v7537, 1.442695
      %v7560 = vpow.pop %v7559
      %v7561 = vmul.f32 %v7538, 1.442695
      %v7562 = vpow.pop %v7561
      %v7563 = vmul.f32 %v7539, 1.442695
      %v7564 = vpow.pop %v7563
      %v7565 = vmul.f32 %v7540, 1.442695
      %v7566 = vpow.pop %v7565
      %v7567 = vmul.f32 %v7541, 1.442695
      %v7568 = vpow.pop %v7567
      %v7569 = vmul.f32 %v7542, 1.442695
      %v7570 = vpow.pop %v7569
      %v7571 = vmul.f32 %v7543, 1.442695
      %v7572 = vpow.pop %v7571
      %v7573 = vmul.f32 %v7544, 1.442695
      %v7574 = vpow.pop %v7573
      %v7575 = vmul.f32 %v7545, 1.442695
      %v7576 = vpow.pop %v7575
      %v7577 = vmul.f32 %v7546, 1.442695
      %v7578 = vpow.pop %v7577
      %7579 = vadd.xlane.f32.xlu0 %v7548
      %v7580 = vpop.xlane.xlu0 %7579
      %7581 = vadd.xlane.f32.xlu0 %v7550
      %v7582 = vpop.xlane.xlu0 %7581
      %7583 = vadd.xlane.f32.xlu0 %v7552
      %v7584 = vpop.xlane.xlu0 %7583
      %7585 = vadd.xlane.f32.xlu0 %v7554
      %v7586 = vpop.xlane.xlu0 %7585
      %7587 = vadd.xlane.f32.xlu0 %v7556
      %v7588 = vpop.xlane.xlu0 %7587
      %7589 = vadd.xlane.f32.xlu0 %v7558
      %v7590 = vpop.xlane.xlu0 %7589
      %7591 = vadd.xlane.f32.xlu0 %v7560
      %v7592 = vpop.xlane.xlu0 %7591
      %7593 = vadd.xlane.f32.xlu0 %v7562
      %v7594 = vpop.xlane.xlu0 %7593
      %7595 = vadd.xlane.f32.xlu0 %v7564
      %v7596 = vpop.xlane.xlu0 %7595
      %7597 = vadd.xlane.f32.xlu0 %v7566
      %v7598 = vpop.xlane.xlu0 %7597
      %7599 = vadd.xlane.f32.xlu0 %v7568
      %v7600 = vpop.xlane.xlu0 %7599
      %7601 = vadd.xlane.f32.xlu0 %v7570
      %v7602 = vpop.xlane.xlu0 %7601
      %7603 = vadd.xlane.f32.xlu0 %v7572
      %v7604 = vpop.xlane.xlu0 %7603
      %7605 = vadd.xlane.f32.xlu0 %v7574
      %v7606 = vpop.xlane.xlu0 %7605
      %7607 = vadd.xlane.f32.xlu0 %v7576
      %v7608 = vpop.xlane.xlu0 %7607
      %7609 = vadd.xlane.f32.xlu0 %v7578
      %v7610 = vpop.xlane.xlu0 %7609
      %v7611 = vrcp.pop %v7580
      %v7612 = vrcp.pop %v7582
      %v7613 = vrcp.pop %v7584
      %v7614 = vrcp.pop %v7586
      %v7615 = vrcp.pop %v7588
      %v7616 = vrcp.pop %v7590
      %v7617 = vrcp.pop %v7592
      %v7618 = vrcp.pop %v7594
      %v7619 = vrcp.pop %v7596
      %v7620 = vrcp.pop %v7598
      %v7621 = vrcp.pop %v7600
      %v7622 = vrcp.pop %v7602
      %v7623 = vrcp.pop %v7604
      %v7624 = vrcp.pop %v7606
      %v7625 = vrcp.pop %v7608
      %v7626 = vrcp.pop %v7610
      %v7627 = vmul.f32 %v7548, %v7611
      %v7628 = vmul.f32 %v7550, %v7612
      %v7629 = vmul.f32 %v7552, %v7613
      %v7630 = vmul.f32 %v7554, %v7614
      %v7631 = vmul.f32 %v7556, %v7615
      %v7632 = vmul.f32 %v7558, %v7616
      %v7633 = vmul.f32 %v7560, %v7617
      %v7634 = vmul.f32 %v7562, %v7618
      %v7635 = vmul.f32 %v7564, %v7619
      %v7636 = vmul.f32 %v7566, %v7620
      %v7637 = vmul.f32 %v7568, %v7621
      %v7638 = vmul.f32 %v7570, %v7622
      %v7639 = vmul.f32 %v7572, %v7623
      %v7640 = vmul.f32 %v7574, %v7624
      %v7641 = vmul.f32 %v7576, %v7625
      %v7642 = vmul.f32 %v7578, %v7626
      %v7643 = vpack.c.bf16 %v7628, %v7627
      %v7644 = vpack.c.bf16 %v7630, %v7629
      %v7645 = vpack.c.bf16 %v7632, %v7631
      %v7646 = vpack.c.bf16 %v7634, %v7633
      %v7647 = vpack.c.bf16 %v7636, %v7635
      %v7648 = vpack.c.bf16 %v7638, %v7637
      %v7649 = vpack.c.bf16 %v7640, %v7639
      %v7650 = vpack.c.bf16 %v7642, %v7641
      %7651 = vmatprep.subr.bf16.mxu0 0
      %7652 = vmatpush1.bf16.msra.mxu0 %v7346
      %7653 = vmatprep.subr.bf16.mxu0 0
      %7654 = vmatpush1.bf16.msra.mxu0 %v7347
      %7655 = vmatprep.subr.bf16.mxu0 0
      %7656 = vmatpush1.bf16.msra.mxu0 %v7348
      %7657 = vmatprep.subr.bf16.mxu0 0
      %7658 = vmatpush1.bf16.msra.mxu0 %v7349
      %7659 = vmatprep.subr.bf16.mxu0 0
      %7660 = vmatpush1.bf16.msra.mxu0 %v7350
      %7661 = vmatprep.subr.bf16.mxu0 0
      %7662 = vmatpush1.bf16.msra.mxu0 %v7351
      %7663 = vmatprep.subr.bf16.mxu0 0
      %7664 = vmatpush1.bf16.msra.mxu0 %v7352
      %7665 = vmatprep.subr.bf16.mxu0 0
      %7666 = vmatpush1.bf16.msra.mxu0 %v7353
      %7667 = vmatprep.subr.bf16.mxu0 0
      %7668 = vmatpush1.bf16.msra.mxu0 0
      %7669 = vmatprep.subr.bf16.mxu0 0
      %7670 = vmatpush1.bf16.msra.mxu0 0
      %7671 = vmatprep.subr.bf16.mxu0 0
      %7672 = vmatpush1.bf16.msra.mxu0 0
      %7673 = vmatprep.subr.bf16.mxu0 0
      %7674 = vmatpush1.bf16.msra.mxu0 0
      %7675 = vmatprep.subr.bf16.mxu0 0
      %7676 = vmatpush1.bf16.msra.mxu0 0
      %7677 = vmatprep.subr.bf16.mxu0 0
      %7678 = vmatpush1.bf16.msra.mxu0 0
      %7679 = vmatprep.subr.bf16.mxu0 0
      %7680 = vmatpush1.bf16.msra.mxu0 0
      %7681 = vmatprep.subr.bf16.mxu0 0
      %7682 = vmatpush1.bf16.msra.mxu0 0
      %7683 = vmatprep.mubr.bf16.mxu0 0
      %7684 = vmatmul.mubr.bf16.gmra.mrb[0].mxu0 %v7643
      %v7685 = vpop.f32.mrb[0].mxu0
      %v7686 = vadd.f32 0.0, %v7685
      %v7687 = vpop.f32.mrb[0].mxu0
      %v7688 = vpop.f32.mrb[0].mxu0
      %v7689 = vadd.f32 0.0, %v7688
      %v7690 = vpop.f32.mrb[0].mxu0
      %7691 = vmatprep.mubr.bf16.mxu0 0
      %7692 = vmatmul.mubr.bf16.gmra.mrb[0].mxu0 %v7644
      %v7693 = vpop.f32.mrb[0].mxu0
      %v7694 = vadd.f32 0.0, %v7693
      %v7695 = vpop.f32.mrb[0].mxu0
      %v7696 = vpop.f32.mrb[0].mxu0
      %v7697 = vadd.f32 0.0, %v7696
      %v7698 = vpop.f32.mrb[0].mxu0
      %7699 = vmatprep.mubr.bf16.mxu0 0
      %7700 = vmatmul.mubr.bf16.gmra.mrb[0].mxu0 %v7645
      %v7701 = vpop.f32.mrb[0].mxu0
      %v7702 = vadd.f32 0.0, %v7701
      %v7703 = vpop.f32.mrb[0].mxu0
      %v7704 = vpop.f32.mrb[0].mxu0
      %v7705 = vadd.f32 0.0, %v7704
      %v7706 = vpop.f32.mrb[0].mxu0
      %7707 = vmatprep.mubr.bf16.mxu0 0
      %7708 = vmatmul.mubr.bf16.gmra.mrb[0].mxu0 %v7646
      %v7709 = vpop.f32.mrb[0].mxu0
      %v7710 = vadd.f32 0.0, %v7709
      %v7711 = vpop.f32.mrb[0].mxu0
      %v7712 = vpop.f32.mrb[0].mxu0
      %v7713 = vadd.f32 0.0, %v7712
      %v7714 = vpop.f32.mrb[0].mxu0
      %7715 = vmatprep.mubr.bf16.mxu0 0
      %7716 = vmatmul.mubr.bf16.gmra.mrb[0].mxu0 %v7647
      %v7717 = vpop.f32.mrb[0].mxu0
      %v7718 = vadd.f32 0.0, %v7717
      %v7719 = vpop.f32.mrb[0].mxu0
      %v7720 = vpop.f32.mrb[0].mxu0
      %v7721 = vadd.f32 0.0, %v7720
      %v7722 = vpop.f32.mrb[0].mxu0
      %7723 = vmatprep.mubr.bf16.mxu0 0
      %7724 = vmatmul.mubr.bf16.gmra.mrb[0].mxu0 %v7648
      %v7725 = vpop.f32.mrb[0].mxu0
      %v7726 = vadd.f32 0.0, %v7725
      %v7727 = vpop.f32.mrb[0].mxu0
      %v7728 = vpop.f32.mrb[0].mxu0
      %v7729 = vadd.f32 0.0, %v7728
      %v7730 = vpop.f32.mrb[0].mxu0
      %7731 = vmatprep.mubr.bf16.mxu0 0
      %7732 = vmatmul.mubr.bf16.gmra.mrb[0].mxu0 %v7649
      %v7733 = vpop.f32.mrb[0].mxu0
      %v7734 = vadd.f32 0.0, %v7733
      %v7735 = vpop.f32.mrb[0].mxu0
      %v7736 = vpop.f32.mrb[0].mxu0
      %v7737 = vadd.f32 0.0, %v7736
      %v7738 = vpop.f32.mrb[0].mxu0
      %7739 = vmatprep.mubr.bf16.mxu0 0
      %7740 = vmatmul.mubr.bf16.gmra.mrb[0].mxu0 %v7650
      %v7741 = vpop.f32.mrb[0].mxu0
      %v7742 = vadd.f32 0.0, %v7741
      %v7743 = vpop.f32.mrb[0].mxu0
      %v7744 = vpop.f32.mrb[0].mxu0
      %v7745 = vadd.f32 0.0, %v7744
      %v7746 = vpop.f32.mrb[0].mxu0
      %7747 = vdwg.mxu0
      %v7748 = vpack.c.bf16 %v7689, %v7686
      %v7749 = vpack.c.bf16 %v7697, %v7694
      %v7750 = vpack.c.bf16 %v7705, %v7702
      %v7751 = vpack.c.bf16 %v7713, %v7710
      %v7752 = vpack.c.bf16 %v7721, %v7718
      %v7753 = vpack.c.bf16 %v7729, %v7726
      %v7754 = vpack.c.bf16 %v7737, %v7734
      %v7755 = vpack.c.bf16 %v7745, %v7742
      %v7756 = vld [vmem:[#allocation2] sm:$0xff]
      %v7757 = vld [vmem:[#allocation2 + $0x8] sm:$0xff]
      %v7758 = vld [vmem:[#allocation2 + $0x10] sm:$0xff]
      %v7759 = vld [vmem:[#allocation2 + $0x18] sm:$0xff]
      %v7760 = vld [vmem:[#allocation2 + $0x20] sm:$0xff]
      %v7761 = vld [vmem:[#allocation2 + $0x28] sm:$0xff]
      %v7762 = vld [vmem:[#allocation2 + $0x30] sm:$0xff]
      %v7763 = vld [vmem:[#allocation2 + $0x38] sm:$0xff]
      %v7764 = vld [vmem:[#allocation2 + $0x40] sm:$0xff]
      %v7765 = vld [vmem:[#allocation2 + $0x48] sm:$0xff]
      %v7766 = vld [vmem:[#allocation2 + $0x50] sm:$0xff]
      %v7767 = vld [vmem:[#allocation2 + $0x58] sm:$0xff]
      %v7768 = vld [vmem:[#allocation2 + $0x60] sm:$0xff]
      %v7769 = vld [vmem:[#allocation2 + $0x68] sm:$0xff]
      %v7770 = vld [vmem:[#allocation2 + $0x70] sm:$0xff]
      %v7771 = vld [vmem:[#allocation2 + $0x78] sm:$0xff]
      %s7772 = scalar_lea.vmem %s4, 48
      %v7773 = vld [vmem:[%s7772] sm:$0xf]
      %v7774 = vld [vmem:[%s7772 + $0x4] sm:$0xf]
      %v7777 = vunpack.c.l.b16 %v7773
      %v7778 = vunpack.c.l.b16 %v7774
      %v7779 = vpack.c.b16 %v7778, %v7777
      %v7782 = vsel %vm814, %v7748, 0
      %v7785 = vsel %vm814, %v7749, 0
      %v7788 = vsel %vm814, %v7750, 0
      %v7791 = vsel %vm814, %v7751, 0
      %v7794 = vsel %vm814, %v7752, 0
      %v7797 = vsel %vm814, %v7753, 0
      %v7800 = vsel %vm814, %v7754, 0
      %v7803 = vsel %vm814, %v7755, 0
      %7805 = vmatprep.subr.bf16.mxu0 0
      %7806 = vmatpush1.bf16.msra.mxu0 %v7779
      %7807 = vmatprep.subr.bf16.mxu0 0
      %7808 = vmatpush1.bf16.msra.mxu0 0
      %7809 = vmatprep.subr.bf16.mxu0 0
      %7810 = vmatpush1.bf16.msra.mxu0 0
      %7811 = vmatprep.subr.bf16.mxu0 0
      %7812 = vmatpush1.bf16.msra.mxu0 0
      %7813 = vmatprep.subr.bf16.mxu0 0
      %7814 = vmatpush1.bf16.msra.mxu0 0
      %7815 = vmatprep.subr.bf16.mxu0 0
      %7816 = vmatpush1.bf16.msra.mxu0 0
      %7817 = vmatprep.subr.bf16.mxu0 0
      %7818 = vmatpush1.bf16.msra.mxu0 0
      %7819 = vmatprep.subr.bf16.mxu0 0
      %7820 = vmatpush1.bf16.msra.mxu0 0
      %7821 = vmatprep.subr.bf16.mxu0 0
      %7822 = vmatpush1.bf16.msra.mxu0 0
      %7823 = vmatprep.subr.bf16.mxu0 0
      %7824 = vmatpush1.bf16.msra.mxu0 0
      %7825 = vmatprep.subr.bf16.mxu0 0
      %7826 = vmatpush1.bf16.msra.mxu0 0
      %7827 = vmatprep.subr.bf16.mxu0 0
      %7828 = vmatpush1.bf16.msra.mxu0 0
      %7829 = vmatprep.subr.bf16.mxu0 0
      %7830 = vmatpush1.bf16.msra.mxu0 0
      %7831 = vmatprep.subr.bf16.mxu0 0
      %7832 = vmatpush1.bf16.msra.mxu0 0
      %7833 = vmatprep.subr.bf16.mxu0 0
      %7834 = vmatpush1.bf16.msra.mxu0 0
      %7835 = vmatprep.subr.bf16.mxu0 0
      %7836 = vmatpush1.bf16.msra.mxu0 0
      %7837 = vmatprep.mubr.bf16.mxu0 0
      %7838 = vmatmul.mubr.bf16.gmra.mrb[0].mxu0 %v7782
      %v7839 = vpop.f32.mrb[0].mxu0
      %v7840 = vadd.f32 0.0, %v7839
      %v7841 = vpop.f32.mrb[0].mxu0
      %v7842 = vpop.f32.mrb[0].mxu0
      %v7843 = vadd.f32 0.0, %v7842
      %v7844 = vpop.f32.mrb[0].mxu0
      %7845 = vmatprep.mubr.bf16.mxu0 0
      %7846 = vmatmul.mubr.bf16.gmra.mrb[0].mxu0 %v7785
      %v7847 = vpop.f32.mrb[0].mxu0
      %v7848 = vadd.f32 0.0, %v7847
      %v7849 = vpop.f32.mrb[0].mxu0
      %v7850 = vpop.f32.mrb[0].mxu0
      %v7851 = vadd.f32 0.0, %v7850
      %v7852 = vpop.f32.mrb[0].mxu0
      %7853 = vmatprep.mubr.bf16.mxu0 0
      %7854 = vmatmul.mubr.bf16.gmra.mrb[0].mxu0 %v7788
      %v7855 = vpop.f32.mrb[0].mxu0
      %v7856 = vadd.f32 0.0, %v7855
      %v7857 = vpop.f32.mrb[0].mxu0
      %v7858 = vpop.f32.mrb[0].mxu0
      %v7859 = vadd.f32 0.0, %v7858
      %v7860 = vpop.f32.mrb[0].mxu0
      %7861 = vmatprep.mubr.bf16.mxu0 0
      %7862 = vmatmul.mubr.bf16.gmra.mrb[0].mxu0 %v7791
      %v7863 = vpop.f32.mrb[0].mxu0
      %v7864 = vadd.f32 0.0, %v7863
      %v7865 = vpop.f32.mrb[0].mxu0
      %v7866 = vpop.f32.mrb[0].mxu0
      %v7867 = vadd.f32 0.0, %v7866
      %v7868 = vpop.f32.mrb[0].mxu0
      %7869 = vmatprep.mubr.bf16.mxu0 0
      %7870 = vmatmul.mubr.bf16.gmra.mrb[0].mxu0 %v7794
      %v7871 = vpop.f32.mrb[0].mxu0
      %v7872 = vadd.f32 0.0, %v7871
      %v7873 = vpop.f32.mrb[0].mxu0
      %v7874 = vpop.f32.mrb[0].mxu0
      %v7875 = vadd.f32 0.0, %v7874
      %v7876 = vpop.f32.mrb[0].mxu0
      %7877 = vmatprep.mubr.bf16.mxu0 0
      %7878 = vmatmul.mubr.bf16.gmra.mrb[0].mxu0 %v7797
      %v7879 = vpop.f32.mrb[0].mxu0
      %v7880 = vadd.f32 0.0, %v7879
      %v7881 = vpop.f32.mrb[0].mxu0
      %v7882 = vpop.f32.mrb[0].mxu0
      %v7883 = vadd.f32 0.0, %v7882
      %v7884 = vpop.f32.mrb[0].mxu0
      %7885 = vmatprep.mubr.bf16.mxu0 0
      %7886 = vmatmul.mubr.bf16.gmra.mrb[0].mxu0 %v7800
      %v7887 = vpop.f32.mrb[0].mxu0
      %v7888 = vadd.f32 0.0, %v7887
      %v7889 = vpop.f32.mrb[0].mxu0
      %v7890 = vpop.f32.mrb[0].mxu0
      %v7891 = vadd.f32 0.0, %v7890
      %v7892 = vpop.f32.mrb[0].mxu0
      %7893 = vmatprep.mubr.bf16.mxu0 0
      %7894 = vmatmul.mubr.bf16.gmra.mrb[0].mxu0 %v7803
      %v7895 = vpop.f32.mrb[0].mxu0
      %v7896 = vadd.f32 0.0, %v7895
      %v7897 = vpop.f32.mrb[0].mxu0
      %v7898 = vpop.f32.mrb[0].mxu0
      %v7899 = vadd.f32 0.0, %v7898
      %v7900 = vpop.f32.mrb[0].mxu0
      %7901 = vdwg.mxu0
      %v7902 = vadd.f32 %v7756, %v7840
      %v7903 = vadd.f32 %v7757, %v7843
      %v7904 = vadd.f32 %v7758, %v7848
      %v7905 = vadd.f32 %v7759, %v7851
      %v7906 = vadd.f32 %v7760, %v7856
      %v7907 = vadd.f32 %v7761, %v7859
      %v7908 = vadd.f32 %v7762, %v7864
      %v7909 = vadd.f32 %v7763, %v7867
      %v7910 = vadd.f32 %v7764, %v7872
      %v7911 = vadd.f32 %v7765, %v7875
      %v7912 = vadd.f32 %v7766, %v7880
      %v7913 = vadd.f32 %v7767, %v7883
      %v7914 = vadd.f32 %v7768, %v7888
      %v7915 = vadd.f32 %v7769, %v7891
      %v7916 = vadd.f32 %v7770, %v7896
      %v7917 = vadd.f32 %v7771, %v7899
      %7918 = vst [vmem:[#allocation2] sm:$0xff] %v7902
      %7919 = vst [vmem:[#allocation2 + $0x8] sm:$0xff] %v7903
      %7920 = vst [vmem:[#allocation2 + $0x10] sm:$0xff] %v7904
      %7921 = vst [vmem:[#allocation2 + $0x18] sm:$0xff] %v7905
      %7922 = vst [vmem:[#allocation2 + $0x20] sm:$0xff] %v7906
      %7923 = vst [vmem:[#allocation2 + $0x28] sm:$0xff] %v7907
      %7924 = vst [vmem:[#allocation2 + $0x30] sm:$0xff] %v7908
      %7925 = vst [vmem:[#allocation2 + $0x38] sm:$0xff] %v7909
      %7926 = vst [vmem:[#allocation2 + $0x40] sm:$0xff] %v7910
      %7927 = vst [vmem:[#allocation2 + $0x48] sm:$0xff] %v7911
      %7928 = vst [vmem:[#allocation2 + $0x50] sm:$0xff] %v7912
      %7929 = vst [vmem:[#allocation2 + $0x58] sm:$0xff] %v7913
      %7930 = vst [vmem:[#allocation2 + $0x60] sm:$0xff] %v7914
      %7931 = vst [vmem:[#allocation2 + $0x68] sm:$0xff] %v7915
      %7932 = vst [vmem:[#allocation2 + $0x70] sm:$0xff] %v7916
      %7933 = vst [vmem:[#allocation2 + $0x78] sm:$0xff] %v7917
      %s7934 = scalar_lea.vmem %s1, 448
      %v7935 = vld [vmem:[%s7934] sm:$0xf]
      %v7936 = vld [vmem:[%s7934 + $0x4] sm:$0xf]
      %v7937 = vld [vmem:[%s7934 + $0x8] sm:$0xf]
      %v7938 = vld [vmem:[%s7934 + $0xc] sm:$0xf]
      %v7939 = vld [vmem:[%s7934 + $0x10] sm:$0xf]
      %v7940 = vld [vmem:[%s7934 + $0x14] sm:$0xf]
      %v7941 = vld [vmem:[%s7934 + $0x18] sm:$0xf]
      %v7942 = vld [vmem:[%s7934 + $0x1c] sm:$0xf]
      %v7943 = vld [vmem:[%s7934 + $0x20] sm:$0xf]
      %v7944 = vld [vmem:[%s7934 + $0x24] sm:$0xf]
      %v7945 = vld [vmem:[%s7934 + $0x28] sm:$0xf]
      %v7946 = vld [vmem:[%s7934 + $0x2c] sm:$0xf]
      %v7947 = vld [vmem:[%s7934 + $0x30] sm:$0xf]
      %v7948 = vld [vmem:[%s7934 + $0x34] sm:$0xf]
      %v7949 = vld [vmem:[%s7934 + $0x38] sm:$0xf]
      %v7950 = vld [vmem:[%s7934 + $0x3c] sm:$0xf]
      %v7967 = vunpack.c.l.b16 %v7935
      %v7968 = vunpack.c.l.b16 %v7936
      %v7969 = vunpack.c.l.b16 %v7937
      %v7970 = vunpack.c.l.b16 %v7938
      %v7971 = vunpack.c.l.b16 %v7939
      %v7972 = vunpack.c.l.b16 %v7940
      %v7973 = vunpack.c.l.b16 %v7941
      %v7974 = vunpack.c.l.b16 %v7942
      %v7975 = vunpack.c.l.b16 %v7943
      %v7976 = vunpack.c.l.b16 %v7944
      %v7977 = vunpack.c.l.b16 %v7945
      %v7978 = vunpack.c.l.b16 %v7946
      %v7979 = vunpack.c.l.b16 %v7947
      %v7980 = vunpack.c.l.b16 %v7948
      %v7981 = vunpack.c.l.b16 %v7949
      %v7982 = vunpack.c.l.b16 %v7950
      %v7983 = vpack.c.b16 %v7968, %v7967
      %v7984 = vpack.c.b16 %v7970, %v7969
      %v7985 = vpack.c.b16 %v7972, %v7971
      %v7986 = vpack.c.b16 %v7974, %v7973
      %v7987 = vpack.c.b16 %v7976, %v7975
      %v7988 = vpack.c.b16 %v7978, %v7977
      %v7989 = vpack.c.b16 %v7980, %v7979
      %v7990 = vpack.c.b16 %v7982, %v7981
      %7999 = vmatprep.subr.bf16.mxu0 0
      %8000 = vmatpush1.bf16.msra.mxu0 %v7983
      %8001 = vmatprep.subr.bf16.mxu0 0
      %8002 = vmatpush1.bf16.msra.mxu0 %v7984
      %8003 = vmatprep.subr.bf16.mxu0 0
      %8004 = vmatpush1.bf16.msra.mxu0 %v7985
      %8005 = vmatprep.subr.bf16.mxu0 0
      %8006 = vmatpush1.bf16.msra.mxu0 %v7986
      %8007 = vmatprep.subr.bf16.mxu0 0
      %8008 = vmatpush1.bf16.msra.mxu0 %v7987
      %8009 = vmatprep.subr.bf16.mxu0 0
      %8010 = vmatpush1.bf16.msra.mxu0 %v7988
      %8011 = vmatprep.subr.bf16.mxu0 0
      %8012 = vmatpush1.bf16.msra.mxu0 %v7989
      %8013 = vmatprep.subr.bf16.mxu0 0
      %8014 = vmatpush1.bf16.msra.mxu0 %v7990
      %8015 = vmatprep.subr.bf16.mxu0 0
      %8016 = vmatpush1.bf16.msra.mxu0 0
      %8017 = vmatprep.subr.bf16.mxu0 0
      %8018 = vmatpush1.bf16.msra.mxu0 0
      %8019 = vmatprep.subr.bf16.mxu0 0
      %8020 = vmatpush1.bf16.msra.mxu0 0
      %8021 = vmatprep.subr.bf16.mxu0 0
      %8022 = vmatpush1.bf16.msra.mxu0 0
      %8023 = vmatprep.subr.bf16.mxu0 0
      %8024 = vmatpush1.bf16.msra.mxu0 0
      %8025 = vmatprep.subr.bf16.mxu0 0
      %8026 = vmatpush1.bf16.msra.mxu0 0
      %8027 = vmatprep.subr.bf16.mxu0 0
      %8028 = vmatpush1.bf16.msra.mxu0 0
      %8029 = vmatprep.subr.bf16.mxu0 0
      %8030 = vmatpush1.bf16.msra.mxu0 0
      %8031 = vmatprep.mubr.bf16.mxu0 0
      %8032 = vmatmul.mubr.bf16.gmra.mrb[0].mxu0 %v283
      %v8033 = vpop.f32.mrb[0].mxu0
      %v8034 = vadd.f32 0.0, %v8033
      %v8035 = vpop.f32.mrb[0].mxu0
      %v8036 = vpop.f32.mrb[0].mxu0
      %v8037 = vadd.f32 0.0, %v8036
      %v8038 = vpop.f32.mrb[0].mxu0
      %8039 = vmatprep.mubr.bf16.mxu0 0
      %8040 = vmatmul.mubr.bf16.gmra.mrb[0].mxu0 %v284
      %v8041 = vpop.f32.mrb[0].mxu0
      %v8042 = vadd.f32 0.0, %v8041
      %v8043 = vpop.f32.mrb[0].mxu0
      %v8044 = vpop.f32.mrb[0].mxu0
      %v8045 = vadd.f32 0.0, %v8044
      %v8046 = vpop.f32.mrb[0].mxu0
      %8047 = vmatprep.mubr.bf16.mxu0 0
      %8048 = vmatmul.mubr.bf16.gmra.mrb[0].mxu0 %v285
      %v8049 = vpop.f32.mrb[0].mxu0
      %v8050 = vadd.f32 0.0, %v8049
      %v8051 = vpop.f32.mrb[0].mxu0
      %v8052 = vpop.f32.mrb[0].mxu0
      %v8053 = vadd.f32 0.0, %v8052
      %v8054 = vpop.f32.mrb[0].mxu0
      %8055 = vmatprep.mubr.bf16.mxu0 0
      %8056 = vmatmul.mubr.bf16.gmra.mrb[0].mxu0 %v286
      %v8057 = vpop.f32.mrb[0].mxu0
      %v8058 = vadd.f32 0.0, %v8057
      %v8059 = vpop.f32.mrb[0].mxu0
      %v8060 = vpop.f32.mrb[0].mxu0
      %v8061 = vadd.f32 0.0, %v8060
      %v8062 = vpop.f32.mrb[0].mxu0
      %8063 = vmatprep.mubr.bf16.mxu0 0
      %8064 = vmatmul.mubr.bf16.gmra.mrb[0].mxu0 %v287
      %v8065 = vpop.f32.mrb[0].mxu0
      %v8066 = vadd.f32 0.0, %v8065
      %v8067 = vpop.f32.mrb[0].mxu0
      %v8068 = vpop.f32.mrb[0].mxu0
      %v8069 = vadd.f32 0.0, %v8068
      %v8070 = vpop.f32.mrb[0].mxu0
      %8071 = vmatprep.mubr.bf16.mxu0 0
      %8072 = vmatmul.mubr.bf16.gmra.mrb[0].mxu0 %v288
      %v8073 = vpop.f32.mrb[0].mxu0
      %v8074 = vadd.f32 0.0, %v8073
      %v8075 = vpop.f32.mrb[0].mxu0
      %v8076 = vpop.f32.mrb[0].mxu0
      %v8077 = vadd.f32 0.0, %v8076
      %v8078 = vpop.f32.mrb[0].mxu0
      %8079 = vmatprep.mubr.bf16.mxu0 0
      %8080 = vmatmul.mubr.bf16.gmra.mrb[0].mxu0 %v289
      %v8081 = vpop.f32.mrb[0].mxu0
      %v8082 = vadd.f32 0.0, %v8081
      %v8083 = vpop.f32.mrb[0].mxu0
      %v8084 = vpop.f32.mrb[0].mxu0
      %v8085 = vadd.f32 0.0, %v8084
      %v8086 = vpop.f32.mrb[0].mxu0
      %8087 = vmatprep.mubr.bf16.mxu0 0
      %8088 = vmatmul.mubr.bf16.gmra.mrb[0].mxu0 %v290
      %v8089 = vpop.f32.mrb[0].mxu0
      %v8090 = vadd.f32 0.0, %v8089
      %v8091 = vpop.f32.mrb[0].mxu0
      %v8092 = vpop.f32.mrb[0].mxu0
      %v8093 = vadd.f32 0.0, %v8092
      %v8094 = vpop.f32.mrb[0].mxu0
      %8095 = vdwg.mxu0
      %v8096 = vpack.c.bf16 %v8037, %v8034
      %v8097 = vpack.c.bf16 %v8045, %v8042
      %v8098 = vpack.c.bf16 %v8053, %v8050
      %v8099 = vpack.c.bf16 %v8061, %v8058
      %v8100 = vpack.c.bf16 %v8069, %v8066
      %v8101 = vpack.c.bf16 %v8077, %v8074
      %v8102 = vpack.c.bf16 %v8085, %v8082
      %v8103 = vpack.c.bf16 %v8093, %v8090
      %s8104 = scalar_lea.vmem %s2, 448
      %v8105 = vld [vmem:[%s8104] sm:$0xf]
      %v8106 = vld [vmem:[%s8104 + $0x4] sm:$0xf]
      %v8107 = vld [vmem:[%s8104 + $0x8] sm:$0xf]
      %v8108 = vld [vmem:[%s8104 + $0xc] sm:$0xf]
      %v8109 = vld [vmem:[%s8104 + $0x10] sm:$0xf]
      %v8110 = vld [vmem:[%s8104 + $0x14] sm:$0xf]
      %v8111 = vld [vmem:[%s8104 + $0x18] sm:$0xf]
      %v8112 = vld [vmem:[%s8104 + $0x1c] sm:$0xf]
      %v8113 = vld [vmem:[%s8104 + $0x20] sm:$0xf]
      %v8114 = vld [vmem:[%s8104 + $0x24] sm:$0xf]
      %v8115 = vld [vmem:[%s8104 + $0x28] sm:$0xf]
      %v8116 = vld [vmem:[%s8104 + $0x2c] sm:$0xf]
      %v8117 = vld [vmem:[%s8104 + $0x30] sm:$0xf]
      %v8118 = vld [vmem:[%s8104 + $0x34] sm:$0xf]
      %v8119 = vld [vmem:[%s8104 + $0x38] sm:$0xf]
      %v8120 = vld [vmem:[%s8104 + $0x3c] sm:$0xf]
      %v8137 = vunpack.c.l.b16 %v8105
      %v8138 = vunpack.c.l.b16 %v8106
      %v8139 = vunpack.c.l.b16 %v8107
      %v8140 = vunpack.c.l.b16 %v8108
      %v8141 = vunpack.c.l.b16 %v8109
      %v8142 = vunpack.c.l.b16 %v8110
      %v8143 = vunpack.c.l.b16 %v8111
      %v8144 = vunpack.c.l.b16 %v8112
      %v8145 = vunpack.c.l.b16 %v8113
      %v8146 = vunpack.c.l.b16 %v8114
      %v8147 = vunpack.c.l.b16 %v8115
      %v8148 = vunpack.c.l.b16 %v8116
      %v8149 = vunpack.c.l.b16 %v8117
      %v8150 = vunpack.c.l.b16 %v8118
      %v8151 = vunpack.c.l.b16 %v8119
      %v8152 = vunpack.c.l.b16 %v8120
      %v8153 = vpack.c.b16 %v8138, %v8137
      %v8154 = vpack.c.b16 %v8140, %v8139
      %v8155 = vpack.c.b16 %v8142, %v8141
      %v8156 = vpack.c.b16 %v8144, %v8143
      %v8157 = vpack.c.b16 %v8146, %v8145
      %v8158 = vpack.c.b16 %v8148, %v8147
      %v8159 = vpack.c.b16 %v8150, %v8149
      %v8160 = vpack.c.b16 %v8152, %v8151
      %8169 = vmatprep.subr.bf16.mxu0 0
      %8170 = vmatpush1.bf16.msra.mxu0 %v8153
      %8171 = vmatprep.subr.bf16.mxu0 0
      %8172 = vmatpush1.bf16.msra.mxu0 %v8154
      %8173 = vmatprep.subr.bf16.mxu0 0
      %8174 = vmatpush1.bf16.msra.mxu0 %v8155
      %8175 = vmatprep.subr.bf16.mxu0 0
      %8176 = vmatpush1.bf16.msra.mxu0 %v8156
      %8177 = vmatprep.subr.bf16.mxu0 0
      %8178 = vmatpush1.bf16.msra.mxu0 %v8157
      %8179 = vmatprep.subr.bf16.mxu0 0
      %8180 = vmatpush1.bf16.msra.mxu0 %v8158
      %8181 = vmatprep.subr.bf16.mxu0 0
      %8182 = vmatpush1.bf16.msra.mxu0 %v8159
      %8183 = vmatprep.subr.bf16.mxu0 0
      %8184 = vmatpush1.bf16.msra.mxu0 %v8160
      %8185 = vmatprep.subr.bf16.mxu0 0
      %8186 = vmatpush1.bf16.msra.mxu0 0
      %8187 = vmatprep.subr.bf16.mxu0 0
      %8188 = vmatpush1.bf16.msra.mxu0 0
      %8189 = vmatprep.subr.bf16.mxu0 0
      %8190 = vmatpush1.bf16.msra.mxu0 0
      %8191 = vmatprep.subr.bf16.mxu0 0
      %8192 = vmatpush1.bf16.msra.mxu0 0
      %8193 = vmatprep.subr.bf16.mxu0 0
      %8194 = vmatpush1.bf16.msra.mxu0 0
      %8195 = vmatprep.subr.bf16.mxu0 0
      %8196 = vmatpush1.bf16.msra.mxu0 0
      %8197 = vmatprep.subr.bf16.mxu0 0
      %8198 = vmatpush1.bf16.msra.mxu0 0
      %8199 = vmatprep.subr.bf16.mxu0 0
      %8200 = vmatpush1.bf16.msra.mxu0 0
      %8201 = vmatprep.mubr.bf16.mxu0 0
      %8202 = vmatmul.mubr.bf16.gmra.mrb[0].mxu0 %v283
      %v8203 = vpop.f32.mrb[0].mxu0
      %v8204 = vadd.f32 0.0, %v8203
      %v8205 = vpop.f32.mrb[0].mxu0
      %v8206 = vpop.f32.mrb[0].mxu0
      %v8207 = vadd.f32 0.0, %v8206
      %v8208 = vpop.f32.mrb[0].mxu0
      %8209 = vmatprep.mubr.bf16.mxu0 0
      %8210 = vmatmul.mubr.bf16.gmra.mrb[0].mxu0 %v284
      %v8211 = vpop.f32.mrb[0].mxu0
      %v8212 = vadd.f32 0.0, %v8211
      %v8213 = vpop.f32.mrb[0].mxu0
      %v8214 = vpop.f32.mrb[0].mxu0
      %v8215 = vadd.f32 0.0, %v8214
      %v8216 = vpop.f32.mrb[0].mxu0
      %8217 = vmatprep.mubr.bf16.mxu0 0
      %8218 = vmatmul.mubr.bf16.gmra.mrb[0].mxu0 %v285
      %v8219 = vpop.f32.mrb[0].mxu0
      %v8220 = vadd.f32 0.0, %v8219
      %v8221 = vpop.f32.mrb[0].mxu0
      %v8222 = vpop.f32.mrb[0].mxu0
      %v8223 = vadd.f32 0.0, %v8222
      %v8224 = vpop.f32.mrb[0].mxu0
      %8225 = vmatprep.mubr.bf16.mxu0 0
      %8226 = vmatmul.mubr.bf16.gmra.mrb[0].mxu0 %v286
      %v8227 = vpop.f32.mrb[0].mxu0
      %v8228 = vadd.f32 0.0, %v8227
      %v8229 = vpop.f32.mrb[0].mxu0
      %v8230 = vpop.f32.mrb[0].mxu0
      %v8231 = vadd.f32 0.0, %v8230
      %v8232 = vpop.f32.mrb[0].mxu0
      %8233 = vmatprep.mubr.bf16.mxu0 0
      %8234 = vmatmul.mubr.bf16.gmra.mrb[0].mxu0 %v287
      %v8235 = vpop.f32.mrb[0].mxu0
      %v8236 = vadd.f32 0.0, %v8235
      %v8237 = vpop.f32.mrb[0].mxu0
      %v8238 = vpop.f32.mrb[0].mxu0
      %v8239 = vadd.f32 0.0, %v8238
      %v8240 = vpop.f32.mrb[0].mxu0
      %8241 = vmatprep.mubr.bf16.mxu0 0
      %8242 = vmatmul.mubr.bf16.gmra.mrb[0].mxu0 %v288
      %v8243 = vpop.f32.mrb[0].mxu0
      %v8244 = vadd.f32 0.0, %v8243
      %v8245 = vpop.f32.mrb[0].mxu0
      %v8246 = vpop.f32.mrb[0].mxu0
      %v8247 = vadd.f32 0.0, %v8246
      %v8248 = vpop.f32.mrb[0].mxu0
      %8249 = vmatprep.mubr.bf16.mxu0 0
      %8250 = vmatmul.mubr.bf16.gmra.mrb[0].mxu0 %v289
      %v8251 = vpop.f32.mrb[0].mxu0
      %v8252 = vadd.f32 0.0, %v8251
      %v8253 = vpop.f32.mrb[0].mxu0
      %v8254 = vpop.f32.mrb[0].mxu0
      %v8255 = vadd.f32 0.0, %v8254
      %v8256 = vpop.f32.mrb[0].mxu0
      %8257 = vmatprep.mubr.bf16.mxu0 0
      %8258 = vmatmul.mubr.bf16.gmra.mrb[0].mxu0 %v290
      %v8259 = vpop.f32.mrb[0].mxu0
      %v8260 = vadd.f32 0.0, %v8259
      %v8261 = vpop.f32.mrb[0].mxu0
      %v8262 = vpop.f32.mrb[0].mxu0
      %v8263 = vadd.f32 0.0, %v8262
      %v8264 = vpop.f32.mrb[0].mxu0
      %8265 = vdwg.mxu0
      %v8266 = vpack.c.bf16 %v8207, %v8204
      %v8267 = vpack.c.bf16 %v8215, %v8212
      %v8268 = vpack.c.bf16 %v8223, %v8220
      %v8269 = vpack.c.bf16 %v8231, %v8228
      %v8270 = vpack.c.bf16 %v8239, %v8236
      %v8271 = vpack.c.bf16 %v8247, %v8244
      %v8272 = vpack.c.bf16 %v8255, %v8252
      %v8273 = vpack.c.bf16 %v8263, %v8260
      %s8274 = scalar_lea.vmem %s3, 448
      %v8275 = vld [vmem:[%s8274] sm:$0xf]
      %v8276 = vld [vmem:[%s8274 + $0x4] sm:$0xf]
      %v8277 = vld [vmem:[%s8274 + $0x8] sm:$0xf]
      %v8278 = vld [vmem:[%s8274 + $0xc] sm:$0xf]
      %v8279 = vld [vmem:[%s8274 + $0x10] sm:$0xf]
      %v8280 = vld [vmem:[%s8274 + $0x14] sm:$0xf]
      %v8281 = vld [vmem:[%s8274 + $0x18] sm:$0xf]
      %v8282 = vld [vmem:[%s8274 + $0x1c] sm:$0xf]
      %v8283 = vld [vmem:[%s8274 + $0x20] sm:$0xf]
      %v8284 = vld [vmem:[%s8274 + $0x24] sm:$0xf]
      %v8285 = vld [vmem:[%s8274 + $0x28] sm:$0xf]
      %v8286 = vld [vmem:[%s8274 + $0x2c] sm:$0xf]
      %v8287 = vld [vmem:[%s8274 + $0x30] sm:$0xf]
      %v8288 = vld [vmem:[%s8274 + $0x34] sm:$0xf]
      %v8289 = vld [vmem:[%s8274 + $0x38] sm:$0xf]
      %v8290 = vld [vmem:[%s8274 + $0x3c] sm:$0xf]
      %v8307 = vunpack.c.l.b16 %v8275
      %v8308 = vunpack.c.l.b16 %v8276
      %v8309 = vunpack.c.l.b16 %v8277
      %v8310 = vunpack.c.l.b16 %v8278
      %v8311 = vunpack.c.l.b16 %v8279
      %v8312 = vunpack.c.l.b16 %v8280
      %v8313 = vunpack.c.l.b16 %v8281
      %v8314 = vunpack.c.l.b16 %v8282
      %v8315 = vunpack.c.l.b16 %v8283
      %v8316 = vunpack.c.l.b16 %v8284
      %v8317 = vunpack.c.l.b16 %v8285
      %v8318 = vunpack.c.l.b16 %v8286
      %v8319 = vunpack.c.l.b16 %v8287
      %v8320 = vunpack.c.l.b16 %v8288
      %v8321 = vunpack.c.l.b16 %v8289
      %v8322 = vunpack.c.l.b16 %v8290
      %v8323 = vpack.c.b16 %v8308, %v8307
      %v8324 = vpack.c.b16 %v8310, %v8309
      %v8325 = vpack.c.b16 %v8312, %v8311
      %v8326 = vpack.c.b16 %v8314, %v8313
      %v8327 = vpack.c.b16 %v8316, %v8315
      %v8328 = vpack.c.b16 %v8318, %v8317
      %v8329 = vpack.c.b16 %v8320, %v8319
      %v8330 = vpack.c.b16 %v8322, %v8321
      %8339 = vmatprep.subr.bf16.mxu0 0
      %8340 = vmatpush1.bf16.msra.mxu0 %v8323
      %8341 = vmatprep.subr.bf16.mxu0 0
      %8342 = vmatpush1.bf16.msra.mxu0 %v8324
      %8343 = vmatprep.subr.bf16.mxu0 0
      %8344 = vmatpush1.bf16.msra.mxu0 %v8325
      %8345 = vmatprep.subr.bf16.mxu0 0
      %8346 = vmatpush1.bf16.msra.mxu0 %v8326
      %8347 = vmatprep.subr.bf16.mxu0 0
      %8348 = vmatpush1.bf16.msra.mxu0 %v8327
      %8349 = vmatprep.subr.bf16.mxu0 0
      %8350 = vmatpush1.bf16.msra.mxu0 %v8328
      %8351 = vmatprep.subr.bf16.mxu0 0
      %8352 = vmatpush1.bf16.msra.mxu0 %v8329
      %8353 = vmatprep.subr.bf16.mxu0 0
      %8354 = vmatpush1.bf16.msra.mxu0 %v8330
      %8355 = vmatprep.subr.bf16.mxu0 0
      %8356 = vmatpush1.bf16.msra.mxu0 0
      %8357 = vmatprep.subr.bf16.mxu0 0
      %8358 = vmatpush1.bf16.msra.mxu0 0
      %8359 = vmatprep.subr.bf16.mxu0 0
      %8360 = vmatpush1.bf16.msra.mxu0 0
      %8361 = vmatprep.subr.bf16.mxu0 0
      %8362 = vmatpush1.bf16.msra.mxu0 0
      %8363 = vmatprep.subr.bf16.mxu0 0
      %8364 = vmatpush1.bf16.msra.mxu0 0
      %8365 = vmatprep.subr.bf16.mxu0 0
      %8366 = vmatpush1.bf16.msra.mxu0 0
      %8367 = vmatprep.subr.bf16.mxu0 0
      %8368 = vmatpush1.bf16.msra.mxu0 0
      %8369 = vmatprep.subr.bf16.mxu0 0
      %8370 = vmatpush1.bf16.msra.mxu0 0
      %8371 = vmatprep.mubr.bf16.mxu0 0
      %8372 = vmatmul.mubr.bf16.gmra.mrb[0].mxu0 %v283
      %v8373 = vpop.f32.mrb[0].mxu0
      %v8374 = vadd.f32 0.0, %v8373
      %v8375 = vpop.f32.mrb[0].mxu0
      %v8376 = vpop.f32.mrb[0].mxu0
      %v8377 = vadd.f32 0.0, %v8376
      %v8378 = vpop.f32.mrb[0].mxu0
      %8379 = vmatprep.mubr.bf16.mxu0 0
      %8380 = vmatmul.mubr.bf16.gmra.mrb[0].mxu0 %v284
      %v8381 = vpop.f32.mrb[0].mxu0
      %v8382 = vadd.f32 0.0, %v8381
      %v8383 = vpop.f32.mrb[0].mxu0
      %v8384 = vpop.f32.mrb[0].mxu0
      %v8385 = vadd.f32 0.0, %v8384
      %v8386 = vpop.f32.mrb[0].mxu0
      %8387 = vmatprep.mubr.bf16.mxu0 0
      %8388 = vmatmul.mubr.bf16.gmra.mrb[0].mxu0 %v285
      %v8389 = vpop.f32.mrb[0].mxu0
      %v8390 = vadd.f32 0.0, %v8389
      %v8391 = vpop.f32.mrb[0].mxu0
      %v8392 = vpop.f32.mrb[0].mxu0
      %v8393 = vadd.f32 0.0, %v8392
      %v8394 = vpop.f32.mrb[0].mxu0
      %8395 = vmatprep.mubr.bf16.mxu0 0
      %8396 = vmatmul.mubr.bf16.gmra.mrb[0].mxu0 %v286
      %v8397 = vpop.f32.mrb[0].mxu0
      %v8398 = vadd.f32 0.0, %v8397
      %v8399 = vpop.f32.mrb[0].mxu0
      %v8400 = vpop.f32.mrb[0].mxu0
      %v8401 = vadd.f32 0.0, %v8400
      %v8402 = vpop.f32.mrb[0].mxu0
      %8403 = vmatprep.mubr.bf16.mxu0 0
      %8404 = vmatmul.mubr.bf16.gmra.mrb[0].mxu0 %v287
      %v8405 = vpop.f32.mrb[0].mxu0
      %v8406 = vadd.f32 0.0, %v8405
      %v8407 = vpop.f32.mrb[0].mxu0
      %v8408 = vpop.f32.mrb[0].mxu0
      %v8409 = vadd.f32 0.0, %v8408
      %v8410 = vpop.f32.mrb[0].mxu0
      %8411 = vmatprep.mubr.bf16.mxu0 0
      %8412 = vmatmul.mubr.bf16.gmra.mrb[0].mxu0 %v288
      %v8413 = vpop.f32.mrb[0].mxu0
      %v8414 = vadd.f32 0.0, %v8413
      %v8415 = vpop.f32.mrb[0].mxu0
      %v8416 = vpop.f32.mrb[0].mxu0
      %v8417 = vadd.f32 0.0, %v8416
      %v8418 = vpop.f32.mrb[0].mxu0
      %8419 = vmatprep.mubr.bf16.mxu0 0
      %8420 = vmatmul.mubr.bf16.gmra.mrb[0].mxu0 %v289
      %v8421 = vpop.f32.mrb[0].mxu0
      %v8422 = vadd.f32 0.0, %v8421
      %v8423 = vpop.f32.mrb[0].mxu0
      %v8424 = vpop.f32.mrb[0].mxu0
      %v8425 = vadd.f32 0.0, %v8424
      %v8426 = vpop.f32.mrb[0].mxu0
      %8427 = vmatprep.mubr.bf16.mxu0 0
      %8428 = vmatmul.mubr.bf16.gmra.mrb[0].mxu0 %v290
      %v8429 = vpop.f32.mrb[0].mxu0
      %v8430 = vadd.f32 0.0, %v8429
      %v8431 = vpop.f32.mrb[0].mxu0
      %v8432 = vpop.f32.mrb[0].mxu0
      %v8433 = vadd.f32 0.0, %v8432
      %v8434 = vpop.f32.mrb[0].mxu0
      %8435 = vdwg.mxu0
      %v8436 = vpack.c.bf16 %v8377, %v8374
      %v8437 = vpack.c.bf16 %v8385, %v8382
      %v8438 = vpack.c.bf16 %v8393, %v8390
      %v8439 = vpack.c.bf16 %v8401, %v8398
      %v8440 = vpack.c.bf16 %v8409, %v8406
      %v8441 = vpack.c.bf16 %v8417, %v8414
      %v8442 = vpack.c.bf16 %v8425, %v8422
      %v8443 = vpack.c.bf16 %v8433, %v8430
      %v8445 = vsel %vm814, %v8096, 0
      %v8448 = vsel %vm814, %v8097, 0
      %v8451 = vsel %vm814, %v8098, 0
      %v8454 = vsel %vm814, %v8099, 0
      %v8457 = vsel %vm814, %v8100, 0
      %v8460 = vsel %vm814, %v8101, 0
      %v8463 = vsel %vm814, %v8102, 0
      %v8466 = vsel %vm814, %v8103, 0
      %v8469 = vsel %vm814, %v8266, 0
      %v8472 = vsel %vm814, %v8267, 0
      %v8475 = vsel %vm814, %v8268, 0
      %v8478 = vsel %vm814, %v8269, 0
      %v8481 = vsel %vm814, %v8270, 0
      %v8484 = vsel %vm814, %v8271, 0
      %v8487 = vsel %vm814, %v8272, 0
      %v8490 = vsel %vm814, %v8273, 0
      %8492 = vmatprep.subr.bf16.mxu0 0
      %8493 = vmatpush1.bf16.xpose.msra.mxu0 %v8469
      %8494 = vmatprep.subr.bf16.mxu0 0
      %8495 = vmatpush1.bf16.xpose.msra.mxu0 %v8472
      %8496 = vmatprep.subr.bf16.mxu0 0
      %8497 = vmatpush1.bf16.xpose.msra.mxu0 %v8475
      %8498 = vmatprep.subr.bf16.mxu0 0
      %8499 = vmatpush1.bf16.xpose.msra.mxu0 %v8478
      %8500 = vmatprep.subr.bf16.mxu0 0
      %8501 = vmatpush1.bf16.xpose.msra.mxu0 %v8481
      %8502 = vmatprep.subr.bf16.mxu0 0
      %8503 = vmatpush1.bf16.xpose.msra.mxu0 %v8484
      %8504 = vmatprep.subr.bf16.mxu0 0
      %8505 = vmatpush1.bf16.xpose.msra.mxu0 %v8487
      %8506 = vmatprep.subr.bf16.mxu0 0
      %8507 = vmatpush1.bf16.xpose.msra.mxu0 %v8490
      %8508 = vmatprep.subr.bf16.mxu0 0
      %8509 = vmatpush1.bf16.xpose.msra.mxu0 0
      %8510 = vmatprep.subr.bf16.mxu0 0
      %8511 = vmatpush1.bf16.xpose.msra.mxu0 0
      %8512 = vmatprep.subr.bf16.mxu0 0
      %8513 = vmatpush1.bf16.xpose.msra.mxu0 0
      %8514 = vmatprep.subr.bf16.mxu0 0
      %8515 = vmatpush1.bf16.xpose.msra.mxu0 0
      %8516 = vmatprep.subr.bf16.mxu0 0
      %8517 = vmatpush1.bf16.xpose.msra.mxu0 0
      %8518 = vmatprep.subr.bf16.mxu0 0
      %8519 = vmatpush1.bf16.xpose.msra.mxu0 0
      %8520 = vmatprep.subr.bf16.mxu0 0
      %8521 = vmatpush1.bf16.xpose.msra.mxu0 0
      %8522 = vmatprep.subr.bf16.mxu0 0
      %8523 = vmatpush1.bf16.xpose.msra.mxu0 0
      %8524 = vmatprep.mubr.bf16.mxu0 0
      %8525 = vmatmul.mubr.bf16.gmra.mrb[0].mxu0 %v8445
      %v8526 = vpop.f32.mrb[0].mxu0
      %v8527 = vadd.f32 0.0, %v8526
      %v8528 = vpop.f32.mrb[0].mxu0
      %v8529 = vpop.f32.mrb[0].mxu0
      %v8530 = vadd.f32 0.0, %v8529
      %v8531 = vpop.f32.mrb[0].mxu0
      %8532 = vmatprep.mubr.bf16.mxu0 0
      %8533 = vmatmul.mubr.bf16.gmra.mrb[0].mxu0 %v8448
      %v8534 = vpop.f32.mrb[0].mxu0
      %v8535 = vadd.f32 0.0, %v8534
      %v8536 = vpop.f32.mrb[0].mxu0
      %v8537 = vpop.f32.mrb[0].mxu0
      %v8538 = vadd.f32 0.0, %v8537
      %v8539 = vpop.f32.mrb[0].mxu0
      %8540 = vmatprep.mubr.bf16.mxu0 0
      %8541 = vmatmul.mubr.bf16.gmra.mrb[0].mxu0 %v8451
      %v8542 = vpop.f32.mrb[0].mxu0
      %v8543 = vadd.f32 0.0, %v8542
      %v8544 = vpop.f32.mrb[0].mxu0
      %v8545 = vpop.f32.mrb[0].mxu0
      %v8546 = vadd.f32 0.0, %v8545
      %v8547 = vpop.f32.mrb[0].mxu0
      %8548 = vmatprep.mubr.bf16.mxu0 0
      %8549 = vmatmul.mubr.bf16.gmra.mrb[0].mxu0 %v8454
      %v8550 = vpop.f32.mrb[0].mxu0
      %v8551 = vadd.f32 0.0, %v8550
      %v8552 = vpop.f32.mrb[0].mxu0
      %v8553 = vpop.f32.mrb[0].mxu0
      %v8554 = vadd.f32 0.0, %v8553
      %v8555 = vpop.f32.mrb[0].mxu0
      %8556 = vmatprep.mubr.bf16.mxu0 0
      %8557 = vmatmul.mubr.bf16.gmra.mrb[0].mxu0 %v8457
      %v8558 = vpop.f32.mrb[0].mxu0
      %v8559 = vadd.f32 0.0, %v8558
      %v8560 = vpop.f32.mrb[0].mxu0
      %v8561 = vpop.f32.mrb[0].mxu0
      %v8562 = vadd.f32 0.0, %v8561
      %v8563 = vpop.f32.mrb[0].mxu0
      %8564 = vmatprep.mubr.bf16.mxu0 0
      %8565 = vmatmul.mubr.bf16.gmra.mrb[0].mxu0 %v8460
      %v8566 = vpop.f32.mrb[0].mxu0
      %v8567 = vadd.f32 0.0, %v8566
      %v8568 = vpop.f32.mrb[0].mxu0
      %v8569 = vpop.f32.mrb[0].mxu0
      %v8570 = vadd.f32 0.0, %v8569
      %v8571 = vpop.f32.mrb[0].mxu0
      %8572 = vmatprep.mubr.bf16.mxu0 0
      %8573 = vmatmul.mubr.bf16.gmra.mrb[0].mxu0 %v8463
      %v8574 = vpop.f32.mrb[0].mxu0
      %v8575 = vadd.f32 0.0, %v8574
      %v8576 = vpop.f32.mrb[0].mxu0
      %v8577 = vpop.f32.mrb[0].mxu0
      %v8578 = vadd.f32 0.0, %v8577
      %v8579 = vpop.f32.mrb[0].mxu0
      %8580 = vmatprep.mubr.bf16.mxu0 0
      %8581 = vmatmul.mubr.bf16.gmra.mrb[0].mxu0 %v8466
      %v8582 = vpop.f32.mrb[0].mxu0
      %v8583 = vadd.f32 0.0, %v8582
      %v8584 = vpop.f32.mrb[0].mxu0
      %v8585 = vpop.f32.mrb[0].mxu0
      %v8586 = vadd.f32 0.0, %v8585
      %v8587 = vpop.f32.mrb[0].mxu0
      %8588 = vdwg.mxu0
      %8589 = vmax.xlane.f32.xlu0 %v8527
      %v8590 = vpop.xlane.xlu0 %8589
      %8591 = vmax.xlane.f32.xlu0 %v8530
      %v8592 = vpop.xlane.xlu0 %8591
      %8593 = vmax.xlane.f32.xlu0 %v8535
      %v8594 = vpop.xlane.xlu0 %8593
      %8595 = vmax.xlane.f32.xlu0 %v8538
      %v8596 = vpop.xlane.xlu0 %8595
      %8597 = vmax.xlane.f32.xlu0 %v8543
      %v8598 = vpop.xlane.xlu0 %8597
      %8599 = vmax.xlane.f32.xlu0 %v8546
      %v8600 = vpop.xlane.xlu0 %8599
      %8601 = vmax.xlane.f32.xlu0 %v8551
      %v8602 = vpop.xlane.xlu0 %8601
      %8603 = vmax.xlane.f32.xlu0 %v8554
      %v8604 = vpop.xlane.xlu0 %8603
      %8605 = vmax.xlane.f32.xlu0 %v8559
      %v8606 = vpop.xlane.xlu0 %8605
      %8607 = vmax.xlane.f32.xlu0 %v8562
      %v8608 = vpop.xlane.xlu0 %8607
      %8609 = vmax.xlane.f32.xlu0 %v8567
      %v8610 = vpop.xlane.xlu0 %8609
      %8611 = vmax.xlane.f32.xlu0 %v8570
      %v8612 = vpop.xlane.xlu0 %8611
      %8613 = vmax.xlane.f32.xlu0 %v8575
      %v8614 = vpop.xlane.xlu0 %8613
      %8615 = vmax.xlane.f32.xlu0 %v8578
      %v8616 = vpop.xlane.xlu0 %8615
      %8617 = vmax.xlane.f32.xlu0 %v8583
      %v8618 = vpop.xlane.xlu0 %8617
      %8619 = vmax.xlane.f32.xlu0 %v8586
      %v8620 = vpop.xlane.xlu0 %8619
      %v8621 = vsub.f32 %v8527, %v8590
      %v8622 = vsub.f32 %v8530, %v8592
      %v8623 = vsub.f32 %v8535, %v8594
      %v8624 = vsub.f32 %v8538, %v8596
      %v8625 = vsub.f32 %v8543, %v8598
      %v8626 = vsub.f32 %v8546, %v8600
      %v8627 = vsub.f32 %v8551, %v8602
      %v8628 = vsub.f32 %v8554, %v8604
      %v8629 = vsub.f32 %v8559, %v8606
      %v8630 = vsub.f32 %v8562, %v8608
      %v8631 = vsub.f32 %v8567, %v8610
      %v8632 = vsub.f32 %v8570, %v8612
      %v8633 = vsub.f32 %v8575, %v8614
      %v8634 = vsub.f32 %v8578, %v8616
      %v8635 = vsub.f32 %v8583, %v8618
      %v8636 = vsub.f32 %v8586, %v8620
      %v8637 = vmul.f32 %v8621, 1.442695
      %v8638 = vpow.pop %v8637
      %v8639 = vmul.f32 %v8622, 1.442695
      %v8640 = vpow.pop %v8639
      %v8641 = vmul.f32 %v8623, 1.442695
      %v8642 = vpow.pop %v8641
      %v8643 = vmul.f32 %v8624, 1.442695
      %v8644 = vpow.pop %v8643
      %v8645 = vmul.f32 %v8625, 1.442695
      %v8646 = vpow.pop %v8645
      %v8647 = vmul.f32 %v8626, 1.442695
      %v8648 = vpow.pop %v8647
      %v8649 = vmul.f32 %v8627, 1.442695
      %v8650 = vpow.pop %v8649
      %v8651 = vmul.f32 %v8628, 1.442695
      %v8652 = vpow.pop %v8651
      %v8653 = vmul.f32 %v8629, 1.442695
      %v8654 = vpow.pop %v8653
      %v8655 = vmul.f32 %v8630, 1.442695
      %v8656 = vpow.pop %v8655
      %v8657 = vmul.f32 %v8631, 1.442695
      %v8658 = vpow.pop %v8657
      %v8659 = vmul.f32 %v8632, 1.442695
      %v8660 = vpow.pop %v8659
      %v8661 = vmul.f32 %v8633, 1.442695
      %v8662 = vpow.pop %v8661
      %v8663 = vmul.f32 %v8634, 1.442695
      %v8664 = vpow.pop %v8663
      %v8665 = vmul.f32 %v8635, 1.442695
      %v8666 = vpow.pop %v8665
      %v8667 = vmul.f32 %v8636, 1.442695
      %v8668 = vpow.pop %v8667
      %8669 = vadd.xlane.f32.xlu0 %v8638
      %v8670 = vpop.xlane.xlu0 %8669
      %8671 = vadd.xlane.f32.xlu0 %v8640
      %v8672 = vpop.xlane.xlu0 %8671
      %8673 = vadd.xlane.f32.xlu0 %v8642
      %v8674 = vpop.xlane.xlu0 %8673
      %8675 = vadd.xlane.f32.xlu0 %v8644
      %v8676 = vpop.xlane.xlu0 %8675
      %8677 = vadd.xlane.f32.xlu0 %v8646
      %v8678 = vpop.xlane.xlu0 %8677
      %8679 = vadd.xlane.f32.xlu0 %v8648
      %v8680 = vpop.xlane.xlu0 %8679
      %8681 = vadd.xlane.f32.xlu0 %v8650
      %v8682 = vpop.xlane.xlu0 %8681
      %8683 = vadd.xlane.f32.xlu0 %v8652
      %v8684 = vpop.xlane.xlu0 %8683
      %8685 = vadd.xlane.f32.xlu0 %v8654
      %v8686 = vpop.xlane.xlu0 %8685
      %8687 = vadd.xlane.f32.xlu0 %v8656
      %v8688 = vpop.xlane.xlu0 %8687
      %8689 = vadd.xlane.f32.xlu0 %v8658
      %v8690 = vpop.xlane.xlu0 %8689
      %8691 = vadd.xlane.f32.xlu0 %v8660
      %v8692 = vpop.xlane.xlu0 %8691
      %8693 = vadd.xlane.f32.xlu0 %v8662
      %v8694 = vpop.xlane.xlu0 %8693
      %8695 = vadd.xlane.f32.xlu0 %v8664
      %v8696 = vpop.xlane.xlu0 %8695
      %8697 = vadd.xlane.f32.xlu0 %v8666
      %v8698 = vpop.xlane.xlu0 %8697
      %8699 = vadd.xlane.f32.xlu0 %v8668
      %v8700 = vpop.xlane.xlu0 %8699
      %v8701 = vrcp.pop %v8670
      %v8702 = vrcp.pop %v8672
      %v8703 = vrcp.pop %v8674
      %v8704 = vrcp.pop %v8676
      %v8705 = vrcp.pop %v8678
      %v8706 = vrcp.pop %v8680
      %v8707 = vrcp.pop %v8682
      %v8708 = vrcp.pop %v8684
      %v8709 = vrcp.pop %v8686
      %v8710 = vrcp.pop %v8688
      %v8711 = vrcp.pop %v8690
      %v8712 = vrcp.pop %v8692
      %v8713 = vrcp.pop %v8694
      %v8714 = vrcp.pop %v8696
      %v8715 = vrcp.pop %v8698
      %v8716 = vrcp.pop %v8700
      %v8717 = vmul.f32 %v8638, %v8701
      %v8718 = vmul.f32 %v8640, %v8702
      %v8719 = vmul.f32 %v8642, %v8703
      %v8720 = vmul.f32 %v8644, %v8704
      %v8721 = vmul.f32 %v8646, %v8705
      %v8722 = vmul.f32 %v8648, %v8706
      %v8723 = vmul.f32 %v8650, %v8707
      %v8724 = vmul.f32 %v8652, %v8708
      %v8725 = vmul.f32 %v8654, %v8709
      %v8726 = vmul.f32 %v8656, %v8710
      %v8727 = vmul.f32 %v8658, %v8711
      %v8728 = vmul.f32 %v8660, %v8712
      %v8729 = vmul.f32 %v8662, %v8713
      %v8730 = vmul.f32 %v8664, %v8714
      %v8731 = vmul.f32 %v8666, %v8715
      %v8732 = vmul.f32 %v8668, %v8716
      %v8733 = vpack.c.bf16 %v8718, %v8717
      %v8734 = vpack.c.bf16 %v8720, %v8719
      %v8735 = vpack.c.bf16 %v8722, %v8721
      %v8736 = vpack.c.bf16 %v8724, %v8723
      %v8737 = vpack.c.bf16 %v8726, %v8725
      %v8738 = vpack.c.bf16 %v8728, %v8727
      %v8739 = vpack.c.bf16 %v8730, %v8729
      %v8740 = vpack.c.bf16 %v8732, %v8731
      %8741 = vmatprep.subr.bf16.mxu0 0
      %8742 = vmatpush1.bf16.msra.mxu0 %v8436
      %8743 = vmatprep.subr.bf16.mxu0 0
      %8744 = vmatpush1.bf16.msra.mxu0 %v8437
      %8745 = vmatprep.subr.bf16.mxu0 0
      %8746 = vmatpush1.bf16.msra.mxu0 %v8438
      %8747 = vmatprep.subr.bf16.mxu0 0
      %8748 = vmatpush1.bf16.msra.mxu0 %v8439
      %8749 = vmatprep.subr.bf16.mxu0 0
      %8750 = vmatpush1.bf16.msra.mxu0 %v8440
      %8751 = vmatprep.subr.bf16.mxu0 0
      %8752 = vmatpush1.bf16.msra.mxu0 %v8441
      %8753 = vmatprep.subr.bf16.mxu0 0
      %8754 = vmatpush1.bf16.msra.mxu0 %v8442
      %8755 = vmatprep.subr.bf16.mxu0 0
      %8756 = vmatpush1.bf16.msra.mxu0 %v8443
      %8757 = vmatprep.subr.bf16.mxu0 0
      %8758 = vmatpush1.bf16.msra.mxu0 0
      %8759 = vmatprep.subr.bf16.mxu0 0
      %8760 = vmatpush1.bf16.msra.mxu0 0
      %8761 = vmatprep.subr.bf16.mxu0 0
      %8762 = vmatpush1.bf16.msra.mxu0 0
      %8763 = vmatprep.subr.bf16.mxu0 0
      %8764 = vmatpush1.bf16.msra.mxu0 0
      %8765 = vmatprep.subr.bf16.mxu0 0
      %8766 = vmatpush1.bf16.msra.mxu0 0
      %8767 = vmatprep.subr.bf16.mxu0 0
      %8768 = vmatpush1.bf16.msra.mxu0 0
      %8769 = vmatprep.subr.bf16.mxu0 0
      %8770 = vmatpush1.bf16.msra.mxu0 0
      %8771 = vmatprep.subr.bf16.mxu0 0
      %8772 = vmatpush1.bf16.msra.mxu0 0
      %8773 = vmatprep.mubr.bf16.mxu0 0
      %8774 = vmatmul.mubr.bf16.gmra.mrb[0].mxu0 %v8733
      %v8775 = vpop.f32.mrb[0].mxu0
      %v8776 = vadd.f32 0.0, %v8775
      %v8777 = vpop.f32.mrb[0].mxu0
      %v8778 = vpop.f32.mrb[0].mxu0
      %v8779 = vadd.f32 0.0, %v8778
      %v8780 = vpop.f32.mrb[0].mxu0
      %8781 = vmatprep.mubr.bf16.mxu0 0
      %8782 = vmatmul.mubr.bf16.gmra.mrb[0].mxu0 %v8734
      %v8783 = vpop.f32.mrb[0].mxu0
      %v8784 = vadd.f32 0.0, %v8783
      %v8785 = vpop.f32.mrb[0].mxu0
      %v8786 = vpop.f32.mrb[0].mxu0
      %v8787 = vadd.f32 0.0, %v8786
      %v8788 = vpop.f32.mrb[0].mxu0
      %8789 = vmatprep.mubr.bf16.mxu0 0
      %8790 = vmatmul.mubr.bf16.gmra.mrb[0].mxu0 %v8735
      %v8791 = vpop.f32.mrb[0].mxu0
      %v8792 = vadd.f32 0.0, %v8791
      %v8793 = vpop.f32.mrb[0].mxu0
      %v8794 = vpop.f32.mrb[0].mxu0
      %v8795 = vadd.f32 0.0, %v8794
      %v8796 = vpop.f32.mrb[0].mxu0
      %8797 = vmatprep.mubr.bf16.mxu0 0
      %8798 = vmatmul.mubr.bf16.gmra.mrb[0].mxu0 %v8736
      %v8799 = vpop.f32.mrb[0].mxu0
      %v8800 = vadd.f32 0.0, %v8799
      %v8801 = vpop.f32.mrb[0].mxu0
      %v8802 = vpop.f32.mrb[0].mxu0
      %v8803 = vadd.f32 0.0, %v8802
      %v8804 = vpop.f32.mrb[0].mxu0
      %8805 = vmatprep.mubr.bf16.mxu0 0
      %8806 = vmatmul.mubr.bf16.gmra.mrb[0].mxu0 %v8737
      %v8807 = vpop.f32.mrb[0].mxu0
      %v8808 = vadd.f32 0.0, %v8807
      %v8809 = vpop.f32.mrb[0].mxu0
      %v8810 = vpop.f32.mrb[0].mxu0
      %v8811 = vadd.f32 0.0, %v8810
      %v8812 = vpop.f32.mrb[0].mxu0
      %8813 = vmatprep.mubr.bf16.mxu0 0
      %8814 = vmatmul.mubr.bf16.gmra.mrb[0].mxu0 %v8738
      %v8815 = vpop.f32.mrb[0].mxu0
      %v8816 = vadd.f32 0.0, %v8815
      %v8817 = vpop.f32.mrb[0].mxu0
      %v8818 = vpop.f32.mrb[0].mxu0
      %v8819 = vadd.f32 0.0, %v8818
      %v8820 = vpop.f32.mrb[0].mxu0
      %8821 = vmatprep.mubr.bf16.mxu0 0
      %8822 = vmatmul.mubr.bf16.gmra.mrb[0].mxu0 %v8739
      %v8823 = vpop.f32.mrb[0].mxu0
      %v8824 = vadd.f32 0.0, %v8823
      %v8825 = vpop.f32.mrb[0].mxu0
      %v8826 = vpop.f32.mrb[0].mxu0
      %v8827 = vadd.f32 0.0, %v8826
      %v8828 = vpop.f32.mrb[0].mxu0
      %8829 = vmatprep.mubr.bf16.mxu0 0
      %8830 = vmatmul.mubr.bf16.gmra.mrb[0].mxu0 %v8740
      %v8831 = vpop.f32.mrb[0].mxu0
      %v8832 = vadd.f32 0.0, %v8831
      %v8833 = vpop.f32.mrb[0].mxu0
      %v8834 = vpop.f32.mrb[0].mxu0
      %v8835 = vadd.f32 0.0, %v8834
      %v8836 = vpop.f32.mrb[0].mxu0
      %8837 = vdwg.mxu0
      %v8838 = vpack.c.bf16 %v8779, %v8776
      %v8839 = vpack.c.bf16 %v8787, %v8784
      %v8840 = vpack.c.bf16 %v8795, %v8792
      %v8841 = vpack.c.bf16 %v8803, %v8800
      %v8842 = vpack.c.bf16 %v8811, %v8808
      %v8843 = vpack.c.bf16 %v8819, %v8816
      %v8844 = vpack.c.bf16 %v8827, %v8824
      %v8845 = vpack.c.bf16 %v8835, %v8832
      %v8846 = vld [vmem:[#allocation2] sm:$0xff]
      %v8847 = vld [vmem:[#allocation2 + $0x8] sm:$0xff]
      %v8848 = vld [vmem:[#allocation2 + $0x10] sm:$0xff]
      %v8849 = vld [vmem:[#allocation2 + $0x18] sm:$0xff]
      %v8850 = vld [vmem:[#allocation2 + $0x20] sm:$0xff]
      %v8851 = vld [vmem:[#allocation2 + $0x28] sm:$0xff]
      %v8852 = vld [vmem:[#allocation2 + $0x30] sm:$0xff]
      %v8853 = vld [vmem:[#allocation2 + $0x38] sm:$0xff]
      %v8854 = vld [vmem:[#allocation2 + $0x40] sm:$0xff]
      %v8855 = vld [vmem:[#allocation2 + $0x48] sm:$0xff]
      %v8856 = vld [vmem:[#allocation2 + $0x50] sm:$0xff]
      %v8857 = vld [vmem:[#allocation2 + $0x58] sm:$0xff]
      %v8858 = vld [vmem:[#allocation2 + $0x60] sm:$0xff]
      %v8859 = vld [vmem:[#allocation2 + $0x68] sm:$0xff]
      %v8860 = vld [vmem:[#allocation2 + $0x70] sm:$0xff]
      %v8861 = vld [vmem:[#allocation2 + $0x78] sm:$0xff]
      %s8862 = scalar_lea.vmem %s4, 56
      %v8863 = vld [vmem:[%s8862] sm:$0xf]
      %v8864 = vld [vmem:[%s8862 + $0x4] sm:$0xf]
      %v8867 = vunpack.c.l.b16 %v8863
      %v8868 = vunpack.c.l.b16 %v8864
      %v8869 = vpack.c.b16 %v8868, %v8867
      %v8872 = vsel %vm814, %v8838, 0
      %v8875 = vsel %vm814, %v8839, 0
      %v8878 = vsel %vm814, %v8840, 0
      %v8881 = vsel %vm814, %v8841, 0
      %v8884 = vsel %vm814, %v8842, 0
      %v8887 = vsel %vm814, %v8843, 0
      %v8890 = vsel %vm814, %v8844, 0
      %v8893 = vsel %vm814, %v8845, 0
      %8895 = vmatprep.subr.bf16.mxu0 0
      %8896 = vmatpush1.bf16.msra.mxu0 %v8869
      %8897 = vmatprep.subr.bf16.mxu0 0
      %8898 = vmatpush1.bf16.msra.mxu0 0
      %8899 = vmatprep.subr.bf16.mxu0 0
      %8900 = vmatpush1.bf16.msra.mxu0 0
      %8901 = vmatprep.subr.bf16.mxu0 0
      %8902 = vmatpush1.bf16.msra.mxu0 0
      %8903 = vmatprep.subr.bf16.mxu0 0
      %8904 = vmatpush1.bf16.msra.mxu0 0
      %8905 = vmatprep.subr.bf16.mxu0 0
      %8906 = vmatpush1.bf16.msra.mxu0 0
      %8907 = vmatprep.subr.bf16.mxu0 0
      %8908 = vmatpush1.bf16.msra.mxu0 0
      %8909 = vmatprep.subr.bf16.mxu0 0
      %8910 = vmatpush1.bf16.msra.mxu0 0
      %8911 = vmatprep.subr.bf16.mxu0 0
      %8912 = vmatpush1.bf16.msra.mxu0 0
      %8913 = vmatprep.subr.bf16.mxu0 0
      %8914 = vmatpush1.bf16.msra.mxu0 0
      %8915 = vmatprep.subr.bf16.mxu0 0
      %8916 = vmatpush1.bf16.msra.mxu0 0
      %8917 = vmatprep.subr.bf16.mxu0 0
      %8918 = vmatpush1.bf16.msra.mxu0 0
      %8919 = vmatprep.subr.bf16.mxu0 0
      %8920 = vmatpush1.bf16.msra.mxu0 0
      %8921 = vmatprep.subr.bf16.mxu0 0
      %8922 = vmatpush1.bf16.msra.mxu0 0
      %8923 = vmatprep.subr.bf16.mxu0 0
      %8924 = vmatpush1.bf16.msra.mxu0 0
      %8925 = vmatprep.subr.bf16.mxu0 0
      %8926 = vmatpush1.bf16.msra.mxu0 0
      %8927 = vmatprep.mubr.bf16.mxu0 0
      %8928 = vmatmul.mubr.bf16.gmra.mrb[0].mxu0 %v8872
      %v8929 = vpop.f32.mrb[0].mxu0
      %v8930 = vadd.f32 0.0, %v8929
      %v8931 = vpop.f32.mrb[0].mxu0
      %v8932 = vpop.f32.mrb[0].mxu0
      %v8933 = vadd.f32 0.0, %v8932
      %v8934 = vpop.f32.mrb[0].mxu0
      %8935 = vmatprep.mubr.bf16.mxu0 0
      %8936 = vmatmul.mubr.bf16.gmra.mrb[0].mxu0 %v8875
      %v8937 = vpop.f32.mrb[0].mxu0
      %v8938 = vadd.f32 0.0, %v8937
      %v8939 = vpop.f32.mrb[0].mxu0
      %v8940 = vpop.f32.mrb[0].mxu0
      %v8941 = vadd.f32 0.0, %v8940
      %v8942 = vpop.f32.mrb[0].mxu0
      %8943 = vmatprep.mubr.bf16.mxu0 0
      %8944 = vmatmul.mubr.bf16.gmra.mrb[0].mxu0 %v8878
      %v8945 = vpop.f32.mrb[0].mxu0
      %v8946 = vadd.f32 0.0, %v8945
      %v8947 = vpop.f32.mrb[0].mxu0
      %v8948 = vpop.f32.mrb[0].mxu0
      %v8949 = vadd.f32 0.0, %v8948
      %v8950 = vpop.f32.mrb[0].mxu0
      %8951 = vmatprep.mubr.bf16.mxu0 0
      %8952 = vmatmul.mubr.bf16.gmra.mrb[0].mxu0 %v8881
      %v8953 = vpop.f32.mrb[0].mxu0
      %v8954 = vadd.f32 0.0, %v8953
      %v8955 = vpop.f32.mrb[0].mxu0
      %v8956 = vpop.f32.mrb[0].mxu0
      %v8957 = vadd.f32 0.0, %v8956
      %v8958 = vpop.f32.mrb[0].mxu0
      %8959 = vmatprep.mubr.bf16.mxu0 0
      %8960 = vmatmul.mubr.bf16.gmra.mrb[0].mxu0 %v8884
      %v8961 = vpop.f32.mrb[0].mxu0
      %v8962 = vadd.f32 0.0, %v8961
      %v8963 = vpop.f32.mrb[0].mxu0
      %v8964 = vpop.f32.mrb[0].mxu0
      %v8965 = vadd.f32 0.0, %v8964
      %v8966 = vpop.f32.mrb[0].mxu0
      %8967 = vmatprep.mubr.bf16.mxu0 0
      %8968 = vmatmul.mubr.bf16.gmra.mrb[0].mxu0 %v8887
      %v8969 = vpop.f32.mrb[0].mxu0
      %v8970 = vadd.f32 0.0, %v8969
      %v8971 = vpop.f32.mrb[0].mxu0
      %v8972 = vpop.f32.mrb[0].mxu0
      %v8973 = vadd.f32 0.0, %v8972
      %v8974 = vpop.f32.mrb[0].mxu0
      %8975 = vmatprep.mubr.bf16.mxu0 0
      %8976 = vmatmul.mubr.bf16.gmra.mrb[0].mxu0 %v8890
      %v8977 = vpop.f32.mrb[0].mxu0
      %v8978 = vadd.f32 0.0, %v8977
      %v8979 = vpop.f32.mrb[0].mxu0
      %v8980 = vpop.f32.mrb[0].mxu0
      %v8981 = vadd.f32 0.0, %v8980
      %v8982 = vpop.f32.mrb[0].mxu0
      %8983 = vmatprep.mubr.bf16.mxu0 0
      %8984 = vmatmul.mubr.bf16.gmra.mrb[0].mxu0 %v8893
      %v8985 = vpop.f32.mrb[0].mxu0
      %v8986 = vadd.f32 0.0, %v8985
      %v8987 = vpop.f32.mrb[0].mxu0
      %v8988 = vpop.f32.mrb[0].mxu0
      %v8989 = vadd.f32 0.0, %v8988
      %v8990 = vpop.f32.mrb[0].mxu0
      %8991 = vdwg.mxu0
      %v8992 = vadd.f32 %v8846, %v8930
      %v8993 = vadd.f32 %v8847, %v8933
      %v8994 = vadd.f32 %v8848, %v8938
      %v8995 = vadd.f32 %v8849, %v8941
      %v8996 = vadd.f32 %v8850, %v8946
      %v8997 = vadd.f32 %v8851, %v8949
      %v8998 = vadd.f32 %v8852, %v8954
      %v8999 = vadd.f32 %v8853, %v8957
      %v9000 = vadd.f32 %v8854, %v8962
      %v9001 = vadd.f32 %v8855, %v8965
      %v9002 = vadd.f32 %v8856, %v8970
      %v9003 = vadd.f32 %v8857, %v8973
      %v9004 = vadd.f32 %v8858, %v8978
      %v9005 = vadd.f32 %v8859, %v8981
      %v9006 = vadd.f32 %v8860, %v8986
      %v9007 = vadd.f32 %v8861, %v8989
      %9008 = vst [vmem:[#allocation2] sm:$0xff] %v8992
      %9009 = vst [vmem:[#allocation2 + $0x8] sm:$0xff] %v8993
      %9010 = vst [vmem:[#allocation2 + $0x10] sm:$0xff] %v8994
      %9011 = vst [vmem:[#allocation2 + $0x18] sm:$0xff] %v8995
      %9012 = vst [vmem:[#allocation2 + $0x20] sm:$0xff] %v8996
      %9013 = vst [vmem:[#allocation2 + $0x28] sm:$0xff] %v8997
      %9014 = vst [vmem:[#allocation2 + $0x30] sm:$0xff] %v8998
      %9015 = vst [vmem:[#allocation2 + $0x38] sm:$0xff] %v8999
      %9016 = vst [vmem:[#allocation2 + $0x40] sm:$0xff] %v9000
      %9017 = vst [vmem:[#allocation2 + $0x48] sm:$0xff] %v9001
      %9018 = vst [vmem:[#allocation2 + $0x50] sm:$0xff] %v9002
      %9019 = vst [vmem:[#allocation2 + $0x58] sm:$0xff] %v9003
      %9020 = vst [vmem:[#allocation2 + $0x60] sm:$0xff] %v9004
      %9021 = vst [vmem:[#allocation2 + $0x68] sm:$0xff] %v9005
      %9022 = vst [vmem:[#allocation2 + $0x70] sm:$0xff] %v9006
      %9023 = vst [vmem:[#allocation2 + $0x78] sm:$0xff] %v9007
      %v9024 = vld [vmem:[#allocation2] sm:$0xff]
      %v9025 = vld [vmem:[#allocation2 + $0x8] sm:$0xff]
      %v9026 = vld [vmem:[#allocation2 + $0x10] sm:$0xff]
      %v9027 = vld [vmem:[#allocation2 + $0x18] sm:$0xff]
      %v9028 = vld [vmem:[#allocation2 + $0x20] sm:$0xff]
      %v9029 = vld [vmem:[#allocation2 + $0x28] sm:$0xff]
      %v9030 = vld [vmem:[#allocation2 + $0x30] sm:$0xff]
      %v9031 = vld [vmem:[#allocation2 + $0x38] sm:$0xff]
      %v9032 = vld [vmem:[#allocation2 + $0x40] sm:$0xff]
      %v9033 = vld [vmem:[#allocation2 + $0x48] sm:$0xff]
      %v9034 = vld [vmem:[#allocation2 + $0x50] sm:$0xff]
      %v9035 = vld [vmem:[#allocation2 + $0x58] sm:$0xff]
      %v9036 = vld [vmem:[#allocation2 + $0x60] sm:$0xff]
      %v9037 = vld [vmem:[#allocation2 + $0x68] sm:$0xff]
      %v9038 = vld [vmem:[#allocation2 + $0x70] sm:$0xff]
      %v9039 = vld [vmem:[#allocation2 + $0x78] sm:$0xff]
      %v9040 = vadd.f32 %v267, %v9024
      %v9041 = vadd.f32 %v268, %v9025
      %v9042 = vadd.f32 %v269, %v9026
      %v9043 = vadd.f32 %v270, %v9027
      %v9044 = vadd.f32 %v271, %v9028
      %v9045 = vadd.f32 %v272, %v9029
      %v9046 = vadd.f32 %v273, %v9030
      %v9047 = vadd.f32 %v274, %v9031
      %v9048 = vadd.f32 %v275, %v9032
      %v9049 = vadd.f32 %v276, %v9033
      %v9050 = vadd.f32 %v277, %v9034
      %v9051 = vadd.f32 %v278, %v9035
      %v9052 = vadd.f32 %v279, %v9036
      %v9053 = vadd.f32 %v280, %v9037
      %v9054 = vadd.f32 %v281, %v9038
      %v9055 = vadd.f32 %v282, %v9039
      %v9056 = vpack.c.bf16 %v9041, %v9040
      %v9057 = vpack.c.bf16 %v9043, %v9042
      %v9058 = vpack.c.bf16 %v9045, %v9044
      %v9059 = vpack.c.bf16 %v9047, %v9046
      %v9060 = vpack.c.bf16 %v9049, %v9048
      %v9061 = vpack.c.bf16 %v9051, %v9050
      %v9062 = vpack.c.bf16 %v9053, %v9052
      %v9063 = vpack.c.bf16 %v9055, %v9054
      %v9072 = vunpack.c.l.b16 %v9056
      %v9073 = vunpack.c.h.b16 %v9056
      %v9074 = vunpack.c.l.b16 %v9057
      %v9075 = vunpack.c.h.b16 %v9057
      %v9076 = vunpack.c.l.b16 %v9058
      %v9077 = vunpack.c.h.b16 %v9058
      %v9078 = vunpack.c.l.b16 %v9059
      %v9079 = vunpack.c.h.b16 %v9059
      %v9080 = vunpack.c.l.b16 %v9060
      %v9081 = vunpack.c.h.b16 %v9060
      %v9082 = vunpack.c.l.b16 %v9061
      %v9083 = vunpack.c.h.b16 %v9061
      %v9084 = vunpack.c.l.b16 %v9062
      %v9085 = vunpack.c.h.b16 %v9062
      %v9086 = vunpack.c.l.b16 %v9063
      %v9087 = vunpack.c.h.b16 %v9063
      %v9088 = vpack.c.b16 %v9072, %v9072
      %v9089 = vpack.c.b16 %v9073, %v9073
      %v9090 = vpack.c.b16 %v9074, %v9074
      %v9091 = vpack.c.b16 %v9075, %v9075
      %v9092 = vpack.c.b16 %v9076, %v9076
      %v9093 = vpack.c.b16 %v9077, %v9077
      %v9094 = vpack.c.b16 %v9078, %v9078
      %v9095 = vpack.c.b16 %v9079, %v9079
      %v9096 = vpack.c.b16 %v9080, %v9080
      %v9097 = vpack.c.b16 %v9081, %v9081
      %v9098 = vpack.c.b16 %v9082, %v9082
      %v9099 = vpack.c.b16 %v9083, %v9083
      %v9100 = vpack.c.b16 %v9084, %v9084
      %v9101 = vpack.c.b16 %v9085, %v9085
      %v9102 = vpack.c.b16 %v9086, %v9086
      %v9103 = vpack.c.b16 %v9087, %v9087
      %9120 = vst [vmem:[%s260] sm:$0xf] %v9088
      %9121 = vst [vmem:[%s260 + $0x4] sm:$0xf] %v9089
      %9122 = vst [vmem:[%s260 + $0x8] sm:$0xf] %v9090
      %9123 = vst [vmem:[%s260 + $0xc] sm:$0xf] %v9091
      %9124 = vst [vmem:[%s260 + $0x10] sm:$0xf] %v9092
      %9125 = vst [vmem:[%s260 + $0x14] sm:$0xf] %v9093
      %9126 = vst [vmem:[%s260 + $0x18] sm:$0xf] %v9094
      %9127 = vst [vmem:[%s260 + $0x1c] sm:$0xf] %v9095
      %9128 = vst [vmem:[%s260 + $0x20] sm:$0xf] %v9096
      %9129 = vst [vmem:[%s260 + $0x24] sm:$0xf] %v9097
      %9130 = vst [vmem:[%s260 + $0x28] sm:$0xf] %v9098
      %9131 = vst [vmem:[%s260 + $0x2c] sm:$0xf] %v9099
      %9132 = vst [vmem:[%s260 + $0x30] sm:$0xf] %v9100
      %9133 = vst [vmem:[%s260 + $0x34] sm:$0xf] %v9101
      %9134 = vst [vmem:[%s260 + $0x38] sm:$0xf] %v9102
      %9135 = vst [vmem:[%s260 + $0x3c] sm:$0xf] %v9103
      %v9136 = vadd.f32 %v9040, %v9041
      %v9137 = vadd.f32 %v9136, %v9042
      %v9138 = vadd.f32 %v9137, %v9043
      %v9139 = vadd.f32 %v9138, %v9044
      %v9140 = vadd.f32 %v9139, %v9045
      %v9141 = vadd.f32 %v9140, %v9046
      %v9142 = vadd.f32 %v9141, %v9047
      %v9143 = vadd.f32 %v9142, %v9048
      %v9144 = vadd.f32 %v9143, %v9049
      %v9145 = vadd.f32 %v9144, %v9050
      %v9146 = vadd.f32 %v9145, %v9051
      %v9147 = vadd.f32 %v9146, %v9052
      %v9148 = vadd.f32 %v9147, %v9053
      %v9149 = vadd.f32 %v9148, %v9054
      %v9150 = vadd.f32 %v9149, %v9055
      %v9151 = vrot.slane %v9150, 4
      %v9152 = vadd.f32 %v9150, %v9151
      %v9153 = vrot.slane %v9152, 2
      %v9154 = vadd.f32 %v9152, %v9153
      %v9155 = vrot.slane %v9154, 1
      %v9156 = vadd.f32 %v9154, %v9155
      %v9157 = vmul.f32 %v9040, %v9040
      %v9158 = vmul.f32 %v9041, %v9041
      %v9159 = vmul.f32 %v9042, %v9042
      %v9160 = vmul.f32 %v9043, %v9043
      %v9161 = vmul.f32 %v9044, %v9044
      %v9162 = vmul.f32 %v9045, %v9045
      %v9163 = vmul.f32 %v9046, %v9046
      %v9164 = vmul.f32 %v9047, %v9047
      %v9165 = vmul.f32 %v9048, %v9048
      %v9166 = vmul.f32 %v9049, %v9049
      %v9167 = vmul.f32 %v9050, %v9050
      %v9168 = vmul.f32 %v9051, %v9051
      %v9169 = vmul.f32 %v9052, %v9052
      %v9170 = vmul.f32 %v9053, %v9053
      %v9171 = vmul.f32 %v9054, %v9054
      %v9172 = vmul.f32 %v9055, %v9055
      %v9173 = vadd.f32 %v9157, %v9158
      %v9174 = vadd.f32 %v9173, %v9159
      %v9175 = vadd.f32 %v9174, %v9160
      %v9176 = vadd.f32 %v9175, %v9161
      %v9177 = vadd.f32 %v9176, %v9162
      %v9178 = vadd.f32 %v9177, %v9163
      %v9179 = vadd.f32 %v9178, %v9164
      %v9180 = vadd.f32 %v9179, %v9165
      %v9181 = vadd.f32 %v9180, %v9166
      %v9182 = vadd.f32 %v9181, %v9167
      %v9183 = vadd.f32 %v9182, %v9168
      %v9184 = vadd.f32 %v9183, %v9169
      %v9185 = vadd.f32 %v9184, %v9170
      %v9186 = vadd.f32 %v9185, %v9171
      %v9187 = vadd.f32 %v9186, %v9172
      %v9188 = vrot.slane %v9187, 4
      %v9189 = vadd.f32 %v9187, %v9188
      %v9190 = vrot.slane %v9189, 2
      %v9191 = vadd.f32 %v9189, %v9190
      %v9192 = vrot.slane %v9191, 1
      %v9193 = vadd.f32 %v9191, %v9192
      %vm9194 = vcmask 1040384
      %v9195 = vsel %vm9194, %v9156, %v9193
      %9196 = vst [vmem:[%s265] sm:$0x3] %v9195
      %s9197 = smul.u32 16, %s18
      %p9198 = scmp.lt.s32.totalorder %s9197, 31
      %s9199 = scalar_select %p9198, %s9197, 31
      %s9200 = smul.addr %s9199, 4
      %s9201 = scalar_lea.vmem %s5, %s9200
      %p9202 = scmp.lt.s32.totalorder %s18, 1
      %s9203 = scalar_select %p9202, %s18, 1
      %s9204 = smul.addr %s9203, 2
      %s9205 = scalar_lea.vmem %s6, %s9204
      // Predicated region
      $region41: #{mha_layer1_forward.3} parent=39 // pred_check
        %p9206 = pneg %p146
      $region42: #{mha_layer1_forward.3} parent=39 // pred_check_branch
        %9208 = sbr.rel (%p9206) target = $region44
      $region43: #{mha_layer1_forward.3} parent=39 // pred_region
        %s9209 = smul.u32 16, %s18
      $region44: #{mha_layer1_forward.3} parent=39 // pred_fallthru
        _
      // Predicated region
      $region45: #{mha_layer1_forward.3} parent=39 // pred_check
        %p9210 = pneg %p172
      $region46: #{mha_layer1_forward.3} parent=39 // pred_check_branch
        %9212 = sbr.rel (%p9210) target = $region48
      $region47: #{mha_layer1_forward.3} parent=39 // pred_region
        _
      $region48: #{mha_layer1_forward.3} parent=39 // pred_fallthru
        _
    $region40: #{mha_layer1_forward.3} parent=5 // pred_fallthru
      _
    %p9213 = scmp.le.s32.totalorder 2, %s13
    // Predicated region
    $region49: #{mha_layer1_forward.3} parent=5 // pred_check
      %p9214 = pneg %p9213
    $region50: #{mha_layer1_forward.3} parent=5 // pred_check_branch
      %9216 = sbr.rel (%p9214) target = $region52
    $region51: #{mha_layer1_forward.3} parent=5 // pred_region
      %s9217 = ssub.s32 %s13, 2
      // Predicated region
      $region53: #{mha_layer1_forward.3} parent=51 // pred_check
        %p9218 = pneg %p152
      $region54: #{mha_layer1_forward.3} parent=51 // pred_check_branch
        %9220 = sbr.rel (%p9218) target = $region56
      $region55: #{mha_layer1_forward.3} parent=51 // pred_region
        %s9221 = smul.u32 16, %s19
        %p9222 = scmp.lt.s32.totalorder %s9221, 31
        %s9223 = scalar_select %p9222, %s9221, 31
        %s9224 = smul.addr %s9223, 4
        %s9225 = scalar_lea.vmem %s5, %s9224
      $region56: #{mha_layer1_forward.3} parent=51 // pred_fallthru
        _
      // Predicated region
      $region57: #{mha_layer1_forward.3} parent=51 // pred_check
        %p9226 = pneg %p178
      $region58: #{mha_layer1_forward.3} parent=51 // pred_check_branch
        %9228 = sbr.rel (%p9226) target = $region60
      $region59: #{mha_layer1_forward.3} parent=51 // pred_region
        %p9229 = scmp.lt.s32.totalorder %s19, 1
        %s9230 = scalar_select %p9229, %s19, 1
        %s9231 = smul.addr %s9230, 2
        %s9232 = scalar_lea.vmem %s6, %s9231
      $region60: #{mha_layer1_forward.3} parent=51 // pred_fallthru
        _
    $region52: #{mha_layer1_forward.3} parent=5 // pred_fallthru
      _
  $region6: #{mha_layer1_forward.3} parent=0 // loop_footer
    %s17 = sadd.s32 1, %s13
  $region7: #{mha_layer1_forward.3} parent=0 // loop_footer_branch
    %12 = sbr.rel target = $region3
  $region8: #{mha_layer1_forward.3} parent=0 // loop_exit
    _

</llo_original>
